<compile_context>
chip_gen: v6e
topology: v6e:2x2x1
jax: 0.10.0
libtpu: 0.0.40
codegen_flags: <defaults>
</compile_context>

<pallas_src>
import functools

import jax
import jax.numpy as jnp
from jax.experimental import pallas as pl
from jax.experimental.pallas import tpu as pltpu


def _round_up(x, m):
    return ((x + m - 1) // m) * m


# --------------------------------------------------------------------------
# Fused Conv-4 kernel: 4 x [conv3x3 (+folded BN) + (Leaky)ReLU + maxpool2x2]
# --------------------------------------------------------------------------
def _make_fused_conv4_kernel(*, bpb, spatial, k1, hidden, n_blocks, leakyrelu, slope):
    C = hidden

    def activate(y):
        if leakyrelu:
            return jnp.where(y > 0.0, y, slope * y)
        return jnp.maximum(y, 0.0)

    def act_pool(acc, shift, H, W):
        # acc: (bpb*H*W, C) f32 conv accumulator; returns pooled (bpb, H//2, W//2, C) bf16.
        y = activate(acc + shift)
        y = y.astype(jnp.bfloat16)                 # pool in bf16 (identical to pool-then-cast)
        Hout, Wout = H // 2, W // 2
        y = y.reshape(bpb, H, W, C)
        if (H % 2) or (W % 2):                     # floor semantics, like nn.MaxPool2d
            y = y[:, :2 * Hout, :2 * Wout, :]
        y = jnp.max(y.reshape(bpb * 2 * Hout, Wout, 2, C), axis=2)   # pool along W
        y = jnp.max(y.reshape(bpb * Hout, 2, Wout, C), axis=1)       # pool along H
        return y.reshape(bpb, Hout, Wout, C)

    def write_haloed(act_ref, pooled, Hn, Wn):
        # Zero only the halo strips (cheap) and write the pooled output directly into the
        # interior of the next block's padded layout — no separate pad-copy per block.
        zrow = jnp.zeros((bpb, 1, Wn + 2, C), jnp.bfloat16)
        act_ref[:, 0:1, :, :] = zrow
        act_ref[:, Hn + 1:Hn + 2, :, :] = zrow
        zcol = jnp.zeros((bpb, Hn + 2, 1, C), jnp.bfloat16)
        act_ref[:, :, 0:1, :] = zcol
        act_ref[:, :, Wn + 1:Wn + 2, :] = zcol
        act_ref[:, 1:Hn + 1, 1:Wn + 1, :] = pooled

    def kernel(*refs):
        x_ref = refs[0]
        w_refs = [refs[1 + 2 * i] for i in range(n_blocks)]
        s_refs = [refs[2 + 2 * i] for i in range(n_blocks)]
        o_ref = refs[1 + 2 * n_blocks]
        act_refs = list(refs[2 + 2 * n_blocks:])   # n_blocks-1 haloed bf16 activation scratches

        # ---- block 1: dense matmul on the XLA-im2col'ed input (K = k1, already lane-aligned)
        H, W = spatial[0]
        lhs = x_ref[...].reshape(bpb * H * W, k1)
        acc = jnp.dot(lhs, w_refs[0][...], preferred_element_type=jnp.float32)
        pooled = act_pool(acc, s_refs[0][...], H, W)
        if n_blocks == 1:
            o_ref[...] = pooled
            return
        write_haloed(act_refs[0], pooled, H // 2, W // 2)

        # ---- blocks 2..n: accumulate 9 K=C matmuls straight from the haloed scratch
        # (ky/kx tap shifts are plain slices; no im2col patch buffer, no patch stores).
        for blk in range(1, n_blocks):
            H, W = spatial[blk]
            src = act_refs[blk - 1]
            w_ref = w_refs[blk]
            acc = None
            for t in range(9):
                ky, kx = divmod(t, 3)
                tap = src[:, ky:ky + H, kx:kx + W, :]           # (bpb, H, W, C) bf16
                d = jnp.dot(tap.reshape(bpb * H * W, C),
                            w_ref[t * C:(t + 1) * C, :],
                            preferred_element_type=jnp.float32)
                acc = d if acc is None else acc + d
            pooled = act_pool(acc, s_refs[blk][...], H, W)
            if blk == n_blocks - 1:
                o_ref[...] = pooled
            else:
                write_haloed(act_refs[blk], pooled, H // 2, W // 2)

    return kernel


# --------------------------------------------------------------------------
# Wrapper: block-1 im2col in XLA, batch blocking, single fused pallas_call
# --------------------------------------------------------------------------
@functools.partial(jax.jit, static_argnames=("leakyrelu", "flatten", "slope"))
def _conv4_forward(x_nhwc, params, *, leakyrelu, flatten, slope):
    B, H0, W0, _ = x_nhwc.shape
    n_blocks = len(params)
    hidden = params[0][0].shape[-1]
    k1 = params[0][0].shape[0]

    # Spatial size of each block's conv input; final pooled feature grid.
    spatial = []
    h, w = H0, W0
    for _ in range(n_blocks):
        spatial.append((h, w))
        h, w = h // 2, w // 2
    Hf, Wf = h, w
    assert Hf >= 1 and Wf >= 1, "input too small for this many conv/pool blocks"

    # Block-1 im2col in XLA: Cin is tiny (3), so the 9x blow-up is a few channels/pixel,
    # and it removes the lane-sparse Cin-padded scratch & masked copies from the kernel.
    x = x_nhwc.astype(jnp.bfloat16)
    xp = jnp.pad(x, ((0, 0), (1, 1), (1, 1), (0, 0)))
    pats = jnp.concatenate([xp[:, ky:ky + H0, kx:kx + W0, :]
                            for ky in range(3) for kx in range(3)], axis=-1)
    if pats.shape[-1] < k1:
        pats = jnp.pad(pats, ((0, 0), (0, 0), (0, 0), (0, k1 - pats.shape[-1])))

    # Batch-block the grid: BPB images per step fattens M on the small-spatial blocks and
    # amortizes per-step overhead; keep >= 2 grid steps so v7x's 2 TensorCores share work.
    target_bpb = 4 if max(H0, W0) >= 64 else 8        # VMEM-conservative on v7x (64 MiB)
    bpb = max(1, min(target_bpb, B // 2))
    b_pad = _round_up(B, bpb)
    if b_pad > B:
        pats = jnp.pad(pats, ((0, b_pad - B), (0, 0), (0, 0), (0, 0)))
    num_steps = b_pad // bpb

    kernel = _make_fused_conv4_kernel(bpb=bpb, spatial=tuple(spatial), k1=k1,
                                      hidden=hidden, n_blocks=n_blocks,
                                      leakyrelu=leakyrelu, slope=slope)

    in_specs = [pl.BlockSpec((bpb, H0, W0, k1), lambda b: (b, 0, 0, 0))]
    flat_inputs = [pats]
    for (wg, sh) in params:
        in_specs.append(pl.BlockSpec(wg.shape, lambda b: (0, 0)))    # weights resident
        in_specs.append(pl.BlockSpec(sh.shape, lambda b: (0, 0)))    # BN shift resident
        flat_inputs += [wg, sh]

    # Haloed inter-block activation scratches (bf16); they never touch HBM.
    scratch_shapes = [pltpu.VMEM((bpb, spatial[i][0] + 2, spatial[i][1] + 2, hidden),
                                 jnp.bfloat16)
                      for i in range(1, n_blocks)]

    out = pl.pallas_call(
        kernel,
        out_shape=jax.ShapeDtypeStruct((b_pad, Hf, Wf, hidden), jnp.bfloat16),
        grid=(num_steps,),
        in_specs=in_specs,
        out_specs=pl.BlockSpec((bpb, Hf, Wf, hidden), lambda b: (b, 0, 0, 0)),
        scratch_shapes=scratch_shapes,
        compiler_params=pltpu.CompilerParams(
            dimension_semantics=("parallel",),          # megacore: batch split across TCs
            vmem_limit_bytes=40 * 1024 * 1024),         # <= ~48 MiB per review (v7x: 64 MiB)
    )(*flat_inputs)

    y = out[:B].astype(jnp.float32)
    if flatten:
        y = y.reshape(B, Hf * Wf * hidden)
    return y


# --------------------------------------------------------------------------
# Pure-JAX reference of the same backbone (for a numerical sanity check)
# --------------------------------------------------------------------------
def _conv4_reference(x_nhwc, params, leakyrelu=False, slope=0.1):
    x = x_nhwc.astype(jnp.bfloat16).astype(jnp.float32)
    cin = x_nhwc.shape[-1]
    for blk, (w2d, shift) in enumerate(params):
        C = w2d.shape[1]
        ci = cin if blk == 0 else C
        w = w2d.astype(jnp.float32)[:9 * ci].reshape(3, 3, ci, C)
        y = jax.lax.conv_general_dilated(x, w, (1, 1), ((1, 1), (1, 1)),
                                         dimension_numbers=("NHWC", "HWIO", "NHWC"),
                                         precision=jax.lax.Precision.HIGHEST)
        y = y + shift.reshape(1, 1, 1, C)
        y = jnp.where(y > 0.0, y, slope * y) if leakyrelu else jnp.maximum(y, 0.0)
        y = y.astype(jnp.bfloat16).astype(jnp.float32)
        B, H, W, _ = y.shape
        Ho, Wo = H // 2, W // 2
        x = y[:, :2 * Ho, :2 * Wo, :].reshape(B, Ho, 2, Wo, 2, C).max(axis=(2, 4))
    return x.reshape(x.shape[0], -1)


# --------------------------------------------------------------------------
# consistency_loss — plain JAX on purpose (tiny lane-sparse score matrices)
# --------------------------------------------------------------------------
def _log_softmax(s):
    m = jnp.max(s, axis=-1, keepdims=True)
    z = s - m
    return z - jnp.log(jnp.sum(jnp.exp(z), axis=-1, keepdims=True))


def consistency_loss(scoresM1, scoresM2, type='euclidean'):
    s1 = scoresM1.astype(jnp.float32)
    s2 = scoresM2.astype(jnp.float32)
    avg = 0.5 * (s1 + s2)
    if type == 'euclidean':
        m1 = jnp.sqrt(jnp.sum((s1 - avg) ** 2, axis=1))
        m2 = jnp.sqrt(jnp.sum((s2 - avg) ** 2, axis=1))
    elif type == 'KL':
        ls1, ls2, lsa = _log_softmax(s1), _log_softmax(s2), _log_softmax(avg)
        m1 = jnp.sum(jnp.exp(ls1) * (ls1 - lsa), axis=1)
        m2 = jnp.sum(jnp.exp(ls2) * (ls2 - lsa), axis=1)
    else:
        return None
    return 0.5 * (jnp.mean(m1) + jnp.mean(m2))


# --------------------------------------------------------------------------
# Conv-4 feature backbone (the `model_func` for MetaTemplate)
# --------------------------------------------------------------------------
class Conv4Features:
    """4 x [Conv3x3 -> BN(folded, inference) -> (Leaky)ReLU -> MaxPool2x2], then flatten."""

    def __init__(self, key, in_channels=3, hidden=64, n_blocks=4, image_size=16,
                 flatten=True, leakyrelu=False):
        self.flatten = flatten
        self.leakyrelu = leakyrelu
        self.slope = 0.1   # few-shot Conv-4 backbones use LeakyReLU(0.1); torch default is 0.01
        eps = 1e-5
        params = []
        cin = in_channels
        for blk in range(n_blocks):
            key, kw = jax.random.split(key)
            # Deterministic Kaiming-style init; BN in inference form, folded into the conv.
            w = jax.random.normal(kw, (3, 3, cin, hidden), jnp.float32) * (2.0 / (9 * cin)) ** 0.5
            conv_bias = jnp.zeros((hidden,), jnp.float32)
            gamma = jnp.ones((hidden,), jnp.float32)
            beta = jnp.zeros((hidden,), jnp.float32)
            running_mean = jnp.zeros((hidden,), jnp.float32)
            running_var = jnp.ones((hidden,), jnp.float32)
            scale = gamma / jnp.sqrt(running_var + eps)
            shift = (conv_bias - running_mean) * scale + beta
            w2d = (w * scale).reshape(9 * cin, hidden)
            if blk == 0:
                k1 = _round_up(9 * cin, 8)                 # 27 -> 32: aligned matmul K
                w2d = jnp.pad(w2d, ((0, k1 - 9 * cin), (0, 0)))
            params.append((w2d.astype(jnp.bfloat16),
                           shift.reshape(1, hidden).astype(jnp.float32)))
            cin = hidden
        self.params = tuple(params)
        # Feature dim computed from the image size (review fix: was hardcoded to `hidden`,
        # which is only correct for 16x16 inputs).
        h = w = image_size
        for _ in range(n_blocks):
            h, w = h // 2, w // 2
        self.final_feat_dim = hidden * h * w if flatten else (h, w, hidden)

    def forward(self, x_nhwc):
        return _conv4_forward(x_nhwc, self.params, leakyrelu=self.leakyrelu,
                              flatten=self.flatten, slope=self.slope)


# --------------------------------------------------------------------------
# MetaTemplate (forward pass + parse_feature; training loops are host-side)
# --------------------------------------------------------------------------
class MetaTemplate:
    def __init__(self, model_func, n_way, n_support, flatten=True,
                 leakyrelu=False, tf_path=None, change_way=True):
        self.n_way = n_way
        self.n_support = n_support
        self.n_query = -1
        self.feature = model_func(flatten=flatten, leakyrelu=leakyrelu)
        self.feat_dim = self.feature.final_feat_dim
        self.change_way = change_way
        # TODO(synk): SummaryWriter / optimizer / abstract set_forward(_loss) / train_loop /
        # test_loop are host-side bookkeeping with no kernel equivalent.

    def forward(self, x_nchw):
        # Input follows PyTorch NCHW; kernels run channels-last (NHWC, channels on lanes).
        x = jnp.transpose(x_nchw, (0, 2, 3, 1))
        return self.feature.forward(x)

    def parse_feature(self, x, is_feature):
        if is_feature:
            z_all = x
        else:
            xr = x.reshape((self.n_way * (self.n_support + self.n_query),) + x.shape[2:])
            z_all = self.forward(xr)
            z_all = z_all.reshape(self.n_way, self.n_support + self.n_query, -1)
        z_support = z_all[:, :self.n_support]
        z_query = z_all[:, self.n_support:]
        return z_support, z_query


# --------------------------------------------------------------------------
if __name__ == "__main__":
    key = jax.random.PRNGKey(0)
    k_model, k_x, k_ep, k_s1, k_s2 = jax.random.split(key, 5)

    model_func = functools.partial(Conv4Features, k_model, 3, 64, 4)
    net = MetaTemplate(model_func, n_way=2, n_support=1)

    # Plain forward (what MetaTemplate.forward does): batch of NCHW images.
    x = jax.random.normal(k_x, (2, 3, 16, 16), jnp.float32)
    feats = jax.block_until_ready(net.forward(x))
    assert feats.shape == (2, net.feat_dim), feats.shape
    assert bool(jnp.all(jnp.isfinite(feats)))

    # Numerical sanity check against a pure-JAX reference of the same (bf16-folded) backbone.
    ref = jax.block_until_ready(
        _conv4_reference(jnp.transpose(x, (0, 2, 3, 1)), net.feature.params))
    max_err = float(jnp.max(jnp.abs(feats - ref)))
    assert max_err < 0.1, max_err

    # Episode-style input through parse_feature: [n_way, n_support+n_query, C, H, W]
    net.n_query = 2
    x_ep = jax.random.normal(k_ep, (2, 3, 3, 16, 16), jnp.float32)
    z_s, z_q = net.parse_feature(x_ep, is_feature=False)
    z_s, z_q = jax.block_until_ready((z_s, z_q))
    assert z_s.shape == (2, 1, net.feat_dim) and z_q.shape == (2, 2, net.feat_dim)

    # consistency_loss on score matrices [n_way*n_query, n_way] (used with 'KL' in train_loop)
    s1 = jax.random.normal(k_s1, (4, 2), jnp.float32)
    s2 = jax.random.normal(k_s2, (4, 2), jnp.float32)
    kl = jax.block_until_ready(consistency_loss(s1, s2, 'KL'))
    eu = jax.block_until_ready(consistency_loss(s1, s2, 'euclidean'))
    assert kl.shape == () and eu.shape == ()

    print("KERNEL_OK")
</pallas_src>

<mosaic_0001>
module attributes {stable_mosaic.version = 11 : i64} {
  func.func @kernel(%arg0: i32, %arg1: memref<1x16x16x32xbf16, #tpu.memory_space<vmem>>, %arg2: memref<32x64xbf16, #tpu.memory_space<vmem>>, %arg3: memref<1x64xf32, #tpu.memory_space<vmem>>, %arg4: memref<576x64xbf16, #tpu.memory_space<vmem>>, %arg5: memref<1x64xf32, #tpu.memory_space<vmem>>, %arg6: memref<576x64xbf16, #tpu.memory_space<vmem>>, %arg7: memref<1x64xf32, #tpu.memory_space<vmem>>, %arg8: memref<576x64xbf16, #tpu.memory_space<vmem>>, %arg9: memref<1x64xf32, #tpu.memory_space<vmem>>, %arg10: memref<1x1x1x64xbf16, #tpu.memory_space<vmem>>, %arg11: memref<1x10x10x64xbf16, #tpu.memory_space<vmem>>, %arg12: memref<1x6x6x64xbf16, #tpu.memory_space<vmem>>, %arg13: memref<1x4x4x64xbf16, #tpu.memory_space<vmem>>) attributes {dimension_semantics = [#tpu.dimension_semantics<parallel>], iteration_bounds = array<i64: 2>, scalar_prefetch = 0 : i64, scratch_operands = 3 : i64, tpu.core_type = #tpu.core_type<tc>, window_params = [{transform_indices = @transform_0, window_bounds = array<i64: 1, 16, 16, 32>}, {pipeline_mode = #tpu.pipeline_mode<synchronous>, transform_indices = @transform_1, window_bounds = array<i64: 32, 64>}, {pipeline_mode = #tpu.pipeline_mode<synchronous>, transform_indices = @transform_2, window_bounds = array<i64: 1, 64>}, {pipeline_mode = #tpu.pipeline_mode<synchronous>, transform_indices = @transform_3, window_bounds = array<i64: 576, 64>}, {pipeline_mode = #tpu.pipeline_mode<synchronous>, transform_indices = @transform_4, window_bounds = array<i64: 1, 64>}, {pipeline_mode = #tpu.pipeline_mode<synchronous>, transform_indices = @transform_5, window_bounds = array<i64: 576, 64>}, {pipeline_mode = #tpu.pipeline_mode<synchronous>, transform_indices = @transform_6, window_bounds = array<i64: 1, 64>}, {pipeline_mode = #tpu.pipeline_mode<synchronous>, transform_indices = @transform_7, window_bounds = array<i64: 576, 64>}, {pipeline_mode = #tpu.pipeline_mode<synchronous>, transform_indices = @transform_8, window_bounds = array<i64: 1, 64>}, {transform_indices = @transform_9, window_bounds = array<i64: 1, 1, 1, 64>}]} {
    %c0 = arith.constant 0 : index
    %c0_0 = arith.constant 0 : index
    %c0_1 = arith.constant 0 : index
    %c0_2 = arith.constant 0 : index
    %0 = vector.load %arg1[%c0, %c0_0, %c0_1, %c0_2] : memref<1x16x16x32xbf16, #tpu.memory_space<vmem>>, vector<1x16x16x32xbf16>
    %1 = vector.shape_cast %0 : vector<1x16x16x32xbf16> to vector<256x32xbf16>
    %c0_3 = arith.constant 0 : index
    %c0_4 = arith.constant 0 : index
    %2 = vector.load %arg2[%c0_3, %c0_4] : memref<32x64xbf16, #tpu.memory_space<vmem>>, vector<32x64xbf16>
    %cst = arith.constant dense<0.000000e+00> : vector<256x64xf32>
    %3 = tpu.matmul %1, %2, %cst {dimension_numbers = #tpu.dot_dimension_numbers<[1], [0], [0], [1], [0, 0, 1, 1], [], []>} : vector<256x32xbf16>, vector<32x64xbf16>, vector<256x64xf32> -> vector<256x64xf32>
    %c0_5 = arith.constant 0 : index
    %c0_6 = arith.constant 0 : index
    %4 = vector.load %arg3[%c0_5, %c0_6] : memref<1x64xf32, #tpu.memory_space<vmem>>, vector<1x64xf32>
    %5 = vector.broadcast %4 : vector<1x64xf32> to vector<256x64xf32>
    %6 = arith.addf %3, %5 : vector<256x64xf32>
    %cst_7 = arith.constant 0.000000e+00 : f32
    %7 = vector.broadcast %cst_7 : f32 to vector<256x64xf32>
    %8 = arith.maximumf %6, %7 : vector<256x64xf32>
    %9 = arith.truncf %8 : vector<256x64xf32> to vector<256x64xbf16>
    %10 = vector.shape_cast %9 : vector<256x64xbf16> to vector<1x16x16x64xbf16>
    %11 = vector.shape_cast %10 : vector<1x16x16x64xbf16> to vector<16x8x2x64xbf16>
    %cst_8 = arith.constant dense<0xFF80> : vector<16x8x64xbf16>
    %12 = vector.multi_reduction <maximumf>, %11, %cst_8 [2] : vector<16x8x2x64xbf16> to vector<16x8x64xbf16>
    %13 = vector.shape_cast %12 : vector<16x8x64xbf16> to vector<8x2x8x64xbf16>
    %cst_9 = arith.constant dense<0xFF80> : vector<8x8x64xbf16>
    %14 = vector.multi_reduction <maximumf>, %13, %cst_9 [1] : vector<8x2x8x64xbf16> to vector<8x8x64xbf16>
    %15 = vector.shape_cast %14 : vector<8x8x64xbf16> to vector<1x8x8x64xbf16>
    %cst_10 = arith.constant 0.000000e+00 : bf16
    %16 = vector.broadcast %cst_10 : bf16 to vector<1x1x10x64xbf16>
    %c0_11 = arith.constant 0 : index
    %c0_12 = arith.constant 0 : index
    %c0_13 = arith.constant 0 : index
    %c0_14 = arith.constant 0 : index
    %17 = vector.load %arg11[%c0_11, %c0_12, %c0_13, %c0_14] : memref<1x10x10x64xbf16, #tpu.memory_space<vmem>>, vector<1x1x10x64xbf16>
    tpu.vector_store %arg11[%c0_11, %c0_12, %c0_13, %c0_14], %16 {strides = array<i32>} : memref<1x10x10x64xbf16, #tpu.memory_space<vmem>>, vector<1x1x10x64xbf16>,
    %c0_15 = arith.constant 0 : index
    %c9 = arith.constant 9 : index
    %c0_16 = arith.constant 0 : index
    %c0_17 = arith.constant 0 : index
    %18 = vector.load %arg11[%c0_15, %c9, %c0_16, %c0_17] : memref<1x10x10x64xbf16, #tpu.memory_space<vmem>>, vector<1x1x10x64xbf16>
    tpu.vector_store %arg11[%c0_15, %c9, %c0_16, %c0_17], %16 {strides = array<i32>} : memref<1x10x10x64xbf16, #tpu.memory_space<vmem>>, vector<1x1x10x64xbf16>,
    %cst_18 = arith.constant 0.000000e+00 : bf16
    %19 = vector.broadcast %cst_18 : bf16 to vector<1x10x1x64xbf16>
    %c0_19 = arith.constant 0 : index
    %c0_20 = arith.constant 0 : index
    %c0_21 = arith.constant 0 : index
    %c0_22 = arith.constant 0 : index
    %20 = vector.load %arg11[%c0_19, %c0_20, %c0_21, %c0_22] : memref<1x10x10x64xbf16, #tpu.memory_space<vmem>>, vector<1x10x1x64xbf16>
    tpu.vector_store %arg11[%c0_19, %c0_20, %c0_21, %c0_22], %19 {strides = array<i32>} : memref<1x10x10x64xbf16, #tpu.memory_space<vmem>>, vector<1x10x1x64xbf16>,
    %c0_23 = arith.constant 0 : index
    %c0_24 = arith.constant 0 : index
    %c9_25 = arith.constant 9 : index
    %c0_26 = arith.constant 0 : index
    %21 = vector.load %arg11[%c0_23, %c0_24, %c9_25, %c0_26] : memref<1x10x10x64xbf16, #tpu.memory_space<vmem>>, vector<1x10x1x64xbf16>
    tpu.vector_store %arg11[%c0_23, %c0_24, %c9_25, %c0_26], %19 {strides = array<i32>} : memref<1x10x10x64xbf16, #tpu.memory_space<vmem>>, vector<1x10x1x64xbf16>,
    %c0_27 = arith.constant 0 : index
    %c1 = arith.constant 1 : index
    %c1_28 = arith.constant 1 : index
    %c0_29 = arith.constant 0 : index
    %22 = vector.load %arg11[%c0_27, %c1, %c1_28, %c0_29] : memref<1x10x10x64xbf16, #tpu.memory_space<vmem>>, vector<1x8x8x64xbf16>
    tpu.vector_store %arg11[%c0_27, %c1, %c1_28, %c0_29], %15 {strides = array<i32>} : memref<1x10x10x64xbf16, #tpu.memory_space<vmem>>, vector<1x8x8x64xbf16>,
    %c0_30 = arith.constant 0 : index
    %c0_31 = arith.constant 0 : index
    %c0_32 = arith.constant 0 : index
    %c0_33 = arith.constant 0 : index
    %23 = vector.load %arg11[%c0_30, %c0_31, %c0_32, %c0_33] : memref<1x10x10x64xbf16, #tpu.memory_space<vmem>>, vector<1x8x8x64xbf16>
    %24 = vector.shape_cast %23 : vector<1x8x8x64xbf16> to vector<64x64xbf16>
    %c0_34 = arith.constant 0 : index
    %c0_35 = arith.constant 0 : index
    %25 = vector.load %arg4[%c0_34, %c0_35] : memref<576x64xbf16, #tpu.memory_space<vmem>>, vector<64x64xbf16>
    %cst_36 = arith.constant dense<0.000000e+00> : vector<64x64xf32>
    %26 = tpu.matmul %24, %25, %cst_36 {dimension_numbers = #tpu.dot_dimension_numbers<[1], [0], [0], [1], [0, 0, 1, 1], [], []>} : vector<64x64xbf16>, vector<64x64xbf16>, vector<64x64xf32> -> vector<64x64xf32>
    %c0_37 = arith.constant 0 : index
    %c0_38 = arith.constant 0 : index
    %c1_39 = arith.constant 1 : index
    %c0_40 = arith.constant 0 : index
    %27 = vector.load %arg11[%c0_37, %c0_38, %c1_39, %c0_40] : memref<1x10x10x64xbf16, #tpu.memory_space<vmem>>, vector<1x8x8x64xbf16>
    %28 = vector.shape_cast %27 : vector<1x8x8x64xbf16> to vector<64x64xbf16>
    %c64 = arith.constant 64 : index
    %c0_41 = arith.constant 0 : index
    %29 = vector.load %arg4[%c64, %c0_41] : memref<576x64xbf16, #tpu.memory_space<vmem>>, vector<64x64xbf16>
    %cst_42 = arith.constant dense<0.000000e+00> : vector<64x64xf32>
    %30 = tpu.matmul %28, %29, %cst_42 {dimension_numbers = #tpu.dot_dimension_numbers<[1], [0], [0], [1], [0, 0, 1, 1], [], []>} : vector<64x64xbf16>, vector<64x64xbf16>, vector<64x64xf32> -> vector<64x64xf32>
    %31 = arith.addf %26, %30 : vector<64x64xf32>
    %c0_43 = arith.constant 0 : index
    %c0_44 = arith.constant 0 : index
    %c2 = arith.constant 2 : index
    %c0_45 = arith.constant 0 : index
    %32 = vector.load %arg11[%c0_43, %c0_44, %c2, %c0_45] : memref<1x10x10x64xbf16, #tpu.memory_space<vmem>>, vector<1x8x8x64xbf16>
    %33 = vector.shape_cast %32 : vector<1x8x8x64xbf16> to vector<64x64xbf16>
    %c128 = arith.constant 128 : index
    %c0_46 = arith.constant 0 : index
    %34 = vector.load %arg4[%c128, %c0_46] : memref<576x64xbf16, #tpu.memory_space<vmem>>, vector<64x64xbf16>
    %cst_47 = arith.constant dense<0.000000e+00> : vector<64x64xf32>
    %35 = tpu.matmul %33, %34, %cst_47 {dimension_numbers = #tpu.dot_dimension_numbers<[1], [0], [0], [1], [0, 0, 1, 1], [], []>} : vector<64x64xbf16>, vector<64x64xbf16>, vector<64x64xf32> -> vector<64x64xf32>
    %36 = arith.addf %31, %35 : vector<64x64xf32>
    %c0_48 = arith.constant 0 : index
    %c1_49 = arith.constant 1 : index
    %c0_50 = arith.constant 0 : index
    %c0_51 = arith.constant 0 : index
    %37 = vector.load %arg11[%c0_48, %c1_49, %c0_50, %c0_51] : memref<1x10x10x64xbf16, #tpu.memory_space<vmem>>, vector<1x8x8x64xbf16>
    %38 = vector.shape_cast %37 : vector<1x8x8x64xbf16> to vector<64x64xbf16>
    %c192 = arith.constant 192 : index
    %c0_52 = arith.constant 0 : index
    %39 = vector.load %arg4[%c192, %c0_52] : memref<576x64xbf16, #tpu.memory_space<vmem>>, vector<64x64xbf16>
    %cst_53 = arith.constant dense<0.000000e+00> : vector<64x64xf32>
    %40 = tpu.matmul %38, %39, %cst_53 {dimension_numbers = #tpu.dot_dimension_numbers<[1], [0], [0], [1], [0, 0, 1, 1], [], []>} : vector<64x64xbf16>, vector<64x64xbf16>, vector<64x64xf32> -> vector<64x64xf32>
    %41 = arith.addf %36, %40 : vector<64x64xf32>
    %c0_54 = arith.constant 0 : index
    %c1_55 = arith.constant 1 : index
    %c1_56 = arith.constant 1 : index
    %c0_57 = arith.constant 0 : index
    %42 = vector.load %arg11[%c0_54, %c1_55, %c1_56, %c0_57] : memref<1x10x10x64xbf16, #tpu.memory_space<vmem>>, vector<1x8x8x64xbf16>
    %43 = vector.shape_cast %42 : vector<1x8x8x64xbf16> to vector<64x64xbf16>
    %c256 = arith.constant 256 : index
    %c0_58 = arith.constant 0 : index
    %44 = vector.load %arg4[%c256, %c0_58] : memref<576x64xbf16, #tpu.memory_space<vmem>>, vector<64x64xbf16>
    %cst_59 = arith.constant dense<0.000000e+00> : vector<64x64xf32>
    %45 = tpu.matmul %43, %44, %cst_59 {dimension_numbers = #tpu.dot_dimension_numbers<[1], [0], [0], [1], [0, 0, 1, 1], [], []>} : vector<64x64xbf16>, vector<64x64xbf16>, vector<64x64xf32> -> vector<64x64xf32>
    %46 = arith.addf %41, %45 : vector<64x64xf32>
    %c0_60 = arith.constant 0 : index
    %c1_61 = arith.constant 1 : index
    %c2_62 = arith.constant 2 : index
    %c0_63 = arith.constant 0 : index
    %47 = vector.load %arg11[%c0_60, %c1_61, %c2_62, %c0_63] : memref<1x10x10x64xbf16, #tpu.memory_space<vmem>>, vector<1x8x8x64xbf16>
    %48 = vector.shape_cast %47 : vector<1x8x8x64xbf16> to vector<64x64xbf16>
    %c320 = arith.constant 320 : index
    %c0_64 = arith.constant 0 : index
    %49 = vector.load %arg4[%c320, %c0_64] : memref<576x64xbf16, #tpu.memory_space<vmem>>, vector<64x64xbf16>
    %cst_65 = arith.constant dense<0.000000e+00> : vector<64x64xf32>
    %50 = tpu.matmul %48, %49, %cst_65 {dimension_numbers = #tpu.dot_dimension_numbers<[1], [0], [0], [1], [0, 0, 1, 1], [], []>} : vector<64x64xbf16>, vector<64x64xbf16>, vector<64x64xf32> -> vector<64x64xf32>
    %51 = arith.addf %46, %50 : vector<64x64xf32>
    %c0_66 = arith.constant 0 : index
    %c2_67 = arith.constant 2 : index
    %c0_68 = arith.constant 0 : index
    %c0_69 = arith.constant 0 : index
    %52 = vector.load %arg11[%c0_66, %c2_67, %c0_68, %c0_69] : memref<1x10x10x64xbf16, #tpu.memory_space<vmem>>, vector<1x8x8x64xbf16>
    %53 = vector.shape_cast %52 : vector<1x8x8x64xbf16> to vector<64x64xbf16>
    %c384 = arith.constant 384 : index
    %c0_70 = arith.constant 0 : index
    %54 = vector.load %arg4[%c384, %c0_70] : memref<576x64xbf16, #tpu.memory_space<vmem>>, vector<64x64xbf16>
    %cst_71 = arith.constant dense<0.000000e+00> : vector<64x64xf32>
    %55 = tpu.matmul %53, %54, %cst_71 {dimension_numbers = #tpu.dot_dimension_numbers<[1], [0], [0], [1], [0, 0, 1, 1], [], []>} : vector<64x64xbf16>, vector<64x64xbf16>, vector<64x64xf32> -> vector<64x64xf32>
    %56 = arith.addf %51, %55 : vector<64x64xf32>
    %c0_72 = arith.constant 0 : index
    %c2_73 = arith.constant 2 : index
    %c1_74 = arith.constant 1 : index
    %c0_75 = arith.constant 0 : index
    %57 = vector.load %arg11[%c0_72, %c2_73, %c1_74, %c0_75] : memref<1x10x10x64xbf16, #tpu.memory_space<vmem>>, vector<1x8x8x64xbf16>
    %58 = vector.shape_cast %57 : vector<1x8x8x64xbf16> to vector<64x64xbf16>
    %c448 = arith.constant 448 : index
    %c0_76 = arith.constant 0 : index
    %59 = vector.load %arg4[%c448, %c0_76] : memref<576x64xbf16, #tpu.memory_space<vmem>>, vector<64x64xbf16>
    %cst_77 = arith.constant dense<0.000000e+00> : vector<64x64xf32>
    %60 = tpu.matmul %58, %59, %cst_77 {dimension_numbers = #tpu.dot_dimension_numbers<[1], [0], [0], [1], [0, 0, 1, 1], [], []>} : vector<64x64xbf16>, vector<64x64xbf16>, vector<64x64xf32> -> vector<64x64xf32>
    %61 = arith.addf %56, %60 : vector<64x64xf32>
    %c0_78 = arith.constant 0 : index
    %c2_79 = arith.constant 2 : index
    %c2_80 = arith.constant 2 : index
    %c0_81 = arith.constant 0 : index
    %62 = vector.load %arg11[%c0_78, %c2_79, %c2_80, %c0_81] : memref<1x10x10x64xbf16, #tpu.memory_space<vmem>>, vector<1x8x8x64xbf16>
    %63 = vector.shape_cast %62 : vector<1x8x8x64xbf16> to vector<64x64xbf16>
    %c512 = arith.constant 512 : index
    %c0_82 = arith.constant 0 : index
    %64 = vector.load %arg4[%c512, %c0_82] : memref<576x64xbf16, #tpu.memory_space<vmem>>, vector<64x64xbf16>
    %cst_83 = arith.constant dense<0.000000e+00> : vector<64x64xf32>
    %65 = tpu.matmul %63, %64, %cst_83 {dimension_numbers = #tpu.dot_dimension_numbers<[1], [0], [0], [1], [0, 0, 1, 1], [], []>} : vector<64x64xbf16>, vector<64x64xbf16>, vector<64x64xf32> -> vector<64x64xf32>
    %66 = arith.addf %61, %65 : vector<64x64xf32>
    %c0_84 = arith.constant 0 : index
    %c0_85 = arith.constant 0 : index
    %67 = vector.load %arg5[%c0_84, %c0_85] : memref<1x64xf32, #tpu.memory_space<vmem>>, vector<1x64xf32>
    %68 = vector.broadcast %67 : vector<1x64xf32> to vector<64x64xf32>
    %69 = arith.addf %66, %68 : vector<64x64xf32>
    %cst_86 = arith.constant 0.000000e+00 : f32
    %70 = vector.broadcast %cst_86 : f32 to vector<64x64xf32>
    %71 = arith.maximumf %69, %70 : vector<64x64xf32>
    %72 = arith.truncf %71 : vector<64x64xf32> to vector<64x64xbf16>
    %73 = vector.shape_cast %72 : vector<64x64xbf16> to vector<1x8x8x64xbf16>
    %74 = vector.shape_cast %73 : vector<1x8x8x64xbf16> to vector<8x4x2x64xbf16>
    %cst_87 = arith.constant dense<0xFF80> : vector<8x4x64xbf16>
    %75 = vector.multi_reduction <maximumf>, %74, %cst_87 [2] : vector<8x4x2x64xbf16> to vector<8x4x64xbf16>
    %76 = vector.shape_cast %75 : vector<8x4x64xbf16> to vector<4x2x4x64xbf16>
    %cst_88 = arith.constant dense<0xFF80> : vector<4x4x64xbf16>
    %77 = vector.multi_reduction <maximumf>, %76, %cst_88 [1] : vector<4x2x4x64xbf16> to vector<4x4x64xbf16>
    %78 = vector.shape_cast %77 : vector<4x4x64xbf16> to vector<1x4x4x64xbf16>
    %cst_89 = arith.constant 0.000000e+00 : bf16
    %79 = vector.broadcast %cst_89 : bf16 to vector<1x1x6x64xbf16>
    %c0_90 = arith.constant 0 : index
    %c0_91 = arith.constant 0 : index
    %c0_92 = arith.constant 0 : index
    %c0_93 = arith.constant 0 : index
    %80 = vector.load %arg12[%c0_90, %c0_91, %c0_92, %c0_93] : memref<1x6x6x64xbf16, #tpu.memory_space<vmem>>, vector<1x1x6x64xbf16>
    tpu.vector_store %arg12[%c0_90, %c0_91, %c0_92, %c0_93], %79 {strides = array<i32>} : memref<1x6x6x64xbf16, #tpu.memory_space<vmem>>, vector<1x1x6x64xbf16>,
    %c0_94 = arith.constant 0 : index
    %c5 = arith.constant 5 : index
    %c0_95 = arith.constant 0 : index
    %c0_96 = arith.constant 0 : index
    %81 = vector.load %arg12[%c0_94, %c5, %c0_95, %c0_96] : memref<1x6x6x64xbf16, #tpu.memory_space<vmem>>, vector<1x1x6x64xbf16>
    tpu.vector_store %arg12[%c0_94, %c5, %c0_95, %c0_96], %79 {strides = array<i32>} : memref<1x6x6x64xbf16, #tpu.memory_space<vmem>>, vector<1x1x6x64xbf16>,
    %cst_97 = arith.constant 0.000000e+00 : bf16
    %82 = vector.broadcast %cst_97 : bf16 to vector<1x6x1x64xbf16>
    %c0_98 = arith.constant 0 : index
    %c0_99 = arith.constant 0 : index
    %c0_100 = arith.constant 0 : index
    %c0_101 = arith.constant 0 : index
    %83 = vector.load %arg12[%c0_98, %c0_99, %c0_100, %c0_101] : memref<1x6x6x64xbf16, #tpu.memory_space<vmem>>, vector<1x6x1x64xbf16>
    tpu.vector_store %arg12[%c0_98, %c0_99, %c0_100, %c0_101], %82 {strides = array<i32>} : memref<1x6x6x64xbf16, #tpu.memory_space<vmem>>, vector<1x6x1x64xbf16>,
    %c0_102 = arith.constant 0 : index
    %c0_103 = arith.constant 0 : index
    %c5_104 = arith.constant 5 : index
    %c0_105 = arith.constant 0 : index
    %84 = vector.load %arg12[%c0_102, %c0_103, %c5_104, %c0_105] : memref<1x6x6x64xbf16, #tpu.memory_space<vmem>>, vector<1x6x1x64xbf16>
    tpu.vector_store %arg12[%c0_102, %c0_103, %c5_104, %c0_105], %82 {strides = array<i32>} : memref<1x6x6x64xbf16, #tpu.memory_space<vmem>>, vector<1x6x1x64xbf16>,
    %c0_106 = arith.constant 0 : index
    %c1_107 = arith.constant 1 : index
    %c1_108 = arith.constant 1 : index
    %c0_109 = arith.constant 0 : index
    %85 = vector.load %arg12[%c0_106, %c1_107, %c1_108, %c0_109] : memref<1x6x6x64xbf16, #tpu.memory_space<vmem>>, vector<1x4x4x64xbf16>
    tpu.vector_store %arg12[%c0_106, %c1_107, %c1_108, %c0_109], %78 {strides = array<i32>} : memref<1x6x6x64xbf16, #tpu.memory_space<vmem>>, vector<1x4x4x64xbf16>,
    %c0_110 = arith.constant 0 : index
    %c0_111 = arith.constant 0 : index
    %c0_112 = arith.constant 0 : index
    %c0_113 = arith.constant 0 : index
    %86 = vector.load %arg12[%c0_110, %c0_111, %c0_112, %c0_113] : memref<1x6x6x64xbf16, #tpu.memory_space<vmem>>, vector<1x4x4x64xbf16>
    %87 = vector.shape_cast %86 : vector<1x4x4x64xbf16> to vector<16x64xbf16>
    %c0_114 = arith.constant 0 : index
    %c0_115 = arith.constant 0 : index
    %88 = vector.load %arg6[%c0_114, %c0_115] : memref<576x64xbf16, #tpu.memory_space<vmem>>, vector<64x64xbf16>
    %cst_116 = arith.constant dense<0.000000e+00> : vector<16x64xf32>
    %89 = tpu.matmul %87, %88, %cst_116 {dimension_numbers = #tpu.dot_dimension_numbers<[1], [0], [0], [1], [0, 0, 1, 1], [], []>} : vector<16x64xbf16>, vector<64x64xbf16>, vector<16x64xf32> -> vector<16x64xf32>
    %c0_117 = arith.constant 0 : index
    %c0_118 = arith.constant 0 : index
    %c1_119 = arith.constant 1 : index
    %c0_120 = arith.constant 0 : index
    %90 = vector.load %arg12[%c0_117, %c0_118, %c1_119, %c0_120] : memref<1x6x6x64xbf16, #tpu.memory_space<vmem>>, vector<1x4x4x64xbf16>
    %91 = vector.shape_cast %90 : vector<1x4x4x64xbf16> to vector<16x64xbf16>
    %c64_121 = arith.constant 64 : index
    %c0_122 = arith.constant 0 : index
    %92 = vector.load %arg6[%c64_121, %c0_122] : memref<576x64xbf16, #tpu.memory_space<vmem>>, vector<64x64xbf16>
    %cst_123 = arith.constant dense<0.000000e+00> : vector<16x64xf32>
    %93 = tpu.matmul %91, %92, %cst_123 {dimension_numbers = #tpu.dot_dimension_numbers<[1], [0], [0], [1], [0, 0, 1, 1], [], []>} : vector<16x64xbf16>, vector<64x64xbf16>, vector<16x64xf32> -> vector<16x64xf32>
    %94 = arith.addf %89, %93 : vector<16x64xf32>
    %c0_124 = arith.constant 0 : index
    %c0_125 = arith.constant 0 : index
    %c2_126 = arith.constant 2 : index
    %c0_127 = arith.constant 0 : index
    %95 = vector.load %arg12[%c0_124, %c0_125, %c2_126, %c0_127] : memref<1x6x6x64xbf16, #tpu.memory_space<vmem>>, vector<1x4x4x64xbf16>
    %96 = vector.shape_cast %95 : vector<1x4x4x64xbf16> to vector<16x64xbf16>
    %c128_128 = arith.constant 128 : index
    %c0_129 = arith.constant 0 : index
    %97 = vector.load %arg6[%c128_128, %c0_129] : memref<576x64xbf16, #tpu.memory_space<vmem>>, vector<64x64xbf16>
    %cst_130 = arith.constant dense<0.000000e+00> : vector<16x64xf32>
    %98 = tpu.matmul %96, %97, %cst_130 {dimension_numbers = #tpu.dot_dimension_numbers<[1], [0], [0], [1], [0, 0, 1, 1], [], []>} : vector<16x64xbf16>, vector<64x64xbf16>, vector<16x64xf32> -> vector<16x64xf32>
    %99 = arith.addf %94, %98 : vector<16x64xf32>
    %c0_131 = arith.constant 0 : index
    %c1_132 = arith.constant 1 : index
    %c0_133 = arith.constant 0 : index
    %c0_134 = arith.constant 0 : index
    %100 = vector.load %arg12[%c0_131, %c1_132, %c0_133, %c0_134] : memref<1x6x6x64xbf16, #tpu.memory_space<vmem>>, vector<1x4x4x64xbf16>
    %101 = vector.shape_cast %100 : vector<1x4x4x64xbf16> to vector<16x64xbf16>
    %c192_135 = arith.constant 192 : index
    %c0_136 = arith.constant 0 : index
    %102 = vector.load %arg6[%c192_135, %c0_136] : memref<576x64xbf16, #tpu.memory_space<vmem>>, vector<64x64xbf16>
    %cst_137 = arith.constant dense<0.000000e+00> : vector<16x64xf32>
    %103 = tpu.matmul %101, %102, %cst_137 {dimension_numbers = #tpu.dot_dimension_numbers<[1], [0], [0], [1], [0, 0, 1, 1], [], []>} : vector<16x64xbf16>, vector<64x64xbf16>, vector<16x64xf32> -> vector<16x64xf32>
    %104 = arith.addf %99, %103 : vector<16x64xf32>
    %c0_138 = arith.constant 0 : index
    %c1_139 = arith.constant 1 : index
    %c1_140 = arith.constant 1 : index
    %c0_141 = arith.constant 0 : index
    %105 = vector.load %arg12[%c0_138, %c1_139, %c1_140, %c0_141] : memref<1x6x6x64xbf16, #tpu.memory_space<vmem>>, vector<1x4x4x64xbf16>
    %106 = vector.shape_cast %105 : vector<1x4x4x64xbf16> to vector<16x64xbf16>
    %c256_142 = arith.constant 256 : index
    %c0_143 = arith.constant 0 : index
    %107 = vector.load %arg6[%c256_142, %c0_143] : memref<576x64xbf16, #tpu.memory_space<vmem>>, vector<64x64xbf16>
    %cst_144 = arith.constant dense<0.000000e+00> : vector<16x64xf32>
    %108 = tpu.matmul %106, %107, %cst_144 {dimension_numbers = #tpu.dot_dimension_numbers<[1], [0], [0], [1], [0, 0, 1, 1], [], []>} : vector<16x64xbf16>, vector<64x64xbf16>, vector<16x64xf32> -> vector<16x64xf32>
    %109 = arith.addf %104, %108 : vector<16x64xf32>
    %c0_145 = arith.constant 0 : index
    %c1_146 = arith.constant 1 : index
    %c2_147 = arith.constant 2 : index
    %c0_148 = arith.constant 0 : index
    %110 = vector.load %arg12[%c0_145, %c1_146, %c2_147, %c0_148] : memref<1x6x6x64xbf16, #tpu.memory_space<vmem>>, vector<1x4x4x64xbf16>
    %111 = vector.shape_cast %110 : vector<1x4x4x64xbf16> to vector<16x64xbf16>
    %c320_149 = arith.constant 320 : index
    %c0_150 = arith.constant 0 : index
    %112 = vector.load %arg6[%c320_149, %c0_150] : memref<576x64xbf16, #tpu.memory_space<vmem>>, vector<64x64xbf16>
    %cst_151 = arith.constant dense<0.000000e+00> : vector<16x64xf32>
    %113 = tpu.matmul %111, %112, %cst_151 {dimension_numbers = #tpu.dot_dimension_numbers<[1], [0], [0], [1], [0, 0, 1, 1], [], []>} : vector<16x64xbf16>, vector<64x64xbf16>, vector<16x64xf32> -> vector<16x64xf32>
    %114 = arith.addf %109, %113 : vector<16x64xf32>
    %c0_152 = arith.constant 0 : index
    %c2_153 = arith.constant 2 : index
    %c0_154 = arith.constant 0 : index
    %c0_155 = arith.constant 0 : index
    %115 = vector.load %arg12[%c0_152, %c2_153, %c0_154, %c0_155] : memref<1x6x6x64xbf16, #tpu.memory_space<vmem>>, vector<1x4x4x64xbf16>
    %116 = vector.shape_cast %115 : vector<1x4x4x64xbf16> to vector<16x64xbf16>
    %c384_156 = arith.constant 384 : index
    %c0_157 = arith.constant 0 : index
    %117 = vector.load %arg6[%c384_156, %c0_157] : memref<576x64xbf16, #tpu.memory_space<vmem>>, vector<64x64xbf16>
    %cst_158 = arith.constant dense<0.000000e+00> : vector<16x64xf32>
    %118 = tpu.matmul %116, %117, %cst_158 {dimension_numbers = #tpu.dot_dimension_numbers<[1], [0], [0], [1], [0, 0, 1, 1], [], []>} : vector<16x64xbf16>, vector<64x64xbf16>, vector<16x64xf32> -> vector<16x64xf32>
    %119 = arith.addf %114, %118 : vector<16x64xf32>
    %c0_159 = arith.constant 0 : index
    %c2_160 = arith.constant 2 : index
    %c1_161 = arith.constant 1 : index
    %c0_162 = arith.constant 0 : index
    %120 = vector.load %arg12[%c0_159, %c2_160, %c1_161, %c0_162] : memref<1x6x6x64xbf16, #tpu.memory_space<vmem>>, vector<1x4x4x64xbf16>
    %121 = vector.shape_cast %120 : vector<1x4x4x64xbf16> to vector<16x64xbf16>
    %c448_163 = arith.constant 448 : index
    %c0_164 = arith.constant 0 : index
    %122 = vector.load %arg6[%c448_163, %c0_164] : memref<576x64xbf16, #tpu.memory_space<vmem>>, vector<64x64xbf16>
    %cst_165 = arith.constant dense<0.000000e+00> : vector<16x64xf32>
    %123 = tpu.matmul %121, %122, %cst_165 {dimension_numbers = #tpu.dot_dimension_numbers<[1], [0], [0], [1], [0, 0, 1, 1], [], []>} : vector<16x64xbf16>, vector<64x64xbf16>, vector<16x64xf32> -> vector<16x64xf32>
    %124 = arith.addf %119, %123 : vector<16x64xf32>
    %c0_166 = arith.constant 0 : index
    %c2_167 = arith.constant 2 : index
    %c2_168 = arith.constant 2 : index
    %c0_169 = arith.constant 0 : index
    %125 = vector.load %arg12[%c0_166, %c2_167, %c2_168, %c0_169] : memref<1x6x6x64xbf16, #tpu.memory_space<vmem>>, vector<1x4x4x64xbf16>
    %126 = vector.shape_cast %125 : vector<1x4x4x64xbf16> to vector<16x64xbf16>
    %c512_170 = arith.constant 512 : index
    %c0_171 = arith.constant 0 : index
    %127 = vector.load %arg6[%c512_170, %c0_171] : memref<576x64xbf16, #tpu.memory_space<vmem>>, vector<64x64xbf16>
    %cst_172 = arith.constant dense<0.000000e+00> : vector<16x64xf32>
    %128 = tpu.matmul %126, %127, %cst_172 {dimension_numbers = #tpu.dot_dimension_numbers<[1], [0], [0], [1], [0, 0, 1, 1], [], []>} : vector<16x64xbf16>, vector<64x64xbf16>, vector<16x64xf32> -> vector<16x64xf32>
    %129 = arith.addf %124, %128 : vector<16x64xf32>
    %c0_173 = arith.constant 0 : index
    %c0_174 = arith.constant 0 : index
    %130 = vector.load %arg7[%c0_173, %c0_174] : memref<1x64xf32, #tpu.memory_space<vmem>>, vector<1x64xf32>
    %131 = vector.broadcast %130 : vector<1x64xf32> to vector<16x64xf32>
    %132 = arith.addf %129, %131 : vector<16x64xf32>
    %cst_175 = arith.constant 0.000000e+00 : f32
    %133 = vector.broadcast %cst_175 : f32 to vector<16x64xf32>
    %134 = arith.maximumf %132, %133 : vector<16x64xf32>
    %135 = arith.truncf %134 : vector<16x64xf32> to vector<16x64xbf16>
    %136 = vector.shape_cast %135 : vector<16x64xbf16> to vector<1x4x4x64xbf16>
    %137 = vector.shape_cast %136 : vector<1x4x4x64xbf16> to vector<4x2x2x64xbf16>
    %cst_176 = arith.constant dense<0xFF80> : vector<4x2x64xbf16>
    %138 = vector.multi_reduction <maximumf>, %137, %cst_176 [2] : vector<4x2x2x64xbf16> to vector<4x2x64xbf16>
    %139 = vector.shape_cast %138 : vector<4x2x64xbf16> to vector<2x2x2x64xbf16>
    %cst_177 = arith.constant dense<0xFF80> : vector<2x2x64xbf16>
    %140 = vector.multi_reduction <maximumf>, %139, %cst_177 [1] : vector<2x2x2x64xbf16> to vector<2x2x64xbf16>
    %141 = vector.shape_cast %140 : vector<2x2x64xbf16> to vector<1x2x2x64xbf16>
    %cst_178 = arith.constant 0.000000e+00 : bf16
    %142 = vector.broadcast %cst_178 : bf16 to vector<1x1x4x64xbf16>
    %c0_179 = arith.constant 0 : index
    %c0_180 = arith.constant 0 : index
    %c0_181 = arith.constant 0 : index
    %c0_182 = arith.constant 0 : index
    %143 = vector.load %arg13[%c0_179, %c0_180, %c0_181, %c0_182] : memref<1x4x4x64xbf16, #tpu.memory_space<vmem>>, vector<1x1x4x64xbf16>
    tpu.vector_store %arg13[%c0_179, %c0_180, %c0_181, %c0_182], %142 {strides = array<i32>} : memref<1x4x4x64xbf16, #tpu.memory_space<vmem>>, vector<1x1x4x64xbf16>,
    %c0_183 = arith.constant 0 : index
    %c3 = arith.constant 3 : index
    %c0_184 = arith.constant 0 : index
    %c0_185 = arith.constant 0 : index
    %144 = vector.load %arg13[%c0_183, %c3, %c0_184, %c0_185] : memref<1x4x4x64xbf16, #tpu.memory_space<vmem>>, vector<1x1x4x64xbf16>
    tpu.vector_store %arg13[%c0_183, %c3, %c0_184, %c0_185], %142 {strides = array<i32>} : memref<1x4x4x64xbf16, #tpu.memory_space<vmem>>, vector<1x1x4x64xbf16>,
    %cst_186 = arith.constant 0.000000e+00 : bf16
    %145 = vector.broadcast %cst_186 : bf16 to vector<1x4x1x64xbf16>
    %c0_187 = arith.constant 0 : index
    %c0_188 = arith.constant 0 : index
    %c0_189 = arith.constant 0 : index
    %c0_190 = arith.constant 0 : index
    %146 = vector.load %arg13[%c0_187, %c0_188, %c0_189, %c0_190] : memref<1x4x4x64xbf16, #tpu.memory_space<vmem>>, vector<1x4x1x64xbf16>
    tpu.vector_store %arg13[%c0_187, %c0_188, %c0_189, %c0_190], %145 {strides = array<i32>} : memref<1x4x4x64xbf16, #tpu.memory_space<vmem>>, vector<1x4x1x64xbf16>,
    %c0_191 = arith.constant 0 : index
    %c0_192 = arith.constant 0 : index
    %c3_193 = arith.constant 3 : index
    %c0_194 = arith.constant 0 : index
    %147 = vector.load %arg13[%c0_191, %c0_192, %c3_193, %c0_194] : memref<1x4x4x64xbf16, #tpu.memory_space<vmem>>, vector<1x4x1x64xbf16>
    tpu.vector_store %arg13[%c0_191, %c0_192, %c3_193, %c0_194], %145 {strides = array<i32>} : memref<1x4x4x64xbf16, #tpu.memory_space<vmem>>, vector<1x4x1x64xbf16>,
    %c0_195 = arith.constant 0 : index
    %c1_196 = arith.constant 1 : index
    %c1_197 = arith.constant 1 : index
    %c0_198 = arith.constant 0 : index
    %148 = vector.load %arg13[%c0_195, %c1_196, %c1_197, %c0_198] : memref<1x4x4x64xbf16, #tpu.memory_space<vmem>>, vector<1x2x2x64xbf16>
    tpu.vector_store %arg13[%c0_195, %c1_196, %c1_197, %c0_198], %141 {strides = array<i32>} : memref<1x4x4x64xbf16, #tpu.memory_space<vmem>>, vector<1x2x2x64xbf16>,
    %c0_199 = arith.constant 0 : index
    %c0_200 = arith.constant 0 : index
    %c0_201 = arith.constant 0 : index
    %c0_202 = arith.constant 0 : index
    %149 = vector.load %arg13[%c0_199, %c0_200, %c0_201, %c0_202] : memref<1x4x4x64xbf16, #tpu.memory_space<vmem>>, vector<1x2x2x64xbf16>
    %150 = vector.shape_cast %149 : vector<1x2x2x64xbf16> to vector<4x64xbf16>
    %c0_203 = arith.constant 0 : index
    %c0_204 = arith.constant 0 : index
    %151 = vector.load %arg8[%c0_203, %c0_204] : memref<576x64xbf16, #tpu.memory_space<vmem>>, vector<64x64xbf16>
    %cst_205 = arith.constant dense<0.000000e+00> : vector<4x64xf32>
    %152 = tpu.matmul %150, %151, %cst_205 {dimension_numbers = #tpu.dot_dimension_numbers<[1], [0], [0], [1], [0, 0, 1, 1], [], []>} : vector<4x64xbf16>, vector<64x64xbf16>, vector<4x64xf32> -> vector<4x64xf32>
    %c0_206 = arith.constant 0 : index
    %c0_207 = arith.constant 0 : index
    %c1_208 = arith.constant 1 : index
    %c0_209 = arith.constant 0 : index
    %153 = vector.load %arg13[%c0_206, %c0_207, %c1_208, %c0_209] : memref<1x4x4x64xbf16, #tpu.memory_space<vmem>>, vector<1x2x2x64xbf16>
    %154 = vector.shape_cast %153 : vector<1x2x2x64xbf16> to vector<4x64xbf16>
    %c64_210 = arith.constant 64 : index
    %c0_211 = arith.constant 0 : index
    %155 = vector.load %arg8[%c64_210, %c0_211] : memref<576x64xbf16, #tpu.memory_space<vmem>>, vector<64x64xbf16>
    %cst_212 = arith.constant dense<0.000000e+00> : vector<4x64xf32>
    %156 = tpu.matmul %154, %155, %cst_212 {dimension_numbers = #tpu.dot_dimension_numbers<[1], [0], [0], [1], [0, 0, 1, 1], [], []>} : vector<4x64xbf16>, vector<64x64xbf16>, vector<4x64xf32> -> vector<4x64xf32>
    %157 = arith.addf %152, %156 : vector<4x64xf32>
    %c0_213 = arith.constant 0 : index
    %c0_214 = arith.constant 0 : index
    %c2_215 = arith.constant 2 : index
    %c0_216 = arith.constant 0 : index
    %158 = vector.load %arg13[%c0_213, %c0_214, %c2_215, %c0_216] : memref<1x4x4x64xbf16, #tpu.memory_space<vmem>>, vector<1x2x2x64xbf16>
    %159 = vector.shape_cast %158 : vector<1x2x2x64xbf16> to vector<4x64xbf16>
    %c128_217 = arith.constant 128 : index
    %c0_218 = arith.constant 0 : index
    %160 = vector.load %arg8[%c128_217, %c0_218] : memref<576x64xbf16, #tpu.memory_space<vmem>>, vector<64x64xbf16>
    %cst_219 = arith.constant dense<0.000000e+00> : vector<4x64xf32>
    %161 = tpu.matmul %159, %160, %cst_219 {dimension_numbers = #tpu.dot_dimension_numbers<[1], [0], [0], [1], [0, 0, 1, 1], [], []>} : vector<4x64xbf16>, vector<64x64xbf16>, vector<4x64xf32> -> vector<4x64xf32>
    %162 = arith.addf %157, %161 : vector<4x64xf32>
    %c0_220 = arith.constant 0 : index
    %c1_221 = arith.constant 1 : index
    %c0_222 = arith.constant 0 : index
    %c0_223 = arith.constant 0 : index
    %163 = vector.load %arg13[%c0_220, %c1_221, %c0_222, %c0_223] : memref<1x4x4x64xbf16, #tpu.memory_space<vmem>>, vector<1x2x2x64xbf16>
    %164 = vector.shape_cast %163 : vector<1x2x2x64xbf16> to vector<4x64xbf16>
    %c192_224 = arith.constant 192 : index
    %c0_225 = arith.constant 0 : index
    %165 = vector.load %arg8[%c192_224, %c0_225] : memref<576x64xbf16, #tpu.memory_space<vmem>>, vector<64x64xbf16>
    %cst_226 = arith.constant dense<0.000000e+00> : vector<4x64xf32>
    %166 = tpu.matmul %164, %165, %cst_226 {dimension_numbers = #tpu.dot_dimension_numbers<[1], [0], [0], [1], [0, 0, 1, 1], [], []>} : vector<4x64xbf16>, vector<64x64xbf16>, vector<4x64xf32> -> vector<4x64xf32>
    %167 = arith.addf %162, %166 : vector<4x64xf32>
    %c0_227 = arith.constant 0 : index
    %c1_228 = arith.constant 1 : index
    %c1_229 = arith.constant 1 : index
    %c0_230 = arith.constant 0 : index
    %168 = vector.load %arg13[%c0_227, %c1_228, %c1_229, %c0_230] : memref<1x4x4x64xbf16, #tpu.memory_space<vmem>>, vector<1x2x2x64xbf16>
    %169 = vector.shape_cast %168 : vector<1x2x2x64xbf16> to vector<4x64xbf16>
    %c256_231 = arith.constant 256 : index
    %c0_232 = arith.constant 0 : index
    %170 = vector.load %arg8[%c256_231, %c0_232] : memref<576x64xbf16, #tpu.memory_space<vmem>>, vector<64x64xbf16>
    %cst_233 = arith.constant dense<0.000000e+00> : vector<4x64xf32>
    %171 = tpu.matmul %169, %170, %cst_233 {dimension_numbers = #tpu.dot_dimension_numbers<[1], [0], [0], [1], [0, 0, 1, 1], [], []>} : vector<4x64xbf16>, vector<64x64xbf16>, vector<4x64xf32> -> vector<4x64xf32>
    %172 = arith.addf %167, %171 : vector<4x64xf32>
    %c0_234 = arith.constant 0 : index
    %c1_235 = arith.constant 1 : index
    %c2_236 = arith.constant 2 : index
    %c0_237 = arith.constant 0 : index
    %173 = vector.load %arg13[%c0_234, %c1_235, %c2_236, %c0_237] : memref<1x4x4x64xbf16, #tpu.memory_space<vmem>>, vector<1x2x2x64xbf16>
    %174 = vector.shape_cast %173 : vector<1x2x2x64xbf16> to vector<4x64xbf16>
    %c320_238 = arith.constant 320 : index
    %c0_239 = arith.constant 0 : index
    %175 = vector.load %arg8[%c320_238, %c0_239] : memref<576x64xbf16, #tpu.memory_space<vmem>>, vector<64x64xbf16>
    %cst_240 = arith.constant dense<0.000000e+00> : vector<4x64xf32>
    %176 = tpu.matmul %174, %175, %cst_240 {dimension_numbers = #tpu.dot_dimension_numbers<[1], [0], [0], [1], [0, 0, 1, 1], [], []>} : vector<4x64xbf16>, vector<64x64xbf16>, vector<4x64xf32> -> vector<4x64xf32>
    %177 = arith.addf %172, %176 : vector<4x64xf32>
    %c0_241 = arith.constant 0 : index
    %c2_242 = arith.constant 2 : index
    %c0_243 = arith.constant 0 : index
    %c0_244 = arith.constant 0 : index
    %178 = vector.load %arg13[%c0_241, %c2_242, %c0_243, %c0_244] : memref<1x4x4x64xbf16, #tpu.memory_space<vmem>>, vector<1x2x2x64xbf16>
    %179 = vector.shape_cast %178 : vector<1x2x2x64xbf16> to vector<4x64xbf16>
    %c384_245 = arith.constant 384 : index
    %c0_246 = arith.constant 0 : index
    %180 = vector.load %arg8[%c384_245, %c0_246] : memref<576x64xbf16, #tpu.memory_space<vmem>>, vector<64x64xbf16>
    %cst_247 = arith.constant dense<0.000000e+00> : vector<4x64xf32>
    %181 = tpu.matmul %179, %180, %cst_247 {dimension_numbers = #tpu.dot_dimension_numbers<[1], [0], [0], [1], [0, 0, 1, 1], [], []>} : vector<4x64xbf16>, vector<64x64xbf16>, vector<4x64xf32> -> vector<4x64xf32>
    %182 = arith.addf %177, %181 : vector<4x64xf32>
    %c0_248 = arith.constant 0 : index
    %c2_249 = arith.constant 2 : index
    %c1_250 = arith.constant 1 : index
    %c0_251 = arith.constant 0 : index
    %183 = vector.load %arg13[%c0_248, %c2_249, %c1_250, %c0_251] : memref<1x4x4x64xbf16, #tpu.memory_space<vmem>>, vector<1x2x2x64xbf16>
    %184 = vector.shape_cast %183 : vector<1x2x2x64xbf16> to vector<4x64xbf16>
    %c448_252 = arith.constant 448 : index
    %c0_253 = arith.constant 0 : index
    %185 = vector.load %arg8[%c448_252, %c0_253] : memref<576x64xbf16, #tpu.memory_space<vmem>>, vector<64x64xbf16>
    %cst_254 = arith.constant dense<0.000000e+00> : vector<4x64xf32>
    %186 = tpu.matmul %184, %185, %cst_254 {dimension_numbers = #tpu.dot_dimension_numbers<[1], [0], [0], [1], [0, 0, 1, 1], [], []>} : vector<4x64xbf16>, vector<64x64xbf16>, vector<4x64xf32> -> vector<4x64xf32>
    %187 = arith.addf %182, %186 : vector<4x64xf32>
    %c0_255 = arith.constant 0 : index
    %c2_256 = arith.constant 2 : index
    %c2_257 = arith.constant 2 : index
    %c0_258 = arith.constant 0 : index
    %188 = vector.load %arg13[%c0_255, %c2_256, %c2_257, %c0_258] : memref<1x4x4x64xbf16, #tpu.memory_space<vmem>>, vector<1x2x2x64xbf16>
    %189 = vector.shape_cast %188 : vector<1x2x2x64xbf16> to vector<4x64xbf16>
    %c512_259 = arith.constant 512 : index
    %c0_260 = arith.constant 0 : index
    %190 = vector.load %arg8[%c512_259, %c0_260] : memref<576x64xbf16, #tpu.memory_space<vmem>>, vector<64x64xbf16>
    %cst_261 = arith.constant dense<0.000000e+00> : vector<4x64xf32>
    %191 = tpu.matmul %189, %190, %cst_261 {dimension_numbers = #tpu.dot_dimension_numbers<[1], [0], [0], [1], [0, 0, 1, 1], [], []>} : vector<4x64xbf16>, vector<64x64xbf16>, vector<4x64xf32> -> vector<4x64xf32>
    %192 = arith.addf %187, %191 : vector<4x64xf32>
    %c0_262 = arith.constant 0 : index
    %c0_263 = arith.constant 0 : index
    %193 = vector.load %arg9[%c0_262, %c0_263] : memref<1x64xf32, #tpu.memory_space<vmem>>, vector<1x64xf32>
    %194 = vector.broadcast %193 : vector<1x64xf32> to vector<4x64xf32>
    %195 = arith.addf %192, %194 : vector<4x64xf32>
    %cst_264 = arith.constant 0.000000e+00 : f32
    %196 = vector.broadcast %cst_264 : f32 to vector<4x64xf32>
    %197 = arith.maximumf %195, %196 : vector<4x64xf32>
    %198 = arith.truncf %197 : vector<4x64xf32> to vector<4x64xbf16>
    %199 = vector.shape_cast %198 : vector<4x64xbf16> to vector<1x2x2x64xbf16>
    %200 = vector.shape_cast %199 : vector<1x2x2x64xbf16> to vector<2x1x2x64xbf16>
    %cst_265 = arith.constant dense<0xFF80> : vector<2x1x64xbf16>
    %201 = vector.multi_reduction <maximumf>, %200, %cst_265 [2] : vector<2x1x2x64xbf16> to vector<2x1x64xbf16>
    %202 = vector.shape_cast %201 : vector<2x1x64xbf16> to vector<1x2x1x64xbf16>
    %cst_266 = arith.constant dense<0xFF80> : vector<1x1x64xbf16>
    %203 = vector.multi_reduction <maximumf>, %202, %cst_266 [1] : vector<1x2x1x64xbf16> to vector<1x1x64xbf16>
    %204 = vector.shape_cast %203 : vector<1x1x64xbf16> to vector<1x1x1x64xbf16>
    %c0_267 = arith.constant 0 : index
    %c0_268 = arith.constant 0 : index
    %c0_269 = arith.constant 0 : index
    %c0_270 = arith.constant 0 : index
    %205 = vector.load %arg10[%c0_267, %c0_268, %c0_269, %c0_270] : memref<1x1x1x64xbf16, #tpu.memory_space<vmem>>, vector<1x1x1x64xbf16>
    tpu.vector_store %arg10[%c0_267, %c0_268, %c0_269, %c0_270], %204 {strides = array<i32>} : memref<1x1x1x64xbf16, #tpu.memory_space<vmem>>, vector<1x1x1x64xbf16>,
    return
  }
  func.func @transform_0(%arg0: i32) -> (i32, i32, i32, i32) {
    %c0_i32 = arith.constant 0 : i32
    %c0_i32_0 = arith.constant 0 : i32
    %c0_i32_1 = arith.constant 0 : i32
    %c0_i32_2 = arith.constant 0 : i32
    return %arg0, %c0_i32, %c0_i32_0, %c0_i32_1 : i32, i32, i32, i32
  }
  func.func @transform_1(%arg0: i32) -> (i32, i32) {
    %c0_i32 = arith.constant 0 : i32
    %c0_i32_0 = arith.constant 0 : i32
    %c0_i32_1 = arith.constant 0 : i32
    return %c0_i32, %c0_i32_0 : i32, i32
  }
  func.func @transform_2(%arg0: i32) -> (i32, i32) {
    %c0_i32 = arith.constant 0 : i32
    %c0_i32_0 = arith.constant 0 : i32
    %c0_i32_1 = arith.constant 0 : i32
    return %c0_i32, %c0_i32_0 : i32, i32
  }
  func.func @transform_3(%arg0: i32) -> (i32, i32) {
    %c0_i32 = arith.constant 0 : i32
    %c0_i32_0 = arith.constant 0 : i32
    %c0_i32_1 = arith.constant 0 : i32
    return %c0_i32, %c0_i32_0 : i32, i32
  }
  func.func @transform_4(%arg0: i32) -> (i32, i32) {
    %c0_i32 = arith.constant 0 : i32
    %c0_i32_0 = arith.constant 0 : i32
    %c0_i32_1 = arith.constant 0 : i32
    return %c0_i32, %c0_i32_0 : i32, i32
  }
  func.func @transform_5(%arg0: i32) -> (i32, i32) {
    %c0_i32 = arith.constant 0 : i32
    %c0_i32_0 = arith.constant 0 : i32
    %c0_i32_1 = arith.constant 0 : i32
    return %c0_i32, %c0_i32_0 : i32, i32
  }
  func.func @transform_6(%arg0: i32) -> (i32, i32) {
    %c0_i32 = arith.constant 0 : i32
    %c0_i32_0 = arith.constant 0 : i32
    %c0_i32_1 = arith.constant 0 : i32
    return %c0_i32, %c0_i32_0 : i32, i32
  }
  func.func @transform_7(%arg0: i32) -> (i32, i32) {
    %c0_i32 = arith.constant 0 : i32
    %c0_i32_0 = arith.constant 0 : i32
    %c0_i32_1 = arith.constant 0 : i32
    return %c0_i32, %c0_i32_0 : i32, i32
  }
  func.func @transform_8(%arg0: i32) -> (i32, i32) {
    %c0_i32 = arith.constant 0 : i32
    %c0_i32_0 = arith.constant 0 : i32
    %c0_i32_1 = arith.constant 0 : i32
    return %c0_i32, %c0_i32_0 : i32, i32
  }
  func.func @transform_9(%arg0: i32) -> (i32, i32, i32, i32) {
    %c0_i32 = arith.constant 0 : i32
    %c0_i32_0 = arith.constant 0 : i32
    %c0_i32_1 = arith.constant 0 : i32
    %c0_i32_2 = arith.constant 0 : i32
    return %arg0, %c0_i32, %c0_i32_0, %c0_i32_1 : i32, i32, i32, i32
  }
}

</mosaic_0001>

<llo_original>
// kernel: _conv4_forward.1
$region0: #{_conv4_forward.1}
  #allocation0 [shape = 'u32[]', space=smem, size = 0x4, offset = 0x4, fixed_abs, tag = 'smem constant byte address 0x4 - core index']
  #allocation1 [shape = 'u32[144,128]{1,0:T(1,128)}', space=vmem, size = 0x12000, scoped, tag = 'internal scratch']
  #allocation2 [shape = 'bf16[1,10,10,64]{3,2,1,0:T(8,128)(2,1)}', space=vmem, size = 0xa000, scoped, tag = 'scratch operand']
  #allocation3 [shape = 'bf16[1,6,6,64]{3,2,1,0:T(8,128)(2,1)}', space=vmem, size = 0x3000, scoped, tag = 'scratch operand']
  #allocation4 [shape = 'bf16[1,4,4,64]{3,2,1,0:T(4,128)(2,1)}', space=vmem, size = 0x1000, scoped, tag = 'scratch operand']
  %s0 = inlined_call_operand.vmem [shape: bf16[2,16,16,32], index: 0, kind: input, shape index: {}]
  %s1 = inlined_call_operand.vmem [shape: bf16[32,64], index: 1, kind: input, shape index: {}]
  %s2 = inlined_call_operand.vmem [shape: f32[1,64], index: 2, kind: input, shape index: {}]
  %s3 = inlined_call_operand.vmem [shape: bf16[576,64], index: 3, kind: input, shape index: {}]
  %s4 = inlined_call_operand.vmem [shape: f32[1,64], index: 4, kind: input, shape index: {}]
  %s5 = inlined_call_operand.vmem [shape: bf16[576,64], index: 5, kind: input, shape index: {}]
  %s6 = inlined_call_operand.vmem [shape: f32[1,64], index: 6, kind: input, shape index: {}]
  %s7 = inlined_call_operand.vmem [shape: bf16[576,64], index: 7, kind: input, shape index: {}]
  %s8 = inlined_call_operand.vmem [shape: f32[1,64], index: 8, kind: input, shape index: {}]
  %s9 = inlined_call_operand.vmem [shape: bf16[2,1,1,64], index: 9, kind: output, shape index: {}]
  %s10 = sld [smem:[#allocation0]]
  $region69: #{_conv4_forward.1} parent=0
    _
  %s12 = ssub.s32 1, %s10
  %s13 = scalar_select 0, %s12, %s10
  loop: start=0, step=1, limit=4
  $region2: #{_conv4_forward.1} parent=0 // loop_pre_header
    _
  $region3: #{_conv4_forward.1} parent=0 // loop_header
    %s15 = sphi 0, %s19
    %p16 = scmp.ge.s32.totalorder %s15, 4
    %s25 = sphi 0, %s27
    %s28 = sphi 0, %s25
    %s29 = sphi 0, %s28
    %s45 = sphi 0, %s29
    %s49 = sphi 0, %s49
    %s51 = sphi 0, %s49
    %s52 = sphi 0, %s51
    %s66 = sphi 0, %s52
    %s70 = sphi 0, %s70
    %s72 = sphi 0, %s70
    %s73 = sphi 0, %s72
    %s87 = sphi 0, %s73
    %s91 = sphi 0, %s91
    %s93 = sphi 0, %s91
    %s94 = sphi 0, %s93
    %s108 = sphi 0, %s94
    %s112 = sphi 0, %s112
    %s114 = sphi 0, %s112
    %s115 = sphi 0, %s114
    %s129 = sphi 0, %s115
    %s133 = sphi 0, %s133
    %s135 = sphi 0, %s133
    %s136 = sphi 0, %s135
    %s150 = sphi 0, %s136
    %s154 = sphi 0, %s154
    %s156 = sphi 0, %s154
    %s157 = sphi 0, %s156
    %s171 = sphi 0, %s157
    %s175 = sphi 0, %s175
    %s177 = sphi 0, %s175
    %s178 = sphi 0, %s177
    %s192 = sphi 0, %s178
    %s196 = sphi 0, %s196
    %s198 = sphi 0, %s196
    %s199 = sphi 0, %s198
    %s213 = sphi 0, %s199
    %s219 = sphi 0, %s221
    %s222 = sphi 0, %s219
    %s223 = sphi 0, %s222
    %s239 = sphi 0, %s223
  $region4: #{_conv4_forward.1} parent=0 // loop_header_branch
    %18 = sbr.rel (%p16) target = $region8
  $region5: #{_conv4_forward.1} parent=0 // loop_body
    %s20 = ssub.s32 %s15, 1
    %s21 = ssub.s32 %s15, 2
    %s22 = sadd.s32 %s15, 1
    %s23 = ssub.s32 %s15, %s22
    %p24 = scmp.eq.s32.totalorder %s23, 0
    %s26 = sadd.s32 %s25, 1
    %s27 = scalar_select %p24, %s25, %s26
    %p30 = pneg %p24
    %p31 = scmp.eq.s32.totalorder %s15, 1
    %p32 = por %p30, %p31
    %p33 = scmp.ne.s32.totalorder %s25, %s28
    %p34 = scmp.eq.s32.totalorder %s15, 0
    %p35 = por %p33, %p34
    %p36 = scmp.ne.s32.totalorder %s25, %s28
    %p37 = scmp.eq.s32.totalorder %s20, 1
    %p38 = por %p36, %p37
    %p39 = scmp.ne.s32.totalorder %s28, %s29
    %p40 = scmp.eq.s32.totalorder %s20, 0
    %p41 = por %p39, %p40
    %p42 = scmp.ne.s32.totalorder %s28, %s29
    %p43 = scmp.eq.s32.totalorder %s21, 1
    %p44 = por %p42, %p43
    %p46 = scmp.ne.s32.totalorder %s29, %s45
    %p47 = scmp.eq.s32.totalorder %s21, 0
    %p48 = por %p46, %p47
    %s50 = sadd.s32 %s49, 1
    %p53 = scmp.eq.s32.totalorder %s15, 1
    %p54 = scmp.ne.s32.totalorder %s49, %s51
    %p55 = scmp.eq.s32.totalorder %s15, 0
    %p56 = por %p54, %p55
    %p57 = scmp.ne.s32.totalorder %s49, %s51
    %p58 = scmp.eq.s32.totalorder %s20, 1
    %p59 = por %p57, %p58
    %p60 = scmp.ne.s32.totalorder %s51, %s52
    %p61 = scmp.eq.s32.totalorder %s20, 0
    %p62 = por %p60, %p61
    %p63 = scmp.ne.s32.totalorder %s51, %s52
    %p64 = scmp.eq.s32.totalorder %s21, 1
    %p65 = por %p63, %p64
    %p67 = scmp.ne.s32.totalorder %s52, %s66
    %p68 = scmp.eq.s32.totalorder %s21, 0
    %p69 = por %p67, %p68
    %s71 = sadd.s32 %s70, 1
    %p74 = scmp.eq.s32.totalorder %s15, 1
    %p75 = scmp.ne.s32.totalorder %s70, %s72
    %p76 = scmp.eq.s32.totalorder %s15, 0
    %p77 = por %p75, %p76
    %p78 = scmp.ne.s32.totalorder %s70, %s72
    %p79 = scmp.eq.s32.totalorder %s20, 1
    %p80 = por %p78, %p79
    %p81 = scmp.ne.s32.totalorder %s72, %s73
    %p82 = scmp.eq.s32.totalorder %s20, 0
    %p83 = por %p81, %p82
    %p84 = scmp.ne.s32.totalorder %s72, %s73
    %p85 = scmp.eq.s32.totalorder %s21, 1
    %p86 = por %p84, %p85
    %p88 = scmp.ne.s32.totalorder %s73, %s87
    %p89 = scmp.eq.s32.totalorder %s21, 0
    %p90 = por %p88, %p89
    %s92 = sadd.s32 %s91, 1
    %p95 = scmp.eq.s32.totalorder %s15, 1
    %p96 = scmp.ne.s32.totalorder %s91, %s93
    %p97 = scmp.eq.s32.totalorder %s15, 0
    %p98 = por %p96, %p97
    %p99 = scmp.ne.s32.totalorder %s91, %s93
    %p100 = scmp.eq.s32.totalorder %s20, 1
    %p101 = por %p99, %p100
    %p102 = scmp.ne.s32.totalorder %s93, %s94
    %p103 = scmp.eq.s32.totalorder %s20, 0
    %p104 = por %p102, %p103
    %p105 = scmp.ne.s32.totalorder %s93, %s94
    %p106 = scmp.eq.s32.totalorder %s21, 1
    %p107 = por %p105, %p106
    %p109 = scmp.ne.s32.totalorder %s94, %s108
    %p110 = scmp.eq.s32.totalorder %s21, 0
    %p111 = por %p109, %p110
    %s113 = sadd.s32 %s112, 1
    %p116 = scmp.eq.s32.totalorder %s15, 1
    %p117 = scmp.ne.s32.totalorder %s112, %s114
    %p118 = scmp.eq.s32.totalorder %s15, 0
    %p119 = por %p117, %p118
    %p120 = scmp.ne.s32.totalorder %s112, %s114
    %p121 = scmp.eq.s32.totalorder %s20, 1
    %p122 = por %p120, %p121
    %p123 = scmp.ne.s32.totalorder %s114, %s115
    %p124 = scmp.eq.s32.totalorder %s20, 0
    %p125 = por %p123, %p124
    %p126 = scmp.ne.s32.totalorder %s114, %s115
    %p127 = scmp.eq.s32.totalorder %s21, 1
    %p128 = por %p126, %p127
    %p130 = scmp.ne.s32.totalorder %s115, %s129
    %p131 = scmp.eq.s32.totalorder %s21, 0
    %p132 = por %p130, %p131
    %s134 = sadd.s32 %s133, 1
    %p137 = scmp.eq.s32.totalorder %s15, 1
    %p138 = scmp.ne.s32.totalorder %s133, %s135
    %p139 = scmp.eq.s32.totalorder %s15, 0
    %p140 = por %p138, %p139
    %p141 = scmp.ne.s32.totalorder %s133, %s135
    %p142 = scmp.eq.s32.totalorder %s20, 1
    %p143 = por %p141, %p142
    %p144 = scmp.ne.s32.totalorder %s135, %s136
    %p145 = scmp.eq.s32.totalorder %s20, 0
    %p146 = por %p144, %p145
    %p147 = scmp.ne.s32.totalorder %s135, %s136
    %p148 = scmp.eq.s32.totalorder %s21, 1
    %p149 = por %p147, %p148
    %p151 = scmp.ne.s32.totalorder %s136, %s150
    %p152 = scmp.eq.s32.totalorder %s21, 0
    %p153 = por %p151, %p152
    %s155 = sadd.s32 %s154, 1
    %p158 = scmp.eq.s32.totalorder %s15, 1
    %p159 = scmp.ne.s32.totalorder %s154, %s156
    %p160 = scmp.eq.s32.totalorder %s15, 0
    %p161 = por %p159, %p160
    %p162 = scmp.ne.s32.totalorder %s154, %s156
    %p163 = scmp.eq.s32.totalorder %s20, 1
    %p164 = por %p162, %p163
    %p165 = scmp.ne.s32.totalorder %s156, %s157
    %p166 = scmp.eq.s32.totalorder %s20, 0
    %p167 = por %p165, %p166
    %p168 = scmp.ne.s32.totalorder %s156, %s157
    %p169 = scmp.eq.s32.totalorder %s21, 1
    %p170 = por %p168, %p169
    %p172 = scmp.ne.s32.totalorder %s157, %s171
    %p173 = scmp.eq.s32.totalorder %s21, 0
    %p174 = por %p172, %p173
    %s176 = sadd.s32 %s175, 1
    %p179 = scmp.eq.s32.totalorder %s15, 1
    %p180 = scmp.ne.s32.totalorder %s175, %s177
    %p181 = scmp.eq.s32.totalorder %s15, 0
    %p182 = por %p180, %p181
    %p183 = scmp.ne.s32.totalorder %s175, %s177
    %p184 = scmp.eq.s32.totalorder %s20, 1
    %p185 = por %p183, %p184
    %p186 = scmp.ne.s32.totalorder %s177, %s178
    %p187 = scmp.eq.s32.totalorder %s20, 0
    %p188 = por %p186, %p187
    %p189 = scmp.ne.s32.totalorder %s177, %s178
    %p190 = scmp.eq.s32.totalorder %s21, 1
    %p191 = por %p189, %p190
    %p193 = scmp.ne.s32.totalorder %s178, %s192
    %p194 = scmp.eq.s32.totalorder %s21, 0
    %p195 = por %p193, %p194
    %s197 = sadd.s32 %s196, 1
    %p200 = scmp.eq.s32.totalorder %s15, 1
    %p201 = scmp.ne.s32.totalorder %s196, %s198
    %p202 = scmp.eq.s32.totalorder %s15, 0
    %p203 = por %p201, %p202
    %p204 = scmp.ne.s32.totalorder %s196, %s198
    %p205 = scmp.eq.s32.totalorder %s20, 1
    %p206 = por %p204, %p205
    %p207 = scmp.ne.s32.totalorder %s198, %s199
    %p208 = scmp.eq.s32.totalorder %s20, 0
    %p209 = por %p207, %p208
    %p210 = scmp.ne.s32.totalorder %s198, %s199
    %p211 = scmp.eq.s32.totalorder %s21, 1
    %p212 = por %p210, %p211
    %p214 = scmp.ne.s32.totalorder %s199, %s213
    %p215 = scmp.eq.s32.totalorder %s21, 0
    %p216 = por %p214, %p215
    %s217 = ssub.s32 %s15, %s22
    %p218 = scmp.eq.s32.totalorder %s217, 0
    %s220 = sadd.s32 %s219, 1
    %s221 = scalar_select %p218, %s219, %s220
    %p224 = pneg %p218
    %p225 = scmp.eq.s32.totalorder %s15, 1
    %p226 = por %p224, %p225
    %p227 = scmp.ne.s32.totalorder %s219, %s222
    %p228 = scmp.eq.s32.totalorder %s15, 0
    %p229 = por %p227, %p228
    %p230 = scmp.ne.s32.totalorder %s219, %s222
    %p231 = scmp.eq.s32.totalorder %s20, 1
    %p232 = por %p230, %p231
    %p233 = scmp.ne.s32.totalorder %s222, %s223
    %p234 = scmp.eq.s32.totalorder %s20, 0
    %p235 = por %p233, %p234
    %p236 = scmp.ne.s32.totalorder %s222, %s223
    %p237 = scmp.eq.s32.totalorder %s21, 1
    %p238 = por %p236, %p237
    %p240 = scmp.ne.s32.totalorder %s223, %s239
    %p241 = scmp.eq.s32.totalorder %s21, 0
    %p242 = por %p240, %p241
    %p243 = scmp.le.s32.totalorder 1, %s15
    %p244 = scmp.lt.s32.totalorder %s15, 3
    %p245 = pnand %p243, %p244
    %p246 = pneg %p245
    // Predicated region
    $region9: #{_conv4_forward.1} parent=5 // pred_check
      _
    $region10: #{_conv4_forward.1} parent=5 // pred_check_branch
      %248 = sbr.rel (%p245) target = $region12
    $region11: #{_conv4_forward.1} parent=5 // pred_region
      %s249 = ssub.s32 %s15, 1
      // Predicated region
      $region13: #{_conv4_forward.1} parent=11 // pred_check
        %p250 = pneg %p62
      $region14: #{_conv4_forward.1} parent=11 // pred_check_branch
        %252 = sbr.rel (%p250) target = $region16
      $region15: #{_conv4_forward.1} parent=11 // pred_region
        _
      $region16: #{_conv4_forward.1} parent=11 // pred_fallthru
        _
      // Predicated region
      $region17: #{_conv4_forward.1} parent=11 // pred_check
        %p253 = pneg %p83
      $region18: #{_conv4_forward.1} parent=11 // pred_check_branch
        %255 = sbr.rel (%p253) target = $region20
      $region19: #{_conv4_forward.1} parent=11 // pred_region
        _
      $region20: #{_conv4_forward.1} parent=11 // pred_fallthru
        _
      // Predicated region
      $region21: #{_conv4_forward.1} parent=11 // pred_check
        %p256 = pneg %p104
      $region22: #{_conv4_forward.1} parent=11 // pred_check_branch
        %258 = sbr.rel (%p256) target = $region24
      $region23: #{_conv4_forward.1} parent=11 // pred_region
        _
      $region24: #{_conv4_forward.1} parent=11 // pred_fallthru
        _
      // Predicated region
      $region25: #{_conv4_forward.1} parent=11 // pred_check
        %p259 = pneg %p125
      $region26: #{_conv4_forward.1} parent=11 // pred_check_branch
        %261 = sbr.rel (%p259) target = $region28
      $region27: #{_conv4_forward.1} parent=11 // pred_region
        _
      $region28: #{_conv4_forward.1} parent=11 // pred_fallthru
        _
      // Predicated region
      $region29: #{_conv4_forward.1} parent=11 // pred_check
        %p262 = pneg %p146
      $region30: #{_conv4_forward.1} parent=11 // pred_check_branch
        %264 = sbr.rel (%p262) target = $region32
      $region31: #{_conv4_forward.1} parent=11 // pred_region
        _
      $region32: #{_conv4_forward.1} parent=11 // pred_fallthru
        _
      // Predicated region
      $region33: #{_conv4_forward.1} parent=11 // pred_check
        %p265 = pneg %p167
      $region34: #{_conv4_forward.1} parent=11 // pred_check_branch
        %267 = sbr.rel (%p265) target = $region36
      $region35: #{_conv4_forward.1} parent=11 // pred_region
        _
      $region36: #{_conv4_forward.1} parent=11 // pred_fallthru
        _
      // Predicated region
      $region37: #{_conv4_forward.1} parent=11 // pred_check
        %p268 = pneg %p188
      $region38: #{_conv4_forward.1} parent=11 // pred_check_branch
        %270 = sbr.rel (%p268) target = $region40
      $region39: #{_conv4_forward.1} parent=11 // pred_region
        _
      $region40: #{_conv4_forward.1} parent=11 // pred_fallthru
        _
      // Predicated region
      $region41: #{_conv4_forward.1} parent=11 // pred_check
        %p271 = pneg %p209
      $region42: #{_conv4_forward.1} parent=11 // pred_check_branch
        %273 = sbr.rel (%p271) target = $region44
      $region43: #{_conv4_forward.1} parent=11 // pred_region
        _
      $region44: #{_conv4_forward.1} parent=11 // pred_fallthru
        _
    $region12: #{_conv4_forward.1} parent=5 // pred_fallthru
      _
    %p274 = scmp.lt.s32.totalorder %s15, 2
    // Predicated region
    $region45: #{_conv4_forward.1} parent=5 // pred_check
      %p275 = pneg %p274
    $region46: #{_conv4_forward.1} parent=5 // pred_check_branch
      %277 = sbr.rel (%p275) target = $region48
    $region47: #{_conv4_forward.1} parent=5 // pred_region
      // Predicated region
      $region49: #{_conv4_forward.1} parent=47 // pred_check
        %p278 = pneg %p35
      $region50: #{_conv4_forward.1} parent=47 // pred_check_branch
        %280 = sbr.rel (%p278) target = $region52
      $region51: #{_conv4_forward.1} parent=47 // pred_region
        %p281 = scmp.lt.s32.totalorder %s15, 1
        %s282 = scalar_select %p281, %s15, 1
        %s283 = smul.addr %s282, 32
        %s284 = smul.addr %s283, 4
        %s285 = scalar_lea.vmem %s0, %s284
      $region52: #{_conv4_forward.1} parent=47 // pred_fallthru
        _
    $region48: #{_conv4_forward.1} parent=5 // pred_fallthru
      _
    %p286 = scmp.le.s32.totalorder 1, %s15
    %p287 = scmp.lt.s32.totalorder %s15, 3
    %p288 = pnand %p286, %p287
    %p289 = pneg %p288
    // Predicated region
    $region53: #{_conv4_forward.1} parent=5 // pred_check
      _
    $region54: #{_conv4_forward.1} parent=5 // pred_check_branch
      %291 = sbr.rel (%p288) target = $region56
    $region55: #{_conv4_forward.1} parent=5 // pred_region
      %s292 = ssub.s32 %s15, 1
      %p293 = scmp.lt.s32.totalorder %s20, 1
      %s294 = scalar_select %p293, %s20, 1
      %s295 = smul.addr %s294, 32
      %s296 = smul.addr %s295, 4
      %s297 = scalar_lea.vmem %s0, %s296
      %p298 = pneg %p41
      %p299 = pneg %p38
      %p300 = pneg %p62
      %p301 = pneg %p59
      %p302 = pneg %p83
      %p303 = pneg %p80
      %p304 = pneg %p104
      %p305 = pneg %p101
      %p306 = pneg %p125
      %p307 = pneg %p122
      %p308 = pneg %p146
      %p309 = pneg %p143
      %p310 = pneg %p167
      %p311 = pneg %p164
      %p312 = pneg %p188
      %p313 = pneg %p185
      %p314 = pneg %p209
      %p315 = pneg %p206
      %p316 = pneg %p235
      %p317 = pneg %p232
      %p318 = scmp.lt.s32.totalorder %s20, 1
      %s319 = scalar_select %p318, %s20, 1
      %s320 = scalar_lea.vmem %s9, %s319
      %p321 = scmp.lt.s32.totalorder %s20, 1
      %s322 = scalar_select %p321, %s20, 1
      %s323 = smul.addr %s322, 32
      %s324 = smul.addr %s323, 4
      %s325 = scalar_lea.vmem %s0, %s324
      %p326 = scmp.lt.s32.totalorder %s20, 1
      %s327 = scalar_select %p326, %s20, 1
      %s328 = scalar_lea.vmem %s9, %s327
      %v331 = vld [vmem:[%s325] sm:$0xf]
      %v332 = vld [vmem:[%s325 + $0x4] sm:$0xf]
      %v333 = vld [vmem:[%s325 + $0x8] sm:$0xf]
      %v334 = vld [vmem:[%s325 + $0xc] sm:$0xf]
      %v335 = vld [vmem:[%s325 + $0x10] sm:$0xf]
      %v336 = vld [vmem:[%s325 + $0x14] sm:$0xf]
      %v337 = vld [vmem:[%s325 + $0x18] sm:$0xf]
      %v338 = vld [vmem:[%s325 + $0x1c] sm:$0xf]
      %v339 = vld [vmem:[%s325 + $0x20] sm:$0xf]
      %v340 = vld [vmem:[%s325 + $0x24] sm:$0xf]
      %v341 = vld [vmem:[%s325 + $0x28] sm:$0xf]
      %v342 = vld [vmem:[%s325 + $0x2c] sm:$0xf]
      %v343 = vld [vmem:[%s325 + $0x30] sm:$0xf]
      %v344 = vld [vmem:[%s325 + $0x34] sm:$0xf]
      %v345 = vld [vmem:[%s325 + $0x38] sm:$0xf]
      %v346 = vld [vmem:[%s325 + $0x3c] sm:$0xf]
      %v347 = vld [vmem:[%s325 + $0x40] sm:$0xf]
      %v348 = vld [vmem:[%s325 + $0x44] sm:$0xf]
      %v349 = vld [vmem:[%s325 + $0x48] sm:$0xf]
      %v350 = vld [vmem:[%s325 + $0x4c] sm:$0xf]
      %v351 = vld [vmem:[%s325 + $0x50] sm:$0xf]
      %v352 = vld [vmem:[%s325 + $0x54] sm:$0xf]
      %v353 = vld [vmem:[%s325 + $0x58] sm:$0xf]
      %v354 = vld [vmem:[%s325 + $0x5c] sm:$0xf]
      %v355 = vld [vmem:[%s325 + $0x60] sm:$0xf]
      %v356 = vld [vmem:[%s325 + $0x64] sm:$0xf]
      %v357 = vld [vmem:[%s325 + $0x68] sm:$0xf]
      %v358 = vld [vmem:[%s325 + $0x6c] sm:$0xf]
      %v359 = vld [vmem:[%s325 + $0x70] sm:$0xf]
      %v360 = vld [vmem:[%s325 + $0x74] sm:$0xf]
      %v361 = vld [vmem:[%s325 + $0x78] sm:$0xf]
      %v362 = vld [vmem:[%s325 + $0x7c] sm:$0xf]
      %v363 = vld [vmem:[%s1] sm:$0xf]
      %v364 = vld [vmem:[%s1 + $0x4] sm:$0xf]
      %v365 = vld [vmem:[%s1 + $0x8] sm:$0xf]
      %v366 = vld [vmem:[%s1 + $0xc] sm:$0xf]
      %v367 = vld [vmem:[%s2] sm:$0x1]
      %v369 = vlaneseq
      %v370 = vshrl.u32 %v369, 7
      %v371 = vsub.s32 0, %v370
      %v372 = vrot.slane %v367, %v371
      %v406 = vunpack.c.l.b16 %v331
      %v407 = vunpack.c.l.b16 %v332
      %v408 = vunpack.c.l.b16 %v333
      %v409 = vunpack.c.l.b16 %v334
      %v410 = vunpack.c.l.b16 %v335
      %v411 = vunpack.c.l.b16 %v336
      %v412 = vunpack.c.l.b16 %v337
      %v413 = vunpack.c.l.b16 %v338
      %v414 = vunpack.c.l.b16 %v339
      %v415 = vunpack.c.l.b16 %v340
      %v416 = vunpack.c.l.b16 %v341
      %v417 = vunpack.c.l.b16 %v342
      %v418 = vunpack.c.l.b16 %v343
      %v419 = vunpack.c.l.b16 %v344
      %v420 = vunpack.c.l.b16 %v345
      %v421 = vunpack.c.l.b16 %v346
      %v422 = vunpack.c.l.b16 %v347
      %v423 = vunpack.c.l.b16 %v348
      %v424 = vunpack.c.l.b16 %v349
      %v425 = vunpack.c.l.b16 %v350
      %v426 = vunpack.c.l.b16 %v351
      %v427 = vunpack.c.l.b16 %v352
      %v428 = vunpack.c.l.b16 %v353
      %v429 = vunpack.c.l.b16 %v354
      %v430 = vunpack.c.l.b16 %v355
      %v431 = vunpack.c.l.b16 %v356
      %v432 = vunpack.c.l.b16 %v357
      %v433 = vunpack.c.l.b16 %v358
      %v434 = vunpack.c.l.b16 %v359
      %v435 = vunpack.c.l.b16 %v360
      %v436 = vunpack.c.l.b16 %v361
      %v437 = vunpack.c.l.b16 %v362
      %v438 = vpack.c.b16 %v407, %v406
      %v439 = vpack.c.b16 %v409, %v408
      %v440 = vpack.c.b16 %v411, %v410
      %v441 = vpack.c.b16 %v413, %v412
      %v442 = vpack.c.b16 %v415, %v414
      %v443 = vpack.c.b16 %v417, %v416
      %v444 = vpack.c.b16 %v419, %v418
      %v445 = vpack.c.b16 %v421, %v420
      %v446 = vpack.c.b16 %v423, %v422
      %v447 = vpack.c.b16 %v425, %v424
      %v448 = vpack.c.b16 %v427, %v426
      %v449 = vpack.c.b16 %v429, %v428
      %v450 = vpack.c.b16 %v431, %v430
      %v451 = vpack.c.b16 %v433, %v432
      %v452 = vpack.c.b16 %v435, %v434
      %v453 = vpack.c.b16 %v437, %v436
      %v458 = vunpack.c.l.b16 %v363
      %v459 = vunpack.c.l.b16 %v364
      %v460 = vunpack.c.l.b16 %v365
      %v461 = vunpack.c.l.b16 %v366
      %v462 = vpack.c.b16 %v459, %v458
      %v463 = vpack.c.b16 %v461, %v460
      %vm466 = vcmask 261120
      %v468 = vsel %vm466, %v438, 0
      %v471 = vsel %vm466, %v439, 0
      %v474 = vsel %vm466, %v440, 0
      %v477 = vsel %vm466, %v441, 0
      %v480 = vsel %vm466, %v442, 0
      %v483 = vsel %vm466, %v443, 0
      %v486 = vsel %vm466, %v444, 0
      %v489 = vsel %vm466, %v445, 0
      %v492 = vsel %vm466, %v446, 0
      %v495 = vsel %vm466, %v447, 0
      %v498 = vsel %vm466, %v448, 0
      %v501 = vsel %vm466, %v449, 0
      %v504 = vsel %vm466, %v450, 0
      %v507 = vsel %vm466, %v451, 0
      %v510 = vsel %vm466, %v452, 0
      %v513 = vsel %vm466, %v453, 0
      %515 = vmatprep.subr.bf16.mxu0 0
      %516 = vmatpush1.bf16.msra.mxu0 0
      %517 = vmatprep.subr.bf16.mxu0 0
      %518 = vmatpush1.bf16.msra.mxu0 0
      %519 = vmatprep.subr.bf16.mxu0 0
      %520 = vmatpush1.bf16.msra.mxu0 0
      %521 = vmatprep.subr.bf16.mxu0 0
      %522 = vmatpush1.bf16.msra.mxu0 0
      %523 = vmatprep.subr.bf16.mxu0 0
      %524 = vmatpush1.bf16.msra.mxu0 0
      %525 = vmatprep.subr.bf16.mxu0 0
      %526 = vmatpush1.bf16.msra.mxu0 0
      %527 = vmatprep.subr.bf16.mxu0 0
      %528 = vmatpush1.bf16.msra.mxu0 %v463
      %529 = vmatprep.subr.bf16.mxu0 0
      %530 = vmatpush1.bf16.msra.mxu0 %v462
      %531 = vmatprep.subr.bf16.mxu0 0
      %532 = vmatpush2.bf16.msra.mxu0 0
      %533 = vmatprep.subr.bf16.mxu0 0
      %534 = vmatpush2.bf16.msra.mxu0 0
      %535 = vmatprep.subr.bf16.mxu0 0
      %536 = vmatpush2.bf16.msra.mxu0 0
      %537 = vmatprep.subr.bf16.mxu0 0
      %538 = vmatpush2.bf16.msra.mxu0 0
      %539 = vmatprep.subr.bf16.mxu0 0
      %540 = vmatpush2.bf16.msra.mxu0 0
      %541 = vmatprep.subr.bf16.mxu0 0
      %542 = vmatpush2.bf16.msra.mxu0 0
      %543 = vmatprep.subr.bf16.mxu0 0
      %544 = vmatpush2.bf16.msra.mxu0 0
      %545 = vmatprep.subr.bf16.mxu0 0
      %546 = vmatpush2.bf16.msra.mxu0 0
      %547 = vmatprep.mubr.bf16.mxu0 0
      %548 = vmatmul.mubr.bf16.gmra.mxu0 %v468
      %v549 = vpop.f32.mrf.mxu0
      %v550 = vadd.f32 %v372, %v549
      %v551 = vpop.f32.mrf.mxu0
      %v552 = vpop.f32.mrf.mxu0
      %v553 = vadd.f32 %v372, %v552
      %v554 = vpop.f32.mrf.mxu0
      %555 = vmatprep.mubr.bf16.mxu0 0
      %556 = vmatmul.mubr.bf16.gmra.mxu0 %v471
      %v557 = vpop.f32.mrf.mxu0
      %v558 = vadd.f32 %v372, %v557
      %v559 = vpop.f32.mrf.mxu0
      %v560 = vpop.f32.mrf.mxu0
      %v561 = vadd.f32 %v372, %v560
      %v562 = vpop.f32.mrf.mxu0
      %563 = vmatprep.mubr.bf16.mxu0 0
      %564 = vmatmul.mubr.bf16.gmra.mxu0 %v474
      %v565 = vpop.f32.mrf.mxu0
      %v566 = vadd.f32 %v372, %v565
      %v567 = vpop.f32.mrf.mxu0
      %v568 = vpop.f32.mrf.mxu0
      %v569 = vadd.f32 %v372, %v568
      %v570 = vpop.f32.mrf.mxu0
      %571 = vmatprep.mubr.bf16.mxu0 0
      %572 = vmatmul.mubr.bf16.gmra.mxu0 %v477
      %v573 = vpop.f32.mrf.mxu0
      %v574 = vadd.f32 %v372, %v573
      %v575 = vpop.f32.mrf.mxu0
      %v576 = vpop.f32.mrf.mxu0
      %v577 = vadd.f32 %v372, %v576
      %v578 = vpop.f32.mrf.mxu0
      %579 = vmatprep.mubr.bf16.mxu0 0
      %580 = vmatmul.mubr.bf16.gmra.mxu0 %v480
      %v581 = vpop.f32.mrf.mxu0
      %v582 = vadd.f32 %v372, %v581
      %v583 = vpop.f32.mrf.mxu0
      %v584 = vpop.f32.mrf.mxu0
      %v585 = vadd.f32 %v372, %v584
      %v586 = vpop.f32.mrf.mxu0
      %587 = vmatprep.mubr.bf16.mxu0 0
      %588 = vmatmul.mubr.bf16.gmra.mxu0 %v483
      %v589 = vpop.f32.mrf.mxu0
      %v590 = vadd.f32 %v372, %v589
      %v591 = vpop.f32.mrf.mxu0
      %v592 = vpop.f32.mrf.mxu0
      %v593 = vadd.f32 %v372, %v592
      %v594 = vpop.f32.mrf.mxu0
      %595 = vmatprep.mubr.bf16.mxu0 0
      %596 = vmatmul.mubr.bf16.gmra.mxu0 %v486
      %v597 = vpop.f32.mrf.mxu0
      %v598 = vadd.f32 %v372, %v597
      %v599 = vpop.f32.mrf.mxu0
      %v600 = vpop.f32.mrf.mxu0
      %v601 = vadd.f32 %v372, %v600
      %v602 = vpop.f32.mrf.mxu0
      %603 = vmatprep.mubr.bf16.mxu0 0
      %604 = vmatmul.mubr.bf16.gmra.mxu0 %v489
      %v605 = vpop.f32.mrf.mxu0
      %v606 = vadd.f32 %v372, %v605
      %v607 = vpop.f32.mrf.mxu0
      %v608 = vpop.f32.mrf.mxu0
      %v609 = vadd.f32 %v372, %v608
      %v610 = vpop.f32.mrf.mxu0
      %611 = vmatprep.mubr.bf16.mxu0 0
      %612 = vmatmul.mubr.bf16.gmra.mxu0 %v492
      %v613 = vpop.f32.mrf.mxu0
      %v614 = vadd.f32 %v372, %v613
      %v615 = vpop.f32.mrf.mxu0
      %v616 = vpop.f32.mrf.mxu0
      %v617 = vadd.f32 %v372, %v616
      %v618 = vpop.f32.mrf.mxu0
      %619 = vmatprep.mubr.bf16.mxu0 0
      %620 = vmatmul.mubr.bf16.gmra.mxu0 %v495
      %v621 = vpop.f32.mrf.mxu0
      %v622 = vadd.f32 %v372, %v621
      %v623 = vpop.f32.mrf.mxu0
      %v624 = vpop.f32.mrf.mxu0
      %v625 = vadd.f32 %v372, %v624
      %v626 = vpop.f32.mrf.mxu0
      %627 = vmatprep.mubr.bf16.mxu0 0
      %628 = vmatmul.mubr.bf16.gmra.mxu0 %v498
      %v629 = vpop.f32.mrf.mxu0
      %v630 = vadd.f32 %v372, %v629
      %v631 = vpop.f32.mrf.mxu0
      %v632 = vpop.f32.mrf.mxu0
      %v633 = vadd.f32 %v372, %v632
      %v634 = vpop.f32.mrf.mxu0
      %635 = vmatprep.mubr.bf16.mxu0 0
      %636 = vmatmul.mubr.bf16.gmra.mxu0 %v501
      %v637 = vpop.f32.mrf.mxu0
      %v638 = vadd.f32 %v372, %v637
      %v639 = vpop.f32.mrf.mxu0
      %v640 = vpop.f32.mrf.mxu0
      %v641 = vadd.f32 %v372, %v640
      %v642 = vpop.f32.mrf.mxu0
      %643 = vmatprep.mubr.bf16.mxu0 0
      %644 = vmatmul.mubr.bf16.gmra.mxu0 %v504
      %v645 = vpop.f32.mrf.mxu0
      %v646 = vadd.f32 %v372, %v645
      %v647 = vpop.f32.mrf.mxu0
      %v648 = vpop.f32.mrf.mxu0
      %v649 = vadd.f32 %v372, %v648
      %v650 = vpop.f32.mrf.mxu0
      %651 = vmatprep.mubr.bf16.mxu0 0
      %652 = vmatmul.mubr.bf16.gmra.mxu0 %v507
      %v653 = vpop.f32.mrf.mxu0
      %v654 = vadd.f32 %v372, %v653
      %v655 = vpop.f32.mrf.mxu0
      %v656 = vpop.f32.mrf.mxu0
      %v657 = vadd.f32 %v372, %v656
      %v658 = vpop.f32.mrf.mxu0
      %659 = vmatprep.mubr.bf16.mxu0 0
      %660 = vmatmul.mubr.bf16.gmra.mxu0 %v510
      %v661 = vpop.f32.mrf.mxu0
      %v662 = vadd.f32 %v372, %v661
      %v663 = vpop.f32.mrf.mxu0
      %v664 = vpop.f32.mrf.mxu0
      %v665 = vadd.f32 %v372, %v664
      %v666 = vpop.f32.mrf.mxu0
      %667 = vmatprep.mubr.bf16.mxu0 0
      %668 = vmatmul.mubr.bf16.gmra.mxu0 %v513
      %v669 = vpop.f32.mrf.mxu0
      %v670 = vadd.f32 %v372, %v669
      %v671 = vpop.f32.mrf.mxu0
      %v672 = vpop.f32.mrf.mxu0
      %v673 = vadd.f32 %v372, %v672
      %v674 = vpop.f32.mrf.mxu0
      %675 = vdwg.mxu0
      %v676 = vmax.f32 %v550, 0.0
      %v677 = vmax.f32 %v553, 0.0
      %v678 = vmax.f32 %v558, 0.0
      %v679 = vmax.f32 %v561, 0.0
      %v680 = vmax.f32 %v566, 0.0
      %v681 = vmax.f32 %v569, 0.0
      %v682 = vmax.f32 %v574, 0.0
      %v683 = vmax.f32 %v577, 0.0
      %v684 = vmax.f32 %v582, 0.0
      %v685 = vmax.f32 %v585, 0.0
      %v686 = vmax.f32 %v590, 0.0
      %v687 = vmax.f32 %v593, 0.0
      %v688 = vmax.f32 %v598, 0.0
      %v689 = vmax.f32 %v601, 0.0
      %v690 = vmax.f32 %v606, 0.0
      %v691 = vmax.f32 %v609, 0.0
      %v692 = vmax.f32 %v614, 0.0
      %v693 = vmax.f32 %v617, 0.0
      %v694 = vmax.f32 %v622, 0.0
      %v695 = vmax.f32 %v625, 0.0
      %v696 = vmax.f32 %v630, 0.0
      %v697 = vmax.f32 %v633, 0.0
      %v698 = vmax.f32 %v638, 0.0
      %v699 = vmax.f32 %v641, 0.0
      %v700 = vmax.f32 %v646, 0.0
      %v701 = vmax.f32 %v649, 0.0
      %v702 = vmax.f32 %v654, 0.0
      %v703 = vmax.f32 %v657, 0.0
      %v704 = vmax.f32 %v662, 0.0
      %v705 = vmax.f32 %v665, 0.0
      %v706 = vmax.f32 %v670, 0.0
      %v707 = vmax.f32 %v673, 0.0
      %v708 = vpack.c.bf16 %v677, %v676
      %v709 = vpack.c.bf16 %v679, %v678
      %v710 = vpack.c.bf16 %v681, %v680
      %v711 = vpack.c.bf16 %v683, %v682
      %v712 = vpack.c.bf16 %v685, %v684
      %v713 = vpack.c.bf16 %v687, %v686
      %v714 = vpack.c.bf16 %v689, %v688
      %v715 = vpack.c.bf16 %v691, %v690
      %v716 = vpack.c.bf16 %v693, %v692
      %v717 = vpack.c.bf16 %v695, %v694
      %v718 = vpack.c.bf16 %v697, %v696
      %v719 = vpack.c.bf16 %v699, %v698
      %v720 = vpack.c.bf16 %v701, %v700
      %v721 = vpack.c.bf16 %v703, %v702
      %v722 = vpack.c.bf16 %v705, %v704
      %v723 = vpack.c.bf16 %v707, %v706
      %v740 = vcombine.high %v708, %v708
      %v742 = vunpack.c.l.s4 1966171168
      %v743 = vunpack.c.0.s8 %v742
      %v744 = vlaneseq
      %v745 = vshrl.u32 %v744, 7
      %v746 = vsub.s32 %v743, %v745
      %v747 = vrot.slane %v708, %v746
      %v749 = vunpack.c.l.s4 1966171168
      %v750 = vunpack.c.0.s8 %v749
      %v751 = vlaneseq
      %v752 = vshrl.u32 %v751, 7
      %v753 = vsub.s32 %v750, %v752
      %v754 = vrot.slane %v740, %v753
      %v755 = vcombine.high %v747, %v747
      %v756 = vcombine.high %v754, %v754
      %v758 = vunpack.c.l.s4 1966171168
      %v759 = vunpack.c.0.s8 %v758
      %v760 = vlaneseq
      %v761 = vshrl.u32 %v760, 7
      %v762 = vsub.s32 %v759, %v761
      %v763 = vrot.slane %v747, %v762
      %v765 = vunpack.c.l.s4 1966171168
      %v766 = vunpack.c.0.s8 %v765
      %v767 = vlaneseq
      %v768 = vshrl.u32 %v767, 7
      %v769 = vsub.s32 %v766, %v768
      %v770 = vrot.slane %v754, %v769
      %v772 = vunpack.c.l.s4 1966171168
      %v773 = vunpack.c.0.s8 %v772
      %v774 = vlaneseq
      %v775 = vshrl.u32 %v774, 7
      %v776 = vsub.s32 %v773, %v775
      %v777 = vrot.slane %v755, %v776
      %v779 = vunpack.c.l.s4 1966171168
      %v780 = vunpack.c.0.s8 %v779
      %v781 = vlaneseq
      %v782 = vshrl.u32 %v781, 7
      %v783 = vsub.s32 %v780, %v782
      %v784 = vrot.slane %v756, %v783
      %v785 = vcombine.high %v763, %v763
      %v786 = vcombine.high %v770, %v770
      %v787 = vcombine.high %v777, %v777
      %v788 = vcombine.high %v784, %v784
      %v789 = vcombine.high %v709, %v709
      %v791 = vunpack.c.l.s4 1966171168
      %v792 = vunpack.c.0.s8 %v791
      %v793 = vlaneseq
      %v794 = vshrl.u32 %v793, 7
      %v795 = vsub.s32 %v792, %v794
      %v796 = vrot.slane %v709, %v795
      %v798 = vunpack.c.l.s4 1966171168
      %v799 = vunpack.c.0.s8 %v798
      %v800 = vlaneseq
      %v801 = vshrl.u32 %v800, 7
      %v802 = vsub.s32 %v799, %v801
      %v803 = vrot.slane %v789, %v802
      %v804 = vcombine.high %v796, %v796
      %v805 = vcombine.high %v803, %v803
      %v807 = vunpack.c.l.s4 1966171168
      %v808 = vunpack.c.0.s8 %v807
      %v809 = vlaneseq
      %v810 = vshrl.u32 %v809, 7
      %v811 = vsub.s32 %v808, %v810
      %v812 = vrot.slane %v796, %v811
      %v814 = vunpack.c.l.s4 1966171168
      %v815 = vunpack.c.0.s8 %v814
      %v816 = vlaneseq
      %v817 = vshrl.u32 %v816, 7
      %v818 = vsub.s32 %v815, %v817
      %v819 = vrot.slane %v803, %v818
      %v821 = vunpack.c.l.s4 1966171168
      %v822 = vunpack.c.0.s8 %v821
      %v823 = vlaneseq
      %v824 = vshrl.u32 %v823, 7
      %v825 = vsub.s32 %v822, %v824
      %v826 = vrot.slane %v804, %v825
      %v828 = vunpack.c.l.s4 1966171168
      %v829 = vunpack.c.0.s8 %v828
      %v830 = vlaneseq
      %v831 = vshrl.u32 %v830, 7
      %v832 = vsub.s32 %v829, %v831
      %v833 = vrot.slane %v805, %v832
      %v834 = vcombine.high %v812, %v812
      %v835 = vcombine.high %v819, %v819
      %v836 = vcombine.high %v826, %v826
      %v837 = vcombine.high %v833, %v833
      %v838 = vcombine.high %v710, %v710
      %v840 = vunpack.c.l.s4 1966171168
      %v841 = vunpack.c.0.s8 %v840
      %v842 = vlaneseq
      %v843 = vshrl.u32 %v842, 7
      %v844 = vsub.s32 %v841, %v843
      %v845 = vrot.slane %v710, %v844
      %v847 = vunpack.c.l.s4 1966171168
      %v848 = vunpack.c.0.s8 %v847
      %v849 = vlaneseq
      %v850 = vshrl.u32 %v849, 7
      %v851 = vsub.s32 %v848, %v850
      %v852 = vrot.slane %v838, %v851
      %v853 = vcombine.high %v845, %v845
      %v854 = vcombine.high %v852, %v852
      %v856 = vunpack.c.l.s4 1966171168
      %v857 = vunpack.c.0.s8 %v856
      %v858 = vlaneseq
      %v859 = vshrl.u32 %v858, 7
      %v860 = vsub.s32 %v857, %v859
      %v861 = vrot.slane %v845, %v860
      %v863 = vunpack.c.l.s4 1966171168
      %v864 = vunpack.c.0.s8 %v863
      %v865 = vlaneseq
      %v866 = vshrl.u32 %v865, 7
      %v867 = vsub.s32 %v864, %v866
      %v868 = vrot.slane %v852, %v867
      %v870 = vunpack.c.l.s4 1966171168
      %v871 = vunpack.c.0.s8 %v870
      %v872 = vlaneseq
      %v873 = vshrl.u32 %v872, 7
      %v874 = vsub.s32 %v871, %v873
      %v875 = vrot.slane %v853, %v874
      %v877 = vunpack.c.l.s4 1966171168
      %v878 = vunpack.c.0.s8 %v877
      %v879 = vlaneseq
      %v880 = vshrl.u32 %v879, 7
      %v881 = vsub.s32 %v878, %v880
      %v882 = vrot.slane %v854, %v881
      %v883 = vcombine.high %v861, %v861
      %v884 = vcombine.high %v868, %v868
      %v885 = vcombine.high %v875, %v875
      %v886 = vcombine.high %v882, %v882
      %v887 = vcombine.high %v711, %v711
      %v889 = vunpack.c.l.s4 1966171168
      %v890 = vunpack.c.0.s8 %v889
      %v891 = vlaneseq
      %v892 = vshrl.u32 %v891, 7
      %v893 = vsub.s32 %v890, %v892
      %v894 = vrot.slane %v711, %v893
      %v896 = vunpack.c.l.s4 1966171168
      %v897 = vunpack.c.0.s8 %v896
      %v898 = vlaneseq
      %v899 = vshrl.u32 %v898, 7
      %v900 = vsub.s32 %v897, %v899
      %v901 = vrot.slane %v887, %v900
      %v902 = vcombine.high %v894, %v894
      %v903 = vcombine.high %v901, %v901
      %v905 = vunpack.c.l.s4 1966171168
      %v906 = vunpack.c.0.s8 %v905
      %v907 = vlaneseq
      %v908 = vshrl.u32 %v907, 7
      %v909 = vsub.s32 %v906, %v908
      %v910 = vrot.slane %v894, %v909
      %v912 = vunpack.c.l.s4 1966171168
      %v913 = vunpack.c.0.s8 %v912
      %v914 = vlaneseq
      %v915 = vshrl.u32 %v914, 7
      %v916 = vsub.s32 %v913, %v915
      %v917 = vrot.slane %v901, %v916
      %v919 = vunpack.c.l.s4 1966171168
      %v920 = vunpack.c.0.s8 %v919
      %v921 = vlaneseq
      %v922 = vshrl.u32 %v921, 7
      %v923 = vsub.s32 %v920, %v922
      %v924 = vrot.slane %v902, %v923
      %v926 = vunpack.c.l.s4 1966171168
      %v927 = vunpack.c.0.s8 %v926
      %v928 = vlaneseq
      %v929 = vshrl.u32 %v928, 7
      %v930 = vsub.s32 %v927, %v929
      %v931 = vrot.slane %v903, %v930
      %v932 = vcombine.high %v910, %v910
      %v933 = vcombine.high %v917, %v917
      %v934 = vcombine.high %v924, %v924
      %v935 = vcombine.high %v931, %v931
      %v936 = vcombine.high %v712, %v712
      %v938 = vunpack.c.l.s4 1966171168
      %v939 = vunpack.c.0.s8 %v938
      %v940 = vlaneseq
      %v941 = vshrl.u32 %v940, 7
      %v942 = vsub.s32 %v939, %v941
      %v943 = vrot.slane %v712, %v942
      %v945 = vunpack.c.l.s4 1966171168
      %v946 = vunpack.c.0.s8 %v945
      %v947 = vlaneseq
      %v948 = vshrl.u32 %v947, 7
      %v949 = vsub.s32 %v946, %v948
      %v950 = vrot.slane %v936, %v949
      %v951 = vcombine.high %v943, %v943
      %v952 = vcombine.high %v950, %v950
      %v954 = vunpack.c.l.s4 1966171168
      %v955 = vunpack.c.0.s8 %v954
      %v956 = vlaneseq
      %v957 = vshrl.u32 %v956, 7
      %v958 = vsub.s32 %v955, %v957
      %v959 = vrot.slane %v943, %v958
      %v961 = vunpack.c.l.s4 1966171168
      %v962 = vunpack.c.0.s8 %v961
      %v963 = vlaneseq
      %v964 = vshrl.u32 %v963, 7
      %v965 = vsub.s32 %v962, %v964
      %v966 = vrot.slane %v950, %v965
      %v968 = vunpack.c.l.s4 1966171168
      %v969 = vunpack.c.0.s8 %v968
      %v970 = vlaneseq
      %v971 = vshrl.u32 %v970, 7
      %v972 = vsub.s32 %v969, %v971
      %v973 = vrot.slane %v951, %v972
      %v975 = vunpack.c.l.s4 1966171168
      %v976 = vunpack.c.0.s8 %v975
      %v977 = vlaneseq
      %v978 = vshrl.u32 %v977, 7
      %v979 = vsub.s32 %v976, %v978
      %v980 = vrot.slane %v952, %v979
      %v981 = vcombine.high %v959, %v959
      %v982 = vcombine.high %v966, %v966
      %v983 = vcombine.high %v973, %v973
      %v984 = vcombine.high %v980, %v980
      %v985 = vcombine.high %v713, %v713
      %v987 = vunpack.c.l.s4 1966171168
      %v988 = vunpack.c.0.s8 %v987
      %v989 = vlaneseq
      %v990 = vshrl.u32 %v989, 7
      %v991 = vsub.s32 %v988, %v990
      %v992 = vrot.slane %v713, %v991
      %v994 = vunpack.c.l.s4 1966171168
      %v995 = vunpack.c.0.s8 %v994
      %v996 = vlaneseq
      %v997 = vshrl.u32 %v996, 7
      %v998 = vsub.s32 %v995, %v997
      %v999 = vrot.slane %v985, %v998
      %v1000 = vcombine.high %v992, %v992
      %v1001 = vcombine.high %v999, %v999
      %v1003 = vunpack.c.l.s4 1966171168
      %v1004 = vunpack.c.0.s8 %v1003
      %v1005 = vlaneseq
      %v1006 = vshrl.u32 %v1005, 7
      %v1007 = vsub.s32 %v1004, %v1006
      %v1008 = vrot.slane %v992, %v1007
      %v1010 = vunpack.c.l.s4 1966171168
      %v1011 = vunpack.c.0.s8 %v1010
      %v1012 = vlaneseq
      %v1013 = vshrl.u32 %v1012, 7
      %v1014 = vsub.s32 %v1011, %v1013
      %v1015 = vrot.slane %v999, %v1014
      %v1017 = vunpack.c.l.s4 1966171168
      %v1018 = vunpack.c.0.s8 %v1017
      %v1019 = vlaneseq
      %v1020 = vshrl.u32 %v1019, 7
      %v1021 = vsub.s32 %v1018, %v1020
      %v1022 = vrot.slane %v1000, %v1021
      %v1024 = vunpack.c.l.s4 1966171168
      %v1025 = vunpack.c.0.s8 %v1024
      %v1026 = vlaneseq
      %v1027 = vshrl.u32 %v1026, 7
      %v1028 = vsub.s32 %v1025, %v1027
      %v1029 = vrot.slane %v1001, %v1028
      %v1030 = vcombine.high %v1008, %v1008
      %v1031 = vcombine.high %v1015, %v1015
      %v1032 = vcombine.high %v1022, %v1022
      %v1033 = vcombine.high %v1029, %v1029
      %v1034 = vcombine.high %v714, %v714
      %v1036 = vunpack.c.l.s4 1966171168
      %v1037 = vunpack.c.0.s8 %v1036
      %v1038 = vlaneseq
      %v1039 = vshrl.u32 %v1038, 7
      %v1040 = vsub.s32 %v1037, %v1039
      %v1041 = vrot.slane %v714, %v1040
      %v1043 = vunpack.c.l.s4 1966171168
      %v1044 = vunpack.c.0.s8 %v1043
      %v1045 = vlaneseq
      %v1046 = vshrl.u32 %v1045, 7
      %v1047 = vsub.s32 %v1044, %v1046
      %v1048 = vrot.slane %v1034, %v1047
      %v1049 = vcombine.high %v1041, %v1041
      %v1050 = vcombine.high %v1048, %v1048
      %v1052 = vunpack.c.l.s4 1966171168
      %v1053 = vunpack.c.0.s8 %v1052
      %v1054 = vlaneseq
      %v1055 = vshrl.u32 %v1054, 7
      %v1056 = vsub.s32 %v1053, %v1055
      %v1057 = vrot.slane %v1041, %v1056
      %v1059 = vunpack.c.l.s4 1966171168
      %v1060 = vunpack.c.0.s8 %v1059
      %v1061 = vlaneseq
      %v1062 = vshrl.u32 %v1061, 7
      %v1063 = vsub.s32 %v1060, %v1062
      %v1064 = vrot.slane %v1048, %v1063
      %v1066 = vunpack.c.l.s4 1966171168
      %v1067 = vunpack.c.0.s8 %v1066
      %v1068 = vlaneseq
      %v1069 = vshrl.u32 %v1068, 7
      %v1070 = vsub.s32 %v1067, %v1069
      %v1071 = vrot.slane %v1049, %v1070
      %v1073 = vunpack.c.l.s4 1966171168
      %v1074 = vunpack.c.0.s8 %v1073
      %v1075 = vlaneseq
      %v1076 = vshrl.u32 %v1075, 7
      %v1077 = vsub.s32 %v1074, %v1076
      %v1078 = vrot.slane %v1050, %v1077
      %v1079 = vcombine.high %v1057, %v1057
      %v1080 = vcombine.high %v1064, %v1064
      %v1081 = vcombine.high %v1071, %v1071
      %v1082 = vcombine.high %v1078, %v1078
      %v1083 = vcombine.high %v715, %v715
      %v1085 = vunpack.c.l.s4 1966171168
      %v1086 = vunpack.c.0.s8 %v1085
      %v1087 = vlaneseq
      %v1088 = vshrl.u32 %v1087, 7
      %v1089 = vsub.s32 %v1086, %v1088
      %v1090 = vrot.slane %v715, %v1089
      %v1092 = vunpack.c.l.s4 1966171168
      %v1093 = vunpack.c.0.s8 %v1092
      %v1094 = vlaneseq
      %v1095 = vshrl.u32 %v1094, 7
      %v1096 = vsub.s32 %v1093, %v1095
      %v1097 = vrot.slane %v1083, %v1096
      %v1098 = vcombine.high %v1090, %v1090
      %v1099 = vcombine.high %v1097, %v1097
      %v1101 = vunpack.c.l.s4 1966171168
      %v1102 = vunpack.c.0.s8 %v1101
      %v1103 = vlaneseq
      %v1104 = vshrl.u32 %v1103, 7
      %v1105 = vsub.s32 %v1102, %v1104
      %v1106 = vrot.slane %v1090, %v1105
      %v1108 = vunpack.c.l.s4 1966171168
      %v1109 = vunpack.c.0.s8 %v1108
      %v1110 = vlaneseq
      %v1111 = vshrl.u32 %v1110, 7
      %v1112 = vsub.s32 %v1109, %v1111
      %v1113 = vrot.slane %v1097, %v1112
      %v1115 = vunpack.c.l.s4 1966171168
      %v1116 = vunpack.c.0.s8 %v1115
      %v1117 = vlaneseq
      %v1118 = vshrl.u32 %v1117, 7
      %v1119 = vsub.s32 %v1116, %v1118
      %v1120 = vrot.slane %v1098, %v1119
      %v1122 = vunpack.c.l.s4 1966171168
      %v1123 = vunpack.c.0.s8 %v1122
      %v1124 = vlaneseq
      %v1125 = vshrl.u32 %v1124, 7
      %v1126 = vsub.s32 %v1123, %v1125
      %v1127 = vrot.slane %v1099, %v1126
      %v1128 = vcombine.high %v1106, %v1106
      %v1129 = vcombine.high %v1113, %v1113
      %v1130 = vcombine.high %v1120, %v1120
      %v1131 = vcombine.high %v1127, %v1127
      %v1132 = vcombine.high %v716, %v716
      %v1134 = vunpack.c.l.s4 1966171168
      %v1135 = vunpack.c.0.s8 %v1134
      %v1136 = vlaneseq
      %v1137 = vshrl.u32 %v1136, 7
      %v1138 = vsub.s32 %v1135, %v1137
      %v1139 = vrot.slane %v716, %v1138
      %v1141 = vunpack.c.l.s4 1966171168
      %v1142 = vunpack.c.0.s8 %v1141
      %v1143 = vlaneseq
      %v1144 = vshrl.u32 %v1143, 7
      %v1145 = vsub.s32 %v1142, %v1144
      %v1146 = vrot.slane %v1132, %v1145
      %v1147 = vcombine.high %v1139, %v1139
      %v1148 = vcombine.high %v1146, %v1146
      %v1150 = vunpack.c.l.s4 1966171168
      %v1151 = vunpack.c.0.s8 %v1150
      %v1152 = vlaneseq
      %v1153 = vshrl.u32 %v1152, 7
      %v1154 = vsub.s32 %v1151, %v1153
      %v1155 = vrot.slane %v1139, %v1154
      %v1157 = vunpack.c.l.s4 1966171168
      %v1158 = vunpack.c.0.s8 %v1157
      %v1159 = vlaneseq
      %v1160 = vshrl.u32 %v1159, 7
      %v1161 = vsub.s32 %v1158, %v1160
      %v1162 = vrot.slane %v1146, %v1161
      %v1164 = vunpack.c.l.s4 1966171168
      %v1165 = vunpack.c.0.s8 %v1164
      %v1166 = vlaneseq
      %v1167 = vshrl.u32 %v1166, 7
      %v1168 = vsub.s32 %v1165, %v1167
      %v1169 = vrot.slane %v1147, %v1168
      %v1171 = vunpack.c.l.s4 1966171168
      %v1172 = vunpack.c.0.s8 %v1171
      %v1173 = vlaneseq
      %v1174 = vshrl.u32 %v1173, 7
      %v1175 = vsub.s32 %v1172, %v1174
      %v1176 = vrot.slane %v1148, %v1175
      %v1177 = vcombine.high %v1155, %v1155
      %v1178 = vcombine.high %v1162, %v1162
      %v1179 = vcombine.high %v1169, %v1169
      %v1180 = vcombine.high %v1176, %v1176
      %v1181 = vcombine.high %v717, %v717
      %v1183 = vunpack.c.l.s4 1966171168
      %v1184 = vunpack.c.0.s8 %v1183
      %v1185 = vlaneseq
      %v1186 = vshrl.u32 %v1185, 7
      %v1187 = vsub.s32 %v1184, %v1186
      %v1188 = vrot.slane %v717, %v1187
      %v1190 = vunpack.c.l.s4 1966171168
      %v1191 = vunpack.c.0.s8 %v1190
      %v1192 = vlaneseq
      %v1193 = vshrl.u32 %v1192, 7
      %v1194 = vsub.s32 %v1191, %v1193
      %v1195 = vrot.slane %v1181, %v1194
      %v1196 = vcombine.high %v1188, %v1188
      %v1197 = vcombine.high %v1195, %v1195
      %v1199 = vunpack.c.l.s4 1966171168
      %v1200 = vunpack.c.0.s8 %v1199
      %v1201 = vlaneseq
      %v1202 = vshrl.u32 %v1201, 7
      %v1203 = vsub.s32 %v1200, %v1202
      %v1204 = vrot.slane %v1188, %v1203
      %v1206 = vunpack.c.l.s4 1966171168
      %v1207 = vunpack.c.0.s8 %v1206
      %v1208 = vlaneseq
      %v1209 = vshrl.u32 %v1208, 7
      %v1210 = vsub.s32 %v1207, %v1209
      %v1211 = vrot.slane %v1195, %v1210
      %v1213 = vunpack.c.l.s4 1966171168
      %v1214 = vunpack.c.0.s8 %v1213
      %v1215 = vlaneseq
      %v1216 = vshrl.u32 %v1215, 7
      %v1217 = vsub.s32 %v1214, %v1216
      %v1218 = vrot.slane %v1196, %v1217
      %v1220 = vunpack.c.l.s4 1966171168
      %v1221 = vunpack.c.0.s8 %v1220
      %v1222 = vlaneseq
      %v1223 = vshrl.u32 %v1222, 7
      %v1224 = vsub.s32 %v1221, %v1223
      %v1225 = vrot.slane %v1197, %v1224
      %v1226 = vcombine.high %v1204, %v1204
      %v1227 = vcombine.high %v1211, %v1211
      %v1228 = vcombine.high %v1218, %v1218
      %v1229 = vcombine.high %v1225, %v1225
      %v1230 = vcombine.high %v718, %v718
      %v1232 = vunpack.c.l.s4 1966171168
      %v1233 = vunpack.c.0.s8 %v1232
      %v1234 = vlaneseq
      %v1235 = vshrl.u32 %v1234, 7
      %v1236 = vsub.s32 %v1233, %v1235
      %v1237 = vrot.slane %v718, %v1236
      %v1239 = vunpack.c.l.s4 1966171168
      %v1240 = vunpack.c.0.s8 %v1239
      %v1241 = vlaneseq
      %v1242 = vshrl.u32 %v1241, 7
      %v1243 = vsub.s32 %v1240, %v1242
      %v1244 = vrot.slane %v1230, %v1243
      %v1245 = vcombine.high %v1237, %v1237
      %v1246 = vcombine.high %v1244, %v1244
      %v1248 = vunpack.c.l.s4 1966171168
      %v1249 = vunpack.c.0.s8 %v1248
      %v1250 = vlaneseq
      %v1251 = vshrl.u32 %v1250, 7
      %v1252 = vsub.s32 %v1249, %v1251
      %v1253 = vrot.slane %v1237, %v1252
      %v1255 = vunpack.c.l.s4 1966171168
      %v1256 = vunpack.c.0.s8 %v1255
      %v1257 = vlaneseq
      %v1258 = vshrl.u32 %v1257, 7
      %v1259 = vsub.s32 %v1256, %v1258
      %v1260 = vrot.slane %v1244, %v1259
      %v1262 = vunpack.c.l.s4 1966171168
      %v1263 = vunpack.c.0.s8 %v1262
      %v1264 = vlaneseq
      %v1265 = vshrl.u32 %v1264, 7
      %v1266 = vsub.s32 %v1263, %v1265
      %v1267 = vrot.slane %v1245, %v1266
      %v1269 = vunpack.c.l.s4 1966171168
      %v1270 = vunpack.c.0.s8 %v1269
      %v1271 = vlaneseq
      %v1272 = vshrl.u32 %v1271, 7
      %v1273 = vsub.s32 %v1270, %v1272
      %v1274 = vrot.slane %v1246, %v1273
      %v1275 = vcombine.high %v1253, %v1253
      %v1276 = vcombine.high %v1260, %v1260
      %v1277 = vcombine.high %v1267, %v1267
      %v1278 = vcombine.high %v1274, %v1274
      %v1279 = vcombine.high %v719, %v719
      %v1281 = vunpack.c.l.s4 1966171168
      %v1282 = vunpack.c.0.s8 %v1281
      %v1283 = vlaneseq
      %v1284 = vshrl.u32 %v1283, 7
      %v1285 = vsub.s32 %v1282, %v1284
      %v1286 = vrot.slane %v719, %v1285
      %v1288 = vunpack.c.l.s4 1966171168
      %v1289 = vunpack.c.0.s8 %v1288
      %v1290 = vlaneseq
      %v1291 = vshrl.u32 %v1290, 7
      %v1292 = vsub.s32 %v1289, %v1291
      %v1293 = vrot.slane %v1279, %v1292
      %v1294 = vcombine.high %v1286, %v1286
      %v1295 = vcombine.high %v1293, %v1293
      %v1297 = vunpack.c.l.s4 1966171168
      %v1298 = vunpack.c.0.s8 %v1297
      %v1299 = vlaneseq
      %v1300 = vshrl.u32 %v1299, 7
      %v1301 = vsub.s32 %v1298, %v1300
      %v1302 = vrot.slane %v1286, %v1301
      %v1304 = vunpack.c.l.s4 1966171168
      %v1305 = vunpack.c.0.s8 %v1304
      %v1306 = vlaneseq
      %v1307 = vshrl.u32 %v1306, 7
      %v1308 = vsub.s32 %v1305, %v1307
      %v1309 = vrot.slane %v1293, %v1308
      %v1311 = vunpack.c.l.s4 1966171168
      %v1312 = vunpack.c.0.s8 %v1311
      %v1313 = vlaneseq
      %v1314 = vshrl.u32 %v1313, 7
      %v1315 = vsub.s32 %v1312, %v1314
      %v1316 = vrot.slane %v1294, %v1315
      %v1318 = vunpack.c.l.s4 1966171168
      %v1319 = vunpack.c.0.s8 %v1318
      %v1320 = vlaneseq
      %v1321 = vshrl.u32 %v1320, 7
      %v1322 = vsub.s32 %v1319, %v1321
      %v1323 = vrot.slane %v1295, %v1322
      %v1324 = vcombine.high %v1302, %v1302
      %v1325 = vcombine.high %v1309, %v1309
      %v1326 = vcombine.high %v1316, %v1316
      %v1327 = vcombine.high %v1323, %v1323
      %v1328 = vcombine.high %v720, %v720
      %v1330 = vunpack.c.l.s4 1966171168
      %v1331 = vunpack.c.0.s8 %v1330
      %v1332 = vlaneseq
      %v1333 = vshrl.u32 %v1332, 7
      %v1334 = vsub.s32 %v1331, %v1333
      %v1335 = vrot.slane %v720, %v1334
      %v1337 = vunpack.c.l.s4 1966171168
      %v1338 = vunpack.c.0.s8 %v1337
      %v1339 = vlaneseq
      %v1340 = vshrl.u32 %v1339, 7
      %v1341 = vsub.s32 %v1338, %v1340
      %v1342 = vrot.slane %v1328, %v1341
      %v1343 = vcombine.high %v1335, %v1335
      %v1344 = vcombine.high %v1342, %v1342
      %v1346 = vunpack.c.l.s4 1966171168
      %v1347 = vunpack.c.0.s8 %v1346
      %v1348 = vlaneseq
      %v1349 = vshrl.u32 %v1348, 7
      %v1350 = vsub.s32 %v1347, %v1349
      %v1351 = vrot.slane %v1335, %v1350
      %v1353 = vunpack.c.l.s4 1966171168
      %v1354 = vunpack.c.0.s8 %v1353
      %v1355 = vlaneseq
      %v1356 = vshrl.u32 %v1355, 7
      %v1357 = vsub.s32 %v1354, %v1356
      %v1358 = vrot.slane %v1342, %v1357
      %v1360 = vunpack.c.l.s4 1966171168
      %v1361 = vunpack.c.0.s8 %v1360
      %v1362 = vlaneseq
      %v1363 = vshrl.u32 %v1362, 7
      %v1364 = vsub.s32 %v1361, %v1363
      %v1365 = vrot.slane %v1343, %v1364
      %v1367 = vunpack.c.l.s4 1966171168
      %v1368 = vunpack.c.0.s8 %v1367
      %v1369 = vlaneseq
      %v1370 = vshrl.u32 %v1369, 7
      %v1371 = vsub.s32 %v1368, %v1370
      %v1372 = vrot.slane %v1344, %v1371
      %v1373 = vcombine.high %v1351, %v1351
      %v1374 = vcombine.high %v1358, %v1358
      %v1375 = vcombine.high %v1365, %v1365
      %v1376 = vcombine.high %v1372, %v1372
      %v1377 = vcombine.high %v721, %v721
      %v1379 = vunpack.c.l.s4 1966171168
      %v1380 = vunpack.c.0.s8 %v1379
      %v1381 = vlaneseq
      %v1382 = vshrl.u32 %v1381, 7
      %v1383 = vsub.s32 %v1380, %v1382
      %v1384 = vrot.slane %v721, %v1383
      %v1386 = vunpack.c.l.s4 1966171168
      %v1387 = vunpack.c.0.s8 %v1386
      %v1388 = vlaneseq
      %v1389 = vshrl.u32 %v1388, 7
      %v1390 = vsub.s32 %v1387, %v1389
      %v1391 = vrot.slane %v1377, %v1390
      %v1392 = vcombine.high %v1384, %v1384
      %v1393 = vcombine.high %v1391, %v1391
      %v1395 = vunpack.c.l.s4 1966171168
      %v1396 = vunpack.c.0.s8 %v1395
      %v1397 = vlaneseq
      %v1398 = vshrl.u32 %v1397, 7
      %v1399 = vsub.s32 %v1396, %v1398
      %v1400 = vrot.slane %v1384, %v1399
      %v1402 = vunpack.c.l.s4 1966171168
      %v1403 = vunpack.c.0.s8 %v1402
      %v1404 = vlaneseq
      %v1405 = vshrl.u32 %v1404, 7
      %v1406 = vsub.s32 %v1403, %v1405
      %v1407 = vrot.slane %v1391, %v1406
      %v1409 = vunpack.c.l.s4 1966171168
      %v1410 = vunpack.c.0.s8 %v1409
      %v1411 = vlaneseq
      %v1412 = vshrl.u32 %v1411, 7
      %v1413 = vsub.s32 %v1410, %v1412
      %v1414 = vrot.slane %v1392, %v1413
      %v1416 = vunpack.c.l.s4 1966171168
      %v1417 = vunpack.c.0.s8 %v1416
      %v1418 = vlaneseq
      %v1419 = vshrl.u32 %v1418, 7
      %v1420 = vsub.s32 %v1417, %v1419
      %v1421 = vrot.slane %v1393, %v1420
      %v1422 = vcombine.high %v1400, %v1400
      %v1423 = vcombine.high %v1407, %v1407
      %v1424 = vcombine.high %v1414, %v1414
      %v1425 = vcombine.high %v1421, %v1421
      %v1426 = vcombine.high %v722, %v722
      %v1428 = vunpack.c.l.s4 1966171168
      %v1429 = vunpack.c.0.s8 %v1428
      %v1430 = vlaneseq
      %v1431 = vshrl.u32 %v1430, 7
      %v1432 = vsub.s32 %v1429, %v1431
      %v1433 = vrot.slane %v722, %v1432
      %v1435 = vunpack.c.l.s4 1966171168
      %v1436 = vunpack.c.0.s8 %v1435
      %v1437 = vlaneseq
      %v1438 = vshrl.u32 %v1437, 7
      %v1439 = vsub.s32 %v1436, %v1438
      %v1440 = vrot.slane %v1426, %v1439
      %v1441 = vcombine.high %v1433, %v1433
      %v1442 = vcombine.high %v1440, %v1440
      %v1444 = vunpack.c.l.s4 1966171168
      %v1445 = vunpack.c.0.s8 %v1444
      %v1446 = vlaneseq
      %v1447 = vshrl.u32 %v1446, 7
      %v1448 = vsub.s32 %v1445, %v1447
      %v1449 = vrot.slane %v1433, %v1448
      %v1451 = vunpack.c.l.s4 1966171168
      %v1452 = vunpack.c.0.s8 %v1451
      %v1453 = vlaneseq
      %v1454 = vshrl.u32 %v1453, 7
      %v1455 = vsub.s32 %v1452, %v1454
      %v1456 = vrot.slane %v1440, %v1455
      %v1458 = vunpack.c.l.s4 1966171168
      %v1459 = vunpack.c.0.s8 %v1458
      %v1460 = vlaneseq
      %v1461 = vshrl.u32 %v1460, 7
      %v1462 = vsub.s32 %v1459, %v1461
      %v1463 = vrot.slane %v1441, %v1462
      %v1465 = vunpack.c.l.s4 1966171168
      %v1466 = vunpack.c.0.s8 %v1465
      %v1467 = vlaneseq
      %v1468 = vshrl.u32 %v1467, 7
      %v1469 = vsub.s32 %v1466, %v1468
      %v1470 = vrot.slane %v1442, %v1469
      %v1471 = vcombine.high %v1449, %v1449
      %v1472 = vcombine.high %v1456, %v1456
      %v1473 = vcombine.high %v1463, %v1463
      %v1474 = vcombine.high %v1470, %v1470
      %v1475 = vcombine.high %v723, %v723
      %v1477 = vunpack.c.l.s4 1966171168
      %v1478 = vunpack.c.0.s8 %v1477
      %v1479 = vlaneseq
      %v1480 = vshrl.u32 %v1479, 7
      %v1481 = vsub.s32 %v1478, %v1480
      %v1482 = vrot.slane %v723, %v1481
      %v1484 = vunpack.c.l.s4 1966171168
      %v1485 = vunpack.c.0.s8 %v1484
      %v1486 = vlaneseq
      %v1487 = vshrl.u32 %v1486, 7
      %v1488 = vsub.s32 %v1485, %v1487
      %v1489 = vrot.slane %v1475, %v1488
      %v1490 = vcombine.high %v1482, %v1482
      %v1491 = vcombine.high %v1489, %v1489
      %v1493 = vunpack.c.l.s4 1966171168
      %v1494 = vunpack.c.0.s8 %v1493
      %v1495 = vlaneseq
      %v1496 = vshrl.u32 %v1495, 7
      %v1497 = vsub.s32 %v1494, %v1496
      %v1498 = vrot.slane %v1482, %v1497
      %v1500 = vunpack.c.l.s4 1966171168
      %v1501 = vunpack.c.0.s8 %v1500
      %v1502 = vlaneseq
      %v1503 = vshrl.u32 %v1502, 7
      %v1504 = vsub.s32 %v1501, %v1503
      %v1505 = vrot.slane %v1489, %v1504
      %v1507 = vunpack.c.l.s4 1966171168
      %v1508 = vunpack.c.0.s8 %v1507
      %v1509 = vlaneseq
      %v1510 = vshrl.u32 %v1509, 7
      %v1511 = vsub.s32 %v1508, %v1510
      %v1512 = vrot.slane %v1490, %v1511
      %v1514 = vunpack.c.l.s4 1966171168
      %v1515 = vunpack.c.0.s8 %v1514
      %v1516 = vlaneseq
      %v1517 = vshrl.u32 %v1516, 7
      %v1518 = vsub.s32 %v1515, %v1517
      %v1519 = vrot.slane %v1491, %v1518
      %v1520 = vcombine.high %v1498, %v1498
      %v1521 = vcombine.high %v1505, %v1505
      %v1522 = vcombine.high %v1512, %v1512
      %v1523 = vcombine.high %v1519, %v1519
      %vm1524 = vcmask 516096
      %v1527 = vsel %vm1524, %v763, 4286644096
      %v1529 = vunpack.i.l.bf16 %v1527
      %v1530 = vunpack.i.h.bf16 %v1527
      %v1531 = vmax.f32 %v1529, %v1530
      %v1532 = vrot.slane %v1531, 4
      %v1533 = vmax.f32 %v1531, %v1532
      %v1534 = vrot.slane %v1533, 2
      %v1535 = vmax.f32 %v1533, %v1534
      %v1536 = vrot.slane %v1535, 1
      %v1537 = vmax.f32 %v1535, %v1536
      %v1538 = vpack.i.bf16 %v1537, %v1537
      %v1540 = vsel %vm1524, %v777, 4286644096
      %v1542 = vunpack.i.l.bf16 %v1540
      %v1543 = vunpack.i.h.bf16 %v1540
      %v1544 = vmax.f32 %v1542, %v1543
      %v1545 = vrot.slane %v1544, 4
      %v1546 = vmax.f32 %v1544, %v1545
      %v1547 = vrot.slane %v1546, 2
      %v1548 = vmax.f32 %v1546, %v1547
      %v1549 = vrot.slane %v1548, 1
      %v1550 = vmax.f32 %v1548, %v1549
      %v1551 = vpack.i.bf16 %v1550, %v1550
      %v1553 = vsel %vm1524, %v785, 4286644096
      %v1555 = vunpack.i.l.bf16 %v1553
      %v1556 = vunpack.i.h.bf16 %v1553
      %v1557 = vmax.f32 %v1555, %v1556
      %v1558 = vrot.slane %v1557, 4
      %v1559 = vmax.f32 %v1557, %v1558
      %v1560 = vrot.slane %v1559, 2
      %v1561 = vmax.f32 %v1559, %v1560
      %v1562 = vrot.slane %v1561, 1
      %v1563 = vmax.f32 %v1561, %v1562
      %v1564 = vpack.i.bf16 %v1563, %v1563
      %v1566 = vsel %vm1524, %v787, 4286644096
      %v1568 = vunpack.i.l.bf16 %v1566
      %v1569 = vunpack.i.h.bf16 %v1566
      %v1570 = vmax.f32 %v1568, %v1569
      %v1571 = vrot.slane %v1570, 4
      %v1572 = vmax.f32 %v1570, %v1571
      %v1573 = vrot.slane %v1572, 2
      %v1574 = vmax.f32 %v1572, %v1573
      %v1575 = vrot.slane %v1574, 1
      %v1576 = vmax.f32 %v1574, %v1575
      %v1577 = vpack.i.bf16 %v1576, %v1576
      %v1579 = vsel %vm1524, %v770, 4286644096
      %v1581 = vunpack.i.l.bf16 %v1579
      %v1582 = vunpack.i.h.bf16 %v1579
      %v1583 = vmax.f32 %v1581, %v1582
      %v1584 = vrot.slane %v1583, 4
      %v1585 = vmax.f32 %v1583, %v1584
      %v1586 = vrot.slane %v1585, 2
      %v1587 = vmax.f32 %v1585, %v1586
      %v1588 = vrot.slane %v1587, 1
      %v1589 = vmax.f32 %v1587, %v1588
      %v1590 = vpack.i.bf16 %v1589, %v1589
      %v1592 = vsel %vm1524, %v784, 4286644096
      %v1594 = vunpack.i.l.bf16 %v1592
      %v1595 = vunpack.i.h.bf16 %v1592
      %v1596 = vmax.f32 %v1594, %v1595
      %v1597 = vrot.slane %v1596, 4
      %v1598 = vmax.f32 %v1596, %v1597
      %v1599 = vrot.slane %v1598, 2
      %v1600 = vmax.f32 %v1598, %v1599
      %v1601 = vrot.slane %v1600, 1
      %v1602 = vmax.f32 %v1600, %v1601
      %v1603 = vpack.i.bf16 %v1602, %v1602
      %v1605 = vsel %vm1524, %v786, 4286644096
      %v1607 = vunpack.i.l.bf16 %v1605
      %v1608 = vunpack.i.h.bf16 %v1605
      %v1609 = vmax.f32 %v1607, %v1608
      %v1610 = vrot.slane %v1609, 4
      %v1611 = vmax.f32 %v1609, %v1610
      %v1612 = vrot.slane %v1611, 2
      %v1613 = vmax.f32 %v1611, %v1612
      %v1614 = vrot.slane %v1613, 1
      %v1615 = vmax.f32 %v1613, %v1614
      %v1616 = vpack.i.bf16 %v1615, %v1615
      %v1618 = vsel %vm1524, %v788, 4286644096
      %v1620 = vunpack.i.l.bf16 %v1618
      %v1621 = vunpack.i.h.bf16 %v1618
      %v1622 = vmax.f32 %v1620, %v1621
      %v1623 = vrot.slane %v1622, 4
      %v1624 = vmax.f32 %v1622, %v1623
      %v1625 = vrot.slane %v1624, 2
      %v1626 = vmax.f32 %v1624, %v1625
      %v1627 = vrot.slane %v1626, 1
      %v1628 = vmax.f32 %v1626, %v1627
      %v1629 = vpack.i.bf16 %v1628, %v1628
      %v1631 = vsel %vm1524, %v812, 4286644096
      %v1633 = vunpack.i.l.bf16 %v1631
      %v1634 = vunpack.i.h.bf16 %v1631
      %v1635 = vmax.f32 %v1633, %v1634
      %v1636 = vrot.slane %v1635, 4
      %v1637 = vmax.f32 %v1635, %v1636
      %v1638 = vrot.slane %v1637, 2
      %v1639 = vmax.f32 %v1637, %v1638
      %v1640 = vrot.slane %v1639, 1
      %v1641 = vmax.f32 %v1639, %v1640
      %v1642 = vpack.i.bf16 %v1641, %v1641
      %v1644 = vsel %vm1524, %v826, 4286644096
      %v1646 = vunpack.i.l.bf16 %v1644
      %v1647 = vunpack.i.h.bf16 %v1644
      %v1648 = vmax.f32 %v1646, %v1647
      %v1649 = vrot.slane %v1648, 4
      %v1650 = vmax.f32 %v1648, %v1649
      %v1651 = vrot.slane %v1650, 2
      %v1652 = vmax.f32 %v1650, %v1651
      %v1653 = vrot.slane %v1652, 1
      %v1654 = vmax.f32 %v1652, %v1653
      %v1655 = vpack.i.bf16 %v1654, %v1654
      %v1657 = vsel %vm1524, %v834, 4286644096
      %v1659 = vunpack.i.l.bf16 %v1657
      %v1660 = vunpack.i.h.bf16 %v1657
      %v1661 = vmax.f32 %v1659, %v1660
      %v1662 = vrot.slane %v1661, 4
      %v1663 = vmax.f32 %v1661, %v1662
      %v1664 = vrot.slane %v1663, 2
      %v1665 = vmax.f32 %v1663, %v1664
      %v1666 = vrot.slane %v1665, 1
      %v1667 = vmax.f32 %v1665, %v1666
      %v1668 = vpack.i.bf16 %v1667, %v1667
      %v1670 = vsel %vm1524, %v836, 4286644096
      %v1672 = vunpack.i.l.bf16 %v1670
      %v1673 = vunpack.i.h.bf16 %v1670
      %v1674 = vmax.f32 %v1672, %v1673
      %v1675 = vrot.slane %v1674, 4
      %v1676 = vmax.f32 %v1674, %v1675
      %v1677 = vrot.slane %v1676, 2
      %v1678 = vmax.f32 %v1676, %v1677
      %v1679 = vrot.slane %v1678, 1
      %v1680 = vmax.f32 %v1678, %v1679
      %v1681 = vpack.i.bf16 %v1680, %v1680
      %v1683 = vsel %vm1524, %v819, 4286644096
      %v1685 = vunpack.i.l.bf16 %v1683
      %v1686 = vunpack.i.h.bf16 %v1683
      %v1687 = vmax.f32 %v1685, %v1686
      %v1688 = vrot.slane %v1687, 4
      %v1689 = vmax.f32 %v1687, %v1688
      %v1690 = vrot.slane %v1689, 2
      %v1691 = vmax.f32 %v1689, %v1690
      %v1692 = vrot.slane %v1691, 1
      %v1693 = vmax.f32 %v1691, %v1692
      %v1694 = vpack.i.bf16 %v1693, %v1693
      %v1696 = vsel %vm1524, %v833, 4286644096
      %v1698 = vunpack.i.l.bf16 %v1696
      %v1699 = vunpack.i.h.bf16 %v1696
      %v1700 = vmax.f32 %v1698, %v1699
      %v1701 = vrot.slane %v1700, 4
      %v1702 = vmax.f32 %v1700, %v1701
      %v1703 = vrot.slane %v1702, 2
      %v1704 = vmax.f32 %v1702, %v1703
      %v1705 = vrot.slane %v1704, 1
      %v1706 = vmax.f32 %v1704, %v1705
      %v1707 = vpack.i.bf16 %v1706, %v1706
      %v1709 = vsel %vm1524, %v835, 4286644096
      %v1711 = vunpack.i.l.bf16 %v1709
      %v1712 = vunpack.i.h.bf16 %v1709
      %v1713 = vmax.f32 %v1711, %v1712
      %v1714 = vrot.slane %v1713, 4
      %v1715 = vmax.f32 %v1713, %v1714
      %v1716 = vrot.slane %v1715, 2
      %v1717 = vmax.f32 %v1715, %v1716
      %v1718 = vrot.slane %v1717, 1
      %v1719 = vmax.f32 %v1717, %v1718
      %v1720 = vpack.i.bf16 %v1719, %v1719
      %v1722 = vsel %vm1524, %v837, 4286644096
      %v1724 = vunpack.i.l.bf16 %v1722
      %v1725 = vunpack.i.h.bf16 %v1722
      %v1726 = vmax.f32 %v1724, %v1725
      %v1727 = vrot.slane %v1726, 4
      %v1728 = vmax.f32 %v1726, %v1727
      %v1729 = vrot.slane %v1728, 2
      %v1730 = vmax.f32 %v1728, %v1729
      %v1731 = vrot.slane %v1730, 1
      %v1732 = vmax.f32 %v1730, %v1731
      %v1733 = vpack.i.bf16 %v1732, %v1732
      %v1735 = vsel %vm1524, %v861, 4286644096
      %v1737 = vunpack.i.l.bf16 %v1735
      %v1738 = vunpack.i.h.bf16 %v1735
      %v1739 = vmax.f32 %v1737, %v1738
      %v1740 = vrot.slane %v1739, 4
      %v1741 = vmax.f32 %v1739, %v1740
      %v1742 = vrot.slane %v1741, 2
      %v1743 = vmax.f32 %v1741, %v1742
      %v1744 = vrot.slane %v1743, 1
      %v1745 = vmax.f32 %v1743, %v1744
      %v1746 = vpack.i.bf16 %v1745, %v1745
      %v1748 = vsel %vm1524, %v875, 4286644096
      %v1750 = vunpack.i.l.bf16 %v1748
      %v1751 = vunpack.i.h.bf16 %v1748
      %v1752 = vmax.f32 %v1750, %v1751
      %v1753 = vrot.slane %v1752, 4
      %v1754 = vmax.f32 %v1752, %v1753
      %v1755 = vrot.slane %v1754, 2
      %v1756 = vmax.f32 %v1754, %v1755
      %v1757 = vrot.slane %v1756, 1
      %v1758 = vmax.f32 %v1756, %v1757
      %v1759 = vpack.i.bf16 %v1758, %v1758
      %v1761 = vsel %vm1524, %v883, 4286644096
      %v1763 = vunpack.i.l.bf16 %v1761
      %v1764 = vunpack.i.h.bf16 %v1761
      %v1765 = vmax.f32 %v1763, %v1764
      %v1766 = vrot.slane %v1765, 4
      %v1767 = vmax.f32 %v1765, %v1766
      %v1768 = vrot.slane %v1767, 2
      %v1769 = vmax.f32 %v1767, %v1768
      %v1770 = vrot.slane %v1769, 1
      %v1771 = vmax.f32 %v1769, %v1770
      %v1772 = vpack.i.bf16 %v1771, %v1771
      %v1774 = vsel %vm1524, %v885, 4286644096
      %v1776 = vunpack.i.l.bf16 %v1774
      %v1777 = vunpack.i.h.bf16 %v1774
      %v1778 = vmax.f32 %v1776, %v1777
      %v1779 = vrot.slane %v1778, 4
      %v1780 = vmax.f32 %v1778, %v1779
      %v1781 = vrot.slane %v1780, 2
      %v1782 = vmax.f32 %v1780, %v1781
      %v1783 = vrot.slane %v1782, 1
      %v1784 = vmax.f32 %v1782, %v1783
      %v1785 = vpack.i.bf16 %v1784, %v1784
      %v1787 = vsel %vm1524, %v868, 4286644096
      %v1789 = vunpack.i.l.bf16 %v1787
      %v1790 = vunpack.i.h.bf16 %v1787
      %v1791 = vmax.f32 %v1789, %v1790
      %v1792 = vrot.slane %v1791, 4
      %v1793 = vmax.f32 %v1791, %v1792
      %v1794 = vrot.slane %v1793, 2
      %v1795 = vmax.f32 %v1793, %v1794
      %v1796 = vrot.slane %v1795, 1
      %v1797 = vmax.f32 %v1795, %v1796
      %v1798 = vpack.i.bf16 %v1797, %v1797
      %v1800 = vsel %vm1524, %v882, 4286644096
      %v1802 = vunpack.i.l.bf16 %v1800
      %v1803 = vunpack.i.h.bf16 %v1800
      %v1804 = vmax.f32 %v1802, %v1803
      %v1805 = vrot.slane %v1804, 4
      %v1806 = vmax.f32 %v1804, %v1805
      %v1807 = vrot.slane %v1806, 2
      %v1808 = vmax.f32 %v1806, %v1807
      %v1809 = vrot.slane %v1808, 1
      %v1810 = vmax.f32 %v1808, %v1809
      %v1811 = vpack.i.bf16 %v1810, %v1810
      %v1813 = vsel %vm1524, %v884, 4286644096
      %v1815 = vunpack.i.l.bf16 %v1813
      %v1816 = vunpack.i.h.bf16 %v1813
      %v1817 = vmax.f32 %v1815, %v1816
      %v1818 = vrot.slane %v1817, 4
      %v1819 = vmax.f32 %v1817, %v1818
      %v1820 = vrot.slane %v1819, 2
      %v1821 = vmax.f32 %v1819, %v1820
      %v1822 = vrot.slane %v1821, 1
      %v1823 = vmax.f32 %v1821, %v1822
      %v1824 = vpack.i.bf16 %v1823, %v1823
      %v1826 = vsel %vm1524, %v886, 4286644096
      %v1828 = vunpack.i.l.bf16 %v1826
      %v1829 = vunpack.i.h.bf16 %v1826
      %v1830 = vmax.f32 %v1828, %v1829
      %v1831 = vrot.slane %v1830, 4
      %v1832 = vmax.f32 %v1830, %v1831
      %v1833 = vrot.slane %v1832, 2
      %v1834 = vmax.f32 %v1832, %v1833
      %v1835 = vrot.slane %v1834, 1
      %v1836 = vmax.f32 %v1834, %v1835
      %v1837 = vpack.i.bf16 %v1836, %v1836
      %v1839 = vsel %vm1524, %v910, 4286644096
      %v1841 = vunpack.i.l.bf16 %v1839
      %v1842 = vunpack.i.h.bf16 %v1839
      %v1843 = vmax.f32 %v1841, %v1842
      %v1844 = vrot.slane %v1843, 4
      %v1845 = vmax.f32 %v1843, %v1844
      %v1846 = vrot.slane %v1845, 2
      %v1847 = vmax.f32 %v1845, %v1846
      %v1848 = vrot.slane %v1847, 1
      %v1849 = vmax.f32 %v1847, %v1848
      %v1850 = vpack.i.bf16 %v1849, %v1849
      %v1852 = vsel %vm1524, %v924, 4286644096
      %v1854 = vunpack.i.l.bf16 %v1852
      %v1855 = vunpack.i.h.bf16 %v1852
      %v1856 = vmax.f32 %v1854, %v1855
      %v1857 = vrot.slane %v1856, 4
      %v1858 = vmax.f32 %v1856, %v1857
      %v1859 = vrot.slane %v1858, 2
      %v1860 = vmax.f32 %v1858, %v1859
      %v1861 = vrot.slane %v1860, 1
      %v1862 = vmax.f32 %v1860, %v1861
      %v1863 = vpack.i.bf16 %v1862, %v1862
      %v1865 = vsel %vm1524, %v932, 4286644096
      %v1867 = vunpack.i.l.bf16 %v1865
      %v1868 = vunpack.i.h.bf16 %v1865
      %v1869 = vmax.f32 %v1867, %v1868
      %v1870 = vrot.slane %v1869, 4
      %v1871 = vmax.f32 %v1869, %v1870
      %v1872 = vrot.slane %v1871, 2
      %v1873 = vmax.f32 %v1871, %v1872
      %v1874 = vrot.slane %v1873, 1
      %v1875 = vmax.f32 %v1873, %v1874
      %v1876 = vpack.i.bf16 %v1875, %v1875
      %v1878 = vsel %vm1524, %v934, 4286644096
      %v1880 = vunpack.i.l.bf16 %v1878
      %v1881 = vunpack.i.h.bf16 %v1878
      %v1882 = vmax.f32 %v1880, %v1881
      %v1883 = vrot.slane %v1882, 4
      %v1884 = vmax.f32 %v1882, %v1883
      %v1885 = vrot.slane %v1884, 2
      %v1886 = vmax.f32 %v1884, %v1885
      %v1887 = vrot.slane %v1886, 1
      %v1888 = vmax.f32 %v1886, %v1887
      %v1889 = vpack.i.bf16 %v1888, %v1888
      %v1891 = vsel %vm1524, %v917, 4286644096
      %v1893 = vunpack.i.l.bf16 %v1891
      %v1894 = vunpack.i.h.bf16 %v1891
      %v1895 = vmax.f32 %v1893, %v1894
      %v1896 = vrot.slane %v1895, 4
      %v1897 = vmax.f32 %v1895, %v1896
      %v1898 = vrot.slane %v1897, 2
      %v1899 = vmax.f32 %v1897, %v1898
      %v1900 = vrot.slane %v1899, 1
      %v1901 = vmax.f32 %v1899, %v1900
      %v1902 = vpack.i.bf16 %v1901, %v1901
      %v1904 = vsel %vm1524, %v931, 4286644096
      %v1906 = vunpack.i.l.bf16 %v1904
      %v1907 = vunpack.i.h.bf16 %v1904
      %v1908 = vmax.f32 %v1906, %v1907
      %v1909 = vrot.slane %v1908, 4
      %v1910 = vmax.f32 %v1908, %v1909
      %v1911 = vrot.slane %v1910, 2
      %v1912 = vmax.f32 %v1910, %v1911
      %v1913 = vrot.slane %v1912, 1
      %v1914 = vmax.f32 %v1912, %v1913
      %v1915 = vpack.i.bf16 %v1914, %v1914
      %v1917 = vsel %vm1524, %v933, 4286644096
      %v1919 = vunpack.i.l.bf16 %v1917
      %v1920 = vunpack.i.h.bf16 %v1917
      %v1921 = vmax.f32 %v1919, %v1920
      %v1922 = vrot.slane %v1921, 4
      %v1923 = vmax.f32 %v1921, %v1922
      %v1924 = vrot.slane %v1923, 2
      %v1925 = vmax.f32 %v1923, %v1924
      %v1926 = vrot.slane %v1925, 1
      %v1927 = vmax.f32 %v1925, %v1926
      %v1928 = vpack.i.bf16 %v1927, %v1927
      %v1930 = vsel %vm1524, %v935, 4286644096
      %v1932 = vunpack.i.l.bf16 %v1930
      %v1933 = vunpack.i.h.bf16 %v1930
      %v1934 = vmax.f32 %v1932, %v1933
      %v1935 = vrot.slane %v1934, 4
      %v1936 = vmax.f32 %v1934, %v1935
      %v1937 = vrot.slane %v1936, 2
      %v1938 = vmax.f32 %v1936, %v1937
      %v1939 = vrot.slane %v1938, 1
      %v1940 = vmax.f32 %v1938, %v1939
      %v1941 = vpack.i.bf16 %v1940, %v1940
      %v1943 = vsel %vm1524, %v959, 4286644096
      %v1945 = vunpack.i.l.bf16 %v1943
      %v1946 = vunpack.i.h.bf16 %v1943
      %v1947 = vmax.f32 %v1945, %v1946
      %v1948 = vrot.slane %v1947, 4
      %v1949 = vmax.f32 %v1947, %v1948
      %v1950 = vrot.slane %v1949, 2
      %v1951 = vmax.f32 %v1949, %v1950
      %v1952 = vrot.slane %v1951, 1
      %v1953 = vmax.f32 %v1951, %v1952
      %v1954 = vpack.i.bf16 %v1953, %v1953
      %v1956 = vsel %vm1524, %v973, 4286644096
      %v1958 = vunpack.i.l.bf16 %v1956
      %v1959 = vunpack.i.h.bf16 %v1956
      %v1960 = vmax.f32 %v1958, %v1959
      %v1961 = vrot.slane %v1960, 4
      %v1962 = vmax.f32 %v1960, %v1961
      %v1963 = vrot.slane %v1962, 2
      %v1964 = vmax.f32 %v1962, %v1963
      %v1965 = vrot.slane %v1964, 1
      %v1966 = vmax.f32 %v1964, %v1965
      %v1967 = vpack.i.bf16 %v1966, %v1966
      %v1969 = vsel %vm1524, %v981, 4286644096
      %v1971 = vunpack.i.l.bf16 %v1969
      %v1972 = vunpack.i.h.bf16 %v1969
      %v1973 = vmax.f32 %v1971, %v1972
      %v1974 = vrot.slane %v1973, 4
      %v1975 = vmax.f32 %v1973, %v1974
      %v1976 = vrot.slane %v1975, 2
      %v1977 = vmax.f32 %v1975, %v1976
      %v1978 = vrot.slane %v1977, 1
      %v1979 = vmax.f32 %v1977, %v1978
      %v1980 = vpack.i.bf16 %v1979, %v1979
      %v1982 = vsel %vm1524, %v983, 4286644096
      %v1984 = vunpack.i.l.bf16 %v1982
      %v1985 = vunpack.i.h.bf16 %v1982
      %v1986 = vmax.f32 %v1984, %v1985
      %v1987 = vrot.slane %v1986, 4
      %v1988 = vmax.f32 %v1986, %v1987
      %v1989 = vrot.slane %v1988, 2
      %v1990 = vmax.f32 %v1988, %v1989
      %v1991 = vrot.slane %v1990, 1
      %v1992 = vmax.f32 %v1990, %v1991
      %v1993 = vpack.i.bf16 %v1992, %v1992
      %v1995 = vsel %vm1524, %v966, 4286644096
      %v1997 = vunpack.i.l.bf16 %v1995
      %v1998 = vunpack.i.h.bf16 %v1995
      %v1999 = vmax.f32 %v1997, %v1998
      %v2000 = vrot.slane %v1999, 4
      %v2001 = vmax.f32 %v1999, %v2000
      %v2002 = vrot.slane %v2001, 2
      %v2003 = vmax.f32 %v2001, %v2002
      %v2004 = vrot.slane %v2003, 1
      %v2005 = vmax.f32 %v2003, %v2004
      %v2006 = vpack.i.bf16 %v2005, %v2005
      %v2008 = vsel %vm1524, %v980, 4286644096
      %v2010 = vunpack.i.l.bf16 %v2008
      %v2011 = vunpack.i.h.bf16 %v2008
      %v2012 = vmax.f32 %v2010, %v2011
      %v2013 = vrot.slane %v2012, 4
      %v2014 = vmax.f32 %v2012, %v2013
      %v2015 = vrot.slane %v2014, 2
      %v2016 = vmax.f32 %v2014, %v2015
      %v2017 = vrot.slane %v2016, 1
      %v2018 = vmax.f32 %v2016, %v2017
      %v2019 = vpack.i.bf16 %v2018, %v2018
      %v2021 = vsel %vm1524, %v982, 4286644096
      %v2023 = vunpack.i.l.bf16 %v2021
      %v2024 = vunpack.i.h.bf16 %v2021
      %v2025 = vmax.f32 %v2023, %v2024
      %v2026 = vrot.slane %v2025, 4
      %v2027 = vmax.f32 %v2025, %v2026
      %v2028 = vrot.slane %v2027, 2
      %v2029 = vmax.f32 %v2027, %v2028
      %v2030 = vrot.slane %v2029, 1
      %v2031 = vmax.f32 %v2029, %v2030
      %v2032 = vpack.i.bf16 %v2031, %v2031
      %v2034 = vsel %vm1524, %v984, 4286644096
      %v2036 = vunpack.i.l.bf16 %v2034
      %v2037 = vunpack.i.h.bf16 %v2034
      %v2038 = vmax.f32 %v2036, %v2037
      %v2039 = vrot.slane %v2038, 4
      %v2040 = vmax.f32 %v2038, %v2039
      %v2041 = vrot.slane %v2040, 2
      %v2042 = vmax.f32 %v2040, %v2041
      %v2043 = vrot.slane %v2042, 1
      %v2044 = vmax.f32 %v2042, %v2043
      %v2045 = vpack.i.bf16 %v2044, %v2044
      %v2047 = vsel %vm1524, %v1008, 4286644096
      %v2049 = vunpack.i.l.bf16 %v2047
      %v2050 = vunpack.i.h.bf16 %v2047
      %v2051 = vmax.f32 %v2049, %v2050
      %v2052 = vrot.slane %v2051, 4
      %v2053 = vmax.f32 %v2051, %v2052
      %v2054 = vrot.slane %v2053, 2
      %v2055 = vmax.f32 %v2053, %v2054
      %v2056 = vrot.slane %v2055, 1
      %v2057 = vmax.f32 %v2055, %v2056
      %v2058 = vpack.i.bf16 %v2057, %v2057
      %v2060 = vsel %vm1524, %v1022, 4286644096
      %v2062 = vunpack.i.l.bf16 %v2060
      %v2063 = vunpack.i.h.bf16 %v2060
      %v2064 = vmax.f32 %v2062, %v2063
      %v2065 = vrot.slane %v2064, 4
      %v2066 = vmax.f32 %v2064, %v2065
      %v2067 = vrot.slane %v2066, 2
      %v2068 = vmax.f32 %v2066, %v2067
      %v2069 = vrot.slane %v2068, 1
      %v2070 = vmax.f32 %v2068, %v2069
      %v2071 = vpack.i.bf16 %v2070, %v2070
      %v2073 = vsel %vm1524, %v1030, 4286644096
      %v2075 = vunpack.i.l.bf16 %v2073
      %v2076 = vunpack.i.h.bf16 %v2073
      %v2077 = vmax.f32 %v2075, %v2076
      %v2078 = vrot.slane %v2077, 4
      %v2079 = vmax.f32 %v2077, %v2078
      %v2080 = vrot.slane %v2079, 2
      %v2081 = vmax.f32 %v2079, %v2080
      %v2082 = vrot.slane %v2081, 1
      %v2083 = vmax.f32 %v2081, %v2082
      %v2084 = vpack.i.bf16 %v2083, %v2083
      %v2086 = vsel %vm1524, %v1032, 4286644096
      %v2088 = vunpack.i.l.bf16 %v2086
      %v2089 = vunpack.i.h.bf16 %v2086
      %v2090 = vmax.f32 %v2088, %v2089
      %v2091 = vrot.slane %v2090, 4
      %v2092 = vmax.f32 %v2090, %v2091
      %v2093 = vrot.slane %v2092, 2
      %v2094 = vmax.f32 %v2092, %v2093
      %v2095 = vrot.slane %v2094, 1
      %v2096 = vmax.f32 %v2094, %v2095
      %v2097 = vpack.i.bf16 %v2096, %v2096
      %v2099 = vsel %vm1524, %v1015, 4286644096
      %v2101 = vunpack.i.l.bf16 %v2099
      %v2102 = vunpack.i.h.bf16 %v2099
      %v2103 = vmax.f32 %v2101, %v2102
      %v2104 = vrot.slane %v2103, 4
      %v2105 = vmax.f32 %v2103, %v2104
      %v2106 = vrot.slane %v2105, 2
      %v2107 = vmax.f32 %v2105, %v2106
      %v2108 = vrot.slane %v2107, 1
      %v2109 = vmax.f32 %v2107, %v2108
      %v2110 = vpack.i.bf16 %v2109, %v2109
      %v2112 = vsel %vm1524, %v1029, 4286644096
      %v2114 = vunpack.i.l.bf16 %v2112
      %v2115 = vunpack.i.h.bf16 %v2112
      %v2116 = vmax.f32 %v2114, %v2115
      %v2117 = vrot.slane %v2116, 4
      %v2118 = vmax.f32 %v2116, %v2117
      %v2119 = vrot.slane %v2118, 2
      %v2120 = vmax.f32 %v2118, %v2119
      %v2121 = vrot.slane %v2120, 1
      %v2122 = vmax.f32 %v2120, %v2121
      %v2123 = vpack.i.bf16 %v2122, %v2122
      %v2125 = vsel %vm1524, %v1031, 4286644096
      %v2127 = vunpack.i.l.bf16 %v2125
      %v2128 = vunpack.i.h.bf16 %v2125
      %v2129 = vmax.f32 %v2127, %v2128
      %v2130 = vrot.slane %v2129, 4
      %v2131 = vmax.f32 %v2129, %v2130
      %v2132 = vrot.slane %v2131, 2
      %v2133 = vmax.f32 %v2131, %v2132
      %v2134 = vrot.slane %v2133, 1
      %v2135 = vmax.f32 %v2133, %v2134
      %v2136 = vpack.i.bf16 %v2135, %v2135
      %v2138 = vsel %vm1524, %v1033, 4286644096
      %v2140 = vunpack.i.l.bf16 %v2138
      %v2141 = vunpack.i.h.bf16 %v2138
      %v2142 = vmax.f32 %v2140, %v2141
      %v2143 = vrot.slane %v2142, 4
      %v2144 = vmax.f32 %v2142, %v2143
      %v2145 = vrot.slane %v2144, 2
      %v2146 = vmax.f32 %v2144, %v2145
      %v2147 = vrot.slane %v2146, 1
      %v2148 = vmax.f32 %v2146, %v2147
      %v2149 = vpack.i.bf16 %v2148, %v2148
      %v2151 = vsel %vm1524, %v1057, 4286644096
      %v2153 = vunpack.i.l.bf16 %v2151
      %v2154 = vunpack.i.h.bf16 %v2151
      %v2155 = vmax.f32 %v2153, %v2154
      %v2156 = vrot.slane %v2155, 4
      %v2157 = vmax.f32 %v2155, %v2156
      %v2158 = vrot.slane %v2157, 2
      %v2159 = vmax.f32 %v2157, %v2158
      %v2160 = vrot.slane %v2159, 1
      %v2161 = vmax.f32 %v2159, %v2160
      %v2162 = vpack.i.bf16 %v2161, %v2161
      %v2164 = vsel %vm1524, %v1071, 4286644096
      %v2166 = vunpack.i.l.bf16 %v2164
      %v2167 = vunpack.i.h.bf16 %v2164
      %v2168 = vmax.f32 %v2166, %v2167
      %v2169 = vrot.slane %v2168, 4
      %v2170 = vmax.f32 %v2168, %v2169
      %v2171 = vrot.slane %v2170, 2
      %v2172 = vmax.f32 %v2170, %v2171
      %v2173 = vrot.slane %v2172, 1
      %v2174 = vmax.f32 %v2172, %v2173
      %v2175 = vpack.i.bf16 %v2174, %v2174
      %v2177 = vsel %vm1524, %v1079, 4286644096
      %v2179 = vunpack.i.l.bf16 %v2177
      %v2180 = vunpack.i.h.bf16 %v2177
      %v2181 = vmax.f32 %v2179, %v2180
      %v2182 = vrot.slane %v2181, 4
      %v2183 = vmax.f32 %v2181, %v2182
      %v2184 = vrot.slane %v2183, 2
      %v2185 = vmax.f32 %v2183, %v2184
      %v2186 = vrot.slane %v2185, 1
      %v2187 = vmax.f32 %v2185, %v2186
      %v2188 = vpack.i.bf16 %v2187, %v2187
      %v2190 = vsel %vm1524, %v1081, 4286644096
      %v2192 = vunpack.i.l.bf16 %v2190
      %v2193 = vunpack.i.h.bf16 %v2190
      %v2194 = vmax.f32 %v2192, %v2193
      %v2195 = vrot.slane %v2194, 4
      %v2196 = vmax.f32 %v2194, %v2195
      %v2197 = vrot.slane %v2196, 2
      %v2198 = vmax.f32 %v2196, %v2197
      %v2199 = vrot.slane %v2198, 1
      %v2200 = vmax.f32 %v2198, %v2199
      %v2201 = vpack.i.bf16 %v2200, %v2200
      %v2203 = vsel %vm1524, %v1064, 4286644096
      %v2205 = vunpack.i.l.bf16 %v2203
      %v2206 = vunpack.i.h.bf16 %v2203
      %v2207 = vmax.f32 %v2205, %v2206
      %v2208 = vrot.slane %v2207, 4
      %v2209 = vmax.f32 %v2207, %v2208
      %v2210 = vrot.slane %v2209, 2
      %v2211 = vmax.f32 %v2209, %v2210
      %v2212 = vrot.slane %v2211, 1
      %v2213 = vmax.f32 %v2211, %v2212
      %v2214 = vpack.i.bf16 %v2213, %v2213
      %v2216 = vsel %vm1524, %v1078, 4286644096
      %v2218 = vunpack.i.l.bf16 %v2216
      %v2219 = vunpack.i.h.bf16 %v2216
      %v2220 = vmax.f32 %v2218, %v2219
      %v2221 = vrot.slane %v2220, 4
      %v2222 = vmax.f32 %v2220, %v2221
      %v2223 = vrot.slane %v2222, 2
      %v2224 = vmax.f32 %v2222, %v2223
      %v2225 = vrot.slane %v2224, 1
      %v2226 = vmax.f32 %v2224, %v2225
      %v2227 = vpack.i.bf16 %v2226, %v2226
      %v2229 = vsel %vm1524, %v1080, 4286644096
      %v2231 = vunpack.i.l.bf16 %v2229
      %v2232 = vunpack.i.h.bf16 %v2229
      %v2233 = vmax.f32 %v2231, %v2232
      %v2234 = vrot.slane %v2233, 4
      %v2235 = vmax.f32 %v2233, %v2234
      %v2236 = vrot.slane %v2235, 2
      %v2237 = vmax.f32 %v2235, %v2236
      %v2238 = vrot.slane %v2237, 1
      %v2239 = vmax.f32 %v2237, %v2238
      %v2240 = vpack.i.bf16 %v2239, %v2239
      %v2242 = vsel %vm1524, %v1082, 4286644096
      %v2244 = vunpack.i.l.bf16 %v2242
      %v2245 = vunpack.i.h.bf16 %v2242
      %v2246 = vmax.f32 %v2244, %v2245
      %v2247 = vrot.slane %v2246, 4
      %v2248 = vmax.f32 %v2246, %v2247
      %v2249 = vrot.slane %v2248, 2
      %v2250 = vmax.f32 %v2248, %v2249
      %v2251 = vrot.slane %v2250, 1
      %v2252 = vmax.f32 %v2250, %v2251
      %v2253 = vpack.i.bf16 %v2252, %v2252
      %v2255 = vsel %vm1524, %v1106, 4286644096
      %v2257 = vunpack.i.l.bf16 %v2255
      %v2258 = vunpack.i.h.bf16 %v2255
      %v2259 = vmax.f32 %v2257, %v2258
      %v2260 = vrot.slane %v2259, 4
      %v2261 = vmax.f32 %v2259, %v2260
      %v2262 = vrot.slane %v2261, 2
      %v2263 = vmax.f32 %v2261, %v2262
      %v2264 = vrot.slane %v2263, 1
      %v2265 = vmax.f32 %v2263, %v2264
      %v2266 = vpack.i.bf16 %v2265, %v2265
      %v2268 = vsel %vm1524, %v1120, 4286644096
      %v2270 = vunpack.i.l.bf16 %v2268
      %v2271 = vunpack.i.h.bf16 %v2268
      %v2272 = vmax.f32 %v2270, %v2271
      %v2273 = vrot.slane %v2272, 4
      %v2274 = vmax.f32 %v2272, %v2273
      %v2275 = vrot.slane %v2274, 2
      %v2276 = vmax.f32 %v2274, %v2275
      %v2277 = vrot.slane %v2276, 1
      %v2278 = vmax.f32 %v2276, %v2277
      %v2279 = vpack.i.bf16 %v2278, %v2278
      %v2281 = vsel %vm1524, %v1128, 4286644096
      %v2283 = vunpack.i.l.bf16 %v2281
      %v2284 = vunpack.i.h.bf16 %v2281
      %v2285 = vmax.f32 %v2283, %v2284
      %v2286 = vrot.slane %v2285, 4
      %v2287 = vmax.f32 %v2285, %v2286
      %v2288 = vrot.slane %v2287, 2
      %v2289 = vmax.f32 %v2287, %v2288
      %v2290 = vrot.slane %v2289, 1
      %v2291 = vmax.f32 %v2289, %v2290
      %v2292 = vpack.i.bf16 %v2291, %v2291
      %v2294 = vsel %vm1524, %v1130, 4286644096
      %v2296 = vunpack.i.l.bf16 %v2294
      %v2297 = vunpack.i.h.bf16 %v2294
      %v2298 = vmax.f32 %v2296, %v2297
      %v2299 = vrot.slane %v2298, 4
      %v2300 = vmax.f32 %v2298, %v2299
      %v2301 = vrot.slane %v2300, 2
      %v2302 = vmax.f32 %v2300, %v2301
      %v2303 = vrot.slane %v2302, 1
      %v2304 = vmax.f32 %v2302, %v2303
      %v2305 = vpack.i.bf16 %v2304, %v2304
      %v2307 = vsel %vm1524, %v1113, 4286644096
      %v2309 = vunpack.i.l.bf16 %v2307
      %v2310 = vunpack.i.h.bf16 %v2307
      %v2311 = vmax.f32 %v2309, %v2310
      %v2312 = vrot.slane %v2311, 4
      %v2313 = vmax.f32 %v2311, %v2312
      %v2314 = vrot.slane %v2313, 2
      %v2315 = vmax.f32 %v2313, %v2314
      %v2316 = vrot.slane %v2315, 1
      %v2317 = vmax.f32 %v2315, %v2316
      %v2318 = vpack.i.bf16 %v2317, %v2317
      %v2320 = vsel %vm1524, %v1127, 4286644096
      %v2322 = vunpack.i.l.bf16 %v2320
      %v2323 = vunpack.i.h.bf16 %v2320
      %v2324 = vmax.f32 %v2322, %v2323
      %v2325 = vrot.slane %v2324, 4
      %v2326 = vmax.f32 %v2324, %v2325
      %v2327 = vrot.slane %v2326, 2
      %v2328 = vmax.f32 %v2326, %v2327
      %v2329 = vrot.slane %v2328, 1
      %v2330 = vmax.f32 %v2328, %v2329
      %v2331 = vpack.i.bf16 %v2330, %v2330
      %v2333 = vsel %vm1524, %v1129, 4286644096
      %v2335 = vunpack.i.l.bf16 %v2333
      %v2336 = vunpack.i.h.bf16 %v2333
      %v2337 = vmax.f32 %v2335, %v2336
      %v2338 = vrot.slane %v2337, 4
      %v2339 = vmax.f32 %v2337, %v2338
      %v2340 = vrot.slane %v2339, 2
      %v2341 = vmax.f32 %v2339, %v2340
      %v2342 = vrot.slane %v2341, 1
      %v2343 = vmax.f32 %v2341, %v2342
      %v2344 = vpack.i.bf16 %v2343, %v2343
      %v2346 = vsel %vm1524, %v1131, 4286644096
      %v2348 = vunpack.i.l.bf16 %v2346
      %v2349 = vunpack.i.h.bf16 %v2346
      %v2350 = vmax.f32 %v2348, %v2349
      %v2351 = vrot.slane %v2350, 4
      %v2352 = vmax.f32 %v2350, %v2351
      %v2353 = vrot.slane %v2352, 2
      %v2354 = vmax.f32 %v2352, %v2353
      %v2355 = vrot.slane %v2354, 1
      %v2356 = vmax.f32 %v2354, %v2355
      %v2357 = vpack.i.bf16 %v2356, %v2356
      %v2359 = vsel %vm1524, %v1155, 4286644096
      %v2361 = vunpack.i.l.bf16 %v2359
      %v2362 = vunpack.i.h.bf16 %v2359
      %v2363 = vmax.f32 %v2361, %v2362
      %v2364 = vrot.slane %v2363, 4
      %v2365 = vmax.f32 %v2363, %v2364
      %v2366 = vrot.slane %v2365, 2
      %v2367 = vmax.f32 %v2365, %v2366
      %v2368 = vrot.slane %v2367, 1
      %v2369 = vmax.f32 %v2367, %v2368
      %v2370 = vpack.i.bf16 %v2369, %v2369
      %v2372 = vsel %vm1524, %v1169, 4286644096
      %v2374 = vunpack.i.l.bf16 %v2372
      %v2375 = vunpack.i.h.bf16 %v2372
      %v2376 = vmax.f32 %v2374, %v2375
      %v2377 = vrot.slane %v2376, 4
      %v2378 = vmax.f32 %v2376, %v2377
      %v2379 = vrot.slane %v2378, 2
      %v2380 = vmax.f32 %v2378, %v2379
      %v2381 = vrot.slane %v2380, 1
      %v2382 = vmax.f32 %v2380, %v2381
      %v2383 = vpack.i.bf16 %v2382, %v2382
      %v2385 = vsel %vm1524, %v1177, 4286644096
      %v2387 = vunpack.i.l.bf16 %v2385
      %v2388 = vunpack.i.h.bf16 %v2385
      %v2389 = vmax.f32 %v2387, %v2388
      %v2390 = vrot.slane %v2389, 4
      %v2391 = vmax.f32 %v2389, %v2390
      %v2392 = vrot.slane %v2391, 2
      %v2393 = vmax.f32 %v2391, %v2392
      %v2394 = vrot.slane %v2393, 1
      %v2395 = vmax.f32 %v2393, %v2394
      %v2396 = vpack.i.bf16 %v2395, %v2395
      %v2398 = vsel %vm1524, %v1179, 4286644096
      %v2400 = vunpack.i.l.bf16 %v2398
      %v2401 = vunpack.i.h.bf16 %v2398
      %v2402 = vmax.f32 %v2400, %v2401
      %v2403 = vrot.slane %v2402, 4
      %v2404 = vmax.f32 %v2402, %v2403
      %v2405 = vrot.slane %v2404, 2
      %v2406 = vmax.f32 %v2404, %v2405
      %v2407 = vrot.slane %v2406, 1
      %v2408 = vmax.f32 %v2406, %v2407
      %v2409 = vpack.i.bf16 %v2408, %v2408
      %v2411 = vsel %vm1524, %v1162, 4286644096
      %v2413 = vunpack.i.l.bf16 %v2411
      %v2414 = vunpack.i.h.bf16 %v2411
      %v2415 = vmax.f32 %v2413, %v2414
      %v2416 = vrot.slane %v2415, 4
      %v2417 = vmax.f32 %v2415, %v2416
      %v2418 = vrot.slane %v2417, 2
      %v2419 = vmax.f32 %v2417, %v2418
      %v2420 = vrot.slane %v2419, 1
      %v2421 = vmax.f32 %v2419, %v2420
      %v2422 = vpack.i.bf16 %v2421, %v2421
      %v2424 = vsel %vm1524, %v1176, 4286644096
      %v2426 = vunpack.i.l.bf16 %v2424
      %v2427 = vunpack.i.h.bf16 %v2424
      %v2428 = vmax.f32 %v2426, %v2427
      %v2429 = vrot.slane %v2428, 4
      %v2430 = vmax.f32 %v2428, %v2429
      %v2431 = vrot.slane %v2430, 2
      %v2432 = vmax.f32 %v2430, %v2431
      %v2433 = vrot.slane %v2432, 1
      %v2434 = vmax.f32 %v2432, %v2433
      %v2435 = vpack.i.bf16 %v2434, %v2434
      %v2437 = vsel %vm1524, %v1178, 4286644096
      %v2439 = vunpack.i.l.bf16 %v2437
      %v2440 = vunpack.i.h.bf16 %v2437
      %v2441 = vmax.f32 %v2439, %v2440
      %v2442 = vrot.slane %v2441, 4
      %v2443 = vmax.f32 %v2441, %v2442
      %v2444 = vrot.slane %v2443, 2
      %v2445 = vmax.f32 %v2443, %v2444
      %v2446 = vrot.slane %v2445, 1
      %v2447 = vmax.f32 %v2445, %v2446
      %v2448 = vpack.i.bf16 %v2447, %v2447
      %v2450 = vsel %vm1524, %v1180, 4286644096
      %v2452 = vunpack.i.l.bf16 %v2450
      %v2453 = vunpack.i.h.bf16 %v2450
      %v2454 = vmax.f32 %v2452, %v2453
      %v2455 = vrot.slane %v2454, 4
      %v2456 = vmax.f32 %v2454, %v2455
      %v2457 = vrot.slane %v2456, 2
      %v2458 = vmax.f32 %v2456, %v2457
      %v2459 = vrot.slane %v2458, 1
      %v2460 = vmax.f32 %v2458, %v2459
      %v2461 = vpack.i.bf16 %v2460, %v2460
      %v2463 = vsel %vm1524, %v1204, 4286644096
      %v2465 = vunpack.i.l.bf16 %v2463
      %v2466 = vunpack.i.h.bf16 %v2463
      %v2467 = vmax.f32 %v2465, %v2466
      %v2468 = vrot.slane %v2467, 4
      %v2469 = vmax.f32 %v2467, %v2468
      %v2470 = vrot.slane %v2469, 2
      %v2471 = vmax.f32 %v2469, %v2470
      %v2472 = vrot.slane %v2471, 1
      %v2473 = vmax.f32 %v2471, %v2472
      %v2474 = vpack.i.bf16 %v2473, %v2473
      %v2476 = vsel %vm1524, %v1218, 4286644096
      %v2478 = vunpack.i.l.bf16 %v2476
      %v2479 = vunpack.i.h.bf16 %v2476
      %v2480 = vmax.f32 %v2478, %v2479
      %v2481 = vrot.slane %v2480, 4
      %v2482 = vmax.f32 %v2480, %v2481
      %v2483 = vrot.slane %v2482, 2
      %v2484 = vmax.f32 %v2482, %v2483
      %v2485 = vrot.slane %v2484, 1
      %v2486 = vmax.f32 %v2484, %v2485
      %v2487 = vpack.i.bf16 %v2486, %v2486
      %v2489 = vsel %vm1524, %v1226, 4286644096
      %v2491 = vunpack.i.l.bf16 %v2489
      %v2492 = vunpack.i.h.bf16 %v2489
      %v2493 = vmax.f32 %v2491, %v2492
      %v2494 = vrot.slane %v2493, 4
      %v2495 = vmax.f32 %v2493, %v2494
      %v2496 = vrot.slane %v2495, 2
      %v2497 = vmax.f32 %v2495, %v2496
      %v2498 = vrot.slane %v2497, 1
      %v2499 = vmax.f32 %v2497, %v2498
      %v2500 = vpack.i.bf16 %v2499, %v2499
      %v2502 = vsel %vm1524, %v1228, 4286644096
      %v2504 = vunpack.i.l.bf16 %v2502
      %v2505 = vunpack.i.h.bf16 %v2502
      %v2506 = vmax.f32 %v2504, %v2505
      %v2507 = vrot.slane %v2506, 4
      %v2508 = vmax.f32 %v2506, %v2507
      %v2509 = vrot.slane %v2508, 2
      %v2510 = vmax.f32 %v2508, %v2509
      %v2511 = vrot.slane %v2510, 1
      %v2512 = vmax.f32 %v2510, %v2511
      %v2513 = vpack.i.bf16 %v2512, %v2512
      %v2515 = vsel %vm1524, %v1211, 4286644096
      %v2517 = vunpack.i.l.bf16 %v2515
      %v2518 = vunpack.i.h.bf16 %v2515
      %v2519 = vmax.f32 %v2517, %v2518
      %v2520 = vrot.slane %v2519, 4
      %v2521 = vmax.f32 %v2519, %v2520
      %v2522 = vrot.slane %v2521, 2
      %v2523 = vmax.f32 %v2521, %v2522
      %v2524 = vrot.slane %v2523, 1
      %v2525 = vmax.f32 %v2523, %v2524
      %v2526 = vpack.i.bf16 %v2525, %v2525
      %v2528 = vsel %vm1524, %v1225, 4286644096
      %v2530 = vunpack.i.l.bf16 %v2528
      %v2531 = vunpack.i.h.bf16 %v2528
      %v2532 = vmax.f32 %v2530, %v2531
      %v2533 = vrot.slane %v2532, 4
      %v2534 = vmax.f32 %v2532, %v2533
      %v2535 = vrot.slane %v2534, 2
      %v2536 = vmax.f32 %v2534, %v2535
      %v2537 = vrot.slane %v2536, 1
      %v2538 = vmax.f32 %v2536, %v2537
      %v2539 = vpack.i.bf16 %v2538, %v2538
      %v2541 = vsel %vm1524, %v1227, 4286644096
      %v2543 = vunpack.i.l.bf16 %v2541
      %v2544 = vunpack.i.h.bf16 %v2541
      %v2545 = vmax.f32 %v2543, %v2544
      %v2546 = vrot.slane %v2545, 4
      %v2547 = vmax.f32 %v2545, %v2546
      %v2548 = vrot.slane %v2547, 2
      %v2549 = vmax.f32 %v2547, %v2548
      %v2550 = vrot.slane %v2549, 1
      %v2551 = vmax.f32 %v2549, %v2550
      %v2552 = vpack.i.bf16 %v2551, %v2551
      %v2554 = vsel %vm1524, %v1229, 4286644096
      %v2556 = vunpack.i.l.bf16 %v2554
      %v2557 = vunpack.i.h.bf16 %v2554
      %v2558 = vmax.f32 %v2556, %v2557
      %v2559 = vrot.slane %v2558, 4
      %v2560 = vmax.f32 %v2558, %v2559
      %v2561 = vrot.slane %v2560, 2
      %v2562 = vmax.f32 %v2560, %v2561
      %v2563 = vrot.slane %v2562, 1
      %v2564 = vmax.f32 %v2562, %v2563
      %v2565 = vpack.i.bf16 %v2564, %v2564
      %v2567 = vsel %vm1524, %v1253, 4286644096
      %v2569 = vunpack.i.l.bf16 %v2567
      %v2570 = vunpack.i.h.bf16 %v2567
      %v2571 = vmax.f32 %v2569, %v2570
      %v2572 = vrot.slane %v2571, 4
      %v2573 = vmax.f32 %v2571, %v2572
      %v2574 = vrot.slane %v2573, 2
      %v2575 = vmax.f32 %v2573, %v2574
      %v2576 = vrot.slane %v2575, 1
      %v2577 = vmax.f32 %v2575, %v2576
      %v2578 = vpack.i.bf16 %v2577, %v2577
      %v2580 = vsel %vm1524, %v1267, 4286644096
      %v2582 = vunpack.i.l.bf16 %v2580
      %v2583 = vunpack.i.h.bf16 %v2580
      %v2584 = vmax.f32 %v2582, %v2583
      %v2585 = vrot.slane %v2584, 4
      %v2586 = vmax.f32 %v2584, %v2585
      %v2587 = vrot.slane %v2586, 2
      %v2588 = vmax.f32 %v2586, %v2587
      %v2589 = vrot.slane %v2588, 1
      %v2590 = vmax.f32 %v2588, %v2589
      %v2591 = vpack.i.bf16 %v2590, %v2590
      %v2593 = vsel %vm1524, %v1275, 4286644096
      %v2595 = vunpack.i.l.bf16 %v2593
      %v2596 = vunpack.i.h.bf16 %v2593
      %v2597 = vmax.f32 %v2595, %v2596
      %v2598 = vrot.slane %v2597, 4
      %v2599 = vmax.f32 %v2597, %v2598
      %v2600 = vrot.slane %v2599, 2
      %v2601 = vmax.f32 %v2599, %v2600
      %v2602 = vrot.slane %v2601, 1
      %v2603 = vmax.f32 %v2601, %v2602
      %v2604 = vpack.i.bf16 %v2603, %v2603
      %v2606 = vsel %vm1524, %v1277, 4286644096
      %v2608 = vunpack.i.l.bf16 %v2606
      %v2609 = vunpack.i.h.bf16 %v2606
      %v2610 = vmax.f32 %v2608, %v2609
      %v2611 = vrot.slane %v2610, 4
      %v2612 = vmax.f32 %v2610, %v2611
      %v2613 = vrot.slane %v2612, 2
      %v2614 = vmax.f32 %v2612, %v2613
      %v2615 = vrot.slane %v2614, 1
      %v2616 = vmax.f32 %v2614, %v2615
      %v2617 = vpack.i.bf16 %v2616, %v2616
      %v2619 = vsel %vm1524, %v1260, 4286644096
      %v2621 = vunpack.i.l.bf16 %v2619
      %v2622 = vunpack.i.h.bf16 %v2619
      %v2623 = vmax.f32 %v2621, %v2622
      %v2624 = vrot.slane %v2623, 4
      %v2625 = vmax.f32 %v2623, %v2624
      %v2626 = vrot.slane %v2625, 2
      %v2627 = vmax.f32 %v2625, %v2626
      %v2628 = vrot.slane %v2627, 1
      %v2629 = vmax.f32 %v2627, %v2628
      %v2630 = vpack.i.bf16 %v2629, %v2629
      %v2632 = vsel %vm1524, %v1274, 4286644096
      %v2634 = vunpack.i.l.bf16 %v2632
      %v2635 = vunpack.i.h.bf16 %v2632
      %v2636 = vmax.f32 %v2634, %v2635
      %v2637 = vrot.slane %v2636, 4
      %v2638 = vmax.f32 %v2636, %v2637
      %v2639 = vrot.slane %v2638, 2
      %v2640 = vmax.f32 %v2638, %v2639
      %v2641 = vrot.slane %v2640, 1
      %v2642 = vmax.f32 %v2640, %v2641
      %v2643 = vpack.i.bf16 %v2642, %v2642
      %v2645 = vsel %vm1524, %v1276, 4286644096
      %v2647 = vunpack.i.l.bf16 %v2645
      %v2648 = vunpack.i.h.bf16 %v2645
      %v2649 = vmax.f32 %v2647, %v2648
      %v2650 = vrot.slane %v2649, 4
      %v2651 = vmax.f32 %v2649, %v2650
      %v2652 = vrot.slane %v2651, 2
      %v2653 = vmax.f32 %v2651, %v2652
      %v2654 = vrot.slane %v2653, 1
      %v2655 = vmax.f32 %v2653, %v2654
      %v2656 = vpack.i.bf16 %v2655, %v2655
      %v2658 = vsel %vm1524, %v1278, 4286644096
      %v2660 = vunpack.i.l.bf16 %v2658
      %v2661 = vunpack.i.h.bf16 %v2658
      %v2662 = vmax.f32 %v2660, %v2661
      %v2663 = vrot.slane %v2662, 4
      %v2664 = vmax.f32 %v2662, %v2663
      %v2665 = vrot.slane %v2664, 2
      %v2666 = vmax.f32 %v2664, %v2665
      %v2667 = vrot.slane %v2666, 1
      %v2668 = vmax.f32 %v2666, %v2667
      %v2669 = vpack.i.bf16 %v2668, %v2668
      %v2671 = vsel %vm1524, %v1302, 4286644096
      %v2673 = vunpack.i.l.bf16 %v2671
      %v2674 = vunpack.i.h.bf16 %v2671
      %v2675 = vmax.f32 %v2673, %v2674
      %v2676 = vrot.slane %v2675, 4
      %v2677 = vmax.f32 %v2675, %v2676
      %v2678 = vrot.slane %v2677, 2
      %v2679 = vmax.f32 %v2677, %v2678
      %v2680 = vrot.slane %v2679, 1
      %v2681 = vmax.f32 %v2679, %v2680
      %v2682 = vpack.i.bf16 %v2681, %v2681
      %v2684 = vsel %vm1524, %v1316, 4286644096
      %v2686 = vunpack.i.l.bf16 %v2684
      %v2687 = vunpack.i.h.bf16 %v2684
      %v2688 = vmax.f32 %v2686, %v2687
      %v2689 = vrot.slane %v2688, 4
      %v2690 = vmax.f32 %v2688, %v2689
      %v2691 = vrot.slane %v2690, 2
      %v2692 = vmax.f32 %v2690, %v2691
      %v2693 = vrot.slane %v2692, 1
      %v2694 = vmax.f32 %v2692, %v2693
      %v2695 = vpack.i.bf16 %v2694, %v2694
      %v2697 = vsel %vm1524, %v1324, 4286644096
      %v2699 = vunpack.i.l.bf16 %v2697
      %v2700 = vunpack.i.h.bf16 %v2697
      %v2701 = vmax.f32 %v2699, %v2700
      %v2702 = vrot.slane %v2701, 4
      %v2703 = vmax.f32 %v2701, %v2702
      %v2704 = vrot.slane %v2703, 2
      %v2705 = vmax.f32 %v2703, %v2704
      %v2706 = vrot.slane %v2705, 1
      %v2707 = vmax.f32 %v2705, %v2706
      %v2708 = vpack.i.bf16 %v2707, %v2707
      %v2710 = vsel %vm1524, %v1326, 4286644096
      %v2712 = vunpack.i.l.bf16 %v2710
      %v2713 = vunpack.i.h.bf16 %v2710
      %v2714 = vmax.f32 %v2712, %v2713
      %v2715 = vrot.slane %v2714, 4
      %v2716 = vmax.f32 %v2714, %v2715
      %v2717 = vrot.slane %v2716, 2
      %v2718 = vmax.f32 %v2716, %v2717
      %v2719 = vrot.slane %v2718, 1
      %v2720 = vmax.f32 %v2718, %v2719
      %v2721 = vpack.i.bf16 %v2720, %v2720
      %v2723 = vsel %vm1524, %v1309, 4286644096
      %v2725 = vunpack.i.l.bf16 %v2723
      %v2726 = vunpack.i.h.bf16 %v2723
      %v2727 = vmax.f32 %v2725, %v2726
      %v2728 = vrot.slane %v2727, 4
      %v2729 = vmax.f32 %v2727, %v2728
      %v2730 = vrot.slane %v2729, 2
      %v2731 = vmax.f32 %v2729, %v2730
      %v2732 = vrot.slane %v2731, 1
      %v2733 = vmax.f32 %v2731, %v2732
      %v2734 = vpack.i.bf16 %v2733, %v2733
      %v2736 = vsel %vm1524, %v1323, 4286644096
      %v2738 = vunpack.i.l.bf16 %v2736
      %v2739 = vunpack.i.h.bf16 %v2736
      %v2740 = vmax.f32 %v2738, %v2739
      %v2741 = vrot.slane %v2740, 4
      %v2742 = vmax.f32 %v2740, %v2741
      %v2743 = vrot.slane %v2742, 2
      %v2744 = vmax.f32 %v2742, %v2743
      %v2745 = vrot.slane %v2744, 1
      %v2746 = vmax.f32 %v2744, %v2745
      %v2747 = vpack.i.bf16 %v2746, %v2746
      %v2749 = vsel %vm1524, %v1325, 4286644096
      %v2751 = vunpack.i.l.bf16 %v2749
      %v2752 = vunpack.i.h.bf16 %v2749
      %v2753 = vmax.f32 %v2751, %v2752
      %v2754 = vrot.slane %v2753, 4
      %v2755 = vmax.f32 %v2753, %v2754
      %v2756 = vrot.slane %v2755, 2
      %v2757 = vmax.f32 %v2755, %v2756
      %v2758 = vrot.slane %v2757, 1
      %v2759 = vmax.f32 %v2757, %v2758
      %v2760 = vpack.i.bf16 %v2759, %v2759
      %v2762 = vsel %vm1524, %v1327, 4286644096
      %v2764 = vunpack.i.l.bf16 %v2762
      %v2765 = vunpack.i.h.bf16 %v2762
      %v2766 = vmax.f32 %v2764, %v2765
      %v2767 = vrot.slane %v2766, 4
      %v2768 = vmax.f32 %v2766, %v2767
      %v2769 = vrot.slane %v2768, 2
      %v2770 = vmax.f32 %v2768, %v2769
      %v2771 = vrot.slane %v2770, 1
      %v2772 = vmax.f32 %v2770, %v2771
      %v2773 = vpack.i.bf16 %v2772, %v2772
      %v2775 = vsel %vm1524, %v1351, 4286644096
      %v2777 = vunpack.i.l.bf16 %v2775
      %v2778 = vunpack.i.h.bf16 %v2775
      %v2779 = vmax.f32 %v2777, %v2778
      %v2780 = vrot.slane %v2779, 4
      %v2781 = vmax.f32 %v2779, %v2780
      %v2782 = vrot.slane %v2781, 2
      %v2783 = vmax.f32 %v2781, %v2782
      %v2784 = vrot.slane %v2783, 1
      %v2785 = vmax.f32 %v2783, %v2784
      %v2786 = vpack.i.bf16 %v2785, %v2785
      %v2788 = vsel %vm1524, %v1365, 4286644096
      %v2790 = vunpack.i.l.bf16 %v2788
      %v2791 = vunpack.i.h.bf16 %v2788
      %v2792 = vmax.f32 %v2790, %v2791
      %v2793 = vrot.slane %v2792, 4
      %v2794 = vmax.f32 %v2792, %v2793
      %v2795 = vrot.slane %v2794, 2
      %v2796 = vmax.f32 %v2794, %v2795
      %v2797 = vrot.slane %v2796, 1
      %v2798 = vmax.f32 %v2796, %v2797
      %v2799 = vpack.i.bf16 %v2798, %v2798
      %v2801 = vsel %vm1524, %v1373, 4286644096
      %v2803 = vunpack.i.l.bf16 %v2801
      %v2804 = vunpack.i.h.bf16 %v2801
      %v2805 = vmax.f32 %v2803, %v2804
      %v2806 = vrot.slane %v2805, 4
      %v2807 = vmax.f32 %v2805, %v2806
      %v2808 = vrot.slane %v2807, 2
      %v2809 = vmax.f32 %v2807, %v2808
      %v2810 = vrot.slane %v2809, 1
      %v2811 = vmax.f32 %v2809, %v2810
      %v2812 = vpack.i.bf16 %v2811, %v2811
      %v2814 = vsel %vm1524, %v1375, 4286644096
      %v2816 = vunpack.i.l.bf16 %v2814
      %v2817 = vunpack.i.h.bf16 %v2814
      %v2818 = vmax.f32 %v2816, %v2817
      %v2819 = vrot.slane %v2818, 4
      %v2820 = vmax.f32 %v2818, %v2819
      %v2821 = vrot.slane %v2820, 2
      %v2822 = vmax.f32 %v2820, %v2821
      %v2823 = vrot.slane %v2822, 1
      %v2824 = vmax.f32 %v2822, %v2823
      %v2825 = vpack.i.bf16 %v2824, %v2824
      %v2827 = vsel %vm1524, %v1358, 4286644096
      %v2829 = vunpack.i.l.bf16 %v2827
      %v2830 = vunpack.i.h.bf16 %v2827
      %v2831 = vmax.f32 %v2829, %v2830
      %v2832 = vrot.slane %v2831, 4
      %v2833 = vmax.f32 %v2831, %v2832
      %v2834 = vrot.slane %v2833, 2
      %v2835 = vmax.f32 %v2833, %v2834
      %v2836 = vrot.slane %v2835, 1
      %v2837 = vmax.f32 %v2835, %v2836
      %v2838 = vpack.i.bf16 %v2837, %v2837
      %v2840 = vsel %vm1524, %v1372, 4286644096
      %v2842 = vunpack.i.l.bf16 %v2840
      %v2843 = vunpack.i.h.bf16 %v2840
      %v2844 = vmax.f32 %v2842, %v2843
      %v2845 = vrot.slane %v2844, 4
      %v2846 = vmax.f32 %v2844, %v2845
      %v2847 = vrot.slane %v2846, 2
      %v2848 = vmax.f32 %v2846, %v2847
      %v2849 = vrot.slane %v2848, 1
      %v2850 = vmax.f32 %v2848, %v2849
      %v2851 = vpack.i.bf16 %v2850, %v2850
      %v2853 = vsel %vm1524, %v1374, 4286644096
      %v2855 = vunpack.i.l.bf16 %v2853
      %v2856 = vunpack.i.h.bf16 %v2853
      %v2857 = vmax.f32 %v2855, %v2856
      %v2858 = vrot.slane %v2857, 4
      %v2859 = vmax.f32 %v2857, %v2858
      %v2860 = vrot.slane %v2859, 2
      %v2861 = vmax.f32 %v2859, %v2860
      %v2862 = vrot.slane %v2861, 1
      %v2863 = vmax.f32 %v2861, %v2862
      %v2864 = vpack.i.bf16 %v2863, %v2863
      %v2866 = vsel %vm1524, %v1376, 4286644096
      %v2868 = vunpack.i.l.bf16 %v2866
      %v2869 = vunpack.i.h.bf16 %v2866
      %v2870 = vmax.f32 %v2868, %v2869
      %v2871 = vrot.slane %v2870, 4
      %v2872 = vmax.f32 %v2870, %v2871
      %v2873 = vrot.slane %v2872, 2
      %v2874 = vmax.f32 %v2872, %v2873
      %v2875 = vrot.slane %v2874, 1
      %v2876 = vmax.f32 %v2874, %v2875
      %v2877 = vpack.i.bf16 %v2876, %v2876
      %v2879 = vsel %vm1524, %v1400, 4286644096
      %v2881 = vunpack.i.l.bf16 %v2879
      %v2882 = vunpack.i.h.bf16 %v2879
      %v2883 = vmax.f32 %v2881, %v2882
      %v2884 = vrot.slane %v2883, 4
      %v2885 = vmax.f32 %v2883, %v2884
      %v2886 = vrot.slane %v2885, 2
      %v2887 = vmax.f32 %v2885, %v2886
      %v2888 = vrot.slane %v2887, 1
      %v2889 = vmax.f32 %v2887, %v2888
      %v2890 = vpack.i.bf16 %v2889, %v2889
      %v2892 = vsel %vm1524, %v1414, 4286644096
      %v2894 = vunpack.i.l.bf16 %v2892
      %v2895 = vunpack.i.h.bf16 %v2892
      %v2896 = vmax.f32 %v2894, %v2895
      %v2897 = vrot.slane %v2896, 4
      %v2898 = vmax.f32 %v2896, %v2897
      %v2899 = vrot.slane %v2898, 2
      %v2900 = vmax.f32 %v2898, %v2899
      %v2901 = vrot.slane %v2900, 1
      %v2902 = vmax.f32 %v2900, %v2901
      %v2903 = vpack.i.bf16 %v2902, %v2902
      %v2905 = vsel %vm1524, %v1422, 4286644096
      %v2907 = vunpack.i.l.bf16 %v2905
      %v2908 = vunpack.i.h.bf16 %v2905
      %v2909 = vmax.f32 %v2907, %v2908
      %v2910 = vrot.slane %v2909, 4
      %v2911 = vmax.f32 %v2909, %v2910
      %v2912 = vrot.slane %v2911, 2
      %v2913 = vmax.f32 %v2911, %v2912
      %v2914 = vrot.slane %v2913, 1
      %v2915 = vmax.f32 %v2913, %v2914
      %v2916 = vpack.i.bf16 %v2915, %v2915
      %v2918 = vsel %vm1524, %v1424, 4286644096
      %v2920 = vunpack.i.l.bf16 %v2918
      %v2921 = vunpack.i.h.bf16 %v2918
      %v2922 = vmax.f32 %v2920, %v2921
      %v2923 = vrot.slane %v2922, 4
      %v2924 = vmax.f32 %v2922, %v2923
      %v2925 = vrot.slane %v2924, 2
      %v2926 = vmax.f32 %v2924, %v2925
      %v2927 = vrot.slane %v2926, 1
      %v2928 = vmax.f32 %v2926, %v2927
      %v2929 = vpack.i.bf16 %v2928, %v2928
      %v2931 = vsel %vm1524, %v1407, 4286644096
      %v2933 = vunpack.i.l.bf16 %v2931
      %v2934 = vunpack.i.h.bf16 %v2931
      %v2935 = vmax.f32 %v2933, %v2934
      %v2936 = vrot.slane %v2935, 4
      %v2937 = vmax.f32 %v2935, %v2936
      %v2938 = vrot.slane %v2937, 2
      %v2939 = vmax.f32 %v2937, %v2938
      %v2940 = vrot.slane %v2939, 1
      %v2941 = vmax.f32 %v2939, %v2940
      %v2942 = vpack.i.bf16 %v2941, %v2941
      %v2944 = vsel %vm1524, %v1421, 4286644096
      %v2946 = vunpack.i.l.bf16 %v2944
      %v2947 = vunpack.i.h.bf16 %v2944
      %v2948 = vmax.f32 %v2946, %v2947
      %v2949 = vrot.slane %v2948, 4
      %v2950 = vmax.f32 %v2948, %v2949
      %v2951 = vrot.slane %v2950, 2
      %v2952 = vmax.f32 %v2950, %v2951
      %v2953 = vrot.slane %v2952, 1
      %v2954 = vmax.f32 %v2952, %v2953
      %v2955 = vpack.i.bf16 %v2954, %v2954
      %v2957 = vsel %vm1524, %v1423, 4286644096
      %v2959 = vunpack.i.l.bf16 %v2957
      %v2960 = vunpack.i.h.bf16 %v2957
      %v2961 = vmax.f32 %v2959, %v2960
      %v2962 = vrot.slane %v2961, 4
      %v2963 = vmax.f32 %v2961, %v2962
      %v2964 = vrot.slane %v2963, 2
      %v2965 = vmax.f32 %v2963, %v2964
      %v2966 = vrot.slane %v2965, 1
      %v2967 = vmax.f32 %v2965, %v2966
      %v2968 = vpack.i.bf16 %v2967, %v2967
      %v2970 = vsel %vm1524, %v1425, 4286644096
      %v2972 = vunpack.i.l.bf16 %v2970
      %v2973 = vunpack.i.h.bf16 %v2970
      %v2974 = vmax.f32 %v2972, %v2973
      %v2975 = vrot.slane %v2974, 4
      %v2976 = vmax.f32 %v2974, %v2975
      %v2977 = vrot.slane %v2976, 2
      %v2978 = vmax.f32 %v2976, %v2977
      %v2979 = vrot.slane %v2978, 1
      %v2980 = vmax.f32 %v2978, %v2979
      %v2981 = vpack.i.bf16 %v2980, %v2980
      %v2983 = vsel %vm1524, %v1449, 4286644096
      %v2985 = vunpack.i.l.bf16 %v2983
      %v2986 = vunpack.i.h.bf16 %v2983
      %v2987 = vmax.f32 %v2985, %v2986
      %v2988 = vrot.slane %v2987, 4
      %v2989 = vmax.f32 %v2987, %v2988
      %v2990 = vrot.slane %v2989, 2
      %v2991 = vmax.f32 %v2989, %v2990
      %v2992 = vrot.slane %v2991, 1
      %v2993 = vmax.f32 %v2991, %v2992
      %v2994 = vpack.i.bf16 %v2993, %v2993
      %v2996 = vsel %vm1524, %v1463, 4286644096
      %v2998 = vunpack.i.l.bf16 %v2996
      %v2999 = vunpack.i.h.bf16 %v2996
      %v3000 = vmax.f32 %v2998, %v2999
      %v3001 = vrot.slane %v3000, 4
      %v3002 = vmax.f32 %v3000, %v3001
      %v3003 = vrot.slane %v3002, 2
      %v3004 = vmax.f32 %v3002, %v3003
      %v3005 = vrot.slane %v3004, 1
      %v3006 = vmax.f32 %v3004, %v3005
      %v3007 = vpack.i.bf16 %v3006, %v3006
      %v3009 = vsel %vm1524, %v1471, 4286644096
      %v3011 = vunpack.i.l.bf16 %v3009
      %v3012 = vunpack.i.h.bf16 %v3009
      %v3013 = vmax.f32 %v3011, %v3012
      %v3014 = vrot.slane %v3013, 4
      %v3015 = vmax.f32 %v3013, %v3014
      %v3016 = vrot.slane %v3015, 2
      %v3017 = vmax.f32 %v3015, %v3016
      %v3018 = vrot.slane %v3017, 1
      %v3019 = vmax.f32 %v3017, %v3018
      %v3020 = vpack.i.bf16 %v3019, %v3019
      %v3022 = vsel %vm1524, %v1473, 4286644096
      %v3024 = vunpack.i.l.bf16 %v3022
      %v3025 = vunpack.i.h.bf16 %v3022
      %v3026 = vmax.f32 %v3024, %v3025
      %v3027 = vrot.slane %v3026, 4
      %v3028 = vmax.f32 %v3026, %v3027
      %v3029 = vrot.slane %v3028, 2
      %v3030 = vmax.f32 %v3028, %v3029
      %v3031 = vrot.slane %v3030, 1
      %v3032 = vmax.f32 %v3030, %v3031
      %v3033 = vpack.i.bf16 %v3032, %v3032
      %v3035 = vsel %vm1524, %v1456, 4286644096
      %v3037 = vunpack.i.l.bf16 %v3035
      %v3038 = vunpack.i.h.bf16 %v3035
      %v3039 = vmax.f32 %v3037, %v3038
      %v3040 = vrot.slane %v3039, 4
      %v3041 = vmax.f32 %v3039, %v3040
      %v3042 = vrot.slane %v3041, 2
      %v3043 = vmax.f32 %v3041, %v3042
      %v3044 = vrot.slane %v3043, 1
      %v3045 = vmax.f32 %v3043, %v3044
      %v3046 = vpack.i.bf16 %v3045, %v3045
      %v3048 = vsel %vm1524, %v1470, 4286644096
      %v3050 = vunpack.i.l.bf16 %v3048
      %v3051 = vunpack.i.h.bf16 %v3048
      %v3052 = vmax.f32 %v3050, %v3051
      %v3053 = vrot.slane %v3052, 4
      %v3054 = vmax.f32 %v3052, %v3053
      %v3055 = vrot.slane %v3054, 2
      %v3056 = vmax.f32 %v3054, %v3055
      %v3057 = vrot.slane %v3056, 1
      %v3058 = vmax.f32 %v3056, %v3057
      %v3059 = vpack.i.bf16 %v3058, %v3058
      %v3061 = vsel %vm1524, %v1472, 4286644096
      %v3063 = vunpack.i.l.bf16 %v3061
      %v3064 = vunpack.i.h.bf16 %v3061
      %v3065 = vmax.f32 %v3063, %v3064
      %v3066 = vrot.slane %v3065, 4
      %v3067 = vmax.f32 %v3065, %v3066
      %v3068 = vrot.slane %v3067, 2
      %v3069 = vmax.f32 %v3067, %v3068
      %v3070 = vrot.slane %v3069, 1
      %v3071 = vmax.f32 %v3069, %v3070
      %v3072 = vpack.i.bf16 %v3071, %v3071
      %v3074 = vsel %vm1524, %v1474, 4286644096
      %v3076 = vunpack.i.l.bf16 %v3074
      %v3077 = vunpack.i.h.bf16 %v3074
      %v3078 = vmax.f32 %v3076, %v3077
      %v3079 = vrot.slane %v3078, 4
      %v3080 = vmax.f32 %v3078, %v3079
      %v3081 = vrot.slane %v3080, 2
      %v3082 = vmax.f32 %v3080, %v3081
      %v3083 = vrot.slane %v3082, 1
      %v3084 = vmax.f32 %v3082, %v3083
      %v3085 = vpack.i.bf16 %v3084, %v3084
      %v3087 = vsel %vm1524, %v1498, 4286644096
      %v3089 = vunpack.i.l.bf16 %v3087
      %v3090 = vunpack.i.h.bf16 %v3087
      %v3091 = vmax.f32 %v3089, %v3090
      %v3092 = vrot.slane %v3091, 4
      %v3093 = vmax.f32 %v3091, %v3092
      %v3094 = vrot.slane %v3093, 2
      %v3095 = vmax.f32 %v3093, %v3094
      %v3096 = vrot.slane %v3095, 1
      %v3097 = vmax.f32 %v3095, %v3096
      %v3098 = vpack.i.bf16 %v3097, %v3097
      %v3100 = vsel %vm1524, %v1512, 4286644096
      %v3102 = vunpack.i.l.bf16 %v3100
      %v3103 = vunpack.i.h.bf16 %v3100
      %v3104 = vmax.f32 %v3102, %v3103
      %v3105 = vrot.slane %v3104, 4
      %v3106 = vmax.f32 %v3104, %v3105
      %v3107 = vrot.slane %v3106, 2
      %v3108 = vmax.f32 %v3106, %v3107
      %v3109 = vrot.slane %v3108, 1
      %v3110 = vmax.f32 %v3108, %v3109
      %v3111 = vpack.i.bf16 %v3110, %v3110
      %v3113 = vsel %vm1524, %v1520, 4286644096
      %v3115 = vunpack.i.l.bf16 %v3113
      %v3116 = vunpack.i.h.bf16 %v3113
      %v3117 = vmax.f32 %v3115, %v3116
      %v3118 = vrot.slane %v3117, 4
      %v3119 = vmax.f32 %v3117, %v3118
      %v3120 = vrot.slane %v3119, 2
      %v3121 = vmax.f32 %v3119, %v3120
      %v3122 = vrot.slane %v3121, 1
      %v3123 = vmax.f32 %v3121, %v3122
      %v3124 = vpack.i.bf16 %v3123, %v3123
      %v3126 = vsel %vm1524, %v1522, 4286644096
      %v3128 = vunpack.i.l.bf16 %v3126
      %v3129 = vunpack.i.h.bf16 %v3126
      %v3130 = vmax.f32 %v3128, %v3129
      %v3131 = vrot.slane %v3130, 4
      %v3132 = vmax.f32 %v3130, %v3131
      %v3133 = vrot.slane %v3132, 2
      %v3134 = vmax.f32 %v3132, %v3133
      %v3135 = vrot.slane %v3134, 1
      %v3136 = vmax.f32 %v3134, %v3135
      %v3137 = vpack.i.bf16 %v3136, %v3136
      %v3139 = vsel %vm1524, %v1505, 4286644096
      %v3141 = vunpack.i.l.bf16 %v3139
      %v3142 = vunpack.i.h.bf16 %v3139
      %v3143 = vmax.f32 %v3141, %v3142
      %v3144 = vrot.slane %v3143, 4
      %v3145 = vmax.f32 %v3143, %v3144
      %v3146 = vrot.slane %v3145, 2
      %v3147 = vmax.f32 %v3145, %v3146
      %v3148 = vrot.slane %v3147, 1
      %v3149 = vmax.f32 %v3147, %v3148
      %v3150 = vpack.i.bf16 %v3149, %v3149
      %v3152 = vsel %vm1524, %v1519, 4286644096
      %v3154 = vunpack.i.l.bf16 %v3152
      %v3155 = vunpack.i.h.bf16 %v3152
      %v3156 = vmax.f32 %v3154, %v3155
      %v3157 = vrot.slane %v3156, 4
      %v3158 = vmax.f32 %v3156, %v3157
      %v3159 = vrot.slane %v3158, 2
      %v3160 = vmax.f32 %v3158, %v3159
      %v3161 = vrot.slane %v3160, 1
      %v3162 = vmax.f32 %v3160, %v3161
      %v3163 = vpack.i.bf16 %v3162, %v3162
      %v3165 = vsel %vm1524, %v1521, 4286644096
      %v3167 = vunpack.i.l.bf16 %v3165
      %v3168 = vunpack.i.h.bf16 %v3165
      %v3169 = vmax.f32 %v3167, %v3168
      %v3170 = vrot.slane %v3169, 4
      %v3171 = vmax.f32 %v3169, %v3170
      %v3172 = vrot.slane %v3171, 2
      %v3173 = vmax.f32 %v3171, %v3172
      %v3174 = vrot.slane %v3173, 1
      %v3175 = vmax.f32 %v3173, %v3174
      %v3176 = vpack.i.bf16 %v3175, %v3175
      %v3178 = vsel %vm1524, %v1523, 4286644096
      %v3180 = vunpack.i.l.bf16 %v3178
      %v3181 = vunpack.i.h.bf16 %v3178
      %v3182 = vmax.f32 %v3180, %v3181
      %v3183 = vrot.slane %v3182, 4
      %v3184 = vmax.f32 %v3182, %v3183
      %v3185 = vrot.slane %v3184, 2
      %v3186 = vmax.f32 %v3184, %v3185
      %v3187 = vrot.slane %v3186, 1
      %v3188 = vmax.f32 %v3186, %v3187
      %v3189 = vpack.i.bf16 %v3188, %v3188
      %vm3190 = vcmask 523264
      %v3192 = vsel %vm3190, %v1538, 4286644096
      %v3195 = vsel %vm3190, %v1642, 4286644096
      %v3197 = vmax.bf16 %v3192, %v3195
      %v3199 = vsel %vm3190, %v1551, 4286644096
      %v3202 = vsel %vm3190, %v1655, 4286644096
      %v3204 = vmax.bf16 %v3199, %v3202
      %v3206 = vsel %vm3190, %v1564, 4286644096
      %v3209 = vsel %vm3190, %v1668, 4286644096
      %v3211 = vmax.bf16 %v3206, %v3209
      %v3213 = vsel %vm3190, %v1577, 4286644096
      %v3216 = vsel %vm3190, %v1681, 4286644096
      %v3218 = vmax.bf16 %v3213, %v3216
      %v3220 = vsel %vm3190, %v1590, 4286644096
      %v3223 = vsel %vm3190, %v1694, 4286644096
      %v3225 = vmax.bf16 %v3220, %v3223
      %v3227 = vsel %vm3190, %v1603, 4286644096
      %v3230 = vsel %vm3190, %v1707, 4286644096
      %v3232 = vmax.bf16 %v3227, %v3230
      %v3234 = vsel %vm3190, %v1616, 4286644096
      %v3237 = vsel %vm3190, %v1720, 4286644096
      %v3239 = vmax.bf16 %v3234, %v3237
      %v3241 = vsel %vm3190, %v1629, 4286644096
      %v3244 = vsel %vm3190, %v1733, 4286644096
      %v3246 = vmax.bf16 %v3241, %v3244
      %v3248 = vsel %vm3190, %v1746, 4286644096
      %v3251 = vsel %vm3190, %v1850, 4286644096
      %v3253 = vmax.bf16 %v3248, %v3251
      %v3255 = vsel %vm3190, %v1759, 4286644096
      %v3258 = vsel %vm3190, %v1863, 4286644096
      %v3260 = vmax.bf16 %v3255, %v3258
      %v3262 = vsel %vm3190, %v1772, 4286644096
      %v3265 = vsel %vm3190, %v1876, 4286644096
      %v3267 = vmax.bf16 %v3262, %v3265
      %v3269 = vsel %vm3190, %v1785, 4286644096
      %v3272 = vsel %vm3190, %v1889, 4286644096
      %v3274 = vmax.bf16 %v3269, %v3272
      %v3276 = vsel %vm3190, %v1798, 4286644096
      %v3279 = vsel %vm3190, %v1902, 4286644096
      %v3281 = vmax.bf16 %v3276, %v3279
      %v3283 = vsel %vm3190, %v1811, 4286644096
      %v3286 = vsel %vm3190, %v1915, 4286644096
      %v3288 = vmax.bf16 %v3283, %v3286
      %v3290 = vsel %vm3190, %v1824, 4286644096
      %v3293 = vsel %vm3190, %v1928, 4286644096
      %v3295 = vmax.bf16 %v3290, %v3293
      %v3297 = vsel %vm3190, %v1837, 4286644096
      %v3300 = vsel %vm3190, %v1941, 4286644096
      %v3302 = vmax.bf16 %v3297, %v3300
      %v3304 = vsel %vm3190, %v1954, 4286644096
      %v3307 = vsel %vm3190, %v2058, 4286644096
      %v3309 = vmax.bf16 %v3304, %v3307
      %v3311 = vsel %vm3190, %v1967, 4286644096
      %v3314 = vsel %vm3190, %v2071, 4286644096
      %v3316 = vmax.bf16 %v3311, %v3314
      %v3318 = vsel %vm3190, %v1980, 4286644096
      %v3321 = vsel %vm3190, %v2084, 4286644096
      %v3323 = vmax.bf16 %v3318, %v3321
      %v3325 = vsel %vm3190, %v1993, 4286644096
      %v3328 = vsel %vm3190, %v2097, 4286644096
      %v3330 = vmax.bf16 %v3325, %v3328
      %v3332 = vsel %vm3190, %v2006, 4286644096
      %v3335 = vsel %vm3190, %v2110, 4286644096
      %v3337 = vmax.bf16 %v3332, %v3335
      %v3339 = vsel %vm3190, %v2019, 4286644096
      %v3342 = vsel %vm3190, %v2123, 4286644096
      %v3344 = vmax.bf16 %v3339, %v3342
      %v3346 = vsel %vm3190, %v2032, 4286644096
      %v3349 = vsel %vm3190, %v2136, 4286644096
      %v3351 = vmax.bf16 %v3346, %v3349
      %v3353 = vsel %vm3190, %v2045, 4286644096
      %v3356 = vsel %vm3190, %v2149, 4286644096
      %v3358 = vmax.bf16 %v3353, %v3356
      %v3360 = vsel %vm3190, %v2162, 4286644096
      %v3363 = vsel %vm3190, %v2266, 4286644096
      %v3365 = vmax.bf16 %v3360, %v3363
      %v3367 = vsel %vm3190, %v2175, 4286644096
      %v3370 = vsel %vm3190, %v2279, 4286644096
      %v3372 = vmax.bf16 %v3367, %v3370
      %v3374 = vsel %vm3190, %v2188, 4286644096
      %v3377 = vsel %vm3190, %v2292, 4286644096
      %v3379 = vmax.bf16 %v3374, %v3377
      %v3381 = vsel %vm3190, %v2201, 4286644096
      %v3384 = vsel %vm3190, %v2305, 4286644096
      %v3386 = vmax.bf16 %v3381, %v3384
      %v3388 = vsel %vm3190, %v2214, 4286644096
      %v3391 = vsel %vm3190, %v2318, 4286644096
      %v3393 = vmax.bf16 %v3388, %v3391
      %v3395 = vsel %vm3190, %v2227, 4286644096
      %v3398 = vsel %vm3190, %v2331, 4286644096
      %v3400 = vmax.bf16 %v3395, %v3398
      %v3402 = vsel %vm3190, %v2240, 4286644096
      %v3405 = vsel %vm3190, %v2344, 4286644096
      %v3407 = vmax.bf16 %v3402, %v3405
      %v3409 = vsel %vm3190, %v2253, 4286644096
      %v3412 = vsel %vm3190, %v2357, 4286644096
      %v3414 = vmax.bf16 %v3409, %v3412
      %v3416 = vsel %vm3190, %v2370, 4286644096
      %v3419 = vsel %vm3190, %v2474, 4286644096
      %v3421 = vmax.bf16 %v3416, %v3419
      %v3423 = vsel %vm3190, %v2383, 4286644096
      %v3426 = vsel %vm3190, %v2487, 4286644096
      %v3428 = vmax.bf16 %v3423, %v3426
      %v3430 = vsel %vm3190, %v2396, 4286644096
      %v3433 = vsel %vm3190, %v2500, 4286644096
      %v3435 = vmax.bf16 %v3430, %v3433
      %v3437 = vsel %vm3190, %v2409, 4286644096
      %v3440 = vsel %vm3190, %v2513, 4286644096
      %v3442 = vmax.bf16 %v3437, %v3440
      %v3444 = vsel %vm3190, %v2422, 4286644096
      %v3447 = vsel %vm3190, %v2526, 4286644096
      %v3449 = vmax.bf16 %v3444, %v3447
      %v3451 = vsel %vm3190, %v2435, 4286644096
      %v3454 = vsel %vm3190, %v2539, 4286644096
      %v3456 = vmax.bf16 %v3451, %v3454
      %v3458 = vsel %vm3190, %v2448, 4286644096
      %v3461 = vsel %vm3190, %v2552, 4286644096
      %v3463 = vmax.bf16 %v3458, %v3461
      %v3465 = vsel %vm3190, %v2461, 4286644096
      %v3468 = vsel %vm3190, %v2565, 4286644096
      %v3470 = vmax.bf16 %v3465, %v3468
      %v3472 = vsel %vm3190, %v2578, 4286644096
      %v3475 = vsel %vm3190, %v2682, 4286644096
      %v3477 = vmax.bf16 %v3472, %v3475
      %v3479 = vsel %vm3190, %v2591, 4286644096
      %v3482 = vsel %vm3190, %v2695, 4286644096
      %v3484 = vmax.bf16 %v3479, %v3482
      %v3486 = vsel %vm3190, %v2604, 4286644096
      %v3489 = vsel %vm3190, %v2708, 4286644096
      %v3491 = vmax.bf16 %v3486, %v3489
      %v3493 = vsel %vm3190, %v2617, 4286644096
      %v3496 = vsel %vm3190, %v2721, 4286644096
      %v3498 = vmax.bf16 %v3493, %v3496
      %v3500 = vsel %vm3190, %v2630, 4286644096
      %v3503 = vsel %vm3190, %v2734, 4286644096
      %v3505 = vmax.bf16 %v3500, %v3503
      %v3507 = vsel %vm3190, %v2643, 4286644096
      %v3510 = vsel %vm3190, %v2747, 4286644096
      %v3512 = vmax.bf16 %v3507, %v3510
      %v3514 = vsel %vm3190, %v2656, 4286644096
      %v3517 = vsel %vm3190, %v2760, 4286644096
      %v3519 = vmax.bf16 %v3514, %v3517
      %v3521 = vsel %vm3190, %v2669, 4286644096
      %v3524 = vsel %vm3190, %v2773, 4286644096
      %v3526 = vmax.bf16 %v3521, %v3524
      %v3528 = vsel %vm3190, %v2786, 4286644096
      %v3531 = vsel %vm3190, %v2890, 4286644096
      %v3533 = vmax.bf16 %v3528, %v3531
      %v3535 = vsel %vm3190, %v2799, 4286644096
      %v3538 = vsel %vm3190, %v2903, 4286644096
      %v3540 = vmax.bf16 %v3535, %v3538
      %v3542 = vsel %vm3190, %v2812, 4286644096
      %v3545 = vsel %vm3190, %v2916, 4286644096
      %v3547 = vmax.bf16 %v3542, %v3545
      %v3549 = vsel %vm3190, %v2825, 4286644096
      %v3552 = vsel %vm3190, %v2929, 4286644096
      %v3554 = vmax.bf16 %v3549, %v3552
      %v3556 = vsel %vm3190, %v2838, 4286644096
      %v3559 = vsel %vm3190, %v2942, 4286644096
      %v3561 = vmax.bf16 %v3556, %v3559
      %v3563 = vsel %vm3190, %v2851, 4286644096
      %v3566 = vsel %vm3190, %v2955, 4286644096
      %v3568 = vmax.bf16 %v3563, %v3566
      %v3570 = vsel %vm3190, %v2864, 4286644096
      %v3573 = vsel %vm3190, %v2968, 4286644096
      %v3575 = vmax.bf16 %v3570, %v3573
      %v3577 = vsel %vm3190, %v2877, 4286644096
      %v3580 = vsel %vm3190, %v2981, 4286644096
      %v3582 = vmax.bf16 %v3577, %v3580
      %v3584 = vsel %vm3190, %v2994, 4286644096
      %v3587 = vsel %vm3190, %v3098, 4286644096
      %v3589 = vmax.bf16 %v3584, %v3587
      %v3591 = vsel %vm3190, %v3007, 4286644096
      %v3594 = vsel %vm3190, %v3111, 4286644096
      %v3596 = vmax.bf16 %v3591, %v3594
      %v3598 = vsel %vm3190, %v3020, 4286644096
      %v3601 = vsel %vm3190, %v3124, 4286644096
      %v3603 = vmax.bf16 %v3598, %v3601
      %v3605 = vsel %vm3190, %v3033, 4286644096
      %v3608 = vsel %vm3190, %v3137, 4286644096
      %v3610 = vmax.bf16 %v3605, %v3608
      %v3612 = vsel %vm3190, %v3046, 4286644096
      %v3615 = vsel %vm3190, %v3150, 4286644096
      %v3617 = vmax.bf16 %v3612, %v3615
      %v3619 = vsel %vm3190, %v3059, 4286644096
      %v3622 = vsel %vm3190, %v3163, 4286644096
      %v3624 = vmax.bf16 %v3619, %v3622
      %v3626 = vsel %vm3190, %v3072, 4286644096
      %v3629 = vsel %vm3190, %v3176, 4286644096
      %v3631 = vmax.bf16 %v3626, %v3629
      %v3633 = vsel %vm3190, %v3085, 4286644096
      %v3636 = vsel %vm3190, %v3189, 4286644096
      %v3638 = vmax.bf16 %v3633, %v3636
      %vm3639 = vcmask 519168
      %3640 = vst.msk [vmem:[#allocation2] sm:$0xf] %vm3639, 0
      %3641 = vst.msk [vmem:[#allocation2 + $0x4] sm:$0x1] %vm1524, 0
      %s3642 = scalar_lea.vmem [#allocation2], 72
      %3643 = vst.msk [vmem:[%s3642] sm:$0xf] %vm3639, 0
      %3644 = vst.msk [vmem:[%s3642 + $0x4] sm:$0x1] %vm1524, 0
      %vm3645 = vcmask 516096
      %vm3646 = vsmask.f32 256
      %vm3647 = vmand %vm3645, %vm3646
      %v3648 = vld [vmem:[#allocation2] sm:$0x1]
      %v3649 = vsel %vm3647, 0, %v3648
      %3650 = vst [vmem:[#allocation2] sm:$0x1] %v3649
      %v3651 = vld [vmem:[#allocation2 + $0x8] sm:$0x1]
      %v3652 = vsel %vm3647, 0, %v3651
      %3653 = vst [vmem:[#allocation2 + $0x8] sm:$0x1] %v3652
      %v3654 = vld [vmem:[#allocation2 + $0x10] sm:$0x1]
      %v3655 = vsel %vm3647, 0, %v3654
      %3656 = vst [vmem:[#allocation2 + $0x10] sm:$0x1] %v3655
      %v3657 = vld [vmem:[#allocation2 + $0x18] sm:$0x1]
      %v3658 = vsel %vm3647, 0, %v3657
      %3659 = vst [vmem:[#allocation2 + $0x18] sm:$0x1] %v3658
      %v3660 = vld [vmem:[#allocation2 + $0x20] sm:$0x1]
      %v3661 = vsel %vm3647, 0, %v3660
      %3662 = vst [vmem:[#allocation2 + $0x20] sm:$0x1] %v3661
      %v3663 = vld [vmem:[#allocation2 + $0x28] sm:$0x1]
      %v3664 = vsel %vm3647, 0, %v3663
      %3665 = vst [vmem:[#allocation2 + $0x28] sm:$0x1] %v3664
      %v3666 = vld [vmem:[#allocation2 + $0x30] sm:$0x1]
      %v3667 = vsel %vm3647, 0, %v3666
      %3668 = vst [vmem:[#allocation2 + $0x30] sm:$0x1] %v3667
      %v3669 = vld [vmem:[#allocation2 + $0x38] sm:$0x1]
      %v3670 = vsel %vm3647, 0, %v3669
      %3671 = vst [vmem:[#allocation2 + $0x38] sm:$0x1] %v3670
      %v3672 = vld [vmem:[#allocation2 + $0x40] sm:$0x1]
      %v3673 = vsel %vm3647, 0, %v3672
      %3674 = vst [vmem:[#allocation2 + $0x40] sm:$0x1] %v3673
      %v3675 = vld [vmem:[#allocation2 + $0x48] sm:$0x1]
      %v3676 = vsel %vm3647, 0, %v3675
      %3677 = vst [vmem:[#allocation2 + $0x48] sm:$0x1] %v3676
      %vm3678 = vsmask.f32 7938
      %vm3679 = vmand %vm3645, %vm3678
      %v3680 = vld [vmem:[#allocation2 + $0x4] sm:$0x1]
      %v3681 = vsel %vm3679, 0, %v3680
      %3682 = vst [vmem:[#allocation2 + $0x4] sm:$0x1] %v3681
      %v3683 = vld [vmem:[#allocation2 + $0xc] sm:$0x1]
      %v3684 = vsel %vm3679, 0, %v3683
      %3685 = vst [vmem:[#allocation2 + $0xc] sm:$0x1] %v3684
      %v3686 = vld [vmem:[#allocation2 + $0x14] sm:$0x1]
      %v3687 = vsel %vm3679, 0, %v3686
      %3688 = vst [vmem:[#allocation2 + $0x14] sm:$0x1] %v3687
      %v3689 = vld [vmem:[#allocation2 + $0x1c] sm:$0x1]
      %v3690 = vsel %vm3679, 0, %v3689
      %3691 = vst [vmem:[#allocation2 + $0x1c] sm:$0x1] %v3690
      %v3692 = vld [vmem:[#allocation2 + $0x24] sm:$0x1]
      %v3693 = vsel %vm3679, 0, %v3692
      %3694 = vst [vmem:[#allocation2 + $0x24] sm:$0x1] %v3693
      %v3695 = vld [vmem:[#allocation2 + $0x2c] sm:$0x1]
      %v3696 = vsel %vm3679, 0, %v3695
      %3697 = vst [vmem:[#allocation2 + $0x2c] sm:$0x1] %v3696
      %v3698 = vld [vmem:[#allocation2 + $0x34] sm:$0x1]
      %v3699 = vsel %vm3679, 0, %v3698
      %3700 = vst [vmem:[#allocation2 + $0x34] sm:$0x1] %v3699
      %v3701 = vld [vmem:[#allocation2 + $0x3c] sm:$0x1]
      %v3702 = vsel %vm3679, 0, %v3701
      %3703 = vst [vmem:[#allocation2 + $0x3c] sm:$0x1] %v3702
      %v3704 = vld [vmem:[#allocation2 + $0x44] sm:$0x1]
      %v3705 = vsel %vm3679, 0, %v3704
      %3706 = vst [vmem:[#allocation2 + $0x44] sm:$0x1] %v3705
      %v3707 = vld [vmem:[#allocation2 + $0x4c] sm:$0x1]
      %v3708 = vsel %vm3679, 0, %v3707
      %3709 = vst [vmem:[#allocation2 + $0x4c] sm:$0x1] %v3708
      %v3774 = vunpack.c.l.b16 %v3197
      %v3775 = vunpack.c.l.b16 %v3204
      %v3776 = vunpack.c.l.b16 %v3211
      %v3777 = vunpack.c.l.b16 %v3218
      %v3778 = vunpack.c.l.b16 %v3225
      %v3779 = vunpack.c.l.b16 %v3232
      %v3780 = vunpack.c.l.b16 %v3239
      %v3781 = vunpack.c.l.b16 %v3246
      %v3782 = vunpack.c.l.b16 %v3253
      %v3783 = vunpack.c.l.b16 %v3260
      %v3784 = vunpack.c.l.b16 %v3267
      %v3785 = vunpack.c.l.b16 %v3274
      %v3786 = vunpack.c.l.b16 %v3281
      %v3787 = vunpack.c.l.b16 %v3288
      %v3788 = vunpack.c.l.b16 %v3295
      %v3789 = vunpack.c.l.b16 %v3302
      %v3790 = vunpack.c.l.b16 %v3309
      %v3791 = vunpack.c.l.b16 %v3316
      %v3792 = vunpack.c.l.b16 %v3323
      %v3793 = vunpack.c.l.b16 %v3330
      %v3794 = vunpack.c.l.b16 %v3337
      %v3795 = vunpack.c.l.b16 %v3344
      %v3796 = vunpack.c.l.b16 %v3351
      %v3797 = vunpack.c.l.b16 %v3358
      %v3798 = vunpack.c.l.b16 %v3365
      %v3799 = vunpack.c.l.b16 %v3372
      %v3800 = vunpack.c.l.b16 %v3379
      %v3801 = vunpack.c.l.b16 %v3386
      %v3802 = vunpack.c.l.b16 %v3393
      %v3803 = vunpack.c.l.b16 %v3400
      %v3804 = vunpack.c.l.b16 %v3407
      %v3805 = vunpack.c.l.b16 %v3414
      %v3806 = vunpack.c.l.b16 %v3421
      %v3807 = vunpack.c.l.b16 %v3428
      %v3808 = vunpack.c.l.b16 %v3435
      %v3809 = vunpack.c.l.b16 %v3442
      %v3810 = vunpack.c.l.b16 %v3449
      %v3811 = vunpack.c.l.b16 %v3456
      %v3812 = vunpack.c.l.b16 %v3463
      %v3813 = vunpack.c.l.b16 %v3470
      %v3814 = vunpack.c.l.b16 %v3477
      %v3815 = vunpack.c.l.b16 %v3484
      %v3816 = vunpack.c.l.b16 %v3491
      %v3817 = vunpack.c.l.b16 %v3498
      %v3818 = vunpack.c.l.b16 %v3505
      %v3819 = vunpack.c.l.b16 %v3512
      %v3820 = vunpack.c.l.b16 %v3519
      %v3821 = vunpack.c.l.b16 %v3526
      %v3822 = vunpack.c.l.b16 %v3533
      %v3823 = vunpack.c.l.b16 %v3540
      %v3824 = vunpack.c.l.b16 %v3547
      %v3825 = vunpack.c.l.b16 %v3554
      %v3826 = vunpack.c.l.b16 %v3561
      %v3827 = vunpack.c.l.b16 %v3568
      %v3828 = vunpack.c.l.b16 %v3575
      %v3829 = vunpack.c.l.b16 %v3582
      %v3830 = vunpack.c.l.b16 %v3589
      %v3831 = vunpack.c.l.b16 %v3596
      %v3832 = vunpack.c.l.b16 %v3603
      %v3833 = vunpack.c.l.b16 %v3610
      %v3834 = vunpack.c.l.b16 %v3617
      %v3835 = vunpack.c.l.b16 %v3624
      %v3836 = vunpack.c.l.b16 %v3631
      %v3837 = vunpack.c.l.b16 %v3638
      %v3838 = vpack.c.b16 %v3774, %v3774
      %v3839 = vpack.c.b16 %v3775, %v3775
      %v3840 = vpack.c.b16 %v3776, %v3776
      %v3841 = vpack.c.b16 %v3777, %v3777
      %v3842 = vpack.c.b16 %v3778, %v3778
      %v3843 = vpack.c.b16 %v3779, %v3779
      %v3844 = vpack.c.b16 %v3780, %v3780
      %v3845 = vpack.c.b16 %v3781, %v3781
      %v3846 = vpack.c.b16 %v3782, %v3782
      %v3847 = vpack.c.b16 %v3783, %v3783
      %v3848 = vpack.c.b16 %v3784, %v3784
      %v3849 = vpack.c.b16 %v3785, %v3785
      %v3850 = vpack.c.b16 %v3786, %v3786
      %v3851 = vpack.c.b16 %v3787, %v3787
      %v3852 = vpack.c.b16 %v3788, %v3788
      %v3853 = vpack.c.b16 %v3789, %v3789
      %v3854 = vpack.c.b16 %v3790, %v3790
      %v3855 = vpack.c.b16 %v3791, %v3791
      %v3856 = vpack.c.b16 %v3792, %v3792
      %v3857 = vpack.c.b16 %v3793, %v3793
      %v3858 = vpack.c.b16 %v3794, %v3794
      %v3859 = vpack.c.b16 %v3795, %v3795
      %v3860 = vpack.c.b16 %v3796, %v3796
      %v3861 = vpack.c.b16 %v3797, %v3797
      %v3862 = vpack.c.b16 %v3798, %v3798
      %v3863 = vpack.c.b16 %v3799, %v3799
      %v3864 = vpack.c.b16 %v3800, %v3800
      %v3865 = vpack.c.b16 %v3801, %v3801
      %v3866 = vpack.c.b16 %v3802, %v3802
      %v3867 = vpack.c.b16 %v3803, %v3803
      %v3868 = vpack.c.b16 %v3804, %v3804
      %v3869 = vpack.c.b16 %v3805, %v3805
      %v3870 = vpack.c.b16 %v3806, %v3806
      %v3871 = vpack.c.b16 %v3807, %v3807
      %v3872 = vpack.c.b16 %v3808, %v3808
      %v3873 = vpack.c.b16 %v3809, %v3809
      %v3874 = vpack.c.b16 %v3810, %v3810
      %v3875 = vpack.c.b16 %v3811, %v3811
      %v3876 = vpack.c.b16 %v3812, %v3812
      %v3877 = vpack.c.b16 %v3813, %v3813
      %v3878 = vpack.c.b16 %v3814, %v3814
      %v3879 = vpack.c.b16 %v3815, %v3815
      %v3880 = vpack.c.b16 %v3816, %v3816
      %v3881 = vpack.c.b16 %v3817, %v3817
      %v3882 = vpack.c.b16 %v3818, %v3818
      %v3883 = vpack.c.b16 %v3819, %v3819
      %v3884 = vpack.c.b16 %v3820, %v3820
      %v3885 = vpack.c.b16 %v3821, %v3821
      %v3886 = vpack.c.b16 %v3822, %v3822
      %v3887 = vpack.c.b16 %v3823, %v3823
      %v3888 = vpack.c.b16 %v3824, %v3824
      %v3889 = vpack.c.b16 %v3825, %v3825
      %v3890 = vpack.c.b16 %v3826, %v3826
      %v3891 = vpack.c.b16 %v3827, %v3827
      %v3892 = vpack.c.b16 %v3828, %v3828
      %v3893 = vpack.c.b16 %v3829, %v3829
      %v3894 = vpack.c.b16 %v3830, %v3830
      %v3895 = vpack.c.b16 %v3831, %v3831
      %v3896 = vpack.c.b16 %v3832, %v3832
      %v3897 = vpack.c.b16 %v3833, %v3833
      %v3898 = vpack.c.b16 %v3834, %v3834
      %v3899 = vpack.c.b16 %v3835, %v3835
      %v3900 = vpack.c.b16 %v3836, %v3836
      %v3901 = vpack.c.b16 %v3837, %v3837
      %v3902 = vunpack.c.l.b16 %v3838
      %v3903 = vunpack.c.l.b16 %v3839
      %v3904 = vunpack.c.l.b16 %v3840
      %v3905 = vunpack.c.l.b16 %v3841
      %v3906 = vunpack.c.l.b16 %v3842
      %v3907 = vunpack.c.l.b16 %v3843
      %v3908 = vunpack.c.l.b16 %v3844
      %v3909 = vunpack.c.l.b16 %v3845
      %v3910 = vunpack.c.l.b16 %v3846
      %v3911 = vunpack.c.l.b16 %v3847
      %v3912 = vunpack.c.l.b16 %v3848
      %v3913 = vunpack.c.l.b16 %v3849
      %v3914 = vunpack.c.l.b16 %v3850
      %v3915 = vunpack.c.l.b16 %v3851
      %v3916 = vunpack.c.l.b16 %v3852
      %v3917 = vunpack.c.l.b16 %v3853
      %v3918 = vunpack.c.l.b16 %v3854
      %v3919 = vunpack.c.l.b16 %v3855
      %v3920 = vunpack.c.l.b16 %v3856
      %v3921 = vunpack.c.l.b16 %v3857
      %v3922 = vunpack.c.l.b16 %v3858
      %v3923 = vunpack.c.l.b16 %v3859
      %v3924 = vunpack.c.l.b16 %v3860
      %v3925 = vunpack.c.l.b16 %v3861
      %v3926 = vunpack.c.l.b16 %v3862
      %v3927 = vunpack.c.l.b16 %v3863
      %v3928 = vunpack.c.l.b16 %v3864
      %v3929 = vunpack.c.l.b16 %v3865
      %v3930 = vunpack.c.l.b16 %v3866
      %v3931 = vunpack.c.l.b16 %v3867
      %v3932 = vunpack.c.l.b16 %v3868
      %v3933 = vunpack.c.l.b16 %v3869
      %v3934 = vunpack.c.l.b16 %v3870
      %v3935 = vunpack.c.l.b16 %v3871
      %v3936 = vunpack.c.l.b16 %v3872
      %v3937 = vunpack.c.l.b16 %v3873
      %v3938 = vunpack.c.l.b16 %v3874
      %v3939 = vunpack.c.l.b16 %v3875
      %v3940 = vunpack.c.l.b16 %v3876
      %v3941 = vunpack.c.l.b16 %v3877
      %v3942 = vunpack.c.l.b16 %v3878
      %v3943 = vunpack.c.l.b16 %v3879
      %v3944 = vunpack.c.l.b16 %v3880
      %v3945 = vunpack.c.l.b16 %v3881
      %v3946 = vunpack.c.l.b16 %v3882
      %v3947 = vunpack.c.l.b16 %v3883
      %v3948 = vunpack.c.l.b16 %v3884
      %v3949 = vunpack.c.l.b16 %v3885
      %v3950 = vunpack.c.l.b16 %v3886
      %v3951 = vunpack.c.l.b16 %v3887
      %v3952 = vunpack.c.l.b16 %v3888
      %v3953 = vunpack.c.l.b16 %v3889
      %v3954 = vunpack.c.l.b16 %v3890
      %v3955 = vunpack.c.l.b16 %v3891
      %v3956 = vunpack.c.l.b16 %v3892
      %v3957 = vunpack.c.l.b16 %v3893
      %v3958 = vunpack.c.l.b16 %v3894
      %v3959 = vunpack.c.l.b16 %v3895
      %v3960 = vunpack.c.l.b16 %v3896
      %v3961 = vunpack.c.l.b16 %v3897
      %v3962 = vunpack.c.l.b16 %v3898
      %v3963 = vunpack.c.l.b16 %v3899
      %v3964 = vunpack.c.l.b16 %v3900
      %v3965 = vunpack.c.l.b16 %v3901
      %vm3966 = vcmask 1042434
      %v3967 = vsel %vm3966, %v3903, %v3902
      %vm3968 = vcmask 1043459
      %v3969 = vsel %vm3968, %v3904, %v3967
      %vm3970 = vcmask 1044484
      %v3971 = vsel %vm3970, %v3905, %v3969
      %vm3972 = vcmask 1045509
      %v3973 = vsel %vm3972, %v3906, %v3971
      %vm3974 = vcmask 1046534
      %v3975 = vsel %vm3974, %v3907, %v3973
      %vm3976 = vcmask 1047559
      %v3977 = vsel %vm3976, %v3908, %v3975
      %v3978 = vsel %vm3966, %v3911, %v3910
      %v3979 = vsel %vm3968, %v3912, %v3978
      %v3980 = vsel %vm3970, %v3913, %v3979
      %v3981 = vsel %vm3972, %v3914, %v3980
      %v3982 = vsel %vm3974, %v3915, %v3981
      %v3983 = vsel %vm3976, %v3916, %v3982
      %v3984 = vsel %vm3966, %v3919, %v3918
      %v3985 = vsel %vm3968, %v3920, %v3984
      %v3986 = vsel %vm3970, %v3921, %v3985
      %v3987 = vsel %vm3972, %v3922, %v3986
      %v3988 = vsel %vm3974, %v3923, %v3987
      %v3989 = vsel %vm3976, %v3924, %v3988
      %v3990 = vsel %vm3966, %v3927, %v3926
      %v3991 = vsel %vm3968, %v3928, %v3990
      %v3992 = vsel %vm3970, %v3929, %v3991
      %v3993 = vsel %vm3972, %v3930, %v3992
      %v3994 = vsel %vm3974, %v3931, %v3993
      %v3995 = vsel %vm3976, %v3932, %v3994
      %v3996 = vsel %vm3966, %v3935, %v3934
      %v3997 = vsel %vm3968, %v3936, %v3996
      %v3998 = vsel %vm3970, %v3937, %v3997
      %v3999 = vsel %vm3972, %v3938, %v3998
      %v4000 = vsel %vm3974, %v3939, %v3999
      %v4001 = vsel %vm3976, %v3940, %v4000
      %v4002 = vsel %vm3966, %v3943, %v3942
      %v4003 = vsel %vm3968, %v3944, %v4002
      %v4004 = vsel %vm3970, %v3945, %v4003
      %v4005 = vsel %vm3972, %v3946, %v4004
      %v4006 = vsel %vm3974, %v3947, %v4005
      %v4007 = vsel %vm3976, %v3948, %v4006
      %v4008 = vsel %vm3966, %v3951, %v3950
      %v4009 = vsel %vm3968, %v3952, %v4008
      %v4010 = vsel %vm3970, %v3953, %v4009
      %v4011 = vsel %vm3972, %v3954, %v4010
      %v4012 = vsel %vm3974, %v3955, %v4011
      %v4013 = vsel %vm3976, %v3956, %v4012
      %v4014 = vsel %vm3966, %v3959, %v3958
      %v4015 = vsel %vm3968, %v3960, %v4014
      %v4016 = vsel %vm3970, %v3961, %v4015
      %v4017 = vsel %vm3972, %v3962, %v4016
      %v4018 = vsel %vm3974, %v3963, %v4017
      %v4019 = vsel %vm3976, %v3964, %v4018
      %v4020 = vpack.c.b16 %v3977, %v3977
      %v4021 = vpack.c.b16 %v3909, %v3909
      %v4022 = vpack.c.b16 %v3983, %v3983
      %v4023 = vpack.c.b16 %v3917, %v3917
      %v4024 = vpack.c.b16 %v3989, %v3989
      %v4025 = vpack.c.b16 %v3925, %v3925
      %v4026 = vpack.c.b16 %v3995, %v3995
      %v4027 = vpack.c.b16 %v3933, %v3933
      %v4028 = vpack.c.b16 %v4001, %v4001
      %v4029 = vpack.c.b16 %v3941, %v3941
      %v4030 = vpack.c.b16 %v4007, %v4007
      %v4031 = vpack.c.b16 %v3949, %v3949
      %v4032 = vpack.c.b16 %v4013, %v4013
      %v4033 = vpack.c.b16 %v3957, %v3957
      %v4034 = vpack.c.b16 %v4019, %v4019
      %v4035 = vpack.c.b16 %v3965, %v3965
      %s4052 = scalar_lea.vmem [#allocation2], 8
      %vm4053 = vcmask 519168
      %vm4054 = vmand %vm4053, %vm3678
      %v4055 = vld [vmem:[%s4052] sm:$0xf]
      %v4056 = vsel %vm4054, %v4020, %v4055
      %4057 = vst [vmem:[%s4052] sm:$0xf] %v4056
      %v4058 = vld [vmem:[%s4052 + $0x4] sm:$0x1]
      %v4059 = vsel %vm3647, %v4021, %v4058
      %4060 = vst [vmem:[%s4052 + $0x4] sm:$0x1] %v4059
      %v4061 = vld [vmem:[%s4052 + $0x8] sm:$0xf]
      %v4062 = vsel %vm4054, %v4022, %v4061
      %4063 = vst [vmem:[%s4052 + $0x8] sm:$0xf] %v4062
      %v4064 = vld [vmem:[%s4052 + $0xc] sm:$0x1]
      %v4065 = vsel %vm3647, %v4023, %v4064
      %4066 = vst [vmem:[%s4052 + $0xc] sm:$0x1] %v4065
      %v4067 = vld [vmem:[%s4052 + $0x10] sm:$0xf]
      %v4068 = vsel %vm4054, %v4024, %v4067
      %4069 = vst [vmem:[%s4052 + $0x10] sm:$0xf] %v4068
      %v4070 = vld [vmem:[%s4052 + $0x14] sm:$0x1]
      %v4071 = vsel %vm3647, %v4025, %v4070
      %4072 = vst [vmem:[%s4052 + $0x14] sm:$0x1] %v4071
      %v4073 = vld [vmem:[%s4052 + $0x18] sm:$0xf]
      %v4074 = vsel %vm4054, %v4026, %v4073
      %4075 = vst [vmem:[%s4052 + $0x18] sm:$0xf] %v4074
      %v4076 = vld [vmem:[%s4052 + $0x1c] sm:$0x1]
      %v4077 = vsel %vm3647, %v4027, %v4076
      %4078 = vst [vmem:[%s4052 + $0x1c] sm:$0x1] %v4077
      %v4079 = vld [vmem:[%s4052 + $0x20] sm:$0xf]
      %v4080 = vsel %vm4054, %v4028, %v4079
      %4081 = vst [vmem:[%s4052 + $0x20] sm:$0xf] %v4080
      %v4082 = vld [vmem:[%s4052 + $0x24] sm:$0x1]
      %v4083 = vsel %vm3647, %v4029, %v4082
      %4084 = vst [vmem:[%s4052 + $0x24] sm:$0x1] %v4083
      %v4085 = vld [vmem:[%s4052 + $0x28] sm:$0xf]
      %v4086 = vsel %vm4054, %v4030, %v4085
      %4087 = vst [vmem:[%s4052 + $0x28] sm:$0xf] %v4086
      %v4088 = vld [vmem:[%s4052 + $0x2c] sm:$0x1]
      %v4089 = vsel %vm3647, %v4031, %v4088
      %4090 = vst [vmem:[%s4052 + $0x2c] sm:$0x1] %v4089
      %v4091 = vld [vmem:[%s4052 + $0x30] sm:$0xf]
      %v4092 = vsel %vm4054, %v4032, %v4091
      %4093 = vst [vmem:[%s4052 + $0x30] sm:$0xf] %v4092
      %v4094 = vld [vmem:[%s4052 + $0x34] sm:$0x1]
      %v4095 = vsel %vm3647, %v4033, %v4094
      %4096 = vst [vmem:[%s4052 + $0x34] sm:$0x1] %v4095
      %v4097 = vld [vmem:[%s4052 + $0x38] sm:$0xf]
      %v4098 = vsel %vm4054, %v4034, %v4097
      %4099 = vst [vmem:[%s4052 + $0x38] sm:$0xf] %v4098
      %v4100 = vld [vmem:[%s4052 + $0x3c] sm:$0x1]
      %v4101 = vsel %vm3647, %v4035, %v4100
      %4102 = vst [vmem:[%s4052 + $0x3c] sm:$0x1] %v4101
      %v4103 = vld [vmem:[#allocation2] sm:$0xf]
      %v4104 = vld [vmem:[#allocation2 + $0x8] sm:$0xf]
      %v4105 = vld [vmem:[#allocation2 + $0x10] sm:$0xf]
      %v4106 = vld [vmem:[#allocation2 + $0x18] sm:$0xf]
      %v4107 = vld [vmem:[#allocation2 + $0x20] sm:$0xf]
      %v4108 = vld [vmem:[#allocation2 + $0x28] sm:$0xf]
      %v4109 = vld [vmem:[#allocation2 + $0x30] sm:$0xf]
      %v4110 = vld [vmem:[#allocation2 + $0x38] sm:$0xf]
      %v4111 = vld [vmem:[%s3] sm:$0xf]
      %v4112 = vld [vmem:[%s3 + $0x4] sm:$0xf]
      %v4113 = vld [vmem:[%s3 + $0x8] sm:$0xf]
      %v4114 = vld [vmem:[%s3 + $0xc] sm:$0xf]
      %v4115 = vld [vmem:[%s3 + $0x10] sm:$0xf]
      %v4116 = vld [vmem:[%s3 + $0x14] sm:$0xf]
      %v4117 = vld [vmem:[%s3 + $0x18] sm:$0xf]
      %v4118 = vld [vmem:[%s3 + $0x1c] sm:$0xf]
      %v4119 = vld [vmem:[#allocation2 + $0x4] sm:$0x1]
      %v4120 = vld [vmem:[#allocation2 + $0xc] sm:$0x1]
      %v4121 = vld [vmem:[#allocation2 + $0x14] sm:$0x1]
      %v4122 = vld [vmem:[#allocation2 + $0x1c] sm:$0x1]
      %v4123 = vld [vmem:[#allocation2 + $0x24] sm:$0x1]
      %v4124 = vld [vmem:[#allocation2 + $0x2c] sm:$0x1]
      %v4125 = vld [vmem:[#allocation2 + $0x34] sm:$0x1]
      %v4126 = vld [vmem:[#allocation2 + $0x3c] sm:$0x1]
      %vm4127 = vsmask.f32 3328
      %vm4128 = vsmask.f32 7440
      %vm4129 = vmor %vm4127, %vm4128
      %v4131 = vshrl.u32 %v4103, 16
      %v4133 = vrot.slane %v4131, 4
      %v4134 = vshll.u32 %v4103, 16
      %v4136 = vrot.slane %v4134, 5
      %v4137 = vor.u32 %v4133, %v4136
      %v4138 = vrot.slane %v4137, 4
      %v4140 = vshll.u32 %v4119, 16
      %v4142 = vrot.slane %v4140, 5
      %v4143 = vsel %vm4129, %v4138, %v4142
      %v4145 = vshrl.u32 %v4104, 16
      %v4147 = vrot.slane %v4145, 4
      %v4148 = vshll.u32 %v4104, 16
      %v4150 = vrot.slane %v4148, 5
      %v4151 = vor.u32 %v4147, %v4150
      %v4152 = vrot.slane %v4151, 4
      %v4154 = vshll.u32 %v4120, 16
      %v4156 = vrot.slane %v4154, 5
      %v4157 = vsel %vm4129, %v4152, %v4156
      %v4159 = vshrl.u32 %v4105, 16
      %v4161 = vrot.slane %v4159, 4
      %v4162 = vshll.u32 %v4105, 16
      %v4164 = vrot.slane %v4162, 5
      %v4165 = vor.u32 %v4161, %v4164
      %v4166 = vrot.slane %v4165, 4
      %v4168 = vshll.u32 %v4121, 16
      %v4170 = vrot.slane %v4168, 5
      %v4171 = vsel %vm4129, %v4166, %v4170
      %v4173 = vshrl.u32 %v4106, 16
      %v4175 = vrot.slane %v4173, 4
      %v4176 = vshll.u32 %v4106, 16
      %v4178 = vrot.slane %v4176, 5
      %v4179 = vor.u32 %v4175, %v4178
      %v4180 = vrot.slane %v4179, 4
      %v4182 = vshll.u32 %v4122, 16
      %v4184 = vrot.slane %v4182, 5
      %v4185 = vsel %vm4129, %v4180, %v4184
      %v4187 = vshrl.u32 %v4107, 16
      %v4189 = vrot.slane %v4187, 4
      %v4190 = vshll.u32 %v4107, 16
      %v4192 = vrot.slane %v4190, 5
      %v4193 = vor.u32 %v4189, %v4192
      %v4194 = vrot.slane %v4193, 4
      %v4196 = vshll.u32 %v4123, 16
      %v4198 = vrot.slane %v4196, 5
      %v4199 = vsel %vm4129, %v4194, %v4198
      %v4201 = vshrl.u32 %v4108, 16
      %v4203 = vrot.slane %v4201, 4
      %v4204 = vshll.u32 %v4108, 16
      %v4206 = vrot.slane %v4204, 5
      %v4207 = vor.u32 %v4203, %v4206
      %v4208 = vrot.slane %v4207, 4
      %v4210 = vshll.u32 %v4124, 16
      %v4212 = vrot.slane %v4210, 5
      %v4213 = vsel %vm4129, %v4208, %v4212
      %v4215 = vshrl.u32 %v4109, 16
      %v4217 = vrot.slane %v4215, 4
      %v4218 = vshll.u32 %v4109, 16
      %v4220 = vrot.slane %v4218, 5
      %v4221 = vor.u32 %v4217, %v4220
      %v4222 = vrot.slane %v4221, 4
      %v4224 = vshll.u32 %v4125, 16
      %v4226 = vrot.slane %v4224, 5
      %v4227 = vsel %vm4129, %v4222, %v4226
      %v4229 = vshrl.u32 %v4110, 16
      %v4231 = vrot.slane %v4229, 4
      %v4232 = vshll.u32 %v4110, 16
      %v4234 = vrot.slane %v4232, 5
      %v4235 = vor.u32 %v4231, %v4234
      %v4236 = vrot.slane %v4235, 4
      %v4238 = vshll.u32 %v4126, 16
      %v4240 = vrot.slane %v4238, 5
      %v4241 = vsel %vm4129, %v4236, %v4240
      %v4242 = vld [vmem:[%s3 + $0x20] sm:$0xf]
      %v4243 = vld [vmem:[%s3 + $0x24] sm:$0xf]
      %v4244 = vld [vmem:[%s3 + $0x28] sm:$0xf]
      %v4245 = vld [vmem:[%s3 + $0x2c] sm:$0xf]
      %v4246 = vld [vmem:[%s3 + $0x30] sm:$0xf]
      %v4247 = vld [vmem:[%s3 + $0x34] sm:$0xf]
      %v4248 = vld [vmem:[%s3 + $0x38] sm:$0xf]
      %v4249 = vld [vmem:[%s3 + $0x3c] sm:$0xf]
      %v4250 = vunpack.c.l.b16 %v4143
      %v4251 = vunpack.c.l.b16 %v4157
      %v4252 = vunpack.c.l.b16 %v4171
      %v4253 = vunpack.c.l.b16 %v4185
      %v4254 = vunpack.c.l.b16 %v4199
      %v4255 = vunpack.c.l.b16 %v4213
      %v4256 = vunpack.c.l.b16 %v4227
      %v4257 = vunpack.c.l.b16 %v4241
      %v4258 = vpack.c.b16 %v4251, %v4250
      %v4259 = vpack.c.b16 %v4253, %v4252
      %v4260 = vpack.c.b16 %v4255, %v4254
      %v4261 = vpack.c.b16 %v4257, %v4256
      %v4270 = vunpack.c.l.b16 %v4242
      %v4271 = vunpack.c.l.b16 %v4243
      %v4272 = vunpack.c.l.b16 %v4244
      %v4273 = vunpack.c.l.b16 %v4245
      %v4274 = vunpack.c.l.b16 %v4246
      %v4275 = vunpack.c.l.b16 %v4247
      %v4276 = vunpack.c.l.b16 %v4248
      %v4277 = vunpack.c.l.b16 %v4249
      %v4278 = vpack.c.b16 %v4271, %v4270
      %v4279 = vpack.c.b16 %v4273, %v4272
      %v4280 = vpack.c.b16 %v4275, %v4274
      %v4281 = vpack.c.b16 %v4277, %v4276
      %v4287 = vsel %vm3190, %v4258, 0
      %v4290 = vsel %vm3190, %v4259, 0
      %v4293 = vsel %vm3190, %v4260, 0
      %v4296 = vsel %vm3190, %v4261, 0
      %4298 = vmatprep.subr.bf16.mxu0 0
      %4299 = vmatpush1.bf16.msra.mxu0 0
      %4300 = vmatprep.subr.bf16.mxu0 0
      %4301 = vmatpush1.bf16.msra.mxu0 0
      %4302 = vmatprep.subr.bf16.mxu0 0
      %4303 = vmatpush1.bf16.msra.mxu0 0
      %4304 = vmatprep.subr.bf16.mxu0 0
      %4305 = vmatpush1.bf16.msra.mxu0 0
      %4306 = vmatprep.subr.bf16.mxu0 0
      %4307 = vmatpush1.bf16.msra.mxu0 %v4281
      %4308 = vmatprep.subr.bf16.mxu0 0
      %4309 = vmatpush1.bf16.msra.mxu0 %v4280
      %4310 = vmatprep.subr.bf16.mxu0 0
      %4311 = vmatpush1.bf16.msra.mxu0 %v4279
      %4312 = vmatprep.subr.bf16.mxu0 0
      %4313 = vmatpush1.bf16.msra.mxu0 %v4278
      %4314 = vmatprep.subr.bf16.mxu0 0
      %4315 = vmatpush2.bf16.msra.mxu0 0
      %4316 = vmatprep.subr.bf16.mxu0 0
      %4317 = vmatpush2.bf16.msra.mxu0 0
      %4318 = vmatprep.subr.bf16.mxu0 0
      %4319 = vmatpush2.bf16.msra.mxu0 0
      %4320 = vmatprep.subr.bf16.mxu0 0
      %4321 = vmatpush2.bf16.msra.mxu0 0
      %4322 = vmatprep.subr.bf16.mxu0 0
      %4323 = vmatpush2.bf16.msra.mxu0 0
      %4324 = vmatprep.subr.bf16.mxu0 0
      %4325 = vmatpush2.bf16.msra.mxu0 0
      %4326 = vmatprep.subr.bf16.mxu0 0
      %4327 = vmatpush2.bf16.msra.mxu0 0
      %4328 = vmatprep.subr.bf16.mxu0 0
      %4329 = vmatpush2.bf16.msra.mxu0 0
      %4330 = vmatprep.mubr.bf16.mxu0 0
      %4331 = vmatmul.mubr.bf16.gmra.mxu0 %v4287
      %v4332 = vpop.f32.mrf.mxu0
      %v4333 = vadd.f32 0.0, %v4332
      %v4334 = vpop.f32.mrf.mxu0
      %v4335 = vpop.f32.mrf.mxu0
      %v4336 = vadd.f32 0.0, %v4335
      %v4337 = vpop.f32.mrf.mxu0
      %4338 = vmatprep.mubr.bf16.mxu0 0
      %4339 = vmatmul.mubr.bf16.gmra.mxu0 %v4290
      %v4340 = vpop.f32.mrf.mxu0
      %v4341 = vadd.f32 0.0, %v4340
      %v4342 = vpop.f32.mrf.mxu0
      %v4343 = vpop.f32.mrf.mxu0
      %v4344 = vadd.f32 0.0, %v4343
      %v4345 = vpop.f32.mrf.mxu0
      %4346 = vmatprep.mubr.bf16.mxu0 0
      %4347 = vmatmul.mubr.bf16.gmra.mxu0 %v4293
      %v4348 = vpop.f32.mrf.mxu0
      %v4349 = vadd.f32 0.0, %v4348
      %v4350 = vpop.f32.mrf.mxu0
      %v4351 = vpop.f32.mrf.mxu0
      %v4352 = vadd.f32 0.0, %v4351
      %v4353 = vpop.f32.mrf.mxu0
      %4354 = vmatprep.mubr.bf16.mxu0 0
      %4355 = vmatmul.mubr.bf16.gmra.mxu0 %v4296
      %v4356 = vpop.f32.mrf.mxu0
      %v4357 = vadd.f32 0.0, %v4356
      %v4358 = vpop.f32.mrf.mxu0
      %v4359 = vpop.f32.mrf.mxu0
      %v4360 = vadd.f32 0.0, %v4359
      %v4361 = vpop.f32.mrf.mxu0
      %4362 = vdwg.mxu0
      %v4371 = vunpack.c.l.b16 %v4103
      %v4372 = vunpack.c.l.b16 %v4104
      %v4373 = vunpack.c.l.b16 %v4105
      %v4374 = vunpack.c.l.b16 %v4106
      %v4375 = vunpack.c.l.b16 %v4107
      %v4376 = vunpack.c.l.b16 %v4108
      %v4377 = vunpack.c.l.b16 %v4109
      %v4378 = vunpack.c.l.b16 %v4110
      %v4379 = vpack.c.b16 %v4372, %v4371
      %v4380 = vpack.c.b16 %v4374, %v4373
      %v4381 = vpack.c.b16 %v4376, %v4375
      %v4382 = vpack.c.b16 %v4378, %v4377
      %v4391 = vunpack.c.l.b16 %v4111
      %v4392 = vunpack.c.l.b16 %v4112
      %v4393 = vunpack.c.l.b16 %v4113
      %v4394 = vunpack.c.l.b16 %v4114
      %v4395 = vunpack.c.l.b16 %v4115
      %v4396 = vunpack.c.l.b16 %v4116
      %v4397 = vunpack.c.l.b16 %v4117
      %v4398 = vunpack.c.l.b16 %v4118
      %v4399 = vpack.c.b16 %v4392, %v4391
      %v4400 = vpack.c.b16 %v4394, %v4393
      %v4401 = vpack.c.b16 %v4396, %v4395
      %v4402 = vpack.c.b16 %v4398, %v4397
      %v4408 = vsel %vm3190, %v4379, 0
      %v4411 = vsel %vm3190, %v4380, 0
      %v4414 = vsel %vm3190, %v4381, 0
      %v4417 = vsel %vm3190, %v4382, 0
      %4419 = vmatprep.subr.bf16.mxu0 0
      %4420 = vmatpush1.bf16.msra.mxu0 0
      %4421 = vmatprep.subr.bf16.mxu0 0
      %4422 = vmatpush1.bf16.msra.mxu0 0
      %4423 = vmatprep.subr.bf16.mxu0 0
      %4424 = vmatpush1.bf16.msra.mxu0 0
      %4425 = vmatprep.subr.bf16.mxu0 0
      %4426 = vmatpush1.bf16.msra.mxu0 0
      %4427 = vmatprep.subr.bf16.mxu0 0
      %4428 = vmatpush1.bf16.msra.mxu0 %v4402
      %4429 = vmatprep.subr.bf16.mxu0 0
      %4430 = vmatpush1.bf16.msra.mxu0 %v4401
      %4431 = vmatprep.subr.bf16.mxu0 0
      %4432 = vmatpush1.bf16.msra.mxu0 %v4400
      %4433 = vmatprep.subr.bf16.mxu0 0
      %4434 = vmatpush1.bf16.msra.mxu0 %v4399
      %4435 = vmatprep.subr.bf16.mxu0 0
      %4436 = vmatpush2.bf16.msra.mxu0 0
      %4437 = vmatprep.subr.bf16.mxu0 0
      %4438 = vmatpush2.bf16.msra.mxu0 0
      %4439 = vmatprep.subr.bf16.mxu0 0
      %4440 = vmatpush2.bf16.msra.mxu0 0
      %4441 = vmatprep.subr.bf16.mxu0 0
      %4442 = vmatpush2.bf16.msra.mxu0 0
      %4443 = vmatprep.subr.bf16.mxu0 0
      %4444 = vmatpush2.bf16.msra.mxu0 0
      %4445 = vmatprep.subr.bf16.mxu0 0
      %4446 = vmatpush2.bf16.msra.mxu0 0
      %4447 = vmatprep.subr.bf16.mxu0 0
      %4448 = vmatpush2.bf16.msra.mxu0 0
      %4449 = vmatprep.subr.bf16.mxu0 0
      %4450 = vmatpush2.bf16.msra.mxu0 0
      %4451 = vmatprep.mubr.bf16.mxu0 0
      %4452 = vmatmul.mubr.bf16.gmra.mxu0 %v4408
      %v4453 = vpop.f32.mrf.mxu0
      %v4454 = vadd.f32 %v4333, %v4453
      %v4455 = vpop.f32.mrf.mxu0
      %v4456 = vpop.f32.mrf.mxu0
      %v4457 = vadd.f32 %v4336, %v4456
      %v4458 = vpop.f32.mrf.mxu0
      %4459 = vmatprep.mubr.bf16.mxu0 0
      %4460 = vmatmul.mubr.bf16.gmra.mxu0 %v4411
      %v4461 = vpop.f32.mrf.mxu0
      %v4462 = vadd.f32 %v4341, %v4461
      %v4463 = vpop.f32.mrf.mxu0
      %v4464 = vpop.f32.mrf.mxu0
      %v4465 = vadd.f32 %v4344, %v4464
      %v4466 = vpop.f32.mrf.mxu0
      %4467 = vmatprep.mubr.bf16.mxu0 0
      %4468 = vmatmul.mubr.bf16.gmra.mxu0 %v4414
      %v4469 = vpop.f32.mrf.mxu0
      %v4470 = vadd.f32 %v4349, %v4469
      %v4471 = vpop.f32.mrf.mxu0
      %v4472 = vpop.f32.mrf.mxu0
      %v4473 = vadd.f32 %v4352, %v4472
      %v4474 = vpop.f32.mrf.mxu0
      %4475 = vmatprep.mubr.bf16.mxu0 0
      %4476 = vmatmul.mubr.bf16.gmra.mxu0 %v4417
      %v4477 = vpop.f32.mrf.mxu0
      %v4478 = vadd.f32 %v4357, %v4477
      %v4479 = vpop.f32.mrf.mxu0
      %v4480 = vpop.f32.mrf.mxu0
      %v4481 = vadd.f32 %v4360, %v4480
      %v4482 = vpop.f32.mrf.mxu0
      %4483 = vdwg.mxu0
      %v4484 = vld [vmem:[#allocation2] sm:$0xe]
      %v4485 = vld [vmem:[#allocation2 + $0x8] sm:$0xe]
      %v4486 = vld [vmem:[#allocation2 + $0x10] sm:$0xe]
      %v4487 = vld [vmem:[#allocation2 + $0x18] sm:$0xe]
      %v4488 = vld [vmem:[#allocation2 + $0x20] sm:$0xe]
      %v4489 = vld [vmem:[#allocation2 + $0x28] sm:$0xe]
      %v4490 = vld [vmem:[#allocation2 + $0x30] sm:$0xe]
      %v4491 = vld [vmem:[#allocation2 + $0x38] sm:$0xe]
      %vm4508 = vcmask 1042432
      %vm4509 = vcmask 1046532
      %vm4510 = vmor %vm4508, %vm4509
      %v4511 = vrot.slane %v4484, 5
      %v4512 = vrot.slane %v4511, 4
      %v4513 = vrot.slane %v4119, 5
      %v4514 = vsel %vm4510, %v4512, %v4513
      %v4515 = vrot.slane %v4485, 5
      %v4516 = vrot.slane %v4515, 4
      %v4517 = vrot.slane %v4120, 5
      %v4518 = vsel %vm4510, %v4516, %v4517
      %v4519 = vrot.slane %v4486, 5
      %v4520 = vrot.slane %v4519, 4
      %v4521 = vrot.slane %v4121, 5
      %v4522 = vsel %vm4510, %v4520, %v4521
      %v4523 = vrot.slane %v4487, 5
      %v4524 = vrot.slane %v4523, 4
      %v4525 = vrot.slane %v4122, 5
      %v4526 = vsel %vm4510, %v4524, %v4525
      %v4527 = vrot.slane %v4488, 5
      %v4528 = vrot.slane %v4527, 4
      %v4529 = vrot.slane %v4123, 5
      %v4530 = vsel %vm4510, %v4528, %v4529
      %v4531 = vrot.slane %v4489, 5
      %v4532 = vrot.slane %v4531, 4
      %v4533 = vrot.slane %v4124, 5
      %v4534 = vsel %vm4510, %v4532, %v4533
      %v4535 = vrot.slane %v4490, 5
      %v4536 = vrot.slane %v4535, 4
      %v4537 = vrot.slane %v4125, 5
      %v4538 = vsel %vm4510, %v4536, %v4537
      %v4539 = vrot.slane %v4491, 5
      %v4540 = vrot.slane %v4539, 4
      %v4541 = vrot.slane %v4126, 5
      %v4542 = vsel %vm4510, %v4540, %v4541
      %v4543 = vld [vmem:[%s3 + $0x40] sm:$0xf]
      %v4544 = vld [vmem:[%s3 + $0x44] sm:$0xf]
      %v4545 = vld [vmem:[%s3 + $0x48] sm:$0xf]
      %v4546 = vld [vmem:[%s3 + $0x4c] sm:$0xf]
      %v4547 = vld [vmem:[%s3 + $0x50] sm:$0xf]
      %v4548 = vld [vmem:[%s3 + $0x54] sm:$0xf]
      %v4549 = vld [vmem:[%s3 + $0x58] sm:$0xf]
      %v4550 = vld [vmem:[%s3 + $0x5c] sm:$0xf]
      %v4551 = vunpack.c.l.b16 %v4514
      %v4552 = vunpack.c.l.b16 %v4518
      %v4553 = vunpack.c.l.b16 %v4522
      %v4554 = vunpack.c.l.b16 %v4526
      %v4555 = vunpack.c.l.b16 %v4530
      %v4556 = vunpack.c.l.b16 %v4534
      %v4557 = vunpack.c.l.b16 %v4538
      %v4558 = vunpack.c.l.b16 %v4542
      %v4559 = vpack.c.b16 %v4552, %v4551
      %v4560 = vpack.c.b16 %v4554, %v4553
      %v4561 = vpack.c.b16 %v4556, %v4555
      %v4562 = vpack.c.b16 %v4558, %v4557
      %v4571 = vunpack.c.l.b16 %v4543
      %v4572 = vunpack.c.l.b16 %v4544
      %v4573 = vunpack.c.l.b16 %v4545
      %v4574 = vunpack.c.l.b16 %v4546
      %v4575 = vunpack.c.l.b16 %v4547
      %v4576 = vunpack.c.l.b16 %v4548
      %v4577 = vunpack.c.l.b16 %v4549
      %v4578 = vunpack.c.l.b16 %v4550
      %v4579 = vpack.c.b16 %v4572, %v4571
      %v4580 = vpack.c.b16 %v4574, %v4573
      %v4581 = vpack.c.b16 %v4576, %v4575
      %v4582 = vpack.c.b16 %v4578, %v4577
      %v4588 = vsel %vm3190, %v4559, 0
      %v4591 = vsel %vm3190, %v4560, 0
      %v4594 = vsel %vm3190, %v4561, 0
      %v4597 = vsel %vm3190, %v4562, 0
      %4599 = vmatprep.subr.bf16.mxu0 0
      %4600 = vmatpush1.bf16.msra.mxu0 0
      %4601 = vmatprep.subr.bf16.mxu0 0
      %4602 = vmatpush1.bf16.msra.mxu0 0
      %4603 = vmatprep.subr.bf16.mxu0 0
      %4604 = vmatpush1.bf16.msra.mxu0 0
      %4605 = vmatprep.subr.bf16.mxu0 0
      %4606 = vmatpush1.bf16.msra.mxu0 0
      %4607 = vmatprep.subr.bf16.mxu0 0
      %4608 = vmatpush1.bf16.msra.mxu0 %v4582
      %4609 = vmatprep.subr.bf16.mxu0 0
      %4610 = vmatpush1.bf16.msra.mxu0 %v4581
      %4611 = vmatprep.subr.bf16.mxu0 0
      %4612 = vmatpush1.bf16.msra.mxu0 %v4580
      %4613 = vmatprep.subr.bf16.mxu0 0
      %4614 = vmatpush1.bf16.msra.mxu0 %v4579
      %4615 = vmatprep.subr.bf16.mxu0 0
      %4616 = vmatpush2.bf16.msra.mxu0 0
      %4617 = vmatprep.subr.bf16.mxu0 0
      %4618 = vmatpush2.bf16.msra.mxu0 0
      %4619 = vmatprep.subr.bf16.mxu0 0
      %4620 = vmatpush2.bf16.msra.mxu0 0
      %4621 = vmatprep.subr.bf16.mxu0 0
      %4622 = vmatpush2.bf16.msra.mxu0 0
      %4623 = vmatprep.subr.bf16.mxu0 0
      %4624 = vmatpush2.bf16.msra.mxu0 0
      %4625 = vmatprep.subr.bf16.mxu0 0
      %4626 = vmatpush2.bf16.msra.mxu0 0
      %4627 = vmatprep.subr.bf16.mxu0 0
      %4628 = vmatpush2.bf16.msra.mxu0 0
      %4629 = vmatprep.subr.bf16.mxu0 0
      %4630 = vmatpush2.bf16.msra.mxu0 0
      %4631 = vmatprep.mubr.bf16.mxu0 0
      %4632 = vmatmul.mubr.bf16.gmra.mxu0 %v4588
      %v4633 = vpop.f32.mrf.mxu0
      %v4634 = vadd.f32 0.0, %v4633
      %v4635 = vpop.f32.mrf.mxu0
      %v4636 = vpop.f32.mrf.mxu0
      %v4637 = vadd.f32 0.0, %v4636
      %v4638 = vpop.f32.mrf.mxu0
      %4639 = vmatprep.mubr.bf16.mxu0 0
      %4640 = vmatmul.mubr.bf16.gmra.mxu0 %v4591
      %v4641 = vpop.f32.mrf.mxu0
      %v4642 = vadd.f32 0.0, %v4641
      %v4643 = vpop.f32.mrf.mxu0
      %v4644 = vpop.f32.mrf.mxu0
      %v4645 = vadd.f32 0.0, %v4644
      %v4646 = vpop.f32.mrf.mxu0
      %4647 = vmatprep.mubr.bf16.mxu0 0
      %4648 = vmatmul.mubr.bf16.gmra.mxu0 %v4594
      %v4649 = vpop.f32.mrf.mxu0
      %v4650 = vadd.f32 0.0, %v4649
      %v4651 = vpop.f32.mrf.mxu0
      %v4652 = vpop.f32.mrf.mxu0
      %v4653 = vadd.f32 0.0, %v4652
      %v4654 = vpop.f32.mrf.mxu0
      %4655 = vmatprep.mubr.bf16.mxu0 0
      %4656 = vmatmul.mubr.bf16.gmra.mxu0 %v4597
      %v4657 = vpop.f32.mrf.mxu0
      %v4658 = vadd.f32 0.0, %v4657
      %v4659 = vpop.f32.mrf.mxu0
      %v4660 = vpop.f32.mrf.mxu0
      %v4661 = vadd.f32 0.0, %v4660
      %v4662 = vpop.f32.mrf.mxu0
      %4663 = vdwg.mxu0
      %v4664 = vadd.f32 %v4454, %v4634
      %v4665 = vadd.f32 %v4457, %v4637
      %v4666 = vadd.f32 %v4462, %v4642
      %v4667 = vadd.f32 %v4465, %v4645
      %v4668 = vadd.f32 %v4470, %v4650
      %v4669 = vadd.f32 %v4473, %v4653
      %v4670 = vadd.f32 %v4478, %v4658
      %v4671 = vadd.f32 %v4481, %v4661
      %v4672 = vld [vmem:[%s4052] sm:$0xf]
      %v4673 = vld [vmem:[%s4052 + $0x8] sm:$0xf]
      %v4674 = vld [vmem:[%s4052 + $0x10] sm:$0xf]
      %v4675 = vld [vmem:[%s4052 + $0x18] sm:$0xf]
      %v4676 = vld [vmem:[%s4052 + $0x20] sm:$0xf]
      %v4677 = vld [vmem:[%s4052 + $0x28] sm:$0xf]
      %v4678 = vld [vmem:[%s4052 + $0x30] sm:$0xf]
      %v4679 = vld [vmem:[%s4052 + $0x38] sm:$0xf]
      %v4680 = vld [vmem:[%s3 + $0x60] sm:$0xf]
      %v4681 = vld [vmem:[%s3 + $0x64] sm:$0xf]
      %v4682 = vld [vmem:[%s3 + $0x68] sm:$0xf]
      %v4683 = vld [vmem:[%s3 + $0x6c] sm:$0xf]
      %v4684 = vld [vmem:[%s3 + $0x70] sm:$0xf]
      %v4685 = vld [vmem:[%s3 + $0x74] sm:$0xf]
      %v4686 = vld [vmem:[%s3 + $0x78] sm:$0xf]
      %v4687 = vld [vmem:[%s3 + $0x7c] sm:$0xf]
      %v4696 = vunpack.c.l.b16 %v4672
      %v4697 = vunpack.c.l.b16 %v4673
      %v4698 = vunpack.c.l.b16 %v4674
      %v4699 = vunpack.c.l.b16 %v4675
      %v4700 = vunpack.c.l.b16 %v4676
      %v4701 = vunpack.c.l.b16 %v4677
      %v4702 = vunpack.c.l.b16 %v4678
      %v4703 = vunpack.c.l.b16 %v4679
      %v4704 = vpack.c.b16 %v4697, %v4696
      %v4705 = vpack.c.b16 %v4699, %v4698
      %v4706 = vpack.c.b16 %v4701, %v4700
      %v4707 = vpack.c.b16 %v4703, %v4702
      %v4716 = vunpack.c.l.b16 %v4680
      %v4717 = vunpack.c.l.b16 %v4681
      %v4718 = vunpack.c.l.b16 %v4682
      %v4719 = vunpack.c.l.b16 %v4683
      %v4720 = vunpack.c.l.b16 %v4684
      %v4721 = vunpack.c.l.b16 %v4685
      %v4722 = vunpack.c.l.b16 %v4686
      %v4723 = vunpack.c.l.b16 %v4687
      %v4724 = vpack.c.b16 %v4717, %v4716
      %v4725 = vpack.c.b16 %v4719, %v4718
      %v4726 = vpack.c.b16 %v4721, %v4720
      %v4727 = vpack.c.b16 %v4723, %v4722
      %v4733 = vsel %vm3190, %v4704, 0
      %v4736 = vsel %vm3190, %v4705, 0
      %v4739 = vsel %vm3190, %v4706, 0
      %v4742 = vsel %vm3190, %v4707, 0
      %4744 = vmatprep.subr.bf16.mxu0 0
      %4745 = vmatpush1.bf16.msra.mxu0 0
      %4746 = vmatprep.subr.bf16.mxu0 0
      %4747 = vmatpush1.bf16.msra.mxu0 0
      %4748 = vmatprep.subr.bf16.mxu0 0
      %4749 = vmatpush1.bf16.msra.mxu0 0
      %4750 = vmatprep.subr.bf16.mxu0 0
      %4751 = vmatpush1.bf16.msra.mxu0 0
      %4752 = vmatprep.subr.bf16.mxu0 0
      %4753 = vmatpush1.bf16.msra.mxu0 %v4727
      %4754 = vmatprep.subr.bf16.mxu0 0
      %4755 = vmatpush1.bf16.msra.mxu0 %v4726
      %4756 = vmatprep.subr.bf16.mxu0 0
      %4757 = vmatpush1.bf16.msra.mxu0 %v4725
      %4758 = vmatprep.subr.bf16.mxu0 0
      %4759 = vmatpush1.bf16.msra.mxu0 %v4724
      %4760 = vmatprep.subr.bf16.mxu0 0
      %4761 = vmatpush2.bf16.msra.mxu0 0
      %4762 = vmatprep.subr.bf16.mxu0 0
      %4763 = vmatpush2.bf16.msra.mxu0 0
      %4764 = vmatprep.subr.bf16.mxu0 0
      %4765 = vmatpush2.bf16.msra.mxu0 0
      %4766 = vmatprep.subr.bf16.mxu0 0
      %4767 = vmatpush2.bf16.msra.mxu0 0
      %4768 = vmatprep.subr.bf16.mxu0 0
      %4769 = vmatpush2.bf16.msra.mxu0 0
      %4770 = vmatprep.subr.bf16.mxu0 0
      %4771 = vmatpush2.bf16.msra.mxu0 0
      %4772 = vmatprep.subr.bf16.mxu0 0
      %4773 = vmatpush2.bf16.msra.mxu0 0
      %4774 = vmatprep.subr.bf16.mxu0 0
      %4775 = vmatpush2.bf16.msra.mxu0 0
      %4776 = vmatprep.mubr.bf16.mxu0 0
      %4777 = vmatmul.mubr.bf16.gmra.mxu0 %v4733
      %v4778 = vpop.f32.mrf.mxu0
      %v4779 = vadd.f32 0.0, %v4778
      %v4780 = vpop.f32.mrf.mxu0
      %v4781 = vpop.f32.mrf.mxu0
      %v4782 = vadd.f32 0.0, %v4781
      %v4783 = vpop.f32.mrf.mxu0
      %4784 = vmatprep.mubr.bf16.mxu0 0
      %4785 = vmatmul.mubr.bf16.gmra.mxu0 %v4736
      %v4786 = vpop.f32.mrf.mxu0
      %v4787 = vadd.f32 0.0, %v4786
      %v4788 = vpop.f32.mrf.mxu0
      %v4789 = vpop.f32.mrf.mxu0
      %v4790 = vadd.f32 0.0, %v4789
      %v4791 = vpop.f32.mrf.mxu0
      %4792 = vmatprep.mubr.bf16.mxu0 0
      %4793 = vmatmul.mubr.bf16.gmra.mxu0 %v4739
      %v4794 = vpop.f32.mrf.mxu0
      %v4795 = vadd.f32 0.0, %v4794
      %v4796 = vpop.f32.mrf.mxu0
      %v4797 = vpop.f32.mrf.mxu0
      %v4798 = vadd.f32 0.0, %v4797
      %v4799 = vpop.f32.mrf.mxu0
      %4800 = vmatprep.mubr.bf16.mxu0 0
      %4801 = vmatmul.mubr.bf16.gmra.mxu0 %v4742
      %v4802 = vpop.f32.mrf.mxu0
      %v4803 = vadd.f32 0.0, %v4802
      %v4804 = vpop.f32.mrf.mxu0
      %v4805 = vpop.f32.mrf.mxu0
      %v4806 = vadd.f32 0.0, %v4805
      %v4807 = vpop.f32.mrf.mxu0
      %4808 = vdwg.mxu0
      %v4809 = vadd.f32 %v4664, %v4779
      %v4810 = vadd.f32 %v4665, %v4782
      %v4811 = vadd.f32 %v4666, %v4787
      %v4812 = vadd.f32 %v4667, %v4790
      %v4813 = vadd.f32 %v4668, %v4795
      %v4814 = vadd.f32 %v4669, %v4798
      %v4815 = vadd.f32 %v4670, %v4803
      %v4816 = vadd.f32 %v4671, %v4806
      %v4817 = vld [vmem:[%s4052] sm:$0xf]
      %v4818 = vld [vmem:[%s4052 + $0x4] sm:$0x1]
      %v4819 = vld [vmem:[%s4052 + $0x8] sm:$0xf]
      %v4820 = vld [vmem:[%s4052 + $0xc] sm:$0x1]
      %v4821 = vld [vmem:[%s4052 + $0x10] sm:$0xf]
      %v4822 = vld [vmem:[%s4052 + $0x14] sm:$0x1]
      %v4823 = vld [vmem:[%s4052 + $0x18] sm:$0xf]
      %v4824 = vld [vmem:[%s4052 + $0x1c] sm:$0x1]
      %v4825 = vld [vmem:[%s4052 + $0x20] sm:$0xf]
      %v4826 = vld [vmem:[%s4052 + $0x24] sm:$0x1]
      %v4827 = vld [vmem:[%s4052 + $0x28] sm:$0xf]
      %v4828 = vld [vmem:[%s4052 + $0x2c] sm:$0x1]
      %v4829 = vld [vmem:[%s4052 + $0x30] sm:$0xf]
      %v4830 = vld [vmem:[%s4052 + $0x34] sm:$0x1]
      %v4831 = vld [vmem:[%s4052 + $0x38] sm:$0xf]
      %v4832 = vld [vmem:[%s4052 + $0x3c] sm:$0x1]
      %v4834 = vshrl.u32 %v4817, 16
      %v4836 = vrot.slane %v4834, 4
      %v4837 = vshll.u32 %v4817, 16
      %v4839 = vrot.slane %v4837, 5
      %v4840 = vor.u32 %v4836, %v4839
      %v4841 = vrot.slane %v4840, 4
      %v4843 = vshll.u32 %v4818, 16
      %v4845 = vrot.slane %v4843, 5
      %v4846 = vsel %vm4129, %v4841, %v4845
      %v4848 = vshrl.u32 %v4819, 16
      %v4850 = vrot.slane %v4848, 4
      %v4851 = vshll.u32 %v4819, 16
      %v4853 = vrot.slane %v4851, 5
      %v4854 = vor.u32 %v4850, %v4853
      %v4855 = vrot.slane %v4854, 4
      %v4857 = vshll.u32 %v4820, 16
      %v4859 = vrot.slane %v4857, 5
      %v4860 = vsel %vm4129, %v4855, %v4859
      %v4862 = vshrl.u32 %v4821, 16
      %v4864 = vrot.slane %v4862, 4
      %v4865 = vshll.u32 %v4821, 16
      %v4867 = vrot.slane %v4865, 5
      %v4868 = vor.u32 %v4864, %v4867
      %v4869 = vrot.slane %v4868, 4
      %v4871 = vshll.u32 %v4822, 16
      %v4873 = vrot.slane %v4871, 5
      %v4874 = vsel %vm4129, %v4869, %v4873
      %v4876 = vshrl.u32 %v4823, 16
      %v4878 = vrot.slane %v4876, 4
      %v4879 = vshll.u32 %v4823, 16
      %v4881 = vrot.slane %v4879, 5
      %v4882 = vor.u32 %v4878, %v4881
      %v4883 = vrot.slane %v4882, 4
      %v4885 = vshll.u32 %v4824, 16
      %v4887 = vrot.slane %v4885, 5
      %v4888 = vsel %vm4129, %v4883, %v4887
      %v4890 = vshrl.u32 %v4825, 16
      %v4892 = vrot.slane %v4890, 4
      %v4893 = vshll.u32 %v4825, 16
      %v4895 = vrot.slane %v4893, 5
      %v4896 = vor.u32 %v4892, %v4895
      %v4897 = vrot.slane %v4896, 4
      %v4899 = vshll.u32 %v4826, 16
      %v4901 = vrot.slane %v4899, 5
      %v4902 = vsel %vm4129, %v4897, %v4901
      %v4904 = vshrl.u32 %v4827, 16
      %v4906 = vrot.slane %v4904, 4
      %v4907 = vshll.u32 %v4827, 16
      %v4909 = vrot.slane %v4907, 5
      %v4910 = vor.u32 %v4906, %v4909
      %v4911 = vrot.slane %v4910, 4
      %v4913 = vshll.u32 %v4828, 16
      %v4915 = vrot.slane %v4913, 5
      %v4916 = vsel %vm4129, %v4911, %v4915
      %v4918 = vshrl.u32 %v4829, 16
      %v4920 = vrot.slane %v4918, 4
      %v4921 = vshll.u32 %v4829, 16
      %v4923 = vrot.slane %v4921, 5
      %v4924 = vor.u32 %v4920, %v4923
      %v4925 = vrot.slane %v4924, 4
      %v4927 = vshll.u32 %v4830, 16
      %v4929 = vrot.slane %v4927, 5
      %v4930 = vsel %vm4129, %v4925, %v4929
      %v4932 = vshrl.u32 %v4831, 16
      %v4934 = vrot.slane %v4932, 4
      %v4935 = vshll.u32 %v4831, 16
      %v4937 = vrot.slane %v4935, 5
      %v4938 = vor.u32 %v4934, %v4937
      %v4939 = vrot.slane %v4938, 4
      %v4941 = vshll.u32 %v4832, 16
      %v4943 = vrot.slane %v4941, 5
      %v4944 = vsel %vm4129, %v4939, %v4943
      %v4945 = vld [vmem:[%s3 + $0x80] sm:$0xf]
      %v4946 = vld [vmem:[%s3 + $0x84] sm:$0xf]
      %v4947 = vld [vmem:[%s3 + $0x88] sm:$0xf]
      %v4948 = vld [vmem:[%s3 + $0x8c] sm:$0xf]
      %v4949 = vld [vmem:[%s3 + $0x90] sm:$0xf]
      %v4950 = vld [vmem:[%s3 + $0x94] sm:$0xf]
      %v4951 = vld [vmem:[%s3 + $0x98] sm:$0xf]
      %v4952 = vld [vmem:[%s3 + $0x9c] sm:$0xf]
      %v4953 = vunpack.c.l.b16 %v4846
      %v4954 = vunpack.c.l.b16 %v4860
      %v4955 = vunpack.c.l.b16 %v4874
      %v4956 = vunpack.c.l.b16 %v4888
      %v4957 = vunpack.c.l.b16 %v4902
      %v4958 = vunpack.c.l.b16 %v4916
      %v4959 = vunpack.c.l.b16 %v4930
      %v4960 = vunpack.c.l.b16 %v4944
      %v4961 = vpack.c.b16 %v4954, %v4953
      %v4962 = vpack.c.b16 %v4956, %v4955
      %v4963 = vpack.c.b16 %v4958, %v4957
      %v4964 = vpack.c.b16 %v4960, %v4959
      %v4973 = vunpack.c.l.b16 %v4945
      %v4974 = vunpack.c.l.b16 %v4946
      %v4975 = vunpack.c.l.b16 %v4947
      %v4976 = vunpack.c.l.b16 %v4948
      %v4977 = vunpack.c.l.b16 %v4949
      %v4978 = vunpack.c.l.b16 %v4950
      %v4979 = vunpack.c.l.b16 %v4951
      %v4980 = vunpack.c.l.b16 %v4952
      %v4981 = vpack.c.b16 %v4974, %v4973
      %v4982 = vpack.c.b16 %v4976, %v4975
      %v4983 = vpack.c.b16 %v4978, %v4977
      %v4984 = vpack.c.b16 %v4980, %v4979
      %v4990 = vsel %vm3190, %v4961, 0
      %v4993 = vsel %vm3190, %v4962, 0
      %v4996 = vsel %vm3190, %v4963, 0
      %v4999 = vsel %vm3190, %v4964, 0
      %5001 = vmatprep.subr.bf16.mxu0 0
      %5002 = vmatpush1.bf16.msra.mxu0 0
      %5003 = vmatprep.subr.bf16.mxu0 0
      %5004 = vmatpush1.bf16.msra.mxu0 0
      %5005 = vmatprep.subr.bf16.mxu0 0
      %5006 = vmatpush1.bf16.msra.mxu0 0
      %5007 = vmatprep.subr.bf16.mxu0 0
      %5008 = vmatpush1.bf16.msra.mxu0 0
      %5009 = vmatprep.subr.bf16.mxu0 0
      %5010 = vmatpush1.bf16.msra.mxu0 %v4984
      %5011 = vmatprep.subr.bf16.mxu0 0
      %5012 = vmatpush1.bf16.msra.mxu0 %v4983
      %5013 = vmatprep.subr.bf16.mxu0 0
      %5014 = vmatpush1.bf16.msra.mxu0 %v4982
      %5015 = vmatprep.subr.bf16.mxu0 0
      %5016 = vmatpush1.bf16.msra.mxu0 %v4981
      %5017 = vmatprep.subr.bf16.mxu0 0
      %5018 = vmatpush2.bf16.msra.mxu0 0
      %5019 = vmatprep.subr.bf16.mxu0 0
      %5020 = vmatpush2.bf16.msra.mxu0 0
      %5021 = vmatprep.subr.bf16.mxu0 0
      %5022 = vmatpush2.bf16.msra.mxu0 0
      %5023 = vmatprep.subr.bf16.mxu0 0
      %5024 = vmatpush2.bf16.msra.mxu0 0
      %5025 = vmatprep.subr.bf16.mxu0 0
      %5026 = vmatpush2.bf16.msra.mxu0 0
      %5027 = vmatprep.subr.bf16.mxu0 0
      %5028 = vmatpush2.bf16.msra.mxu0 0
      %5029 = vmatprep.subr.bf16.mxu0 0
      %5030 = vmatpush2.bf16.msra.mxu0 0
      %5031 = vmatprep.subr.bf16.mxu0 0
      %5032 = vmatpush2.bf16.msra.mxu0 0
      %5033 = vmatprep.mubr.bf16.mxu0 0
      %5034 = vmatmul.mubr.bf16.gmra.mxu0 %v4990
      %v5035 = vpop.f32.mrf.mxu0
      %v5036 = vadd.f32 0.0, %v5035
      %v5037 = vpop.f32.mrf.mxu0
      %v5038 = vpop.f32.mrf.mxu0
      %v5039 = vadd.f32 0.0, %v5038
      %v5040 = vpop.f32.mrf.mxu0
      %5041 = vmatprep.mubr.bf16.mxu0 0
      %5042 = vmatmul.mubr.bf16.gmra.mxu0 %v4993
      %v5043 = vpop.f32.mrf.mxu0
      %v5044 = vadd.f32 0.0, %v5043
      %v5045 = vpop.f32.mrf.mxu0
      %v5046 = vpop.f32.mrf.mxu0
      %v5047 = vadd.f32 0.0, %v5046
      %v5048 = vpop.f32.mrf.mxu0
      %5049 = vmatprep.mubr.bf16.mxu0 0
      %5050 = vmatmul.mubr.bf16.gmra.mxu0 %v4996
      %v5051 = vpop.f32.mrf.mxu0
      %v5052 = vadd.f32 0.0, %v5051
      %v5053 = vpop.f32.mrf.mxu0
      %v5054 = vpop.f32.mrf.mxu0
      %v5055 = vadd.f32 0.0, %v5054
      %v5056 = vpop.f32.mrf.mxu0
      %5057 = vmatprep.mubr.bf16.mxu0 0
      %5058 = vmatmul.mubr.bf16.gmra.mxu0 %v4999
      %v5059 = vpop.f32.mrf.mxu0
      %v5060 = vadd.f32 0.0, %v5059
      %v5061 = vpop.f32.mrf.mxu0
      %v5062 = vpop.f32.mrf.mxu0
      %v5063 = vadd.f32 0.0, %v5062
      %v5064 = vpop.f32.mrf.mxu0
      %5065 = vdwg.mxu0
      %v5066 = vadd.f32 %v4809, %v5036
      %v5067 = vadd.f32 %v4810, %v5039
      %v5068 = vadd.f32 %v4811, %v5044
      %v5069 = vadd.f32 %v4812, %v5047
      %v5070 = vadd.f32 %v4813, %v5052
      %v5071 = vadd.f32 %v4814, %v5055
      %v5072 = vadd.f32 %v4815, %v5060
      %v5073 = vadd.f32 %v4816, %v5063
      %v5074 = vld [vmem:[%s4052] sm:$0xe]
      %v5075 = vld [vmem:[%s4052 + $0x8] sm:$0xe]
      %v5076 = vld [vmem:[%s4052 + $0x10] sm:$0xe]
      %v5077 = vld [vmem:[%s4052 + $0x18] sm:$0xe]
      %v5078 = vld [vmem:[%s4052 + $0x20] sm:$0xe]
      %v5079 = vld [vmem:[%s4052 + $0x28] sm:$0xe]
      %v5080 = vld [vmem:[%s4052 + $0x30] sm:$0xe]
      %v5081 = vld [vmem:[%s4052 + $0x38] sm:$0xe]
      %v5098 = vrot.slane %v5074, 5
      %v5099 = vrot.slane %v5098, 4
      %v5100 = vrot.slane %v4818, 5
      %v5101 = vsel %vm4510, %v5099, %v5100
      %v5102 = vrot.slane %v5075, 5
      %v5103 = vrot.slane %v5102, 4
      %v5104 = vrot.slane %v4820, 5
      %v5105 = vsel %vm4510, %v5103, %v5104
      %v5106 = vrot.slane %v5076, 5
      %v5107 = vrot.slane %v5106, 4
      %v5108 = vrot.slane %v4822, 5
      %v5109 = vsel %vm4510, %v5107, %v5108
      %v5110 = vrot.slane %v5077, 5
      %v5111 = vrot.slane %v5110, 4
      %v5112 = vrot.slane %v4824, 5
      %v5113 = vsel %vm4510, %v5111, %v5112
      %v5114 = vrot.slane %v5078, 5
      %v5115 = vrot.slane %v5114, 4
      %v5116 = vrot.slane %v4826, 5
      %v5117 = vsel %vm4510, %v5115, %v5116
      %v5118 = vrot.slane %v5079, 5
      %v5119 = vrot.slane %v5118, 4
      %v5120 = vrot.slane %v4828, 5
      %v5121 = vsel %vm4510, %v5119, %v5120
      %v5122 = vrot.slane %v5080, 5
      %v5123 = vrot.slane %v5122, 4
      %v5124 = vrot.slane %v4830, 5
      %v5125 = vsel %vm4510, %v5123, %v5124
      %v5126 = vrot.slane %v5081, 5
      %v5127 = vrot.slane %v5126, 4
      %v5128 = vrot.slane %v4832, 5
      %v5129 = vsel %vm4510, %v5127, %v5128
      %v5130 = vld [vmem:[%s3 + $0xa0] sm:$0xf]
      %v5131 = vld [vmem:[%s3 + $0xa4] sm:$0xf]
      %v5132 = vld [vmem:[%s3 + $0xa8] sm:$0xf]
      %v5133 = vld [vmem:[%s3 + $0xac] sm:$0xf]
      %v5134 = vld [vmem:[%s3 + $0xb0] sm:$0xf]
      %v5135 = vld [vmem:[%s3 + $0xb4] sm:$0xf]
      %v5136 = vld [vmem:[%s3 + $0xb8] sm:$0xf]
      %v5137 = vld [vmem:[%s3 + $0xbc] sm:$0xf]
      %v5138 = vunpack.c.l.b16 %v5101
      %v5139 = vunpack.c.l.b16 %v5105
      %v5140 = vunpack.c.l.b16 %v5109
      %v5141 = vunpack.c.l.b16 %v5113
      %v5142 = vunpack.c.l.b16 %v5117
      %v5143 = vunpack.c.l.b16 %v5121
      %v5144 = vunpack.c.l.b16 %v5125
      %v5145 = vunpack.c.l.b16 %v5129
      %v5146 = vpack.c.b16 %v5139, %v5138
      %v5147 = vpack.c.b16 %v5141, %v5140
      %v5148 = vpack.c.b16 %v5143, %v5142
      %v5149 = vpack.c.b16 %v5145, %v5144
      %v5158 = vunpack.c.l.b16 %v5130
      %v5159 = vunpack.c.l.b16 %v5131
      %v5160 = vunpack.c.l.b16 %v5132
      %v5161 = vunpack.c.l.b16 %v5133
      %v5162 = vunpack.c.l.b16 %v5134
      %v5163 = vunpack.c.l.b16 %v5135
      %v5164 = vunpack.c.l.b16 %v5136
      %v5165 = vunpack.c.l.b16 %v5137
      %v5166 = vpack.c.b16 %v5159, %v5158
      %v5167 = vpack.c.b16 %v5161, %v5160
      %v5168 = vpack.c.b16 %v5163, %v5162
      %v5169 = vpack.c.b16 %v5165, %v5164
      %v5175 = vsel %vm3190, %v5146, 0
      %v5178 = vsel %vm3190, %v5147, 0
      %v5181 = vsel %vm3190, %v5148, 0
      %v5184 = vsel %vm3190, %v5149, 0
      %5186 = vmatprep.subr.bf16.mxu0 0
      %5187 = vmatpush1.bf16.msra.mxu0 0
      %5188 = vmatprep.subr.bf16.mxu0 0
      %5189 = vmatpush1.bf16.msra.mxu0 0
      %5190 = vmatprep.subr.bf16.mxu0 0
      %5191 = vmatpush1.bf16.msra.mxu0 0
      %5192 = vmatprep.subr.bf16.mxu0 0
      %5193 = vmatpush1.bf16.msra.mxu0 0
      %5194 = vmatprep.subr.bf16.mxu0 0
      %5195 = vmatpush1.bf16.msra.mxu0 %v5169
      %5196 = vmatprep.subr.bf16.mxu0 0
      %5197 = vmatpush1.bf16.msra.mxu0 %v5168
      %5198 = vmatprep.subr.bf16.mxu0 0
      %5199 = vmatpush1.bf16.msra.mxu0 %v5167
      %5200 = vmatprep.subr.bf16.mxu0 0
      %5201 = vmatpush1.bf16.msra.mxu0 %v5166
      %5202 = vmatprep.subr.bf16.mxu0 0
      %5203 = vmatpush2.bf16.msra.mxu0 0
      %5204 = vmatprep.subr.bf16.mxu0 0
      %5205 = vmatpush2.bf16.msra.mxu0 0
      %5206 = vmatprep.subr.bf16.mxu0 0
      %5207 = vmatpush2.bf16.msra.mxu0 0
      %5208 = vmatprep.subr.bf16.mxu0 0
      %5209 = vmatpush2.bf16.msra.mxu0 0
      %5210 = vmatprep.subr.bf16.mxu0 0
      %5211 = vmatpush2.bf16.msra.mxu0 0
      %5212 = vmatprep.subr.bf16.mxu0 0
      %5213 = vmatpush2.bf16.msra.mxu0 0
      %5214 = vmatprep.subr.bf16.mxu0 0
      %5215 = vmatpush2.bf16.msra.mxu0 0
      %5216 = vmatprep.subr.bf16.mxu0 0
      %5217 = vmatpush2.bf16.msra.mxu0 0
      %5218 = vmatprep.mubr.bf16.mxu0 0
      %5219 = vmatmul.mubr.bf16.gmra.mxu0 %v5175
      %v5220 = vpop.f32.mrf.mxu0
      %v5221 = vadd.f32 0.0, %v5220
      %v5222 = vpop.f32.mrf.mxu0
      %v5223 = vpop.f32.mrf.mxu0
      %v5224 = vadd.f32 0.0, %v5223
      %v5225 = vpop.f32.mrf.mxu0
      %5226 = vmatprep.mubr.bf16.mxu0 0
      %5227 = vmatmul.mubr.bf16.gmra.mxu0 %v5178
      %v5228 = vpop.f32.mrf.mxu0
      %v5229 = vadd.f32 0.0, %v5228
      %v5230 = vpop.f32.mrf.mxu0
      %v5231 = vpop.f32.mrf.mxu0
      %v5232 = vadd.f32 0.0, %v5231
      %v5233 = vpop.f32.mrf.mxu0
      %5234 = vmatprep.mubr.bf16.mxu0 0
      %5235 = vmatmul.mubr.bf16.gmra.mxu0 %v5181
      %v5236 = vpop.f32.mrf.mxu0
      %v5237 = vadd.f32 0.0, %v5236
      %v5238 = vpop.f32.mrf.mxu0
      %v5239 = vpop.f32.mrf.mxu0
      %v5240 = vadd.f32 0.0, %v5239
      %v5241 = vpop.f32.mrf.mxu0
      %5242 = vmatprep.mubr.bf16.mxu0 0
      %5243 = vmatmul.mubr.bf16.gmra.mxu0 %v5184
      %v5244 = vpop.f32.mrf.mxu0
      %v5245 = vadd.f32 0.0, %v5244
      %v5246 = vpop.f32.mrf.mxu0
      %v5247 = vpop.f32.mrf.mxu0
      %v5248 = vadd.f32 0.0, %v5247
      %v5249 = vpop.f32.mrf.mxu0
      %5250 = vdwg.mxu0
      %v5251 = vadd.f32 %v5066, %v5221
      %v5252 = vadd.f32 %v5067, %v5224
      %v5253 = vadd.f32 %v5068, %v5229
      %v5254 = vadd.f32 %v5069, %v5232
      %v5255 = vadd.f32 %v5070, %v5237
      %v5256 = vadd.f32 %v5071, %v5240
      %v5257 = vadd.f32 %v5072, %v5245
      %v5258 = vadd.f32 %v5073, %v5248
      %s5259 = scalar_lea.vmem [#allocation2], 16
      %v5260 = vld [vmem:[%s5259] sm:$0xf]
      %v5261 = vld [vmem:[%s5259 + $0x8] sm:$0xf]
      %v5262 = vld [vmem:[%s5259 + $0x10] sm:$0xf]
      %v5263 = vld [vmem:[%s5259 + $0x18] sm:$0xf]
      %v5264 = vld [vmem:[%s5259 + $0x20] sm:$0xf]
      %v5265 = vld [vmem:[%s5259 + $0x28] sm:$0xf]
      %v5266 = vld [vmem:[%s5259 + $0x30] sm:$0xf]
      %v5267 = vld [vmem:[%s5259 + $0x38] sm:$0xf]
      %v5268 = vld [vmem:[%s3 + $0xc0] sm:$0xf]
      %v5269 = vld [vmem:[%s3 + $0xc4] sm:$0xf]
      %v5270 = vld [vmem:[%s3 + $0xc8] sm:$0xf]
      %v5271 = vld [vmem:[%s3 + $0xcc] sm:$0xf]
      %v5272 = vld [vmem:[%s3 + $0xd0] sm:$0xf]
      %v5273 = vld [vmem:[%s3 + $0xd4] sm:$0xf]
      %v5274 = vld [vmem:[%s3 + $0xd8] sm:$0xf]
      %v5275 = vld [vmem:[%s3 + $0xdc] sm:$0xf]
      %v5284 = vunpack.c.l.b16 %v5260
      %v5285 = vunpack.c.l.b16 %v5261
      %v5286 = vunpack.c.l.b16 %v5262
      %v5287 = vunpack.c.l.b16 %v5263
      %v5288 = vunpack.c.l.b16 %v5264
      %v5289 = vunpack.c.l.b16 %v5265
      %v5290 = vunpack.c.l.b16 %v5266
      %v5291 = vunpack.c.l.b16 %v5267
      %v5292 = vpack.c.b16 %v5285, %v5284
      %v5293 = vpack.c.b16 %v5287, %v5286
      %v5294 = vpack.c.b16 %v5289, %v5288
      %v5295 = vpack.c.b16 %v5291, %v5290
      %v5304 = vunpack.c.l.b16 %v5268
      %v5305 = vunpack.c.l.b16 %v5269
      %v5306 = vunpack.c.l.b16 %v5270
      %v5307 = vunpack.c.l.b16 %v5271
      %v5308 = vunpack.c.l.b16 %v5272
      %v5309 = vunpack.c.l.b16 %v5273
      %v5310 = vunpack.c.l.b16 %v5274
      %v5311 = vunpack.c.l.b16 %v5275
      %v5312 = vpack.c.b16 %v5305, %v5304
      %v5313 = vpack.c.b16 %v5307, %v5306
      %v5314 = vpack.c.b16 %v5309, %v5308
      %v5315 = vpack.c.b16 %v5311, %v5310
      %v5321 = vsel %vm3190, %v5292, 0
      %v5324 = vsel %vm3190, %v5293, 0
      %v5327 = vsel %vm3190, %v5294, 0
      %v5330 = vsel %vm3190, %v5295, 0
      %5332 = vmatprep.subr.bf16.mxu0 0
      %5333 = vmatpush1.bf16.msra.mxu0 0
      %5334 = vmatprep.subr.bf16.mxu0 0
      %5335 = vmatpush1.bf16.msra.mxu0 0
      %5336 = vmatprep.subr.bf16.mxu0 0
      %5337 = vmatpush1.bf16.msra.mxu0 0
      %5338 = vmatprep.subr.bf16.mxu0 0
      %5339 = vmatpush1.bf16.msra.mxu0 0
      %5340 = vmatprep.subr.bf16.mxu0 0
      %5341 = vmatpush1.bf16.msra.mxu0 %v5315
      %5342 = vmatprep.subr.bf16.mxu0 0
      %5343 = vmatpush1.bf16.msra.mxu0 %v5314
      %5344 = vmatprep.subr.bf16.mxu0 0
      %5345 = vmatpush1.bf16.msra.mxu0 %v5313
      %5346 = vmatprep.subr.bf16.mxu0 0
      %5347 = vmatpush1.bf16.msra.mxu0 %v5312
      %5348 = vmatprep.subr.bf16.mxu0 0
      %5349 = vmatpush2.bf16.msra.mxu0 0
      %5350 = vmatprep.subr.bf16.mxu0 0
      %5351 = vmatpush2.bf16.msra.mxu0 0
      %5352 = vmatprep.subr.bf16.mxu0 0
      %5353 = vmatpush2.bf16.msra.mxu0 0
      %5354 = vmatprep.subr.bf16.mxu0 0
      %5355 = vmatpush2.bf16.msra.mxu0 0
      %5356 = vmatprep.subr.bf16.mxu0 0
      %5357 = vmatpush2.bf16.msra.mxu0 0
      %5358 = vmatprep.subr.bf16.mxu0 0
      %5359 = vmatpush2.bf16.msra.mxu0 0
      %5360 = vmatprep.subr.bf16.mxu0 0
      %5361 = vmatpush2.bf16.msra.mxu0 0
      %5362 = vmatprep.subr.bf16.mxu0 0
      %5363 = vmatpush2.bf16.msra.mxu0 0
      %5364 = vmatprep.mubr.bf16.mxu0 0
      %5365 = vmatmul.mubr.bf16.gmra.mxu0 %v5321
      %v5366 = vpop.f32.mrf.mxu0
      %v5367 = vadd.f32 0.0, %v5366
      %v5368 = vpop.f32.mrf.mxu0
      %v5369 = vpop.f32.mrf.mxu0
      %v5370 = vadd.f32 0.0, %v5369
      %v5371 = vpop.f32.mrf.mxu0
      %5372 = vmatprep.mubr.bf16.mxu0 0
      %5373 = vmatmul.mubr.bf16.gmra.mxu0 %v5324
      %v5374 = vpop.f32.mrf.mxu0
      %v5375 = vadd.f32 0.0, %v5374
      %v5376 = vpop.f32.mrf.mxu0
      %v5377 = vpop.f32.mrf.mxu0
      %v5378 = vadd.f32 0.0, %v5377
      %v5379 = vpop.f32.mrf.mxu0
      %5380 = vmatprep.mubr.bf16.mxu0 0
      %5381 = vmatmul.mubr.bf16.gmra.mxu0 %v5327
      %v5382 = vpop.f32.mrf.mxu0
      %v5383 = vadd.f32 0.0, %v5382
      %v5384 = vpop.f32.mrf.mxu0
      %v5385 = vpop.f32.mrf.mxu0
      %v5386 = vadd.f32 0.0, %v5385
      %v5387 = vpop.f32.mrf.mxu0
      %5388 = vmatprep.mubr.bf16.mxu0 0
      %5389 = vmatmul.mubr.bf16.gmra.mxu0 %v5330
      %v5390 = vpop.f32.mrf.mxu0
      %v5391 = vadd.f32 0.0, %v5390
      %v5392 = vpop.f32.mrf.mxu0
      %v5393 = vpop.f32.mrf.mxu0
      %v5394 = vadd.f32 0.0, %v5393
      %v5395 = vpop.f32.mrf.mxu0
      %5396 = vdwg.mxu0
      %v5397 = vadd.f32 %v5251, %v5367
      %v5398 = vadd.f32 %v5252, %v5370
      %v5399 = vadd.f32 %v5253, %v5375
      %v5400 = vadd.f32 %v5254, %v5378
      %v5401 = vadd.f32 %v5255, %v5383
      %v5402 = vadd.f32 %v5256, %v5386
      %v5403 = vadd.f32 %v5257, %v5391
      %v5404 = vadd.f32 %v5258, %v5394
      %v5405 = vld [vmem:[%s5259] sm:$0xf]
      %v5406 = vld [vmem:[%s5259 + $0x4] sm:$0x1]
      %v5407 = vld [vmem:[%s5259 + $0x8] sm:$0xf]
      %v5408 = vld [vmem:[%s5259 + $0xc] sm:$0x1]
      %v5409 = vld [vmem:[%s5259 + $0x10] sm:$0xf]
      %v5410 = vld [vmem:[%s5259 + $0x14] sm:$0x1]
      %v5411 = vld [vmem:[%s5259 + $0x18] sm:$0xf]
      %v5412 = vld [vmem:[%s5259 + $0x1c] sm:$0x1]
      %v5413 = vld [vmem:[%s5259 + $0x20] sm:$0xf]
      %v5414 = vld [vmem:[%s5259 + $0x24] sm:$0x1]
      %v5415 = vld [vmem:[%s5259 + $0x28] sm:$0xf]
      %v5416 = vld [vmem:[%s5259 + $0x2c] sm:$0x1]
      %v5417 = vld [vmem:[%s5259 + $0x30] sm:$0xf]
      %v5418 = vld [vmem:[%s5259 + $0x34] sm:$0x1]
      %v5419 = vld [vmem:[%s5259 + $0x38] sm:$0xf]
      %v5420 = vld [vmem:[%s5259 + $0x3c] sm:$0x1]
      %v5422 = vshrl.u32 %v5405, 16
      %v5424 = vrot.slane %v5422, 4
      %v5425 = vshll.u32 %v5405, 16
      %v5427 = vrot.slane %v5425, 5
      %v5428 = vor.u32 %v5424, %v5427
      %v5429 = vrot.slane %v5428, 4
      %v5431 = vshll.u32 %v5406, 16
      %v5433 = vrot.slane %v5431, 5
      %v5434 = vsel %vm4129, %v5429, %v5433
      %v5436 = vshrl.u32 %v5407, 16
      %v5438 = vrot.slane %v5436, 4
      %v5439 = vshll.u32 %v5407, 16
      %v5441 = vrot.slane %v5439, 5
      %v5442 = vor.u32 %v5438, %v5441
      %v5443 = vrot.slane %v5442, 4
      %v5445 = vshll.u32 %v5408, 16
      %v5447 = vrot.slane %v5445, 5
      %v5448 = vsel %vm4129, %v5443, %v5447
      %v5450 = vshrl.u32 %v5409, 16
      %v5452 = vrot.slane %v5450, 4
      %v5453 = vshll.u32 %v5409, 16
      %v5455 = vrot.slane %v5453, 5
      %v5456 = vor.u32 %v5452, %v5455
      %v5457 = vrot.slane %v5456, 4
      %v5459 = vshll.u32 %v5410, 16
      %v5461 = vrot.slane %v5459, 5
      %v5462 = vsel %vm4129, %v5457, %v5461
      %v5464 = vshrl.u32 %v5411, 16
      %v5466 = vrot.slane %v5464, 4
      %v5467 = vshll.u32 %v5411, 16
      %v5469 = vrot.slane %v5467, 5
      %v5470 = vor.u32 %v5466, %v5469
      %v5471 = vrot.slane %v5470, 4
      %v5473 = vshll.u32 %v5412, 16
      %v5475 = vrot.slane %v5473, 5
      %v5476 = vsel %vm4129, %v5471, %v5475
      %v5478 = vshrl.u32 %v5413, 16
      %v5480 = vrot.slane %v5478, 4
      %v5481 = vshll.u32 %v5413, 16
      %v5483 = vrot.slane %v5481, 5
      %v5484 = vor.u32 %v5480, %v5483
      %v5485 = vrot.slane %v5484, 4
      %v5487 = vshll.u32 %v5414, 16
      %v5489 = vrot.slane %v5487, 5
      %v5490 = vsel %vm4129, %v5485, %v5489
      %v5492 = vshrl.u32 %v5415, 16
      %v5494 = vrot.slane %v5492, 4
      %v5495 = vshll.u32 %v5415, 16
      %v5497 = vrot.slane %v5495, 5
      %v5498 = vor.u32 %v5494, %v5497
      %v5499 = vrot.slane %v5498, 4
      %v5501 = vshll.u32 %v5416, 16
      %v5503 = vrot.slane %v5501, 5
      %v5504 = vsel %vm4129, %v5499, %v5503
      %v5506 = vshrl.u32 %v5417, 16
      %v5508 = vrot.slane %v5506, 4
      %v5509 = vshll.u32 %v5417, 16
      %v5511 = vrot.slane %v5509, 5
      %v5512 = vor.u32 %v5508, %v5511
      %v5513 = vrot.slane %v5512, 4
      %v5515 = vshll.u32 %v5418, 16
      %v5517 = vrot.slane %v5515, 5
      %v5518 = vsel %vm4129, %v5513, %v5517
      %v5520 = vshrl.u32 %v5419, 16
      %v5522 = vrot.slane %v5520, 4
      %v5523 = vshll.u32 %v5419, 16
      %v5525 = vrot.slane %v5523, 5
      %v5526 = vor.u32 %v5522, %v5525
      %v5527 = vrot.slane %v5526, 4
      %v5529 = vshll.u32 %v5420, 16
      %v5531 = vrot.slane %v5529, 5
      %v5532 = vsel %vm4129, %v5527, %v5531
      %v5533 = vld [vmem:[%s3 + $0xe0] sm:$0xf]
      %v5534 = vld [vmem:[%s3 + $0xe4] sm:$0xf]
      %v5535 = vld [vmem:[%s3 + $0xe8] sm:$0xf]
      %v5536 = vld [vmem:[%s3 + $0xec] sm:$0xf]
      %v5537 = vld [vmem:[%s3 + $0xf0] sm:$0xf]
      %v5538 = vld [vmem:[%s3 + $0xf4] sm:$0xf]
      %v5539 = vld [vmem:[%s3 + $0xf8] sm:$0xf]
      %v5540 = vld [vmem:[%s3 + $0xfc] sm:$0xf]
      %v5541 = vunpack.c.l.b16 %v5434
      %v5542 = vunpack.c.l.b16 %v5448
      %v5543 = vunpack.c.l.b16 %v5462
      %v5544 = vunpack.c.l.b16 %v5476
      %v5545 = vunpack.c.l.b16 %v5490
      %v5546 = vunpack.c.l.b16 %v5504
      %v5547 = vunpack.c.l.b16 %v5518
      %v5548 = vunpack.c.l.b16 %v5532
      %v5549 = vpack.c.b16 %v5542, %v5541
      %v5550 = vpack.c.b16 %v5544, %v5543
      %v5551 = vpack.c.b16 %v5546, %v5545
      %v5552 = vpack.c.b16 %v5548, %v5547
      %v5561 = vunpack.c.l.b16 %v5533
      %v5562 = vunpack.c.l.b16 %v5534
      %v5563 = vunpack.c.l.b16 %v5535
      %v5564 = vunpack.c.l.b16 %v5536
      %v5565 = vunpack.c.l.b16 %v5537
      %v5566 = vunpack.c.l.b16 %v5538
      %v5567 = vunpack.c.l.b16 %v5539
      %v5568 = vunpack.c.l.b16 %v5540
      %v5569 = vpack.c.b16 %v5562, %v5561
      %v5570 = vpack.c.b16 %v5564, %v5563
      %v5571 = vpack.c.b16 %v5566, %v5565
      %v5572 = vpack.c.b16 %v5568, %v5567
      %v5578 = vsel %vm3190, %v5549, 0
      %v5581 = vsel %vm3190, %v5550, 0
      %v5584 = vsel %vm3190, %v5551, 0
      %v5587 = vsel %vm3190, %v5552, 0
      %5589 = vmatprep.subr.bf16.mxu0 0
      %5590 = vmatpush1.bf16.msra.mxu0 0
      %5591 = vmatprep.subr.bf16.mxu0 0
      %5592 = vmatpush1.bf16.msra.mxu0 0
      %5593 = vmatprep.subr.bf16.mxu0 0
      %5594 = vmatpush1.bf16.msra.mxu0 0
      %5595 = vmatprep.subr.bf16.mxu0 0
      %5596 = vmatpush1.bf16.msra.mxu0 0
      %5597 = vmatprep.subr.bf16.mxu0 0
      %5598 = vmatpush1.bf16.msra.mxu0 %v5572
      %5599 = vmatprep.subr.bf16.mxu0 0
      %5600 = vmatpush1.bf16.msra.mxu0 %v5571
      %5601 = vmatprep.subr.bf16.mxu0 0
      %5602 = vmatpush1.bf16.msra.mxu0 %v5570
      %5603 = vmatprep.subr.bf16.mxu0 0
      %5604 = vmatpush1.bf16.msra.mxu0 %v5569
      %5605 = vmatprep.subr.bf16.mxu0 0
      %5606 = vmatpush2.bf16.msra.mxu0 0
      %5607 = vmatprep.subr.bf16.mxu0 0
      %5608 = vmatpush2.bf16.msra.mxu0 0
      %5609 = vmatprep.subr.bf16.mxu0 0
      %5610 = vmatpush2.bf16.msra.mxu0 0
      %5611 = vmatprep.subr.bf16.mxu0 0
      %5612 = vmatpush2.bf16.msra.mxu0 0
      %5613 = vmatprep.subr.bf16.mxu0 0
      %5614 = vmatpush2.bf16.msra.mxu0 0
      %5615 = vmatprep.subr.bf16.mxu0 0
      %5616 = vmatpush2.bf16.msra.mxu0 0
      %5617 = vmatprep.subr.bf16.mxu0 0
      %5618 = vmatpush2.bf16.msra.mxu0 0
      %5619 = vmatprep.subr.bf16.mxu0 0
      %5620 = vmatpush2.bf16.msra.mxu0 0
      %5621 = vmatprep.mubr.bf16.mxu0 0
      %5622 = vmatmul.mubr.bf16.gmra.mxu0 %v5578
      %v5623 = vpop.f32.mrf.mxu0
      %v5624 = vadd.f32 0.0, %v5623
      %v5625 = vpop.f32.mrf.mxu0
      %v5626 = vpop.f32.mrf.mxu0
      %v5627 = vadd.f32 0.0, %v5626
      %v5628 = vpop.f32.mrf.mxu0
      %5629 = vmatprep.mubr.bf16.mxu0 0
      %5630 = vmatmul.mubr.bf16.gmra.mxu0 %v5581
      %v5631 = vpop.f32.mrf.mxu0
      %v5632 = vadd.f32 0.0, %v5631
      %v5633 = vpop.f32.mrf.mxu0
      %v5634 = vpop.f32.mrf.mxu0
      %v5635 = vadd.f32 0.0, %v5634
      %v5636 = vpop.f32.mrf.mxu0
      %5637 = vmatprep.mubr.bf16.mxu0 0
      %5638 = vmatmul.mubr.bf16.gmra.mxu0 %v5584
      %v5639 = vpop.f32.mrf.mxu0
      %v5640 = vadd.f32 0.0, %v5639
      %v5641 = vpop.f32.mrf.mxu0
      %v5642 = vpop.f32.mrf.mxu0
      %v5643 = vadd.f32 0.0, %v5642
      %v5644 = vpop.f32.mrf.mxu0
      %5645 = vmatprep.mubr.bf16.mxu0 0
      %5646 = vmatmul.mubr.bf16.gmra.mxu0 %v5587
      %v5647 = vpop.f32.mrf.mxu0
      %v5648 = vadd.f32 0.0, %v5647
      %v5649 = vpop.f32.mrf.mxu0
      %v5650 = vpop.f32.mrf.mxu0
      %v5651 = vadd.f32 0.0, %v5650
      %v5652 = vpop.f32.mrf.mxu0
      %5653 = vdwg.mxu0
      %v5654 = vadd.f32 %v5397, %v5624
      %v5655 = vadd.f32 %v5398, %v5627
      %v5656 = vadd.f32 %v5399, %v5632
      %v5657 = vadd.f32 %v5400, %v5635
      %v5658 = vadd.f32 %v5401, %v5640
      %v5659 = vadd.f32 %v5402, %v5643
      %v5660 = vadd.f32 %v5403, %v5648
      %v5661 = vadd.f32 %v5404, %v5651
      %v5662 = vld [vmem:[%s5259] sm:$0xe]
      %v5663 = vld [vmem:[%s5259 + $0x8] sm:$0xe]
      %v5664 = vld [vmem:[%s5259 + $0x10] sm:$0xe]
      %v5665 = vld [vmem:[%s5259 + $0x18] sm:$0xe]
      %v5666 = vld [vmem:[%s5259 + $0x20] sm:$0xe]
      %v5667 = vld [vmem:[%s5259 + $0x28] sm:$0xe]
      %v5668 = vld [vmem:[%s5259 + $0x30] sm:$0xe]
      %v5669 = vld [vmem:[%s5259 + $0x38] sm:$0xe]
      %v5686 = vrot.slane %v5662, 5
      %v5687 = vrot.slane %v5686, 4
      %v5688 = vrot.slane %v5406, 5
      %v5689 = vsel %vm4510, %v5687, %v5688
      %v5690 = vrot.slane %v5663, 5
      %v5691 = vrot.slane %v5690, 4
      %v5692 = vrot.slane %v5408, 5
      %v5693 = vsel %vm4510, %v5691, %v5692
      %v5694 = vrot.slane %v5664, 5
      %v5695 = vrot.slane %v5694, 4
      %v5696 = vrot.slane %v5410, 5
      %v5697 = vsel %vm4510, %v5695, %v5696
      %v5698 = vrot.slane %v5665, 5
      %v5699 = vrot.slane %v5698, 4
      %v5700 = vrot.slane %v5412, 5
      %v5701 = vsel %vm4510, %v5699, %v5700
      %v5702 = vrot.slane %v5666, 5
      %v5703 = vrot.slane %v5702, 4
      %v5704 = vrot.slane %v5414, 5
      %v5705 = vsel %vm4510, %v5703, %v5704
      %v5706 = vrot.slane %v5667, 5
      %v5707 = vrot.slane %v5706, 4
      %v5708 = vrot.slane %v5416, 5
      %v5709 = vsel %vm4510, %v5707, %v5708
      %v5710 = vrot.slane %v5668, 5
      %v5711 = vrot.slane %v5710, 4
      %v5712 = vrot.slane %v5418, 5
      %v5713 = vsel %vm4510, %v5711, %v5712
      %v5714 = vrot.slane %v5669, 5
      %v5715 = vrot.slane %v5714, 4
      %v5716 = vrot.slane %v5420, 5
      %v5717 = vsel %vm4510, %v5715, %v5716
      %v5718 = vld [vmem:[%s3 + $0x100] sm:$0xf]
      %v5719 = vld [vmem:[%s3 + $0x104] sm:$0xf]
      %v5720 = vld [vmem:[%s3 + $0x108] sm:$0xf]
      %v5721 = vld [vmem:[%s3 + $0x10c] sm:$0xf]
      %v5722 = vld [vmem:[%s3 + $0x110] sm:$0xf]
      %v5723 = vld [vmem:[%s3 + $0x114] sm:$0xf]
      %v5724 = vld [vmem:[%s3 + $0x118] sm:$0xf]
      %v5725 = vld [vmem:[%s3 + $0x11c] sm:$0xf]
      %v5726 = vunpack.c.l.b16 %v5689
      %v5727 = vunpack.c.l.b16 %v5693
      %v5728 = vunpack.c.l.b16 %v5697
      %v5729 = vunpack.c.l.b16 %v5701
      %v5730 = vunpack.c.l.b16 %v5705
      %v5731 = vunpack.c.l.b16 %v5709
      %v5732 = vunpack.c.l.b16 %v5713
      %v5733 = vunpack.c.l.b16 %v5717
      %v5734 = vpack.c.b16 %v5727, %v5726
      %v5735 = vpack.c.b16 %v5729, %v5728
      %v5736 = vpack.c.b16 %v5731, %v5730
      %v5737 = vpack.c.b16 %v5733, %v5732
      %v5746 = vunpack.c.l.b16 %v5718
      %v5747 = vunpack.c.l.b16 %v5719
      %v5748 = vunpack.c.l.b16 %v5720
      %v5749 = vunpack.c.l.b16 %v5721
      %v5750 = vunpack.c.l.b16 %v5722
      %v5751 = vunpack.c.l.b16 %v5723
      %v5752 = vunpack.c.l.b16 %v5724
      %v5753 = vunpack.c.l.b16 %v5725
      %v5754 = vpack.c.b16 %v5747, %v5746
      %v5755 = vpack.c.b16 %v5749, %v5748
      %v5756 = vpack.c.b16 %v5751, %v5750
      %v5757 = vpack.c.b16 %v5753, %v5752
      %v5763 = vsel %vm3190, %v5734, 0
      %v5766 = vsel %vm3190, %v5735, 0
      %v5769 = vsel %vm3190, %v5736, 0
      %v5772 = vsel %vm3190, %v5737, 0
      %5774 = vmatprep.subr.bf16.mxu0 0
      %5775 = vmatpush1.bf16.msra.mxu0 0
      %5776 = vmatprep.subr.bf16.mxu0 0
      %5777 = vmatpush1.bf16.msra.mxu0 0
      %5778 = vmatprep.subr.bf16.mxu0 0
      %5779 = vmatpush1.bf16.msra.mxu0 0
      %5780 = vmatprep.subr.bf16.mxu0 0
      %5781 = vmatpush1.bf16.msra.mxu0 0
      %5782 = vmatprep.subr.bf16.mxu0 0
      %5783 = vmatpush1.bf16.msra.mxu0 %v5757
      %5784 = vmatprep.subr.bf16.mxu0 0
      %5785 = vmatpush1.bf16.msra.mxu0 %v5756
      %5786 = vmatprep.subr.bf16.mxu0 0
      %5787 = vmatpush1.bf16.msra.mxu0 %v5755
      %5788 = vmatprep.subr.bf16.mxu0 0
      %5789 = vmatpush1.bf16.msra.mxu0 %v5754
      %5790 = vmatprep.subr.bf16.mxu0 0
      %5791 = vmatpush2.bf16.msra.mxu0 0
      %5792 = vmatprep.subr.bf16.mxu0 0
      %5793 = vmatpush2.bf16.msra.mxu0 0
      %5794 = vmatprep.subr.bf16.mxu0 0
      %5795 = vmatpush2.bf16.msra.mxu0 0
      %5796 = vmatprep.subr.bf16.mxu0 0
      %5797 = vmatpush2.bf16.msra.mxu0 0
      %5798 = vmatprep.subr.bf16.mxu0 0
      %5799 = vmatpush2.bf16.msra.mxu0 0
      %5800 = vmatprep.subr.bf16.mxu0 0
      %5801 = vmatpush2.bf16.msra.mxu0 0
      %5802 = vmatprep.subr.bf16.mxu0 0
      %5803 = vmatpush2.bf16.msra.mxu0 0
      %5804 = vmatprep.subr.bf16.mxu0 0
      %5805 = vmatpush2.bf16.msra.mxu0 0
      %5806 = vmatprep.mubr.bf16.mxu0 0
      %5807 = vmatmul.mubr.bf16.gmra.mxu0 %v5763
      %v5808 = vpop.f32.mrf.mxu0
      %v5809 = vadd.f32 0.0, %v5808
      %v5810 = vpop.f32.mrf.mxu0
      %v5811 = vpop.f32.mrf.mxu0
      %v5812 = vadd.f32 0.0, %v5811
      %v5813 = vpop.f32.mrf.mxu0
      %5814 = vmatprep.mubr.bf16.mxu0 0
      %5815 = vmatmul.mubr.bf16.gmra.mxu0 %v5766
      %v5816 = vpop.f32.mrf.mxu0
      %v5817 = vadd.f32 0.0, %v5816
      %v5818 = vpop.f32.mrf.mxu0
      %v5819 = vpop.f32.mrf.mxu0
      %v5820 = vadd.f32 0.0, %v5819
      %v5821 = vpop.f32.mrf.mxu0
      %5822 = vmatprep.mubr.bf16.mxu0 0
      %5823 = vmatmul.mubr.bf16.gmra.mxu0 %v5769
      %v5824 = vpop.f32.mrf.mxu0
      %v5825 = vadd.f32 0.0, %v5824
      %v5826 = vpop.f32.mrf.mxu0
      %v5827 = vpop.f32.mrf.mxu0
      %v5828 = vadd.f32 0.0, %v5827
      %v5829 = vpop.f32.mrf.mxu0
      %5830 = vmatprep.mubr.bf16.mxu0 0
      %5831 = vmatmul.mubr.bf16.gmra.mxu0 %v5772
      %v5832 = vpop.f32.mrf.mxu0
      %v5833 = vadd.f32 0.0, %v5832
      %v5834 = vpop.f32.mrf.mxu0
      %v5835 = vpop.f32.mrf.mxu0
      %v5836 = vadd.f32 0.0, %v5835
      %v5837 = vpop.f32.mrf.mxu0
      %5838 = vdwg.mxu0
      %v5839 = vadd.f32 %v5654, %v5809
      %v5840 = vadd.f32 %v5655, %v5812
      %v5841 = vadd.f32 %v5656, %v5817
      %v5842 = vadd.f32 %v5657, %v5820
      %v5843 = vadd.f32 %v5658, %v5825
      %v5844 = vadd.f32 %v5659, %v5828
      %v5845 = vadd.f32 %v5660, %v5833
      %v5846 = vadd.f32 %v5661, %v5836
      %v5847 = vld [vmem:[%s4] sm:$0x1]
      %v5849 = vlaneseq
      %v5850 = vshrl.u32 %v5849, 7
      %v5851 = vsub.s32 0, %v5850
      %v5852 = vrot.slane %v5847, %v5851
      %v5854 = vadd.f32 %v5839, %v5852
      %v5855 = vadd.f32 %v5840, %v5852
      %v5856 = vadd.f32 %v5841, %v5852
      %v5857 = vadd.f32 %v5842, %v5852
      %v5858 = vadd.f32 %v5843, %v5852
      %v5859 = vadd.f32 %v5844, %v5852
      %v5860 = vadd.f32 %v5845, %v5852
      %v5861 = vadd.f32 %v5846, %v5852
      %v5862 = vmax.f32 %v5854, 0.0
      %v5863 = vmax.f32 %v5855, 0.0
      %v5864 = vmax.f32 %v5856, 0.0
      %v5865 = vmax.f32 %v5857, 0.0
      %v5866 = vmax.f32 %v5858, 0.0
      %v5867 = vmax.f32 %v5859, 0.0
      %v5868 = vmax.f32 %v5860, 0.0
      %v5869 = vmax.f32 %v5861, 0.0
      %v5870 = vpack.c.bf16 %v5863, %v5862
      %v5871 = vpack.c.bf16 %v5865, %v5864
      %v5872 = vpack.c.bf16 %v5867, %v5866
      %v5873 = vpack.c.bf16 %v5869, %v5868
      %v5878 = vcombine.high %v5870, %v5870
      %v5880 = vunpack.c.l.s4 1966171168
      %v5881 = vunpack.c.0.s8 %v5880
      %v5882 = vlaneseq
      %v5883 = vshrl.u32 %v5882, 7
      %v5884 = vsub.s32 %v5881, %v5883
      %v5885 = vrot.slane %v5870, %v5884
      %v5887 = vunpack.c.l.s4 1966171168
      %v5888 = vunpack.c.0.s8 %v5887
      %v5889 = vlaneseq
      %v5890 = vshrl.u32 %v5889, 7
      %v5891 = vsub.s32 %v5888, %v5890
      %v5892 = vrot.slane %v5878, %v5891
      %v5893 = vcombine.high %v5885, %v5885
      %v5894 = vcombine.high %v5892, %v5892
      %v5896 = vunpack.c.l.s4 1966171168
      %v5897 = vunpack.c.0.s8 %v5896
      %v5898 = vlaneseq
      %v5899 = vshrl.u32 %v5898, 7
      %v5900 = vsub.s32 %v5897, %v5899
      %v5901 = vrot.slane %v5885, %v5900
      %v5903 = vunpack.c.l.s4 1966171168
      %v5904 = vunpack.c.0.s8 %v5903
      %v5905 = vlaneseq
      %v5906 = vshrl.u32 %v5905, 7
      %v5907 = vsub.s32 %v5904, %v5906
      %v5908 = vrot.slane %v5892, %v5907
      %v5910 = vunpack.c.l.s4 1966171168
      %v5911 = vunpack.c.0.s8 %v5910
      %v5912 = vlaneseq
      %v5913 = vshrl.u32 %v5912, 7
      %v5914 = vsub.s32 %v5911, %v5913
      %v5915 = vrot.slane %v5893, %v5914
      %v5917 = vunpack.c.l.s4 1966171168
      %v5918 = vunpack.c.0.s8 %v5917
      %v5919 = vlaneseq
      %v5920 = vshrl.u32 %v5919, 7
      %v5921 = vsub.s32 %v5918, %v5920
      %v5922 = vrot.slane %v5894, %v5921
      %v5923 = vcombine.high %v5901, %v5901
      %v5924 = vcombine.high %v5908, %v5908
      %v5925 = vcombine.high %v5915, %v5915
      %v5926 = vcombine.high %v5922, %v5922
      %v5927 = vcombine.high %v5871, %v5871
      %v5929 = vunpack.c.l.s4 1966171168
      %v5930 = vunpack.c.0.s8 %v5929
      %v5931 = vlaneseq
      %v5932 = vshrl.u32 %v5931, 7
      %v5933 = vsub.s32 %v5930, %v5932
      %v5934 = vrot.slane %v5871, %v5933
      %v5936 = vunpack.c.l.s4 1966171168
      %v5937 = vunpack.c.0.s8 %v5936
      %v5938 = vlaneseq
      %v5939 = vshrl.u32 %v5938, 7
      %v5940 = vsub.s32 %v5937, %v5939
      %v5941 = vrot.slane %v5927, %v5940
      %v5942 = vcombine.high %v5934, %v5934
      %v5943 = vcombine.high %v5941, %v5941
      %v5945 = vunpack.c.l.s4 1966171168
      %v5946 = vunpack.c.0.s8 %v5945
      %v5947 = vlaneseq
      %v5948 = vshrl.u32 %v5947, 7
      %v5949 = vsub.s32 %v5946, %v5948
      %v5950 = vrot.slane %v5934, %v5949
      %v5952 = vunpack.c.l.s4 1966171168
      %v5953 = vunpack.c.0.s8 %v5952
      %v5954 = vlaneseq
      %v5955 = vshrl.u32 %v5954, 7
      %v5956 = vsub.s32 %v5953, %v5955
      %v5957 = vrot.slane %v5941, %v5956
      %v5959 = vunpack.c.l.s4 1966171168
      %v5960 = vunpack.c.0.s8 %v5959
      %v5961 = vlaneseq
      %v5962 = vshrl.u32 %v5961, 7
      %v5963 = vsub.s32 %v5960, %v5962
      %v5964 = vrot.slane %v5942, %v5963
      %v5966 = vunpack.c.l.s4 1966171168
      %v5967 = vunpack.c.0.s8 %v5966
      %v5968 = vlaneseq
      %v5969 = vshrl.u32 %v5968, 7
      %v5970 = vsub.s32 %v5967, %v5969
      %v5971 = vrot.slane %v5943, %v5970
      %v5972 = vcombine.high %v5950, %v5950
      %v5973 = vcombine.high %v5957, %v5957
      %v5974 = vcombine.high %v5964, %v5964
      %v5975 = vcombine.high %v5971, %v5971
      %v5976 = vcombine.high %v5872, %v5872
      %v5978 = vunpack.c.l.s4 1966171168
      %v5979 = vunpack.c.0.s8 %v5978
      %v5980 = vlaneseq
      %v5981 = vshrl.u32 %v5980, 7
      %v5982 = vsub.s32 %v5979, %v5981
      %v5983 = vrot.slane %v5872, %v5982
      %v5985 = vunpack.c.l.s4 1966171168
      %v5986 = vunpack.c.0.s8 %v5985
      %v5987 = vlaneseq
      %v5988 = vshrl.u32 %v5987, 7
      %v5989 = vsub.s32 %v5986, %v5988
      %v5990 = vrot.slane %v5976, %v5989
      %v5991 = vcombine.high %v5983, %v5983
      %v5992 = vcombine.high %v5990, %v5990
      %v5994 = vunpack.c.l.s4 1966171168
      %v5995 = vunpack.c.0.s8 %v5994
      %v5996 = vlaneseq
      %v5997 = vshrl.u32 %v5996, 7
      %v5998 = vsub.s32 %v5995, %v5997
      %v5999 = vrot.slane %v5983, %v5998
      %v6001 = vunpack.c.l.s4 1966171168
      %v6002 = vunpack.c.0.s8 %v6001
      %v6003 = vlaneseq
      %v6004 = vshrl.u32 %v6003, 7
      %v6005 = vsub.s32 %v6002, %v6004
      %v6006 = vrot.slane %v5990, %v6005
      %v6008 = vunpack.c.l.s4 1966171168
      %v6009 = vunpack.c.0.s8 %v6008
      %v6010 = vlaneseq
      %v6011 = vshrl.u32 %v6010, 7
      %v6012 = vsub.s32 %v6009, %v6011
      %v6013 = vrot.slane %v5991, %v6012
      %v6015 = vunpack.c.l.s4 1966171168
      %v6016 = vunpack.c.0.s8 %v6015
      %v6017 = vlaneseq
      %v6018 = vshrl.u32 %v6017, 7
      %v6019 = vsub.s32 %v6016, %v6018
      %v6020 = vrot.slane %v5992, %v6019
      %v6021 = vcombine.high %v5999, %v5999
      %v6022 = vcombine.high %v6006, %v6006
      %v6023 = vcombine.high %v6013, %v6013
      %v6024 = vcombine.high %v6020, %v6020
      %v6025 = vcombine.high %v5873, %v5873
      %v6027 = vunpack.c.l.s4 1966171168
      %v6028 = vunpack.c.0.s8 %v6027
      %v6029 = vlaneseq
      %v6030 = vshrl.u32 %v6029, 7
      %v6031 = vsub.s32 %v6028, %v6030
      %v6032 = vrot.slane %v5873, %v6031
      %v6034 = vunpack.c.l.s4 1966171168
      %v6035 = vunpack.c.0.s8 %v6034
      %v6036 = vlaneseq
      %v6037 = vshrl.u32 %v6036, 7
      %v6038 = vsub.s32 %v6035, %v6037
      %v6039 = vrot.slane %v6025, %v6038
      %v6040 = vcombine.high %v6032, %v6032
      %v6041 = vcombine.high %v6039, %v6039
      %v6043 = vunpack.c.l.s4 1966171168
      %v6044 = vunpack.c.0.s8 %v6043
      %v6045 = vlaneseq
      %v6046 = vshrl.u32 %v6045, 7
      %v6047 = vsub.s32 %v6044, %v6046
      %v6048 = vrot.slane %v6032, %v6047
      %v6050 = vunpack.c.l.s4 1966171168
      %v6051 = vunpack.c.0.s8 %v6050
      %v6052 = vlaneseq
      %v6053 = vshrl.u32 %v6052, 7
      %v6054 = vsub.s32 %v6051, %v6053
      %v6055 = vrot.slane %v6039, %v6054
      %v6057 = vunpack.c.l.s4 1966171168
      %v6058 = vunpack.c.0.s8 %v6057
      %v6059 = vlaneseq
      %v6060 = vshrl.u32 %v6059, 7
      %v6061 = vsub.s32 %v6058, %v6060
      %v6062 = vrot.slane %v6040, %v6061
      %v6064 = vunpack.c.l.s4 1966171168
      %v6065 = vunpack.c.0.s8 %v6064
      %v6066 = vlaneseq
      %v6067 = vshrl.u32 %v6066, 7
      %v6068 = vsub.s32 %v6065, %v6067
      %v6069 = vrot.slane %v6041, %v6068
      %v6070 = vcombine.high %v6048, %v6048
      %v6071 = vcombine.high %v6055, %v6055
      %v6072 = vcombine.high %v6062, %v6062
      %v6073 = vcombine.high %v6069, %v6069
      %v6075 = vsel %vm1524, %v5901, 4286644096
      %v6077 = vunpack.i.l.bf16 %v6075
      %v6078 = vunpack.i.h.bf16 %v6075
      %v6079 = vmax.f32 %v6077, %v6078
      %v6080 = vrot.slane %v6079, 4
      %v6081 = vmax.f32 %v6079, %v6080
      %v6082 = vrot.slane %v6081, 2
      %v6083 = vmax.f32 %v6081, %v6082
      %v6084 = vrot.slane %v6083, 1
      %v6085 = vmax.f32 %v6083, %v6084
      %v6086 = vpack.i.bf16 %v6085, %v6085
      %v6088 = vsel %vm1524, %v5915, 4286644096
      %v6090 = vunpack.i.l.bf16 %v6088
      %v6091 = vunpack.i.h.bf16 %v6088
      %v6092 = vmax.f32 %v6090, %v6091
      %v6093 = vrot.slane %v6092, 4
      %v6094 = vmax.f32 %v6092, %v6093
      %v6095 = vrot.slane %v6094, 2
      %v6096 = vmax.f32 %v6094, %v6095
      %v6097 = vrot.slane %v6096, 1
      %v6098 = vmax.f32 %v6096, %v6097
      %v6099 = vpack.i.bf16 %v6098, %v6098
      %v6101 = vsel %vm1524, %v5923, 4286644096
      %v6103 = vunpack.i.l.bf16 %v6101
      %v6104 = vunpack.i.h.bf16 %v6101
      %v6105 = vmax.f32 %v6103, %v6104
      %v6106 = vrot.slane %v6105, 4
      %v6107 = vmax.f32 %v6105, %v6106
      %v6108 = vrot.slane %v6107, 2
      %v6109 = vmax.f32 %v6107, %v6108
      %v6110 = vrot.slane %v6109, 1
      %v6111 = vmax.f32 %v6109, %v6110
      %v6112 = vpack.i.bf16 %v6111, %v6111
      %v6114 = vsel %vm1524, %v5925, 4286644096
      %v6116 = vunpack.i.l.bf16 %v6114
      %v6117 = vunpack.i.h.bf16 %v6114
      %v6118 = vmax.f32 %v6116, %v6117
      %v6119 = vrot.slane %v6118, 4
      %v6120 = vmax.f32 %v6118, %v6119
      %v6121 = vrot.slane %v6120, 2
      %v6122 = vmax.f32 %v6120, %v6121
      %v6123 = vrot.slane %v6122, 1
      %v6124 = vmax.f32 %v6122, %v6123
      %v6125 = vpack.i.bf16 %v6124, %v6124
      %v6127 = vsel %vm1524, %v5908, 4286644096
      %v6129 = vunpack.i.l.bf16 %v6127
      %v6130 = vunpack.i.h.bf16 %v6127
      %v6131 = vmax.f32 %v6129, %v6130
      %v6132 = vrot.slane %v6131, 4
      %v6133 = vmax.f32 %v6131, %v6132
      %v6134 = vrot.slane %v6133, 2
      %v6135 = vmax.f32 %v6133, %v6134
      %v6136 = vrot.slane %v6135, 1
      %v6137 = vmax.f32 %v6135, %v6136
      %v6138 = vpack.i.bf16 %v6137, %v6137
      %v6140 = vsel %vm1524, %v5922, 4286644096
      %v6142 = vunpack.i.l.bf16 %v6140
      %v6143 = vunpack.i.h.bf16 %v6140
      %v6144 = vmax.f32 %v6142, %v6143
      %v6145 = vrot.slane %v6144, 4
      %v6146 = vmax.f32 %v6144, %v6145
      %v6147 = vrot.slane %v6146, 2
      %v6148 = vmax.f32 %v6146, %v6147
      %v6149 = vrot.slane %v6148, 1
      %v6150 = vmax.f32 %v6148, %v6149
      %v6151 = vpack.i.bf16 %v6150, %v6150
      %v6153 = vsel %vm1524, %v5924, 4286644096
      %v6155 = vunpack.i.l.bf16 %v6153
      %v6156 = vunpack.i.h.bf16 %v6153
      %v6157 = vmax.f32 %v6155, %v6156
      %v6158 = vrot.slane %v6157, 4
      %v6159 = vmax.f32 %v6157, %v6158
      %v6160 = vrot.slane %v6159, 2
      %v6161 = vmax.f32 %v6159, %v6160
      %v6162 = vrot.slane %v6161, 1
      %v6163 = vmax.f32 %v6161, %v6162
      %v6164 = vpack.i.bf16 %v6163, %v6163
      %v6166 = vsel %vm1524, %v5926, 4286644096
      %v6168 = vunpack.i.l.bf16 %v6166
      %v6169 = vunpack.i.h.bf16 %v6166
      %v6170 = vmax.f32 %v6168, %v6169
      %v6171 = vrot.slane %v6170, 4
      %v6172 = vmax.f32 %v6170, %v6171
      %v6173 = vrot.slane %v6172, 2
      %v6174 = vmax.f32 %v6172, %v6173
      %v6175 = vrot.slane %v6174, 1
      %v6176 = vmax.f32 %v6174, %v6175
      %v6177 = vpack.i.bf16 %v6176, %v6176
      %v6179 = vsel %vm1524, %v5950, 4286644096
      %v6181 = vunpack.i.l.bf16 %v6179
      %v6182 = vunpack.i.h.bf16 %v6179
      %v6183 = vmax.f32 %v6181, %v6182
      %v6184 = vrot.slane %v6183, 4
      %v6185 = vmax.f32 %v6183, %v6184
      %v6186 = vrot.slane %v6185, 2
      %v6187 = vmax.f32 %v6185, %v6186
      %v6188 = vrot.slane %v6187, 1
      %v6189 = vmax.f32 %v6187, %v6188
      %v6190 = vpack.i.bf16 %v6189, %v6189
      %v6192 = vsel %vm1524, %v5964, 4286644096
      %v6194 = vunpack.i.l.bf16 %v6192
      %v6195 = vunpack.i.h.bf16 %v6192
      %v6196 = vmax.f32 %v6194, %v6195
      %v6197 = vrot.slane %v6196, 4
      %v6198 = vmax.f32 %v6196, %v6197
      %v6199 = vrot.slane %v6198, 2
      %v6200 = vmax.f32 %v6198, %v6199
      %v6201 = vrot.slane %v6200, 1
      %v6202 = vmax.f32 %v6200, %v6201
      %v6203 = vpack.i.bf16 %v6202, %v6202
      %v6205 = vsel %vm1524, %v5972, 4286644096
      %v6207 = vunpack.i.l.bf16 %v6205
      %v6208 = vunpack.i.h.bf16 %v6205
      %v6209 = vmax.f32 %v6207, %v6208
      %v6210 = vrot.slane %v6209, 4
      %v6211 = vmax.f32 %v6209, %v6210
      %v6212 = vrot.slane %v6211, 2
      %v6213 = vmax.f32 %v6211, %v6212
      %v6214 = vrot.slane %v6213, 1
      %v6215 = vmax.f32 %v6213, %v6214
      %v6216 = vpack.i.bf16 %v6215, %v6215
      %v6218 = vsel %vm1524, %v5974, 4286644096
      %v6220 = vunpack.i.l.bf16 %v6218
      %v6221 = vunpack.i.h.bf16 %v6218
      %v6222 = vmax.f32 %v6220, %v6221
      %v6223 = vrot.slane %v6222, 4
      %v6224 = vmax.f32 %v6222, %v6223
      %v6225 = vrot.slane %v6224, 2
      %v6226 = vmax.f32 %v6224, %v6225
      %v6227 = vrot.slane %v6226, 1
      %v6228 = vmax.f32 %v6226, %v6227
      %v6229 = vpack.i.bf16 %v6228, %v6228
      %v6231 = vsel %vm1524, %v5957, 4286644096
      %v6233 = vunpack.i.l.bf16 %v6231
      %v6234 = vunpack.i.h.bf16 %v6231
      %v6235 = vmax.f32 %v6233, %v6234
      %v6236 = vrot.slane %v6235, 4
      %v6237 = vmax.f32 %v6235, %v6236
      %v6238 = vrot.slane %v6237, 2
      %v6239 = vmax.f32 %v6237, %v6238
      %v6240 = vrot.slane %v6239, 1
      %v6241 = vmax.f32 %v6239, %v6240
      %v6242 = vpack.i.bf16 %v6241, %v6241
      %v6244 = vsel %vm1524, %v5971, 4286644096
      %v6246 = vunpack.i.l.bf16 %v6244
      %v6247 = vunpack.i.h.bf16 %v6244
      %v6248 = vmax.f32 %v6246, %v6247
      %v6249 = vrot.slane %v6248, 4
      %v6250 = vmax.f32 %v6248, %v6249
      %v6251 = vrot.slane %v6250, 2
      %v6252 = vmax.f32 %v6250, %v6251
      %v6253 = vrot.slane %v6252, 1
      %v6254 = vmax.f32 %v6252, %v6253
      %v6255 = vpack.i.bf16 %v6254, %v6254
      %v6257 = vsel %vm1524, %v5973, 4286644096
      %v6259 = vunpack.i.l.bf16 %v6257
      %v6260 = vunpack.i.h.bf16 %v6257
      %v6261 = vmax.f32 %v6259, %v6260
      %v6262 = vrot.slane %v6261, 4
      %v6263 = vmax.f32 %v6261, %v6262
      %v6264 = vrot.slane %v6263, 2
      %v6265 = vmax.f32 %v6263, %v6264
      %v6266 = vrot.slane %v6265, 1
      %v6267 = vmax.f32 %v6265, %v6266
      %v6268 = vpack.i.bf16 %v6267, %v6267
      %v6270 = vsel %vm1524, %v5975, 4286644096
      %v6272 = vunpack.i.l.bf16 %v6270
      %v6273 = vunpack.i.h.bf16 %v6270
      %v6274 = vmax.f32 %v6272, %v6273
      %v6275 = vrot.slane %v6274, 4
      %v6276 = vmax.f32 %v6274, %v6275
      %v6277 = vrot.slane %v6276, 2
      %v6278 = vmax.f32 %v6276, %v6277
      %v6279 = vrot.slane %v6278, 1
      %v6280 = vmax.f32 %v6278, %v6279
      %v6281 = vpack.i.bf16 %v6280, %v6280
      %v6283 = vsel %vm1524, %v5999, 4286644096
      %v6285 = vunpack.i.l.bf16 %v6283
      %v6286 = vunpack.i.h.bf16 %v6283
      %v6287 = vmax.f32 %v6285, %v6286
      %v6288 = vrot.slane %v6287, 4
      %v6289 = vmax.f32 %v6287, %v6288
      %v6290 = vrot.slane %v6289, 2
      %v6291 = vmax.f32 %v6289, %v6290
      %v6292 = vrot.slane %v6291, 1
      %v6293 = vmax.f32 %v6291, %v6292
      %v6294 = vpack.i.bf16 %v6293, %v6293
      %v6296 = vsel %vm1524, %v6013, 4286644096
      %v6298 = vunpack.i.l.bf16 %v6296
      %v6299 = vunpack.i.h.bf16 %v6296
      %v6300 = vmax.f32 %v6298, %v6299
      %v6301 = vrot.slane %v6300, 4
      %v6302 = vmax.f32 %v6300, %v6301
      %v6303 = vrot.slane %v6302, 2
      %v6304 = vmax.f32 %v6302, %v6303
      %v6305 = vrot.slane %v6304, 1
      %v6306 = vmax.f32 %v6304, %v6305
      %v6307 = vpack.i.bf16 %v6306, %v6306
      %v6309 = vsel %vm1524, %v6021, 4286644096
      %v6311 = vunpack.i.l.bf16 %v6309
      %v6312 = vunpack.i.h.bf16 %v6309
      %v6313 = vmax.f32 %v6311, %v6312
      %v6314 = vrot.slane %v6313, 4
      %v6315 = vmax.f32 %v6313, %v6314
      %v6316 = vrot.slane %v6315, 2
      %v6317 = vmax.f32 %v6315, %v6316
      %v6318 = vrot.slane %v6317, 1
      %v6319 = vmax.f32 %v6317, %v6318
      %v6320 = vpack.i.bf16 %v6319, %v6319
      %v6322 = vsel %vm1524, %v6023, 4286644096
      %v6324 = vunpack.i.l.bf16 %v6322
      %v6325 = vunpack.i.h.bf16 %v6322
      %v6326 = vmax.f32 %v6324, %v6325
      %v6327 = vrot.slane %v6326, 4
      %v6328 = vmax.f32 %v6326, %v6327
      %v6329 = vrot.slane %v6328, 2
      %v6330 = vmax.f32 %v6328, %v6329
      %v6331 = vrot.slane %v6330, 1
      %v6332 = vmax.f32 %v6330, %v6331
      %v6333 = vpack.i.bf16 %v6332, %v6332
      %v6335 = vsel %vm1524, %v6006, 4286644096
      %v6337 = vunpack.i.l.bf16 %v6335
      %v6338 = vunpack.i.h.bf16 %v6335
      %v6339 = vmax.f32 %v6337, %v6338
      %v6340 = vrot.slane %v6339, 4
      %v6341 = vmax.f32 %v6339, %v6340
      %v6342 = vrot.slane %v6341, 2
      %v6343 = vmax.f32 %v6341, %v6342
      %v6344 = vrot.slane %v6343, 1
      %v6345 = vmax.f32 %v6343, %v6344
      %v6346 = vpack.i.bf16 %v6345, %v6345
      %v6348 = vsel %vm1524, %v6020, 4286644096
      %v6350 = vunpack.i.l.bf16 %v6348
      %v6351 = vunpack.i.h.bf16 %v6348
      %v6352 = vmax.f32 %v6350, %v6351
      %v6353 = vrot.slane %v6352, 4
      %v6354 = vmax.f32 %v6352, %v6353
      %v6355 = vrot.slane %v6354, 2
      %v6356 = vmax.f32 %v6354, %v6355
      %v6357 = vrot.slane %v6356, 1
      %v6358 = vmax.f32 %v6356, %v6357
      %v6359 = vpack.i.bf16 %v6358, %v6358
      %v6361 = vsel %vm1524, %v6022, 4286644096
      %v6363 = vunpack.i.l.bf16 %v6361
      %v6364 = vunpack.i.h.bf16 %v6361
      %v6365 = vmax.f32 %v6363, %v6364
      %v6366 = vrot.slane %v6365, 4
      %v6367 = vmax.f32 %v6365, %v6366
      %v6368 = vrot.slane %v6367, 2
      %v6369 = vmax.f32 %v6367, %v6368
      %v6370 = vrot.slane %v6369, 1
      %v6371 = vmax.f32 %v6369, %v6370
      %v6372 = vpack.i.bf16 %v6371, %v6371
      %v6374 = vsel %vm1524, %v6024, 4286644096
      %v6376 = vunpack.i.l.bf16 %v6374
      %v6377 = vunpack.i.h.bf16 %v6374
      %v6378 = vmax.f32 %v6376, %v6377
      %v6379 = vrot.slane %v6378, 4
      %v6380 = vmax.f32 %v6378, %v6379
      %v6381 = vrot.slane %v6380, 2
      %v6382 = vmax.f32 %v6380, %v6381
      %v6383 = vrot.slane %v6382, 1
      %v6384 = vmax.f32 %v6382, %v6383
      %v6385 = vpack.i.bf16 %v6384, %v6384
      %v6387 = vsel %vm1524, %v6048, 4286644096
      %v6389 = vunpack.i.l.bf16 %v6387
      %v6390 = vunpack.i.h.bf16 %v6387
      %v6391 = vmax.f32 %v6389, %v6390
      %v6392 = vrot.slane %v6391, 4
      %v6393 = vmax.f32 %v6391, %v6392
      %v6394 = vrot.slane %v6393, 2
      %v6395 = vmax.f32 %v6393, %v6394
      %v6396 = vrot.slane %v6395, 1
      %v6397 = vmax.f32 %v6395, %v6396
      %v6398 = vpack.i.bf16 %v6397, %v6397
      %v6400 = vsel %vm1524, %v6062, 4286644096
      %v6402 = vunpack.i.l.bf16 %v6400
      %v6403 = vunpack.i.h.bf16 %v6400
      %v6404 = vmax.f32 %v6402, %v6403
      %v6405 = vrot.slane %v6404, 4
      %v6406 = vmax.f32 %v6404, %v6405
      %v6407 = vrot.slane %v6406, 2
      %v6408 = vmax.f32 %v6406, %v6407
      %v6409 = vrot.slane %v6408, 1
      %v6410 = vmax.f32 %v6408, %v6409
      %v6411 = vpack.i.bf16 %v6410, %v6410
      %v6413 = vsel %vm1524, %v6070, 4286644096
      %v6415 = vunpack.i.l.bf16 %v6413
      %v6416 = vunpack.i.h.bf16 %v6413
      %v6417 = vmax.f32 %v6415, %v6416
      %v6418 = vrot.slane %v6417, 4
      %v6419 = vmax.f32 %v6417, %v6418
      %v6420 = vrot.slane %v6419, 2
      %v6421 = vmax.f32 %v6419, %v6420
      %v6422 = vrot.slane %v6421, 1
      %v6423 = vmax.f32 %v6421, %v6422
      %v6424 = vpack.i.bf16 %v6423, %v6423
      %v6426 = vsel %vm1524, %v6072, 4286644096
      %v6428 = vunpack.i.l.bf16 %v6426
      %v6429 = vunpack.i.h.bf16 %v6426
      %v6430 = vmax.f32 %v6428, %v6429
      %v6431 = vrot.slane %v6430, 4
      %v6432 = vmax.f32 %v6430, %v6431
      %v6433 = vrot.slane %v6432, 2
      %v6434 = vmax.f32 %v6432, %v6433
      %v6435 = vrot.slane %v6434, 1
      %v6436 = vmax.f32 %v6434, %v6435
      %v6437 = vpack.i.bf16 %v6436, %v6436
      %v6439 = vsel %vm1524, %v6055, 4286644096
      %v6441 = vunpack.i.l.bf16 %v6439
      %v6442 = vunpack.i.h.bf16 %v6439
      %v6443 = vmax.f32 %v6441, %v6442
      %v6444 = vrot.slane %v6443, 4
      %v6445 = vmax.f32 %v6443, %v6444
      %v6446 = vrot.slane %v6445, 2
      %v6447 = vmax.f32 %v6445, %v6446
      %v6448 = vrot.slane %v6447, 1
      %v6449 = vmax.f32 %v6447, %v6448
      %v6450 = vpack.i.bf16 %v6449, %v6449
      %v6452 = vsel %vm1524, %v6069, 4286644096
      %v6454 = vunpack.i.l.bf16 %v6452
      %v6455 = vunpack.i.h.bf16 %v6452
      %v6456 = vmax.f32 %v6454, %v6455
      %v6457 = vrot.slane %v6456, 4
      %v6458 = vmax.f32 %v6456, %v6457
      %v6459 = vrot.slane %v6458, 2
      %v6460 = vmax.f32 %v6458, %v6459
      %v6461 = vrot.slane %v6460, 1
      %v6462 = vmax.f32 %v6460, %v6461
      %v6463 = vpack.i.bf16 %v6462, %v6462
      %v6465 = vsel %vm1524, %v6071, 4286644096
      %v6467 = vunpack.i.l.bf16 %v6465
      %v6468 = vunpack.i.h.bf16 %v6465
      %v6469 = vmax.f32 %v6467, %v6468
      %v6470 = vrot.slane %v6469, 4
      %v6471 = vmax.f32 %v6469, %v6470
      %v6472 = vrot.slane %v6471, 2
      %v6473 = vmax.f32 %v6471, %v6472
      %v6474 = vrot.slane %v6473, 1
      %v6475 = vmax.f32 %v6473, %v6474
      %v6476 = vpack.i.bf16 %v6475, %v6475
      %v6478 = vsel %vm1524, %v6073, 4286644096
      %v6480 = vunpack.i.l.bf16 %v6478
      %v6481 = vunpack.i.h.bf16 %v6478
      %v6482 = vmax.f32 %v6480, %v6481
      %v6483 = vrot.slane %v6482, 4
      %v6484 = vmax.f32 %v6482, %v6483
      %v6485 = vrot.slane %v6484, 2
      %v6486 = vmax.f32 %v6484, %v6485
      %v6487 = vrot.slane %v6486, 1
      %v6488 = vmax.f32 %v6486, %v6487
      %v6489 = vpack.i.bf16 %v6488, %v6488
      %v6491 = vsel %vm3190, %v6086, 4286644096
      %v6494 = vsel %vm3190, %v6138, 4286644096
      %v6496 = vmax.bf16 %v6491, %v6494
      %v6498 = vsel %vm3190, %v6099, 4286644096
      %v6501 = vsel %vm3190, %v6151, 4286644096
      %v6503 = vmax.bf16 %v6498, %v6501
      %v6505 = vsel %vm3190, %v6112, 4286644096
      %v6508 = vsel %vm3190, %v6164, 4286644096
      %v6510 = vmax.bf16 %v6505, %v6508
      %v6512 = vsel %vm3190, %v6125, 4286644096
      %v6515 = vsel %vm3190, %v6177, 4286644096
      %v6517 = vmax.bf16 %v6512, %v6515
      %v6519 = vsel %vm3190, %v6190, 4286644096
      %v6522 = vsel %vm3190, %v6242, 4286644096
      %v6524 = vmax.bf16 %v6519, %v6522
      %v6526 = vsel %vm3190, %v6203, 4286644096
      %v6529 = vsel %vm3190, %v6255, 4286644096
      %v6531 = vmax.bf16 %v6526, %v6529
      %v6533 = vsel %vm3190, %v6216, 4286644096
      %v6536 = vsel %vm3190, %v6268, 4286644096
      %v6538 = vmax.bf16 %v6533, %v6536
      %v6540 = vsel %vm3190, %v6229, 4286644096
      %v6543 = vsel %vm3190, %v6281, 4286644096
      %v6545 = vmax.bf16 %v6540, %v6543
      %v6547 = vsel %vm3190, %v6294, 4286644096
      %v6550 = vsel %vm3190, %v6346, 4286644096
      %v6552 = vmax.bf16 %v6547, %v6550
      %v6554 = vsel %vm3190, %v6307, 4286644096
      %v6557 = vsel %vm3190, %v6359, 4286644096
      %v6559 = vmax.bf16 %v6554, %v6557
      %v6561 = vsel %vm3190, %v6320, 4286644096
      %v6564 = vsel %vm3190, %v6372, 4286644096
      %v6566 = vmax.bf16 %v6561, %v6564
      %v6568 = vsel %vm3190, %v6333, 4286644096
      %v6571 = vsel %vm3190, %v6385, 4286644096
      %v6573 = vmax.bf16 %v6568, %v6571
      %v6575 = vsel %vm3190, %v6398, 4286644096
      %v6578 = vsel %vm3190, %v6450, 4286644096
      %v6580 = vmax.bf16 %v6575, %v6578
      %v6582 = vsel %vm3190, %v6411, 4286644096
      %v6585 = vsel %vm3190, %v6463, 4286644096
      %v6587 = vmax.bf16 %v6582, %v6585
      %v6589 = vsel %vm3190, %v6424, 4286644096
      %v6592 = vsel %vm3190, %v6476, 4286644096
      %v6594 = vmax.bf16 %v6589, %v6592
      %v6596 = vsel %vm3190, %v6437, 4286644096
      %v6599 = vsel %vm3190, %v6489, 4286644096
      %v6601 = vmax.bf16 %v6596, %v6599
      %vm6602 = vcmask 518144
      %6603 = vst.msk [vmem:[#allocation3] sm:$0x7] %vm6602, 0
      %s6604 = scalar_lea.vmem [#allocation3], 20
      %6605 = vst.msk [vmem:[%s6604] sm:$0x7] %vm6602, 0
      %v6606 = vld [vmem:[#allocation3] sm:$0x1]
      %v6607 = vsel %vm3647, 0, %v6606
      %6608 = vst [vmem:[#allocation3] sm:$0x1] %v6607
      %v6609 = vld [vmem:[#allocation3 + $0x4] sm:$0x1]
      %v6610 = vsel %vm3647, 0, %v6609
      %6611 = vst [vmem:[#allocation3 + $0x4] sm:$0x1] %v6610
      %v6612 = vld [vmem:[#allocation3 + $0x8] sm:$0x1]
      %v6613 = vsel %vm3647, 0, %v6612
      %6614 = vst [vmem:[#allocation3 + $0x8] sm:$0x1] %v6613
      %v6615 = vld [vmem:[#allocation3 + $0xc] sm:$0x1]
      %v6616 = vsel %vm3647, 0, %v6615
      %6617 = vst [vmem:[#allocation3 + $0xc] sm:$0x1] %v6616
      %v6618 = vld [vmem:[#allocation3 + $0x10] sm:$0x1]
      %v6619 = vsel %vm3647, 0, %v6618
      %6620 = vst [vmem:[#allocation3 + $0x10] sm:$0x1] %v6619
      %v6621 = vld [vmem:[#allocation3 + $0x14] sm:$0x1]
      %v6622 = vsel %vm3647, 0, %v6621
      %6623 = vst [vmem:[#allocation3 + $0x14] sm:$0x1] %v6622
      %vm6624 = vcmask 518146
      %vm6625 = vsmask.f32 7946
      %vm6626 = vmand %vm6624, %vm6625
      %v6627 = vld [vmem:[#allocation3] sm:$0x4]
      %v6628 = vsel %vm6626, 0, %v6627
      %6629 = vst [vmem:[#allocation3] sm:$0x4] %v6628
      %v6630 = vld [vmem:[#allocation3 + $0x4] sm:$0x4]
      %v6631 = vsel %vm6626, 0, %v6630
      %6632 = vst [vmem:[#allocation3 + $0x4] sm:$0x4] %v6631
      %v6633 = vld [vmem:[#allocation3 + $0x8] sm:$0x4]
      %v6634 = vsel %vm6626, 0, %v6633
      %6635 = vst [vmem:[#allocation3 + $0x8] sm:$0x4] %v6634
      %v6636 = vld [vmem:[#allocation3 + $0xc] sm:$0x4]
      %v6637 = vsel %vm6626, 0, %v6636
      %6638 = vst [vmem:[#allocation3 + $0xc] sm:$0x4] %v6637
      %v6639 = vld [vmem:[#allocation3 + $0x10] sm:$0x4]
      %v6640 = vsel %vm6626, 0, %v6639
      %6641 = vst [vmem:[#allocation3 + $0x10] sm:$0x4] %v6640
      %v6642 = vld [vmem:[#allocation3 + $0x14] sm:$0x4]
      %v6643 = vsel %vm6626, 0, %v6642
      %6644 = vst [vmem:[#allocation3 + $0x14] sm:$0x4] %v6643
      %v6661 = vunpack.c.l.b16 %v6496
      %v6662 = vunpack.c.l.b16 %v6503
      %v6663 = vunpack.c.l.b16 %v6510
      %v6664 = vunpack.c.l.b16 %v6517
      %v6665 = vunpack.c.l.b16 %v6524
      %v6666 = vunpack.c.l.b16 %v6531
      %v6667 = vunpack.c.l.b16 %v6538
      %v6668 = vunpack.c.l.b16 %v6545
      %v6669 = vunpack.c.l.b16 %v6552
      %v6670 = vunpack.c.l.b16 %v6559
      %v6671 = vunpack.c.l.b16 %v6566
      %v6672 = vunpack.c.l.b16 %v6573
      %v6673 = vunpack.c.l.b16 %v6580
      %v6674 = vunpack.c.l.b16 %v6587
      %v6675 = vunpack.c.l.b16 %v6594
      %v6676 = vunpack.c.l.b16 %v6601
      %v6677 = vpack.c.b16 %v6661, %v6661
      %v6678 = vpack.c.b16 %v6662, %v6662
      %v6679 = vpack.c.b16 %v6663, %v6663
      %v6680 = vpack.c.b16 %v6664, %v6664
      %v6681 = vpack.c.b16 %v6665, %v6665
      %v6682 = vpack.c.b16 %v6666, %v6666
      %v6683 = vpack.c.b16 %v6667, %v6667
      %v6684 = vpack.c.b16 %v6668, %v6668
      %v6685 = vpack.c.b16 %v6669, %v6669
      %v6686 = vpack.c.b16 %v6670, %v6670
      %v6687 = vpack.c.b16 %v6671, %v6671
      %v6688 = vpack.c.b16 %v6672, %v6672
      %v6689 = vpack.c.b16 %v6673, %v6673
      %v6690 = vpack.c.b16 %v6674, %v6674
      %v6691 = vpack.c.b16 %v6675, %v6675
      %v6692 = vpack.c.b16 %v6676, %v6676
      %v6693 = vunpack.c.l.b16 %v6677
      %v6694 = vunpack.c.l.b16 %v6678
      %v6695 = vunpack.c.l.b16 %v6679
      %v6696 = vunpack.c.l.b16 %v6680
      %v6697 = vunpack.c.l.b16 %v6681
      %v6698 = vunpack.c.l.b16 %v6682
      %v6699 = vunpack.c.l.b16 %v6683
      %v6700 = vunpack.c.l.b16 %v6684
      %v6701 = vunpack.c.l.b16 %v6685
      %v6702 = vunpack.c.l.b16 %v6686
      %v6703 = vunpack.c.l.b16 %v6687
      %v6704 = vunpack.c.l.b16 %v6688
      %v6705 = vunpack.c.l.b16 %v6689
      %v6706 = vunpack.c.l.b16 %v6690
      %v6707 = vunpack.c.l.b16 %v6691
      %v6708 = vunpack.c.l.b16 %v6692
      %v6709 = vsel %vm3966, %v6694, %v6693
      %v6710 = vsel %vm3968, %v6695, %v6709
      %v6711 = vsel %vm3970, %v6696, %v6710
      %v6712 = vsel %vm3966, %v6698, %v6697
      %v6713 = vsel %vm3968, %v6699, %v6712
      %v6714 = vsel %vm3970, %v6700, %v6713
      %v6715 = vsel %vm3966, %v6702, %v6701
      %v6716 = vsel %vm3968, %v6703, %v6715
      %v6717 = vsel %vm3970, %v6704, %v6716
      %v6718 = vsel %vm3966, %v6706, %v6705
      %v6719 = vsel %vm3968, %v6707, %v6718
      %v6720 = vsel %vm3970, %v6708, %v6719
      %v6721 = vpack.c.b16 %v6711, %v6711
      %v6722 = vpack.c.b16 %v6714, %v6714
      %v6723 = vpack.c.b16 %v6717, %v6717
      %v6724 = vpack.c.b16 %v6720, %v6720
      %s6729 = scalar_lea.vmem [#allocation3], 4
      %vm6730 = vcmask 518144
      %vm6731 = vsmask.f32 2306
      %vm6732 = vmand %vm6730, %vm6731
      %v6733 = vld [vmem:[%s6729] sm:$0x7]
      %v6734 = vsel %vm6732, %v6721, %v6733
      %6735 = vst [vmem:[%s6729] sm:$0x7] %v6734
      %v6736 = vld [vmem:[%s6729 + $0x4] sm:$0x7]
      %v6737 = vsel %vm6732, %v6722, %v6736
      %6738 = vst [vmem:[%s6729 + $0x4] sm:$0x7] %v6737
      %v6739 = vld [vmem:[%s6729 + $0x8] sm:$0x7]
      %v6740 = vsel %vm6732, %v6723, %v6739
      %6741 = vst [vmem:[%s6729 + $0x8] sm:$0x7] %v6740
      %v6742 = vld [vmem:[%s6729 + $0xc] sm:$0x7]
      %v6743 = vsel %vm6732, %v6724, %v6742
      %6744 = vst [vmem:[%s6729 + $0xc] sm:$0x7] %v6743
      %v6745 = vld [vmem:[#allocation3] sm:$0x3]
      %v6746 = vld [vmem:[#allocation3 + $0x4] sm:$0x3]
      %v6747 = vld [vmem:[#allocation3 + $0x8] sm:$0x3]
      %v6748 = vld [vmem:[#allocation3 + $0xc] sm:$0x3]
      %v6749 = vld [vmem:[%s5] sm:$0xf]
      %v6750 = vld [vmem:[%s5 + $0x4] sm:$0xf]
      %v6751 = vld [vmem:[%s5 + $0x8] sm:$0xf]
      %v6752 = vld [vmem:[%s5 + $0xc] sm:$0xf]
      %v6753 = vld [vmem:[%s5 + $0x10] sm:$0xf]
      %v6754 = vld [vmem:[%s5 + $0x14] sm:$0xf]
      %v6755 = vld [vmem:[%s5 + $0x18] sm:$0xf]
      %v6756 = vld [vmem:[%s5 + $0x1c] sm:$0xf]
      %v6757 = vld [vmem:[#allocation3] sm:$0x7]
      %v6758 = vld [vmem:[#allocation3 + $0x4] sm:$0x7]
      %v6759 = vld [vmem:[#allocation3 + $0x8] sm:$0x7]
      %v6760 = vld [vmem:[#allocation3 + $0xc] sm:$0x7]
      %v6766 = vunpack.c.l.s4 1983009808
      %v6767 = vunpack.c.0.s8 %v6766
      %v6768 = vlaneseq
      %v6769 = vshrl.u32 %v6768, 7
      %v6770 = vsub.s32 %v6767, %v6769
      %v6771 = vrot.slane %v6757, %v6770
      %v6772 = vcombine.high %v6771, %v6771
      %v6774 = vunpack.c.l.s4 1983009808
      %v6775 = vunpack.c.0.s8 %v6774
      %v6776 = vlaneseq
      %v6777 = vshrl.u32 %v6776, 7
      %v6778 = vsub.s32 %v6775, %v6777
      %v6779 = vrot.slane %v6758, %v6778
      %v6780 = vcombine.high %v6779, %v6779
      %v6782 = vunpack.c.l.s4 1983009808
      %v6783 = vunpack.c.0.s8 %v6782
      %v6784 = vlaneseq
      %v6785 = vshrl.u32 %v6784, 7
      %v6786 = vsub.s32 %v6783, %v6785
      %v6787 = vrot.slane %v6759, %v6786
      %v6788 = vcombine.high %v6787, %v6787
      %v6790 = vunpack.c.l.s4 1983009808
      %v6791 = vunpack.c.0.s8 %v6790
      %v6792 = vlaneseq
      %v6793 = vshrl.u32 %v6792, 7
      %v6794 = vsub.s32 %v6791, %v6793
      %v6795 = vrot.slane %v6760, %v6794
      %v6796 = vcombine.high %v6795, %v6795
      %vm6797 = vsmask.f32 1280
      %vm6798 = vsmask.f32 3336
      %vm6799 = vmor %vm6797, %vm6798
      %vm6800 = vsmask.f32 5392
      %vm6801 = vmor %vm6799, %vm6800
      %vm6802 = vsmask.f32 7448
      %vm6803 = vmor %vm6801, %vm6802
      %v6805 = vshrl.u32 %v6771, 16
      %v6807 = vrot.slane %v6805, 6
      %v6808 = vshll.u32 %v6771, 16
      %v6810 = vrot.slane %v6808, 7
      %v6811 = vor.u32 %v6807, %v6810
      %v6812 = vrot.slane %v6811, 2
      %v6814 = vshll.u32 %v6772, 16
      %v6816 = vrot.slane %v6814, 7
      %v6817 = vsel %vm6803, %v6812, %v6816
      %v6819 = vshrl.u32 %v6779, 16
      %v6821 = vrot.slane %v6819, 6
      %v6822 = vshll.u32 %v6779, 16
      %v6824 = vrot.slane %v6822, 7
      %v6825 = vor.u32 %v6821, %v6824
      %v6826 = vrot.slane %v6825, 2
      %v6828 = vshll.u32 %v6780, 16
      %v6830 = vrot.slane %v6828, 7
      %v6831 = vsel %vm6803, %v6826, %v6830
      %v6833 = vshrl.u32 %v6787, 16
      %v6835 = vrot.slane %v6833, 6
      %v6836 = vshll.u32 %v6787, 16
      %v6838 = vrot.slane %v6836, 7
      %v6839 = vor.u32 %v6835, %v6838
      %v6840 = vrot.slane %v6839, 2
      %v6842 = vshll.u32 %v6788, 16
      %v6844 = vrot.slane %v6842, 7
      %v6845 = vsel %vm6803, %v6840, %v6844
      %v6847 = vshrl.u32 %v6795, 16
      %v6849 = vrot.slane %v6847, 6
      %v6850 = vshll.u32 %v6795, 16
      %v6852 = vrot.slane %v6850, 7
      %v6853 = vor.u32 %v6849, %v6852
      %v6854 = vrot.slane %v6853, 2
      %v6856 = vshll.u32 %v6796, 16
      %v6858 = vrot.slane %v6856, 7
      %v6859 = vsel %vm6803, %v6854, %v6858
      %v6860 = vld [vmem:[%s5 + $0x20] sm:$0xf]
      %v6861 = vld [vmem:[%s5 + $0x24] sm:$0xf]
      %v6862 = vld [vmem:[%s5 + $0x28] sm:$0xf]
      %v6863 = vld [vmem:[%s5 + $0x2c] sm:$0xf]
      %v6864 = vld [vmem:[%s5 + $0x30] sm:$0xf]
      %v6865 = vld [vmem:[%s5 + $0x34] sm:$0xf]
      %v6866 = vld [vmem:[%s5 + $0x38] sm:$0xf]
      %v6867 = vld [vmem:[%s5 + $0x3c] sm:$0xf]
      %v6868 = vcombine.low %v6817, %v6831
      %v6869 = vcombine.low %v6845, %v6859
      %v6871 = vunpack.c.l.s4 1983009808
      %v6872 = vunpack.c.0.s8 %v6871
      %v6873 = vlaneseq
      %v6874 = vshrl.u32 %v6873, 7
      %v6875 = vsub.s32 %v6872, %v6874
      %v6876 = vrot.slane %v6868, %v6875
      %v6878 = vunpack.c.l.s4 1983009808
      %v6879 = vunpack.c.0.s8 %v6878
      %v6880 = vlaneseq
      %v6881 = vshrl.u32 %v6880, 7
      %v6882 = vsub.s32 %v6879, %v6881
      %v6883 = vrot.slane %v6869, %v6882
      %v6884 = vcombine.low %v6876, %v6883
      %v6893 = vunpack.c.l.b16 %v6860
      %v6894 = vunpack.c.l.b16 %v6861
      %v6895 = vunpack.c.l.b16 %v6862
      %v6896 = vunpack.c.l.b16 %v6863
      %v6897 = vunpack.c.l.b16 %v6864
      %v6898 = vunpack.c.l.b16 %v6865
      %v6899 = vunpack.c.l.b16 %v6866
      %v6900 = vunpack.c.l.b16 %v6867
      %v6901 = vpack.c.b16 %v6894, %v6893
      %v6902 = vpack.c.b16 %v6896, %v6895
      %v6903 = vpack.c.b16 %v6898, %v6897
      %v6904 = vpack.c.b16 %v6900, %v6899
      %v6910 = vsel %vm3190, %v6884, 0
      %6912 = vmatprep.subr.bf16.mxu0 0
      %6913 = vmatpush1.bf16.msra.mxu0 0
      %6914 = vmatprep.subr.bf16.mxu0 0
      %6915 = vmatpush1.bf16.msra.mxu0 0
      %6916 = vmatprep.subr.bf16.mxu0 0
      %6917 = vmatpush1.bf16.msra.mxu0 0
      %6918 = vmatprep.subr.bf16.mxu0 0
      %6919 = vmatpush1.bf16.msra.mxu0 0
      %6920 = vmatprep.subr.bf16.mxu0 0
      %6921 = vmatpush1.bf16.msra.mxu0 %v6904
      %6922 = vmatprep.subr.bf16.mxu0 0
      %6923 = vmatpush1.bf16.msra.mxu0 %v6903
      %6924 = vmatprep.subr.bf16.mxu0 0
      %6925 = vmatpush1.bf16.msra.mxu0 %v6902
      %6926 = vmatprep.subr.bf16.mxu0 0
      %6927 = vmatpush1.bf16.msra.mxu0 %v6901
      %6928 = vmatprep.subr.bf16.mxu0 0
      %6929 = vmatpush2.bf16.msra.mxu0 0
      %6930 = vmatprep.subr.bf16.mxu0 0
      %6931 = vmatpush2.bf16.msra.mxu0 0
      %6932 = vmatprep.subr.bf16.mxu0 0
      %6933 = vmatpush2.bf16.msra.mxu0 0
      %6934 = vmatprep.subr.bf16.mxu0 0
      %6935 = vmatpush2.bf16.msra.mxu0 0
      %6936 = vmatprep.subr.bf16.mxu0 0
      %6937 = vmatpush2.bf16.msra.mxu0 0
      %6938 = vmatprep.subr.bf16.mxu0 0
      %6939 = vmatpush2.bf16.msra.mxu0 0
      %6940 = vmatprep.subr.bf16.mxu0 0
      %6941 = vmatpush2.bf16.msra.mxu0 0
      %6942 = vmatprep.subr.bf16.mxu0 0
      %6943 = vmatpush2.bf16.msra.mxu0 0
      %6944 = vmatprep.mubr.bf16.mxu0 0
      %6945 = vmatmul.mubr.bf16.gmra.mxu0 %v6910
      %v6946 = vpop.f32.mrf.mxu0
      %v6947 = vadd.f32 0.0, %v6946
      %v6948 = vpop.f32.mrf.mxu0
      %v6949 = vpop.f32.mrf.mxu0
      %v6950 = vadd.f32 0.0, %v6949
      %v6951 = vpop.f32.mrf.mxu0
      %6952 = vdwg.mxu0
      %v6957 = vcombine.low %v6745, %v6746
      %v6958 = vcombine.low %v6747, %v6748
      %v6960 = vunpack.c.l.s4 1983009808
      %v6961 = vunpack.c.0.s8 %v6960
      %v6962 = vlaneseq
      %v6963 = vshrl.u32 %v6962, 7
      %v6964 = vsub.s32 %v6961, %v6963
      %v6965 = vrot.slane %v6957, %v6964
      %v6967 = vunpack.c.l.s4 1983009808
      %v6968 = vunpack.c.0.s8 %v6967
      %v6969 = vlaneseq
      %v6970 = vshrl.u32 %v6969, 7
      %v6971 = vsub.s32 %v6968, %v6970
      %v6972 = vrot.slane %v6958, %v6971
      %v6973 = vcombine.low %v6965, %v6972
      %v6982 = vunpack.c.l.b16 %v6749
      %v6983 = vunpack.c.l.b16 %v6750
      %v6984 = vunpack.c.l.b16 %v6751
      %v6985 = vunpack.c.l.b16 %v6752
      %v6986 = vunpack.c.l.b16 %v6753
      %v6987 = vunpack.c.l.b16 %v6754
      %v6988 = vunpack.c.l.b16 %v6755
      %v6989 = vunpack.c.l.b16 %v6756
      %v6990 = vpack.c.b16 %v6983, %v6982
      %v6991 = vpack.c.b16 %v6985, %v6984
      %v6992 = vpack.c.b16 %v6987, %v6986
      %v6993 = vpack.c.b16 %v6989, %v6988
      %v6999 = vsel %vm3190, %v6973, 0
      %7001 = vmatprep.subr.bf16.mxu0 0
      %7002 = vmatpush1.bf16.msra.mxu0 0
      %7003 = vmatprep.subr.bf16.mxu0 0
      %7004 = vmatpush1.bf16.msra.mxu0 0
      %7005 = vmatprep.subr.bf16.mxu0 0
      %7006 = vmatpush1.bf16.msra.mxu0 0
      %7007 = vmatprep.subr.bf16.mxu0 0
      %7008 = vmatpush1.bf16.msra.mxu0 0
      %7009 = vmatprep.subr.bf16.mxu0 0
      %7010 = vmatpush1.bf16.msra.mxu0 %v6993
      %7011 = vmatprep.subr.bf16.mxu0 0
      %7012 = vmatpush1.bf16.msra.mxu0 %v6992
      %7013 = vmatprep.subr.bf16.mxu0 0
      %7014 = vmatpush1.bf16.msra.mxu0 %v6991
      %7015 = vmatprep.subr.bf16.mxu0 0
      %7016 = vmatpush1.bf16.msra.mxu0 %v6990
      %7017 = vmatprep.subr.bf16.mxu0 0
      %7018 = vmatpush2.bf16.msra.mxu0 0
      %7019 = vmatprep.subr.bf16.mxu0 0
      %7020 = vmatpush2.bf16.msra.mxu0 0
      %7021 = vmatprep.subr.bf16.mxu0 0
      %7022 = vmatpush2.bf16.msra.mxu0 0
      %7023 = vmatprep.subr.bf16.mxu0 0
      %7024 = vmatpush2.bf16.msra.mxu0 0
      %7025 = vmatprep.subr.bf16.mxu0 0
      %7026 = vmatpush2.bf16.msra.mxu0 0
      %7027 = vmatprep.subr.bf16.mxu0 0
      %7028 = vmatpush2.bf16.msra.mxu0 0
      %7029 = vmatprep.subr.bf16.mxu0 0
      %7030 = vmatpush2.bf16.msra.mxu0 0
      %7031 = vmatprep.subr.bf16.mxu0 0
      %7032 = vmatpush2.bf16.msra.mxu0 0
      %7033 = vmatprep.mubr.bf16.mxu0 0
      %7034 = vmatmul.mubr.bf16.gmra.mxu0 %v6999
      %v7035 = vpop.f32.mrf.mxu0
      %v7036 = vadd.f32 %v6947, %v7035
      %v7037 = vpop.f32.mrf.mxu0
      %v7038 = vpop.f32.mrf.mxu0
      %v7039 = vadd.f32 %v6950, %v7038
      %v7040 = vpop.f32.mrf.mxu0
      %7041 = vdwg.mxu0
      %v7042 = vld [vmem:[#allocation3] sm:$0x6]
      %v7043 = vld [vmem:[#allocation3 + $0x4] sm:$0x6]
      %v7044 = vld [vmem:[#allocation3 + $0x8] sm:$0x6]
      %v7045 = vld [vmem:[#allocation3 + $0xc] sm:$0x6]
      %v7051 = vunpack.c.l.s4 1983009808
      %v7052 = vunpack.c.0.s8 %v7051
      %v7053 = vlaneseq
      %v7054 = vshrl.u32 %v7053, 7
      %v7055 = vsub.s32 %v7052, %v7054
      %v7056 = vrot.slane %v7042, %v7055
      %v7057 = vcombine.high %v7056, %v7056
      %v7059 = vunpack.c.l.s4 1983009808
      %v7060 = vunpack.c.0.s8 %v7059
      %v7061 = vlaneseq
      %v7062 = vshrl.u32 %v7061, 7
      %v7063 = vsub.s32 %v7060, %v7062
      %v7064 = vrot.slane %v7043, %v7063
      %v7065 = vcombine.high %v7064, %v7064
      %v7067 = vunpack.c.l.s4 1983009808
      %v7068 = vunpack.c.0.s8 %v7067
      %v7069 = vlaneseq
      %v7070 = vshrl.u32 %v7069, 7
      %v7071 = vsub.s32 %v7068, %v7070
      %v7072 = vrot.slane %v7044, %v7071
      %v7073 = vcombine.high %v7072, %v7072
      %v7075 = vunpack.c.l.s4 1983009808
      %v7076 = vunpack.c.0.s8 %v7075
      %v7077 = vlaneseq
      %v7078 = vshrl.u32 %v7077, 7
      %v7079 = vsub.s32 %v7076, %v7078
      %v7080 = vrot.slane %v7045, %v7079
      %v7081 = vcombine.high %v7080, %v7080
      %vm7082 = vcmask 1040384
      %vm7083 = vcmask 1042434
      %vm7084 = vmor %vm7082, %vm7083
      %vm7085 = vcmask 1044484
      %vm7086 = vmor %vm7084, %vm7085
      %vm7087 = vcmask 1046534
      %vm7088 = vmor %vm7086, %vm7087
      %v7089 = vrot.slane %v7056, 7
      %v7090 = vrot.slane %v7089, 2
      %v7091 = vrot.slane %v7057, 7
      %v7092 = vsel %vm7088, %v7090, %v7091
      %v7093 = vrot.slane %v7064, 7
      %v7094 = vrot.slane %v7093, 2
      %v7095 = vrot.slane %v7065, 7
      %v7096 = vsel %vm7088, %v7094, %v7095
      %v7097 = vrot.slane %v7072, 7
      %v7098 = vrot.slane %v7097, 2
      %v7099 = vrot.slane %v7073, 7
      %v7100 = vsel %vm7088, %v7098, %v7099
      %v7101 = vrot.slane %v7080, 7
      %v7102 = vrot.slane %v7101, 2
      %v7103 = vrot.slane %v7081, 7
      %v7104 = vsel %vm7088, %v7102, %v7103
      %v7105 = vld [vmem:[%s5 + $0x40] sm:$0xf]
      %v7106 = vld [vmem:[%s5 + $0x44] sm:$0xf]
      %v7107 = vld [vmem:[%s5 + $0x48] sm:$0xf]
      %v7108 = vld [vmem:[%s5 + $0x4c] sm:$0xf]
      %v7109 = vld [vmem:[%s5 + $0x50] sm:$0xf]
      %v7110 = vld [vmem:[%s5 + $0x54] sm:$0xf]
      %v7111 = vld [vmem:[%s5 + $0x58] sm:$0xf]
      %v7112 = vld [vmem:[%s5 + $0x5c] sm:$0xf]
      %v7113 = vcombine.low %v7092, %v7096
      %v7114 = vcombine.low %v7100, %v7104
      %v7116 = vunpack.c.l.s4 1983009808
      %v7117 = vunpack.c.0.s8 %v7116
      %v7118 = vlaneseq
      %v7119 = vshrl.u32 %v7118, 7
      %v7120 = vsub.s32 %v7117, %v7119
      %v7121 = vrot.slane %v7113, %v7120
      %v7123 = vunpack.c.l.s4 1983009808
      %v7124 = vunpack.c.0.s8 %v7123
      %v7125 = vlaneseq
      %v7126 = vshrl.u32 %v7125, 7
      %v7127 = vsub.s32 %v7124, %v7126
      %v7128 = vrot.slane %v7114, %v7127
      %v7129 = vcombine.low %v7121, %v7128
      %v7138 = vunpack.c.l.b16 %v7105
      %v7139 = vunpack.c.l.b16 %v7106
      %v7140 = vunpack.c.l.b16 %v7107
      %v7141 = vunpack.c.l.b16 %v7108
      %v7142 = vunpack.c.l.b16 %v7109
      %v7143 = vunpack.c.l.b16 %v7110
      %v7144 = vunpack.c.l.b16 %v7111
      %v7145 = vunpack.c.l.b16 %v7112
      %v7146 = vpack.c.b16 %v7139, %v7138
      %v7147 = vpack.c.b16 %v7141, %v7140
      %v7148 = vpack.c.b16 %v7143, %v7142
      %v7149 = vpack.c.b16 %v7145, %v7144
      %v7155 = vsel %vm3190, %v7129, 0
      %7157 = vmatprep.subr.bf16.mxu0 0
      %7158 = vmatpush1.bf16.msra.mxu0 0
      %7159 = vmatprep.subr.bf16.mxu0 0
      %7160 = vmatpush1.bf16.msra.mxu0 0
      %7161 = vmatprep.subr.bf16.mxu0 0
      %7162 = vmatpush1.bf16.msra.mxu0 0
      %7163 = vmatprep.subr.bf16.mxu0 0
      %7164 = vmatpush1.bf16.msra.mxu0 0
      %7165 = vmatprep.subr.bf16.mxu0 0
      %7166 = vmatpush1.bf16.msra.mxu0 %v7149
      %7167 = vmatprep.subr.bf16.mxu0 0
      %7168 = vmatpush1.bf16.msra.mxu0 %v7148
      %7169 = vmatprep.subr.bf16.mxu0 0
      %7170 = vmatpush1.bf16.msra.mxu0 %v7147
      %7171 = vmatprep.subr.bf16.mxu0 0
      %7172 = vmatpush1.bf16.msra.mxu0 %v7146
      %7173 = vmatprep.subr.bf16.mxu0 0
      %7174 = vmatpush2.bf16.msra.mxu0 0
      %7175 = vmatprep.subr.bf16.mxu0 0
      %7176 = vmatpush2.bf16.msra.mxu0 0
      %7177 = vmatprep.subr.bf16.mxu0 0
      %7178 = vmatpush2.bf16.msra.mxu0 0
      %7179 = vmatprep.subr.bf16.mxu0 0
      %7180 = vmatpush2.bf16.msra.mxu0 0
      %7181 = vmatprep.subr.bf16.mxu0 0
      %7182 = vmatpush2.bf16.msra.mxu0 0
      %7183 = vmatprep.subr.bf16.mxu0 0
      %7184 = vmatpush2.bf16.msra.mxu0 0
      %7185 = vmatprep.subr.bf16.mxu0 0
      %7186 = vmatpush2.bf16.msra.mxu0 0
      %7187 = vmatprep.subr.bf16.mxu0 0
      %7188 = vmatpush2.bf16.msra.mxu0 0
      %7189 = vmatprep.mubr.bf16.mxu0 0
      %7190 = vmatmul.mubr.bf16.gmra.mxu0 %v7155
      %v7191 = vpop.f32.mrf.mxu0
      %v7192 = vadd.f32 0.0, %v7191
      %v7193 = vpop.f32.mrf.mxu0
      %v7194 = vpop.f32.mrf.mxu0
      %v7195 = vadd.f32 0.0, %v7194
      %v7196 = vpop.f32.mrf.mxu0
      %7197 = vdwg.mxu0
      %v7198 = vadd.f32 %v7036, %v7192
      %v7199 = vadd.f32 %v7039, %v7195
      %v7200 = vld [vmem:[%s6729] sm:$0x3]
      %v7201 = vld [vmem:[%s6729 + $0x4] sm:$0x3]
      %v7202 = vld [vmem:[%s6729 + $0x8] sm:$0x3]
      %v7203 = vld [vmem:[%s6729 + $0xc] sm:$0x3]
      %v7204 = vld [vmem:[%s5 + $0x60] sm:$0xf]
      %v7205 = vld [vmem:[%s5 + $0x64] sm:$0xf]
      %v7206 = vld [vmem:[%s5 + $0x68] sm:$0xf]
      %v7207 = vld [vmem:[%s5 + $0x6c] sm:$0xf]
      %v7208 = vld [vmem:[%s5 + $0x70] sm:$0xf]
      %v7209 = vld [vmem:[%s5 + $0x74] sm:$0xf]
      %v7210 = vld [vmem:[%s5 + $0x78] sm:$0xf]
      %v7211 = vld [vmem:[%s5 + $0x7c] sm:$0xf]
      %v7216 = vcombine.low %v7200, %v7201
      %v7217 = vcombine.low %v7202, %v7203
      %v7219 = vunpack.c.l.s4 1983009808
      %v7220 = vunpack.c.0.s8 %v7219
      %v7221 = vlaneseq
      %v7222 = vshrl.u32 %v7221, 7
      %v7223 = vsub.s32 %v7220, %v7222
      %v7224 = vrot.slane %v7216, %v7223
      %v7226 = vunpack.c.l.s4 1983009808
      %v7227 = vunpack.c.0.s8 %v7226
      %v7228 = vlaneseq
      %v7229 = vshrl.u32 %v7228, 7
      %v7230 = vsub.s32 %v7227, %v7229
      %v7231 = vrot.slane %v7217, %v7230
      %v7232 = vcombine.low %v7224, %v7231
      %v7241 = vunpack.c.l.b16 %v7204
      %v7242 = vunpack.c.l.b16 %v7205
      %v7243 = vunpack.c.l.b16 %v7206
      %v7244 = vunpack.c.l.b16 %v7207
      %v7245 = vunpack.c.l.b16 %v7208
      %v7246 = vunpack.c.l.b16 %v7209
      %v7247 = vunpack.c.l.b16 %v7210
      %v7248 = vunpack.c.l.b16 %v7211
      %v7249 = vpack.c.b16 %v7242, %v7241
      %v7250 = vpack.c.b16 %v7244, %v7243
      %v7251 = vpack.c.b16 %v7246, %v7245
      %v7252 = vpack.c.b16 %v7248, %v7247
      %v7258 = vsel %vm3190, %v7232, 0
      %7260 = vmatprep.subr.bf16.mxu0 0
      %7261 = vmatpush1.bf16.msra.mxu0 0
      %7262 = vmatprep.subr.bf16.mxu0 0
      %7263 = vmatpush1.bf16.msra.mxu0 0
      %7264 = vmatprep.subr.bf16.mxu0 0
      %7265 = vmatpush1.bf16.msra.mxu0 0
      %7266 = vmatprep.subr.bf16.mxu0 0
      %7267 = vmatpush1.bf16.msra.mxu0 0
      %7268 = vmatprep.subr.bf16.mxu0 0
      %7269 = vmatpush1.bf16.msra.mxu0 %v7252
      %7270 = vmatprep.subr.bf16.mxu0 0
      %7271 = vmatpush1.bf16.msra.mxu0 %v7251
      %7272 = vmatprep.subr.bf16.mxu0 0
      %7273 = vmatpush1.bf16.msra.mxu0 %v7250
      %7274 = vmatprep.subr.bf16.mxu0 0
      %7275 = vmatpush1.bf16.msra.mxu0 %v7249
      %7276 = vmatprep.subr.bf16.mxu0 0
      %7277 = vmatpush2.bf16.msra.mxu0 0
      %7278 = vmatprep.subr.bf16.mxu0 0
      %7279 = vmatpush2.bf16.msra.mxu0 0
      %7280 = vmatprep.subr.bf16.mxu0 0
      %7281 = vmatpush2.bf16.msra.mxu0 0
      %7282 = vmatprep.subr.bf16.mxu0 0
      %7283 = vmatpush2.bf16.msra.mxu0 0
      %7284 = vmatprep.subr.bf16.mxu0 0
      %7285 = vmatpush2.bf16.msra.mxu0 0
      %7286 = vmatprep.subr.bf16.mxu0 0
      %7287 = vmatpush2.bf16.msra.mxu0 0
      %7288 = vmatprep.subr.bf16.mxu0 0
      %7289 = vmatpush2.bf16.msra.mxu0 0
      %7290 = vmatprep.subr.bf16.mxu0 0
      %7291 = vmatpush2.bf16.msra.mxu0 0
      %7292 = vmatprep.mubr.bf16.mxu0 0
      %7293 = vmatmul.mubr.bf16.gmra.mxu0 %v7258
      %v7294 = vpop.f32.mrf.mxu0
      %v7295 = vadd.f32 0.0, %v7294
      %v7296 = vpop.f32.mrf.mxu0
      %v7297 = vpop.f32.mrf.mxu0
      %v7298 = vadd.f32 0.0, %v7297
      %v7299 = vpop.f32.mrf.mxu0
      %7300 = vdwg.mxu0
      %v7301 = vadd.f32 %v7198, %v7295
      %v7302 = vadd.f32 %v7199, %v7298
      %v7303 = vld [vmem:[%s6729] sm:$0x7]
      %v7304 = vld [vmem:[%s6729 + $0x4] sm:$0x7]
      %v7305 = vld [vmem:[%s6729 + $0x8] sm:$0x7]
      %v7306 = vld [vmem:[%s6729 + $0xc] sm:$0x7]
      %v7312 = vunpack.c.l.s4 1983009808
      %v7313 = vunpack.c.0.s8 %v7312
      %v7314 = vlaneseq
      %v7315 = vshrl.u32 %v7314, 7
      %v7316 = vsub.s32 %v7313, %v7315
      %v7317 = vrot.slane %v7303, %v7316
      %v7318 = vcombine.high %v7317, %v7317
      %v7320 = vunpack.c.l.s4 1983009808
      %v7321 = vunpack.c.0.s8 %v7320
      %v7322 = vlaneseq
      %v7323 = vshrl.u32 %v7322, 7
      %v7324 = vsub.s32 %v7321, %v7323
      %v7325 = vrot.slane %v7304, %v7324
      %v7326 = vcombine.high %v7325, %v7325
      %v7328 = vunpack.c.l.s4 1983009808
      %v7329 = vunpack.c.0.s8 %v7328
      %v7330 = vlaneseq
      %v7331 = vshrl.u32 %v7330, 7
      %v7332 = vsub.s32 %v7329, %v7331
      %v7333 = vrot.slane %v7305, %v7332
      %v7334 = vcombine.high %v7333, %v7333
      %v7336 = vunpack.c.l.s4 1983009808
      %v7337 = vunpack.c.0.s8 %v7336
      %v7338 = vlaneseq
      %v7339 = vshrl.u32 %v7338, 7
      %v7340 = vsub.s32 %v7337, %v7339
      %v7341 = vrot.slane %v7306, %v7340
      %v7342 = vcombine.high %v7341, %v7341
      %v7344 = vshrl.u32 %v7317, 16
      %v7346 = vrot.slane %v7344, 6
      %v7347 = vshll.u32 %v7317, 16
      %v7349 = vrot.slane %v7347, 7
      %v7350 = vor.u32 %v7346, %v7349
      %v7351 = vrot.slane %v7350, 2
      %v7353 = vshll.u32 %v7318, 16
      %v7355 = vrot.slane %v7353, 7
      %v7356 = vsel %vm6803, %v7351, %v7355
      %v7358 = vshrl.u32 %v7325, 16
      %v7360 = vrot.slane %v7358, 6
      %v7361 = vshll.u32 %v7325, 16
      %v7363 = vrot.slane %v7361, 7
      %v7364 = vor.u32 %v7360, %v7363
      %v7365 = vrot.slane %v7364, 2
      %v7367 = vshll.u32 %v7326, 16
      %v7369 = vrot.slane %v7367, 7
      %v7370 = vsel %vm6803, %v7365, %v7369
      %v7372 = vshrl.u32 %v7333, 16
      %v7374 = vrot.slane %v7372, 6
      %v7375 = vshll.u32 %v7333, 16
      %v7377 = vrot.slane %v7375, 7
      %v7378 = vor.u32 %v7374, %v7377
      %v7379 = vrot.slane %v7378, 2
      %v7381 = vshll.u32 %v7334, 16
      %v7383 = vrot.slane %v7381, 7
      %v7384 = vsel %vm6803, %v7379, %v7383
      %v7386 = vshrl.u32 %v7341, 16
      %v7388 = vrot.slane %v7386, 6
      %v7389 = vshll.u32 %v7341, 16
      %v7391 = vrot.slane %v7389, 7
      %v7392 = vor.u32 %v7388, %v7391
      %v7393 = vrot.slane %v7392, 2
      %v7395 = vshll.u32 %v7342, 16
      %v7397 = vrot.slane %v7395, 7
      %v7398 = vsel %vm6803, %v7393, %v7397
      %v7399 = vld [vmem:[%s5 + $0x80] sm:$0xf]
      %v7400 = vld [vmem:[%s5 + $0x84] sm:$0xf]
      %v7401 = vld [vmem:[%s5 + $0x88] sm:$0xf]
      %v7402 = vld [vmem:[%s5 + $0x8c] sm:$0xf]
      %v7403 = vld [vmem:[%s5 + $0x90] sm:$0xf]
      %v7404 = vld [vmem:[%s5 + $0x94] sm:$0xf]
      %v7405 = vld [vmem:[%s5 + $0x98] sm:$0xf]
      %v7406 = vld [vmem:[%s5 + $0x9c] sm:$0xf]
      %v7407 = vcombine.low %v7356, %v7370
      %v7408 = vcombine.low %v7384, %v7398
      %v7410 = vunpack.c.l.s4 1983009808
      %v7411 = vunpack.c.0.s8 %v7410
      %v7412 = vlaneseq
      %v7413 = vshrl.u32 %v7412, 7
      %v7414 = vsub.s32 %v7411, %v7413
      %v7415 = vrot.slane %v7407, %v7414
      %v7417 = vunpack.c.l.s4 1983009808
      %v7418 = vunpack.c.0.s8 %v7417
      %v7419 = vlaneseq
      %v7420 = vshrl.u32 %v7419, 7
      %v7421 = vsub.s32 %v7418, %v7420
      %v7422 = vrot.slane %v7408, %v7421
      %v7423 = vcombine.low %v7415, %v7422
      %v7432 = vunpack.c.l.b16 %v7399
      %v7433 = vunpack.c.l.b16 %v7400
      %v7434 = vunpack.c.l.b16 %v7401
      %v7435 = vunpack.c.l.b16 %v7402
      %v7436 = vunpack.c.l.b16 %v7403
      %v7437 = vunpack.c.l.b16 %v7404
      %v7438 = vunpack.c.l.b16 %v7405
      %v7439 = vunpack.c.l.b16 %v7406
      %v7440 = vpack.c.b16 %v7433, %v7432
      %v7441 = vpack.c.b16 %v7435, %v7434
      %v7442 = vpack.c.b16 %v7437, %v7436
      %v7443 = vpack.c.b16 %v7439, %v7438
      %v7449 = vsel %vm3190, %v7423, 0
      %7451 = vmatprep.subr.bf16.mxu0 0
      %7452 = vmatpush1.bf16.msra.mxu0 0
      %7453 = vmatprep.subr.bf16.mxu0 0
      %7454 = vmatpush1.bf16.msra.mxu0 0
      %7455 = vmatprep.subr.bf16.mxu0 0
      %7456 = vmatpush1.bf16.msra.mxu0 0
      %7457 = vmatprep.subr.bf16.mxu0 0
      %7458 = vmatpush1.bf16.msra.mxu0 0
      %7459 = vmatprep.subr.bf16.mxu0 0
      %7460 = vmatpush1.bf16.msra.mxu0 %v7443
      %7461 = vmatprep.subr.bf16.mxu0 0
      %7462 = vmatpush1.bf16.msra.mxu0 %v7442
      %7463 = vmatprep.subr.bf16.mxu0 0
      %7464 = vmatpush1.bf16.msra.mxu0 %v7441
      %7465 = vmatprep.subr.bf16.mxu0 0
      %7466 = vmatpush1.bf16.msra.mxu0 %v7440
      %7467 = vmatprep.subr.bf16.mxu0 0
      %7468 = vmatpush2.bf16.msra.mxu0 0
      %7469 = vmatprep.subr.bf16.mxu0 0
      %7470 = vmatpush2.bf16.msra.mxu0 0
      %7471 = vmatprep.subr.bf16.mxu0 0
      %7472 = vmatpush2.bf16.msra.mxu0 0
      %7473 = vmatprep.subr.bf16.mxu0 0
      %7474 = vmatpush2.bf16.msra.mxu0 0
      %7475 = vmatprep.subr.bf16.mxu0 0
      %7476 = vmatpush2.bf16.msra.mxu0 0
      %7477 = vmatprep.subr.bf16.mxu0 0
      %7478 = vmatpush2.bf16.msra.mxu0 0
      %7479 = vmatprep.subr.bf16.mxu0 0
      %7480 = vmatpush2.bf16.msra.mxu0 0
      %7481 = vmatprep.subr.bf16.mxu0 0
      %7482 = vmatpush2.bf16.msra.mxu0 0
      %7483 = vmatprep.mubr.bf16.mxu0 0
      %7484 = vmatmul.mubr.bf16.gmra.mxu0 %v7449
      %v7485 = vpop.f32.mrf.mxu0
      %v7486 = vadd.f32 0.0, %v7485
      %v7487 = vpop.f32.mrf.mxu0
      %v7488 = vpop.f32.mrf.mxu0
      %v7489 = vadd.f32 0.0, %v7488
      %v7490 = vpop.f32.mrf.mxu0
      %7491 = vdwg.mxu0
      %v7492 = vadd.f32 %v7301, %v7486
      %v7493 = vadd.f32 %v7302, %v7489
      %v7494 = vld [vmem:[%s6729] sm:$0x6]
      %v7495 = vld [vmem:[%s6729 + $0x4] sm:$0x6]
      %v7496 = vld [vmem:[%s6729 + $0x8] sm:$0x6]
      %v7497 = vld [vmem:[%s6729 + $0xc] sm:$0x6]
      %v7503 = vunpack.c.l.s4 1983009808
      %v7504 = vunpack.c.0.s8 %v7503
      %v7505 = vlaneseq
      %v7506 = vshrl.u32 %v7505, 7
      %v7507 = vsub.s32 %v7504, %v7506
      %v7508 = vrot.slane %v7494, %v7507
      %v7509 = vcombine.high %v7508, %v7508
      %v7511 = vunpack.c.l.s4 1983009808
      %v7512 = vunpack.c.0.s8 %v7511
      %v7513 = vlaneseq
      %v7514 = vshrl.u32 %v7513, 7
      %v7515 = vsub.s32 %v7512, %v7514
      %v7516 = vrot.slane %v7495, %v7515
      %v7517 = vcombine.high %v7516, %v7516
      %v7519 = vunpack.c.l.s4 1983009808
      %v7520 = vunpack.c.0.s8 %v7519
      %v7521 = vlaneseq
      %v7522 = vshrl.u32 %v7521, 7
      %v7523 = vsub.s32 %v7520, %v7522
      %v7524 = vrot.slane %v7496, %v7523
      %v7525 = vcombine.high %v7524, %v7524
      %v7527 = vunpack.c.l.s4 1983009808
      %v7528 = vunpack.c.0.s8 %v7527
      %v7529 = vlaneseq
      %v7530 = vshrl.u32 %v7529, 7
      %v7531 = vsub.s32 %v7528, %v7530
      %v7532 = vrot.slane %v7497, %v7531
      %v7533 = vcombine.high %v7532, %v7532
      %v7534 = vrot.slane %v7508, 7
      %v7535 = vrot.slane %v7534, 2
      %v7536 = vrot.slane %v7509, 7
      %v7537 = vsel %vm7088, %v7535, %v7536
      %v7538 = vrot.slane %v7516, 7
      %v7539 = vrot.slane %v7538, 2
      %v7540 = vrot.slane %v7517, 7
      %v7541 = vsel %vm7088, %v7539, %v7540
      %v7542 = vrot.slane %v7524, 7
      %v7543 = vrot.slane %v7542, 2
      %v7544 = vrot.slane %v7525, 7
      %v7545 = vsel %vm7088, %v7543, %v7544
      %v7546 = vrot.slane %v7532, 7
      %v7547 = vrot.slane %v7546, 2
      %v7548 = vrot.slane %v7533, 7
      %v7549 = vsel %vm7088, %v7547, %v7548
      %v7550 = vld [vmem:[%s5 + $0xa0] sm:$0xf]
      %v7551 = vld [vmem:[%s5 + $0xa4] sm:$0xf]
      %v7552 = vld [vmem:[%s5 + $0xa8] sm:$0xf]
      %v7553 = vld [vmem:[%s5 + $0xac] sm:$0xf]
      %v7554 = vld [vmem:[%s5 + $0xb0] sm:$0xf]
      %v7555 = vld [vmem:[%s5 + $0xb4] sm:$0xf]
      %v7556 = vld [vmem:[%s5 + $0xb8] sm:$0xf]
      %v7557 = vld [vmem:[%s5 + $0xbc] sm:$0xf]
      %v7558 = vcombine.low %v7537, %v7541
      %v7559 = vcombine.low %v7545, %v7549
      %v7561 = vunpack.c.l.s4 1983009808
      %v7562 = vunpack.c.0.s8 %v7561
      %v7563 = vlaneseq
      %v7564 = vshrl.u32 %v7563, 7
      %v7565 = vsub.s32 %v7562, %v7564
      %v7566 = vrot.slane %v7558, %v7565
      %v7568 = vunpack.c.l.s4 1983009808
      %v7569 = vunpack.c.0.s8 %v7568
      %v7570 = vlaneseq
      %v7571 = vshrl.u32 %v7570, 7
      %v7572 = vsub.s32 %v7569, %v7571
      %v7573 = vrot.slane %v7559, %v7572
      %v7574 = vcombine.low %v7566, %v7573
      %v7583 = vunpack.c.l.b16 %v7550
      %v7584 = vunpack.c.l.b16 %v7551
      %v7585 = vunpack.c.l.b16 %v7552
      %v7586 = vunpack.c.l.b16 %v7553
      %v7587 = vunpack.c.l.b16 %v7554
      %v7588 = vunpack.c.l.b16 %v7555
      %v7589 = vunpack.c.l.b16 %v7556
      %v7590 = vunpack.c.l.b16 %v7557
      %v7591 = vpack.c.b16 %v7584, %v7583
      %v7592 = vpack.c.b16 %v7586, %v7585
      %v7593 = vpack.c.b16 %v7588, %v7587
      %v7594 = vpack.c.b16 %v7590, %v7589
      %v7600 = vsel %vm3190, %v7574, 0
      %7602 = vmatprep.subr.bf16.mxu0 0
      %7603 = vmatpush1.bf16.msra.mxu0 0
      %7604 = vmatprep.subr.bf16.mxu0 0
      %7605 = vmatpush1.bf16.msra.mxu0 0
      %7606 = vmatprep.subr.bf16.mxu0 0
      %7607 = vmatpush1.bf16.msra.mxu0 0
      %7608 = vmatprep.subr.bf16.mxu0 0
      %7609 = vmatpush1.bf16.msra.mxu0 0
      %7610 = vmatprep.subr.bf16.mxu0 0
      %7611 = vmatpush1.bf16.msra.mxu0 %v7594
      %7612 = vmatprep.subr.bf16.mxu0 0
      %7613 = vmatpush1.bf16.msra.mxu0 %v7593
      %7614 = vmatprep.subr.bf16.mxu0 0
      %7615 = vmatpush1.bf16.msra.mxu0 %v7592
      %7616 = vmatprep.subr.bf16.mxu0 0
      %7617 = vmatpush1.bf16.msra.mxu0 %v7591
      %7618 = vmatprep.subr.bf16.mxu0 0
      %7619 = vmatpush2.bf16.msra.mxu0 0
      %7620 = vmatprep.subr.bf16.mxu0 0
      %7621 = vmatpush2.bf16.msra.mxu0 0
      %7622 = vmatprep.subr.bf16.mxu0 0
      %7623 = vmatpush2.bf16.msra.mxu0 0
      %7624 = vmatprep.subr.bf16.mxu0 0
      %7625 = vmatpush2.bf16.msra.mxu0 0
      %7626 = vmatprep.subr.bf16.mxu0 0
      %7627 = vmatpush2.bf16.msra.mxu0 0
      %7628 = vmatprep.subr.bf16.mxu0 0
      %7629 = vmatpush2.bf16.msra.mxu0 0
      %7630 = vmatprep.subr.bf16.mxu0 0
      %7631 = vmatpush2.bf16.msra.mxu0 0
      %7632 = vmatprep.subr.bf16.mxu0 0
      %7633 = vmatpush2.bf16.msra.mxu0 0
      %7634 = vmatprep.mubr.bf16.mxu0 0
      %7635 = vmatmul.mubr.bf16.gmra.mxu0 %v7600
      %v7636 = vpop.f32.mrf.mxu0
      %v7637 = vadd.f32 0.0, %v7636
      %v7638 = vpop.f32.mrf.mxu0
      %v7639 = vpop.f32.mrf.mxu0
      %v7640 = vadd.f32 0.0, %v7639
      %v7641 = vpop.f32.mrf.mxu0
      %7642 = vdwg.mxu0
      %v7643 = vadd.f32 %v7492, %v7637
      %v7644 = vadd.f32 %v7493, %v7640
      %s7645 = scalar_lea.vmem [#allocation3], 8
      %v7646 = vld [vmem:[%s7645] sm:$0x3]
      %v7647 = vld [vmem:[%s7645 + $0x4] sm:$0x3]
      %v7648 = vld [vmem:[%s7645 + $0x8] sm:$0x3]
      %v7649 = vld [vmem:[%s7645 + $0xc] sm:$0x3]
      %v7650 = vld [vmem:[%s5 + $0xc0] sm:$0xf]
      %v7651 = vld [vmem:[%s5 + $0xc4] sm:$0xf]
      %v7652 = vld [vmem:[%s5 + $0xc8] sm:$0xf]
      %v7653 = vld [vmem:[%s5 + $0xcc] sm:$0xf]
      %v7654 = vld [vmem:[%s5 + $0xd0] sm:$0xf]
      %v7655 = vld [vmem:[%s5 + $0xd4] sm:$0xf]
      %v7656 = vld [vmem:[%s5 + $0xd8] sm:$0xf]
      %v7657 = vld [vmem:[%s5 + $0xdc] sm:$0xf]
      %v7662 = vcombine.low %v7646, %v7647
      %v7663 = vcombine.low %v7648, %v7649
      %v7665 = vunpack.c.l.s4 1983009808
      %v7666 = vunpack.c.0.s8 %v7665
      %v7667 = vlaneseq
      %v7668 = vshrl.u32 %v7667, 7
      %v7669 = vsub.s32 %v7666, %v7668
      %v7670 = vrot.slane %v7662, %v7669
      %v7672 = vunpack.c.l.s4 1983009808
      %v7673 = vunpack.c.0.s8 %v7672
      %v7674 = vlaneseq
      %v7675 = vshrl.u32 %v7674, 7
      %v7676 = vsub.s32 %v7673, %v7675
      %v7677 = vrot.slane %v7663, %v7676
      %v7678 = vcombine.low %v7670, %v7677
      %v7687 = vunpack.c.l.b16 %v7650
      %v7688 = vunpack.c.l.b16 %v7651
      %v7689 = vunpack.c.l.b16 %v7652
      %v7690 = vunpack.c.l.b16 %v7653
      %v7691 = vunpack.c.l.b16 %v7654
      %v7692 = vunpack.c.l.b16 %v7655
      %v7693 = vunpack.c.l.b16 %v7656
      %v7694 = vunpack.c.l.b16 %v7657
      %v7695 = vpack.c.b16 %v7688, %v7687
      %v7696 = vpack.c.b16 %v7690, %v7689
      %v7697 = vpack.c.b16 %v7692, %v7691
      %v7698 = vpack.c.b16 %v7694, %v7693
      %v7704 = vsel %vm3190, %v7678, 0
      %7706 = vmatprep.subr.bf16.mxu0 0
      %7707 = vmatpush1.bf16.msra.mxu0 0
      %7708 = vmatprep.subr.bf16.mxu0 0
      %7709 = vmatpush1.bf16.msra.mxu0 0
      %7710 = vmatprep.subr.bf16.mxu0 0
      %7711 = vmatpush1.bf16.msra.mxu0 0
      %7712 = vmatprep.subr.bf16.mxu0 0
      %7713 = vmatpush1.bf16.msra.mxu0 0
      %7714 = vmatprep.subr.bf16.mxu0 0
      %7715 = vmatpush1.bf16.msra.mxu0 %v7698
      %7716 = vmatprep.subr.bf16.mxu0 0
      %7717 = vmatpush1.bf16.msra.mxu0 %v7697
      %7718 = vmatprep.subr.bf16.mxu0 0
      %7719 = vmatpush1.bf16.msra.mxu0 %v7696
      %7720 = vmatprep.subr.bf16.mxu0 0
      %7721 = vmatpush1.bf16.msra.mxu0 %v7695
      %7722 = vmatprep.subr.bf16.mxu0 0
      %7723 = vmatpush2.bf16.msra.mxu0 0
      %7724 = vmatprep.subr.bf16.mxu0 0
      %7725 = vmatpush2.bf16.msra.mxu0 0
      %7726 = vmatprep.subr.bf16.mxu0 0
      %7727 = vmatpush2.bf16.msra.mxu0 0
      %7728 = vmatprep.subr.bf16.mxu0 0
      %7729 = vmatpush2.bf16.msra.mxu0 0
      %7730 = vmatprep.subr.bf16.mxu0 0
      %7731 = vmatpush2.bf16.msra.mxu0 0
      %7732 = vmatprep.subr.bf16.mxu0 0
      %7733 = vmatpush2.bf16.msra.mxu0 0
      %7734 = vmatprep.subr.bf16.mxu0 0
      %7735 = vmatpush2.bf16.msra.mxu0 0
      %7736 = vmatprep.subr.bf16.mxu0 0
      %7737 = vmatpush2.bf16.msra.mxu0 0
      %7738 = vmatprep.mubr.bf16.mxu0 0
      %7739 = vmatmul.mubr.bf16.gmra.mxu0 %v7704
      %v7740 = vpop.f32.mrf.mxu0
      %v7741 = vadd.f32 0.0, %v7740
      %v7742 = vpop.f32.mrf.mxu0
      %v7743 = vpop.f32.mrf.mxu0
      %v7744 = vadd.f32 0.0, %v7743
      %v7745 = vpop.f32.mrf.mxu0
      %7746 = vdwg.mxu0
      %v7747 = vadd.f32 %v7643, %v7741
      %v7748 = vadd.f32 %v7644, %v7744
      %v7749 = vld [vmem:[%s7645] sm:$0x7]
      %v7750 = vld [vmem:[%s7645 + $0x4] sm:$0x7]
      %v7751 = vld [vmem:[%s7645 + $0x8] sm:$0x7]
      %v7752 = vld [vmem:[%s7645 + $0xc] sm:$0x7]
      %v7758 = vunpack.c.l.s4 1983009808
      %v7759 = vunpack.c.0.s8 %v7758
      %v7760 = vlaneseq
      %v7761 = vshrl.u32 %v7760, 7
      %v7762 = vsub.s32 %v7759, %v7761
      %v7763 = vrot.slane %v7749, %v7762
      %v7764 = vcombine.high %v7763, %v7763
      %v7766 = vunpack.c.l.s4 1983009808
      %v7767 = vunpack.c.0.s8 %v7766
      %v7768 = vlaneseq
      %v7769 = vshrl.u32 %v7768, 7
      %v7770 = vsub.s32 %v7767, %v7769
      %v7771 = vrot.slane %v7750, %v7770
      %v7772 = vcombine.high %v7771, %v7771
      %v7774 = vunpack.c.l.s4 1983009808
      %v7775 = vunpack.c.0.s8 %v7774
      %v7776 = vlaneseq
      %v7777 = vshrl.u32 %v7776, 7
      %v7778 = vsub.s32 %v7775, %v7777
      %v7779 = vrot.slane %v7751, %v7778
      %v7780 = vcombine.high %v7779, %v7779
      %v7782 = vunpack.c.l.s4 1983009808
      %v7783 = vunpack.c.0.s8 %v7782
      %v7784 = vlaneseq
      %v7785 = vshrl.u32 %v7784, 7
      %v7786 = vsub.s32 %v7783, %v7785
      %v7787 = vrot.slane %v7752, %v7786
      %v7788 = vcombine.high %v7787, %v7787
      %v7790 = vshrl.u32 %v7763, 16
      %v7792 = vrot.slane %v7790, 6
      %v7793 = vshll.u32 %v7763, 16
      %v7795 = vrot.slane %v7793, 7
      %v7796 = vor.u32 %v7792, %v7795
      %v7797 = vrot.slane %v7796, 2
      %v7799 = vshll.u32 %v7764, 16
      %v7801 = vrot.slane %v7799, 7
      %v7802 = vsel %vm6803, %v7797, %v7801
      %v7804 = vshrl.u32 %v7771, 16
      %v7806 = vrot.slane %v7804, 6
      %v7807 = vshll.u32 %v7771, 16
      %v7809 = vrot.slane %v7807, 7
      %v7810 = vor.u32 %v7806, %v7809
      %v7811 = vrot.slane %v7810, 2
      %v7813 = vshll.u32 %v7772, 16
      %v7815 = vrot.slane %v7813, 7
      %v7816 = vsel %vm6803, %v7811, %v7815
      %v7818 = vshrl.u32 %v7779, 16
      %v7820 = vrot.slane %v7818, 6
      %v7821 = vshll.u32 %v7779, 16
      %v7823 = vrot.slane %v7821, 7
      %v7824 = vor.u32 %v7820, %v7823
      %v7825 = vrot.slane %v7824, 2
      %v7827 = vshll.u32 %v7780, 16
      %v7829 = vrot.slane %v7827, 7
      %v7830 = vsel %vm6803, %v7825, %v7829
      %v7832 = vshrl.u32 %v7787, 16
      %v7834 = vrot.slane %v7832, 6
      %v7835 = vshll.u32 %v7787, 16
      %v7837 = vrot.slane %v7835, 7
      %v7838 = vor.u32 %v7834, %v7837
      %v7839 = vrot.slane %v7838, 2
      %v7841 = vshll.u32 %v7788, 16
      %v7843 = vrot.slane %v7841, 7
      %v7844 = vsel %vm6803, %v7839, %v7843
      %v7845 = vld [vmem:[%s5 + $0xe0] sm:$0xf]
      %v7846 = vld [vmem:[%s5 + $0xe4] sm:$0xf]
      %v7847 = vld [vmem:[%s5 + $0xe8] sm:$0xf]
      %v7848 = vld [vmem:[%s5 + $0xec] sm:$0xf]
      %v7849 = vld [vmem:[%s5 + $0xf0] sm:$0xf]
      %v7850 = vld [vmem:[%s5 + $0xf4] sm:$0xf]
      %v7851 = vld [vmem:[%s5 + $0xf8] sm:$0xf]
      %v7852 = vld [vmem:[%s5 + $0xfc] sm:$0xf]
      %v7853 = vcombine.low %v7802, %v7816
      %v7854 = vcombine.low %v7830, %v7844
      %v7856 = vunpack.c.l.s4 1983009808
      %v7857 = vunpack.c.0.s8 %v7856
      %v7858 = vlaneseq
      %v7859 = vshrl.u32 %v7858, 7
      %v7860 = vsub.s32 %v7857, %v7859
      %v7861 = vrot.slane %v7853, %v7860
      %v7863 = vunpack.c.l.s4 1983009808
      %v7864 = vunpack.c.0.s8 %v7863
      %v7865 = vlaneseq
      %v7866 = vshrl.u32 %v7865, 7
      %v7867 = vsub.s32 %v7864, %v7866
      %v7868 = vrot.slane %v7854, %v7867
      %v7869 = vcombine.low %v7861, %v7868
      %v7878 = vunpack.c.l.b16 %v7845
      %v7879 = vunpack.c.l.b16 %v7846
      %v7880 = vunpack.c.l.b16 %v7847
      %v7881 = vunpack.c.l.b16 %v7848
      %v7882 = vunpack.c.l.b16 %v7849
      %v7883 = vunpack.c.l.b16 %v7850
      %v7884 = vunpack.c.l.b16 %v7851
      %v7885 = vunpack.c.l.b16 %v7852
      %v7886 = vpack.c.b16 %v7879, %v7878
      %v7887 = vpack.c.b16 %v7881, %v7880
      %v7888 = vpack.c.b16 %v7883, %v7882
      %v7889 = vpack.c.b16 %v7885, %v7884
      %v7895 = vsel %vm3190, %v7869, 0
      %7897 = vmatprep.subr.bf16.mxu0 0
      %7898 = vmatpush1.bf16.msra.mxu0 0
      %7899 = vmatprep.subr.bf16.mxu0 0
      %7900 = vmatpush1.bf16.msra.mxu0 0
      %7901 = vmatprep.subr.bf16.mxu0 0
      %7902 = vmatpush1.bf16.msra.mxu0 0
      %7903 = vmatprep.subr.bf16.mxu0 0
      %7904 = vmatpush1.bf16.msra.mxu0 0
      %7905 = vmatprep.subr.bf16.mxu0 0
      %7906 = vmatpush1.bf16.msra.mxu0 %v7889
      %7907 = vmatprep.subr.bf16.mxu0 0
      %7908 = vmatpush1.bf16.msra.mxu0 %v7888
      %7909 = vmatprep.subr.bf16.mxu0 0
      %7910 = vmatpush1.bf16.msra.mxu0 %v7887
      %7911 = vmatprep.subr.bf16.mxu0 0
      %7912 = vmatpush1.bf16.msra.mxu0 %v7886
      %7913 = vmatprep.subr.bf16.mxu0 0
      %7914 = vmatpush2.bf16.msra.mxu0 0
      %7915 = vmatprep.subr.bf16.mxu0 0
      %7916 = vmatpush2.bf16.msra.mxu0 0
      %7917 = vmatprep.subr.bf16.mxu0 0
      %7918 = vmatpush2.bf16.msra.mxu0 0
      %7919 = vmatprep.subr.bf16.mxu0 0
      %7920 = vmatpush2.bf16.msra.mxu0 0
      %7921 = vmatprep.subr.bf16.mxu0 0
      %7922 = vmatpush2.bf16.msra.mxu0 0
      %7923 = vmatprep.subr.bf16.mxu0 0
      %7924 = vmatpush2.bf16.msra.mxu0 0
      %7925 = vmatprep.subr.bf16.mxu0 0
      %7926 = vmatpush2.bf16.msra.mxu0 0
      %7927 = vmatprep.subr.bf16.mxu0 0
      %7928 = vmatpush2.bf16.msra.mxu0 0
      %7929 = vmatprep.mubr.bf16.mxu0 0
      %7930 = vmatmul.mubr.bf16.gmra.mxu0 %v7895
      %v7931 = vpop.f32.mrf.mxu0
      %v7932 = vadd.f32 0.0, %v7931
      %v7933 = vpop.f32.mrf.mxu0
      %v7934 = vpop.f32.mrf.mxu0
      %v7935 = vadd.f32 0.0, %v7934
      %v7936 = vpop.f32.mrf.mxu0
      %7937 = vdwg.mxu0
      %v7938 = vadd.f32 %v7747, %v7932
      %v7939 = vadd.f32 %v7748, %v7935
      %v7940 = vld [vmem:[%s7645] sm:$0x6]
      %v7941 = vld [vmem:[%s7645 + $0x4] sm:$0x6]
      %v7942 = vld [vmem:[%s7645 + $0x8] sm:$0x6]
      %v7943 = vld [vmem:[%s7645 + $0xc] sm:$0x6]
      %v7949 = vunpack.c.l.s4 1983009808
      %v7950 = vunpack.c.0.s8 %v7949
      %v7951 = vlaneseq
      %v7952 = vshrl.u32 %v7951, 7
      %v7953 = vsub.s32 %v7950, %v7952
      %v7954 = vrot.slane %v7940, %v7953
      %v7955 = vcombine.high %v7954, %v7954
      %v7957 = vunpack.c.l.s4 1983009808
      %v7958 = vunpack.c.0.s8 %v7957
      %v7959 = vlaneseq
      %v7960 = vshrl.u32 %v7959, 7
      %v7961 = vsub.s32 %v7958, %v7960
      %v7962 = vrot.slane %v7941, %v7961
      %v7963 = vcombine.high %v7962, %v7962
      %v7965 = vunpack.c.l.s4 1983009808
      %v7966 = vunpack.c.0.s8 %v7965
      %v7967 = vlaneseq
      %v7968 = vshrl.u32 %v7967, 7
      %v7969 = vsub.s32 %v7966, %v7968
      %v7970 = vrot.slane %v7942, %v7969
      %v7971 = vcombine.high %v7970, %v7970
      %v7973 = vunpack.c.l.s4 1983009808
      %v7974 = vunpack.c.0.s8 %v7973
      %v7975 = vlaneseq
      %v7976 = vshrl.u32 %v7975, 7
      %v7977 = vsub.s32 %v7974, %v7976
      %v7978 = vrot.slane %v7943, %v7977
      %v7979 = vcombine.high %v7978, %v7978
      %v7980 = vrot.slane %v7954, 7
      %v7981 = vrot.slane %v7980, 2
      %v7982 = vrot.slane %v7955, 7
      %v7983 = vsel %vm7088, %v7981, %v7982
      %v7984 = vrot.slane %v7962, 7
      %v7985 = vrot.slane %v7984, 2
      %v7986 = vrot.slane %v7963, 7
      %v7987 = vsel %vm7088, %v7985, %v7986
      %v7988 = vrot.slane %v7970, 7
      %v7989 = vrot.slane %v7988, 2
      %v7990 = vrot.slane %v7971, 7
      %v7991 = vsel %vm7088, %v7989, %v7990
      %v7992 = vrot.slane %v7978, 7
      %v7993 = vrot.slane %v7992, 2
      %v7994 = vrot.slane %v7979, 7
      %v7995 = vsel %vm7088, %v7993, %v7994
      %v7996 = vld [vmem:[%s5 + $0x100] sm:$0xf]
      %v7997 = vld [vmem:[%s5 + $0x104] sm:$0xf]
      %v7998 = vld [vmem:[%s5 + $0x108] sm:$0xf]
      %v7999 = vld [vmem:[%s5 + $0x10c] sm:$0xf]
      %v8000 = vld [vmem:[%s5 + $0x110] sm:$0xf]
      %v8001 = vld [vmem:[%s5 + $0x114] sm:$0xf]
      %v8002 = vld [vmem:[%s5 + $0x118] sm:$0xf]
      %v8003 = vld [vmem:[%s5 + $0x11c] sm:$0xf]
      %v8004 = vcombine.low %v7983, %v7987
      %v8005 = vcombine.low %v7991, %v7995
      %v8007 = vunpack.c.l.s4 1983009808
      %v8008 = vunpack.c.0.s8 %v8007
      %v8009 = vlaneseq
      %v8010 = vshrl.u32 %v8009, 7
      %v8011 = vsub.s32 %v8008, %v8010
      %v8012 = vrot.slane %v8004, %v8011
      %v8014 = vunpack.c.l.s4 1983009808
      %v8015 = vunpack.c.0.s8 %v8014
      %v8016 = vlaneseq
      %v8017 = vshrl.u32 %v8016, 7
      %v8018 = vsub.s32 %v8015, %v8017
      %v8019 = vrot.slane %v8005, %v8018
      %v8020 = vcombine.low %v8012, %v8019
      %v8029 = vunpack.c.l.b16 %v7996
      %v8030 = vunpack.c.l.b16 %v7997
      %v8031 = vunpack.c.l.b16 %v7998
      %v8032 = vunpack.c.l.b16 %v7999
      %v8033 = vunpack.c.l.b16 %v8000
      %v8034 = vunpack.c.l.b16 %v8001
      %v8035 = vunpack.c.l.b16 %v8002
      %v8036 = vunpack.c.l.b16 %v8003
      %v8037 = vpack.c.b16 %v8030, %v8029
      %v8038 = vpack.c.b16 %v8032, %v8031
      %v8039 = vpack.c.b16 %v8034, %v8033
      %v8040 = vpack.c.b16 %v8036, %v8035
      %v8046 = vsel %vm3190, %v8020, 0
      %8048 = vmatprep.subr.bf16.mxu0 0
      %8049 = vmatpush1.bf16.msra.mxu0 0
      %8050 = vmatprep.subr.bf16.mxu0 0
      %8051 = vmatpush1.bf16.msra.mxu0 0
      %8052 = vmatprep.subr.bf16.mxu0 0
      %8053 = vmatpush1.bf16.msra.mxu0 0
      %8054 = vmatprep.subr.bf16.mxu0 0
      %8055 = vmatpush1.bf16.msra.mxu0 0
      %8056 = vmatprep.subr.bf16.mxu0 0
      %8057 = vmatpush1.bf16.msra.mxu0 %v8040
      %8058 = vmatprep.subr.bf16.mxu0 0
      %8059 = vmatpush1.bf16.msra.mxu0 %v8039
      %8060 = vmatprep.subr.bf16.mxu0 0
      %8061 = vmatpush1.bf16.msra.mxu0 %v8038
      %8062 = vmatprep.subr.bf16.mxu0 0
      %8063 = vmatpush1.bf16.msra.mxu0 %v8037
      %8064 = vmatprep.subr.bf16.mxu0 0
      %8065 = vmatpush2.bf16.msra.mxu0 0
      %8066 = vmatprep.subr.bf16.mxu0 0
      %8067 = vmatpush2.bf16.msra.mxu0 0
      %8068 = vmatprep.subr.bf16.mxu0 0
      %8069 = vmatpush2.bf16.msra.mxu0 0
      %8070 = vmatprep.subr.bf16.mxu0 0
      %8071 = vmatpush2.bf16.msra.mxu0 0
      %8072 = vmatprep.subr.bf16.mxu0 0
      %8073 = vmatpush2.bf16.msra.mxu0 0
      %8074 = vmatprep.subr.bf16.mxu0 0
      %8075 = vmatpush2.bf16.msra.mxu0 0
      %8076 = vmatprep.subr.bf16.mxu0 0
      %8077 = vmatpush2.bf16.msra.mxu0 0
      %8078 = vmatprep.subr.bf16.mxu0 0
      %8079 = vmatpush2.bf16.msra.mxu0 0
      %8080 = vmatprep.mubr.bf16.mxu0 0
      %8081 = vmatmul.mubr.bf16.gmra.mxu0 %v8046
      %v8082 = vpop.f32.mrf.mxu0
      %v8083 = vadd.f32 0.0, %v8082
      %v8084 = vpop.f32.mrf.mxu0
      %v8085 = vpop.f32.mrf.mxu0
      %v8086 = vadd.f32 0.0, %v8085
      %v8087 = vpop.f32.mrf.mxu0
      %8088 = vdwg.mxu0
      %v8089 = vadd.f32 %v7938, %v8083
      %v8090 = vadd.f32 %v7939, %v8086
      %v8091 = vld [vmem:[%s6] sm:$0x1]
      %v8093 = vlaneseq
      %v8094 = vshrl.u32 %v8093, 7
      %v8095 = vsub.s32 0, %v8094
      %v8096 = vrot.slane %v8091, %v8095
      %v8098 = vadd.f32 %v8089, %v8096
      %v8099 = vadd.f32 %v8090, %v8096
      %v8100 = vmax.f32 %v8098, 0.0
      %v8101 = vmax.f32 %v8099, 0.0
      %v8102 = vpack.c.bf16 %v8101, %v8100
      %v8104 = vcombine.high %v8102, %v8102
      %v8106 = vunpack.c.l.s4 1966171168
      %v8107 = vunpack.c.0.s8 %v8106
      %v8108 = vlaneseq
      %v8109 = vshrl.u32 %v8108, 7
      %v8110 = vsub.s32 %v8107, %v8109
      %v8111 = vrot.slane %v8102, %v8110
      %v8113 = vunpack.c.l.s4 1966171168
      %v8114 = vunpack.c.0.s8 %v8113
      %v8115 = vlaneseq
      %v8116 = vshrl.u32 %v8115, 7
      %v8117 = vsub.s32 %v8114, %v8116
      %v8118 = vrot.slane %v8104, %v8117
      %v8119 = vcombine.high %v8111, %v8111
      %v8120 = vcombine.high %v8118, %v8118
      %v8122 = vunpack.c.l.s4 1966171168
      %v8123 = vunpack.c.0.s8 %v8122
      %v8124 = vlaneseq
      %v8125 = vshrl.u32 %v8124, 7
      %v8126 = vsub.s32 %v8123, %v8125
      %v8127 = vrot.slane %v8111, %v8126
      %v8129 = vunpack.c.l.s4 1966171168
      %v8130 = vunpack.c.0.s8 %v8129
      %v8131 = vlaneseq
      %v8132 = vshrl.u32 %v8131, 7
      %v8133 = vsub.s32 %v8130, %v8132
      %v8134 = vrot.slane %v8118, %v8133
      %v8136 = vunpack.c.l.s4 1966171168
      %v8137 = vunpack.c.0.s8 %v8136
      %v8138 = vlaneseq
      %v8139 = vshrl.u32 %v8138, 7
      %v8140 = vsub.s32 %v8137, %v8139
      %v8141 = vrot.slane %v8119, %v8140
      %v8143 = vunpack.c.l.s4 1966171168
      %v8144 = vunpack.c.0.s8 %v8143
      %v8145 = vlaneseq
      %v8146 = vshrl.u32 %v8145, 7
      %v8147 = vsub.s32 %v8144, %v8146
      %v8148 = vrot.slane %v8120, %v8147
      %v8149 = vcombine.high %v8127, %v8127
      %v8150 = vcombine.high %v8134, %v8134
      %v8151 = vcombine.high %v8141, %v8141
      %v8152 = vcombine.high %v8148, %v8148
      %v8154 = vsel %vm1524, %v8127, 4286644096
      %v8156 = vunpack.i.l.bf16 %v8154
      %v8157 = vunpack.i.h.bf16 %v8154
      %v8158 = vmax.f32 %v8156, %v8157
      %v8159 = vrot.slane %v8158, 4
      %v8160 = vmax.f32 %v8158, %v8159
      %v8161 = vrot.slane %v8160, 2
      %v8162 = vmax.f32 %v8160, %v8161
      %v8163 = vrot.slane %v8162, 1
      %v8164 = vmax.f32 %v8162, %v8163
      %v8165 = vpack.i.bf16 %v8164, %v8164
      %v8167 = vsel %vm1524, %v8141, 4286644096
      %v8169 = vunpack.i.l.bf16 %v8167
      %v8170 = vunpack.i.h.bf16 %v8167
      %v8171 = vmax.f32 %v8169, %v8170
      %v8172 = vrot.slane %v8171, 4
      %v8173 = vmax.f32 %v8171, %v8172
      %v8174 = vrot.slane %v8173, 2
      %v8175 = vmax.f32 %v8173, %v8174
      %v8176 = vrot.slane %v8175, 1
      %v8177 = vmax.f32 %v8175, %v8176
      %v8178 = vpack.i.bf16 %v8177, %v8177
      %v8180 = vsel %vm1524, %v8149, 4286644096
      %v8182 = vunpack.i.l.bf16 %v8180
      %v8183 = vunpack.i.h.bf16 %v8180
      %v8184 = vmax.f32 %v8182, %v8183
      %v8185 = vrot.slane %v8184, 4
      %v8186 = vmax.f32 %v8184, %v8185
      %v8187 = vrot.slane %v8186, 2
      %v8188 = vmax.f32 %v8186, %v8187
      %v8189 = vrot.slane %v8188, 1
      %v8190 = vmax.f32 %v8188, %v8189
      %v8191 = vpack.i.bf16 %v8190, %v8190
      %v8193 = vsel %vm1524, %v8151, 4286644096
      %v8195 = vunpack.i.l.bf16 %v8193
      %v8196 = vunpack.i.h.bf16 %v8193
      %v8197 = vmax.f32 %v8195, %v8196
      %v8198 = vrot.slane %v8197, 4
      %v8199 = vmax.f32 %v8197, %v8198
      %v8200 = vrot.slane %v8199, 2
      %v8201 = vmax.f32 %v8199, %v8200
      %v8202 = vrot.slane %v8201, 1
      %v8203 = vmax.f32 %v8201, %v8202
      %v8204 = vpack.i.bf16 %v8203, %v8203
      %v8206 = vsel %vm1524, %v8134, 4286644096
      %v8208 = vunpack.i.l.bf16 %v8206
      %v8209 = vunpack.i.h.bf16 %v8206
      %v8210 = vmax.f32 %v8208, %v8209
      %v8211 = vrot.slane %v8210, 4
      %v8212 = vmax.f32 %v8210, %v8211
      %v8213 = vrot.slane %v8212, 2
      %v8214 = vmax.f32 %v8212, %v8213
      %v8215 = vrot.slane %v8214, 1
      %v8216 = vmax.f32 %v8214, %v8215
      %v8217 = vpack.i.bf16 %v8216, %v8216
      %v8219 = vsel %vm1524, %v8148, 4286644096
      %v8221 = vunpack.i.l.bf16 %v8219
      %v8222 = vunpack.i.h.bf16 %v8219
      %v8223 = vmax.f32 %v8221, %v8222
      %v8224 = vrot.slane %v8223, 4
      %v8225 = vmax.f32 %v8223, %v8224
      %v8226 = vrot.slane %v8225, 2
      %v8227 = vmax.f32 %v8225, %v8226
      %v8228 = vrot.slane %v8227, 1
      %v8229 = vmax.f32 %v8227, %v8228
      %v8230 = vpack.i.bf16 %v8229, %v8229
      %v8232 = vsel %vm1524, %v8150, 4286644096
      %v8234 = vunpack.i.l.bf16 %v8232
      %v8235 = vunpack.i.h.bf16 %v8232
      %v8236 = vmax.f32 %v8234, %v8235
      %v8237 = vrot.slane %v8236, 4
      %v8238 = vmax.f32 %v8236, %v8237
      %v8239 = vrot.slane %v8238, 2
      %v8240 = vmax.f32 %v8238, %v8239
      %v8241 = vrot.slane %v8240, 1
      %v8242 = vmax.f32 %v8240, %v8241
      %v8243 = vpack.i.bf16 %v8242, %v8242
      %v8245 = vsel %vm1524, %v8152, 4286644096
      %v8247 = vunpack.i.l.bf16 %v8245
      %v8248 = vunpack.i.h.bf16 %v8245
      %v8249 = vmax.f32 %v8247, %v8248
      %v8250 = vrot.slane %v8249, 4
      %v8251 = vmax.f32 %v8249, %v8250
      %v8252 = vrot.slane %v8251, 2
      %v8253 = vmax.f32 %v8251, %v8252
      %v8254 = vrot.slane %v8253, 1
      %v8255 = vmax.f32 %v8253, %v8254
      %v8256 = vpack.i.bf16 %v8255, %v8255
      %v8258 = vsel %vm3190, %v8165, 4286644096
      %v8261 = vsel %vm3190, %v8191, 4286644096
      %v8263 = vmax.bf16 %v8258, %v8261
      %v8265 = vsel %vm3190, %v8178, 4286644096
      %v8268 = vsel %vm3190, %v8204, 4286644096
      %v8270 = vmax.bf16 %v8265, %v8268
      %v8272 = vsel %vm3190, %v8217, 4286644096
      %v8275 = vsel %vm3190, %v8243, 4286644096
      %v8277 = vmax.bf16 %v8272, %v8275
      %v8279 = vsel %vm3190, %v8230, 4286644096
      %v8282 = vsel %vm3190, %v8256, 4286644096
      %v8284 = vmax.bf16 %v8279, %v8282
      %vm8285 = vcmask 517120
      %8286 = vst.msk [vmem:[#allocation4] sm:$0x3] %vm8285, 0
      %s8287 = scalar_lea.vmem [#allocation4], 6
      %8288 = vst.msk [vmem:[%s8287] sm:$0x3] %vm8285, 0
      %v8289 = vld [vmem:[#allocation4] sm:$0x1]
      %v8290 = vsel %vm3647, 0, %v8289
      %8291 = vst [vmem:[#allocation4] sm:$0x1] %v8290
      %v8292 = vld [vmem:[#allocation4 + $0x2] sm:$0x1]
      %v8293 = vsel %vm3647, 0, %v8292
      %8294 = vst [vmem:[#allocation4 + $0x2] sm:$0x1] %v8293
      %v8295 = vld [vmem:[#allocation4 + $0x4] sm:$0x1]
      %v8296 = vsel %vm3647, 0, %v8295
      %8297 = vst [vmem:[#allocation4 + $0x4] sm:$0x1] %v8296
      %v8298 = vld [vmem:[#allocation4 + $0x6] sm:$0x1]
      %v8299 = vsel %vm3647, 0, %v8298
      %8300 = vst [vmem:[#allocation4 + $0x6] sm:$0x1] %v8299
      %vm8301 = vcmask 517121
      %vm8302 = vsmask.f32 7942
      %vm8303 = vmand %vm8301, %vm8302
      %v8304 = vld [vmem:[#allocation4] sm:$0x2]
      %v8305 = vsel %vm8303, 0, %v8304
      %8306 = vst [vmem:[#allocation4] sm:$0x2] %v8305
      %v8307 = vld [vmem:[#allocation4 + $0x2] sm:$0x2]
      %v8308 = vsel %vm8303, 0, %v8307
      %8309 = vst [vmem:[#allocation4 + $0x2] sm:$0x2] %v8308
      %v8310 = vld [vmem:[#allocation4 + $0x4] sm:$0x2]
      %v8311 = vsel %vm8303, 0, %v8310
      %8312 = vst [vmem:[#allocation4 + $0x4] sm:$0x2] %v8311
      %v8313 = vld [vmem:[#allocation4 + $0x6] sm:$0x2]
      %v8314 = vsel %vm8303, 0, %v8313
      %8315 = vst [vmem:[#allocation4 + $0x6] sm:$0x2] %v8314
      %v8321 = vunpack.c.l.s4 1983009808
      %v8322 = vunpack.c.0.s8 %v8321
      %v8323 = vlaneseq
      %v8324 = vshrl.u32 %v8323, 7
      %v8325 = vsub.s32 %v8322, %v8324
      %v8326 = vrot.slane %v8263, %v8325
      %v8328 = vunpack.c.l.s4 1983009808
      %v8329 = vunpack.c.0.s8 %v8328
      %v8330 = vlaneseq
      %v8331 = vshrl.u32 %v8330, 7
      %v8332 = vsub.s32 %v8329, %v8331
      %v8333 = vrot.slane %v8270, %v8332
      %v8335 = vunpack.c.l.s4 1983009808
      %v8336 = vunpack.c.0.s8 %v8335
      %v8337 = vlaneseq
      %v8338 = vshrl.u32 %v8337, 7
      %v8339 = vsub.s32 %v8336, %v8338
      %v8340 = vrot.slane %v8277, %v8339
      %v8342 = vunpack.c.l.s4 1983009808
      %v8343 = vunpack.c.0.s8 %v8342
      %v8344 = vlaneseq
      %v8345 = vshrl.u32 %v8344, 7
      %v8346 = vsub.s32 %v8343, %v8345
      %v8347 = vrot.slane %v8284, %v8346
      %v8349 = vunpack.c.l.s4 1983009808
      %v8350 = vunpack.c.0.s8 %v8349
      %v8351 = vlaneseq
      %v8352 = vshrl.u32 %v8351, 7
      %v8353 = vsub.s32 %v8350, %v8352
      %v8354 = vrot.slane %v8326, %v8353
      %v8356 = vunpack.c.l.s4 1983009808
      %v8357 = vunpack.c.0.s8 %v8356
      %v8358 = vlaneseq
      %v8359 = vshrl.u32 %v8358, 7
      %v8360 = vsub.s32 %v8357, %v8359
      %v8361 = vrot.slane %v8333, %v8360
      %v8363 = vunpack.c.l.s4 1983009808
      %v8364 = vunpack.c.0.s8 %v8363
      %v8365 = vlaneseq
      %v8366 = vshrl.u32 %v8365, 7
      %v8367 = vsub.s32 %v8364, %v8366
      %v8368 = vrot.slane %v8340, %v8367
      %v8370 = vunpack.c.l.s4 1983009808
      %v8371 = vunpack.c.0.s8 %v8370
      %v8372 = vlaneseq
      %v8373 = vshrl.u32 %v8372, 7
      %v8374 = vsub.s32 %v8371, %v8373
      %v8375 = vrot.slane %v8347, %v8374
      %v8376 = vunpack.c.l.b16 %v8354
      %v8377 = vunpack.c.l.b16 %v8361
      %v8378 = vunpack.c.l.b16 %v8368
      %v8379 = vunpack.c.l.b16 %v8375
      %v8380 = vrot.slane %v8376, 7
      %v8381 = vrot.slane %v8377, 6
      %v8382 = vsel %vm3966, %v8381, %v8380
      %v8383 = vrot.slane %v8378, 7
      %v8384 = vrot.slane %v8379, 6
      %v8385 = vsel %vm3966, %v8384, %v8383
      %v8386 = vpack.c.b16 %v8382, %v8382
      %v8387 = vpack.c.b16 %v8385, %v8385
      %v8389 = vunpack.c.l.s4 1983009808
      %v8390 = vunpack.c.0.s8 %v8389
      %v8391 = vlaneseq
      %v8392 = vshrl.u32 %v8391, 7
      %v8393 = vsub.s32 %v8390, %v8392
      %v8394 = vrot.slane %v8386, %v8393
      %v8396 = vunpack.c.l.s4 1983009808
      %v8397 = vunpack.c.0.s8 %v8396
      %v8398 = vlaneseq
      %v8399 = vshrl.u32 %v8398, 7
      %v8400 = vsub.s32 %v8397, %v8399
      %v8401 = vrot.slane %v8387, %v8400
      %s8404 = scalar_lea.vmem [#allocation4], 2
      %vm8405 = vcmask 517120
      %vm8406 = vsmask.f32 1282
      %vm8407 = vmand %vm8405, %vm8406
      %v8408 = vld [vmem:[%s8404] sm:$0x3]
      %v8409 = vsel %vm8407, %v8394, %v8408
      %8410 = vst [vmem:[%s8404] sm:$0x3] %v8409
      %v8411 = vld [vmem:[%s8404 + $0x2] sm:$0x3]
      %v8412 = vsel %vm8407, %v8401, %v8411
      %8413 = vst [vmem:[%s8404 + $0x2] sm:$0x3] %v8412
      %v8414 = vld [vmem:[#allocation4] sm:$0x1]
      %v8415 = vld [vmem:[#allocation4 + $0x2] sm:$0x1]
      %v8416 = vld [vmem:[%s7] sm:$0xf]
      %v8417 = vld [vmem:[%s7 + $0x4] sm:$0xf]
      %v8418 = vld [vmem:[%s7 + $0x8] sm:$0xf]
      %v8419 = vld [vmem:[%s7 + $0xc] sm:$0xf]
      %v8420 = vld [vmem:[%s7 + $0x10] sm:$0xf]
      %v8421 = vld [vmem:[%s7 + $0x14] sm:$0xf]
      %v8422 = vld [vmem:[%s7 + $0x18] sm:$0xf]
      %v8423 = vld [vmem:[%s7 + $0x1c] sm:$0xf]
      %v8424 = vld [vmem:[#allocation4] sm:$0x3]
      %v8425 = vld [vmem:[#allocation4 + $0x2] sm:$0x3]
      %v8429 = vunpack.c.l.s4 1966171168
      %v8430 = vunpack.c.0.s8 %v8429
      %v8431 = vlaneseq
      %v8432 = vshrl.u32 %v8431, 7
      %v8433 = vsub.s32 %v8430, %v8432
      %v8434 = vrot.slane %v8424, %v8433
      %v8435 = vcombine.high %v8434, %v8434
      %v8437 = vunpack.c.l.s4 1966171168
      %v8438 = vunpack.c.0.s8 %v8437
      %v8439 = vlaneseq
      %v8440 = vshrl.u32 %v8439, 7
      %v8441 = vsub.s32 %v8438, %v8440
      %v8442 = vrot.slane %v8425, %v8441
      %v8443 = vcombine.high %v8442, %v8442
      %vm8444 = vsmask.f32 1284
      %vm8445 = vmor %vm3646, %vm8444
      %vm8446 = vsmask.f32 2312
      %vm8447 = vmor %vm8445, %vm8446
      %vm8448 = vsmask.f32 3340
      %vm8449 = vmor %vm8447, %vm8448
      %vm8450 = vsmask.f32 4368
      %vm8451 = vmor %vm8449, %vm8450
      %vm8452 = vsmask.f32 5396
      %vm8453 = vmor %vm8451, %vm8452
      %vm8454 = vsmask.f32 6424
      %vm8455 = vmor %vm8453, %vm8454
      %vm8456 = vsmask.f32 7452
      %vm8457 = vmor %vm8455, %vm8456
      %v8459 = vshrl.u32 %v8434, 16
      %v8461 = vrot.slane %v8459, 7
      %v8462 = vrot.slane %v8461, 1
      %v8464 = vshll.u32 %v8435, 16
      %v8466 = vsel %vm8457, %v8462, %v8464
      %v8468 = vshrl.u32 %v8442, 16
      %v8470 = vrot.slane %v8468, 7
      %v8471 = vrot.slane %v8470, 1
      %v8473 = vshll.u32 %v8443, 16
      %v8475 = vsel %vm8457, %v8471, %v8473
      %v8476 = vld [vmem:[%s7 + $0x20] sm:$0xf]
      %v8477 = vld [vmem:[%s7 + $0x24] sm:$0xf]
      %v8478 = vld [vmem:[%s7 + $0x28] sm:$0xf]
      %v8479 = vld [vmem:[%s7 + $0x2c] sm:$0xf]
      %v8480 = vld [vmem:[%s7 + $0x30] sm:$0xf]
      %v8481 = vld [vmem:[%s7 + $0x34] sm:$0xf]
      %v8482 = vld [vmem:[%s7 + $0x38] sm:$0xf]
      %v8483 = vld [vmem:[%s7 + $0x3c] sm:$0xf]
      %v8484 = vcombine.low %v8466, %v8475
      %v8486 = vunpack.c.l.s4 1966171168
      %v8487 = vunpack.c.0.s8 %v8486
      %v8488 = vlaneseq
      %v8489 = vshrl.u32 %v8488, 7
      %v8490 = vsub.s32 %v8487, %v8489
      %v8491 = vrot.slane %v8484, %v8490
      %v8493 = vunpack.c.l.s4 1966171168
      %v8494 = vunpack.c.0.s8 %v8493
      %v8495 = vlaneseq
      %v8496 = vshrl.u32 %v8495, 7
      %v8497 = vsub.s32 %v8494, %v8496
      %v8498 = vrot.slane %v8491, %v8497
      %v8507 = vunpack.c.l.b16 %v8476
      %v8508 = vunpack.c.l.b16 %v8477
      %v8509 = vunpack.c.l.b16 %v8478
      %v8510 = vunpack.c.l.b16 %v8479
      %v8511 = vunpack.c.l.b16 %v8480
      %v8512 = vunpack.c.l.b16 %v8481
      %v8513 = vunpack.c.l.b16 %v8482
      %v8514 = vunpack.c.l.b16 %v8483
      %v8515 = vpack.c.b16 %v8508, %v8507
      %v8516 = vpack.c.b16 %v8510, %v8509
      %v8517 = vpack.c.b16 %v8512, %v8511
      %v8518 = vpack.c.b16 %v8514, %v8513
      %v8524 = vsel %vm3190, %v8498, 0
      %8526 = vmatprep.subr.bf16.mxu0 0
      %8527 = vmatpush1.bf16.msra.mxu0 0
      %8528 = vmatprep.subr.bf16.mxu0 0
      %8529 = vmatpush1.bf16.msra.mxu0 0
      %8530 = vmatprep.subr.bf16.mxu0 0
      %8531 = vmatpush1.bf16.msra.mxu0 0
      %8532 = vmatprep.subr.bf16.mxu0 0
      %8533 = vmatpush1.bf16.msra.mxu0 0
      %8534 = vmatprep.subr.bf16.mxu0 0
      %8535 = vmatpush1.bf16.msra.mxu0 %v8518
      %8536 = vmatprep.subr.bf16.mxu0 0
      %8537 = vmatpush1.bf16.msra.mxu0 %v8517
      %8538 = vmatprep.subr.bf16.mxu0 0
      %8539 = vmatpush1.bf16.msra.mxu0 %v8516
      %8540 = vmatprep.subr.bf16.mxu0 0
      %8541 = vmatpush1.bf16.msra.mxu0 %v8515
      %8542 = vmatprep.subr.bf16.mxu0 0
      %8543 = vmatpush2.bf16.msra.mxu0 0
      %8544 = vmatprep.subr.bf16.mxu0 0
      %8545 = vmatpush2.bf16.msra.mxu0 0
      %8546 = vmatprep.subr.bf16.mxu0 0
      %8547 = vmatpush2.bf16.msra.mxu0 0
      %8548 = vmatprep.subr.bf16.mxu0 0
      %8549 = vmatpush2.bf16.msra.mxu0 0
      %8550 = vmatprep.subr.bf16.mxu0 0
      %8551 = vmatpush2.bf16.msra.mxu0 0
      %8552 = vmatprep.subr.bf16.mxu0 0
      %8553 = vmatpush2.bf16.msra.mxu0 0
      %8554 = vmatprep.subr.bf16.mxu0 0
      %8555 = vmatpush2.bf16.msra.mxu0 0
      %8556 = vmatprep.subr.bf16.mxu0 0
      %8557 = vmatpush2.bf16.msra.mxu0 0
      %8558 = vmatprep.mubr.bf16.mxu0 0
      %8559 = vmatmul.mubr.bf16.gmra.mxu0 %v8524
      %v8560 = vpop.f32.mrf.mxu0
      %v8561 = vadd.f32 0.0, %v8560
      %v8562 = vpop.f32.mrf.mxu0
      %v8563 = vpop.f32.mrf.mxu0
      %v8564 = vpop.f32.mrf.mxu0
      %8565 = vdwg.mxu0
      %v8568 = vcombine.low %v8414, %v8415
      %v8570 = vunpack.c.l.s4 1966171168
      %v8571 = vunpack.c.0.s8 %v8570
      %v8572 = vlaneseq
      %v8573 = vshrl.u32 %v8572, 7
      %v8574 = vsub.s32 %v8571, %v8573
      %v8575 = vrot.slane %v8568, %v8574
      %v8577 = vunpack.c.l.s4 1966171168
      %v8578 = vunpack.c.0.s8 %v8577
      %v8579 = vlaneseq
      %v8580 = vshrl.u32 %v8579, 7
      %v8581 = vsub.s32 %v8578, %v8580
      %v8582 = vrot.slane %v8575, %v8581
      %v8591 = vunpack.c.l.b16 %v8416
      %v8592 = vunpack.c.l.b16 %v8417
      %v8593 = vunpack.c.l.b16 %v8418
      %v8594 = vunpack.c.l.b16 %v8419
      %v8595 = vunpack.c.l.b16 %v8420
      %v8596 = vunpack.c.l.b16 %v8421
      %v8597 = vunpack.c.l.b16 %v8422
      %v8598 = vunpack.c.l.b16 %v8423
      %v8599 = vpack.c.b16 %v8592, %v8591
      %v8600 = vpack.c.b16 %v8594, %v8593
      %v8601 = vpack.c.b16 %v8596, %v8595
      %v8602 = vpack.c.b16 %v8598, %v8597
      %v8608 = vsel %vm3190, %v8582, 0
      %8610 = vmatprep.subr.bf16.mxu0 0
      %8611 = vmatpush1.bf16.msra.mxu0 0
      %8612 = vmatprep.subr.bf16.mxu0 0
      %8613 = vmatpush1.bf16.msra.mxu0 0
      %8614 = vmatprep.subr.bf16.mxu0 0
      %8615 = vmatpush1.bf16.msra.mxu0 0
      %8616 = vmatprep.subr.bf16.mxu0 0
      %8617 = vmatpush1.bf16.msra.mxu0 0
      %8618 = vmatprep.subr.bf16.mxu0 0
      %8619 = vmatpush1.bf16.msra.mxu0 %v8602
      %8620 = vmatprep.subr.bf16.mxu0 0
      %8621 = vmatpush1.bf16.msra.mxu0 %v8601
      %8622 = vmatprep.subr.bf16.mxu0 0
      %8623 = vmatpush1.bf16.msra.mxu0 %v8600
      %8624 = vmatprep.subr.bf16.mxu0 0
      %8625 = vmatpush1.bf16.msra.mxu0 %v8599
      %8626 = vmatprep.subr.bf16.mxu0 0
      %8627 = vmatpush2.bf16.msra.mxu0 0
      %8628 = vmatprep.subr.bf16.mxu0 0
      %8629 = vmatpush2.bf16.msra.mxu0 0
      %8630 = vmatprep.subr.bf16.mxu0 0
      %8631 = vmatpush2.bf16.msra.mxu0 0
      %8632 = vmatprep.subr.bf16.mxu0 0
      %8633 = vmatpush2.bf16.msra.mxu0 0
      %8634 = vmatprep.subr.bf16.mxu0 0
      %8635 = vmatpush2.bf16.msra.mxu0 0
      %8636 = vmatprep.subr.bf16.mxu0 0
      %8637 = vmatpush2.bf16.msra.mxu0 0
      %8638 = vmatprep.subr.bf16.mxu0 0
      %8639 = vmatpush2.bf16.msra.mxu0 0
      %8640 = vmatprep.subr.bf16.mxu0 0
      %8641 = vmatpush2.bf16.msra.mxu0 0
      %8642 = vmatprep.mubr.bf16.mxu0 0
      %8643 = vmatmul.mubr.bf16.gmra.mxu0 %v8608
      %v8644 = vpop.f32.mrf.mxu0
      %v8645 = vadd.f32 %v8561, %v8644
      %v8646 = vpop.f32.mrf.mxu0
      %v8647 = vpop.f32.mrf.mxu0
      %v8648 = vpop.f32.mrf.mxu0
      %8649 = vdwg.mxu0
      %v8650 = vld [vmem:[#allocation4] sm:$0x2]
      %v8651 = vld [vmem:[#allocation4 + $0x2] sm:$0x2]
      %v8655 = vunpack.c.l.s4 1966171168
      %v8656 = vunpack.c.0.s8 %v8655
      %v8657 = vlaneseq
      %v8658 = vshrl.u32 %v8657, 7
      %v8659 = vsub.s32 %v8656, %v8658
      %v8660 = vrot.slane %v8650, %v8659
      %v8661 = vcombine.high %v8660, %v8660
      %v8663 = vunpack.c.l.s4 1966171168
      %v8664 = vunpack.c.0.s8 %v8663
      %v8665 = vlaneseq
      %v8666 = vshrl.u32 %v8665, 7
      %v8667 = vsub.s32 %v8664, %v8666
      %v8668 = vrot.slane %v8651, %v8667
      %v8669 = vcombine.high %v8668, %v8668
      %v8670 = vld [vmem:[%s7 + $0x40] sm:$0xf]
      %v8671 = vld [vmem:[%s7 + $0x44] sm:$0xf]
      %v8672 = vld [vmem:[%s7 + $0x48] sm:$0xf]
      %v8673 = vld [vmem:[%s7 + $0x4c] sm:$0xf]
      %v8674 = vld [vmem:[%s7 + $0x50] sm:$0xf]
      %v8675 = vld [vmem:[%s7 + $0x54] sm:$0xf]
      %v8676 = vld [vmem:[%s7 + $0x58] sm:$0xf]
      %v8677 = vld [vmem:[%s7 + $0x5c] sm:$0xf]
      %v8678 = vcombine.low %v8661, %v8669
      %v8680 = vunpack.c.l.s4 1966171168
      %v8681 = vunpack.c.0.s8 %v8680
      %v8682 = vlaneseq
      %v8683 = vshrl.u32 %v8682, 7
      %v8684 = vsub.s32 %v8681, %v8683
      %v8685 = vrot.slane %v8678, %v8684
      %v8687 = vunpack.c.l.s4 1966171168
      %v8688 = vunpack.c.0.s8 %v8687
      %v8689 = vlaneseq
      %v8690 = vshrl.u32 %v8689, 7
      %v8691 = vsub.s32 %v8688, %v8690
      %v8692 = vrot.slane %v8685, %v8691
      %v8701 = vunpack.c.l.b16 %v8670
      %v8702 = vunpack.c.l.b16 %v8671
      %v8703 = vunpack.c.l.b16 %v8672
      %v8704 = vunpack.c.l.b16 %v8673
      %v8705 = vunpack.c.l.b16 %v8674
      %v8706 = vunpack.c.l.b16 %v8675
      %v8707 = vunpack.c.l.b16 %v8676
      %v8708 = vunpack.c.l.b16 %v8677
      %v8709 = vpack.c.b16 %v8702, %v8701
      %v8710 = vpack.c.b16 %v8704, %v8703
      %v8711 = vpack.c.b16 %v8706, %v8705
      %v8712 = vpack.c.b16 %v8708, %v8707
      %v8718 = vsel %vm3190, %v8692, 0
      %8720 = vmatprep.subr.bf16.mxu0 0
      %8721 = vmatpush1.bf16.msra.mxu0 0
      %8722 = vmatprep.subr.bf16.mxu0 0
      %8723 = vmatpush1.bf16.msra.mxu0 0
      %8724 = vmatprep.subr.bf16.mxu0 0
      %8725 = vmatpush1.bf16.msra.mxu0 0
      %8726 = vmatprep.subr.bf16.mxu0 0
      %8727 = vmatpush1.bf16.msra.mxu0 0
      %8728 = vmatprep.subr.bf16.mxu0 0
      %8729 = vmatpush1.bf16.msra.mxu0 %v8712
      %8730 = vmatprep.subr.bf16.mxu0 0
      %8731 = vmatpush1.bf16.msra.mxu0 %v8711
      %8732 = vmatprep.subr.bf16.mxu0 0
      %8733 = vmatpush1.bf16.msra.mxu0 %v8710
      %8734 = vmatprep.subr.bf16.mxu0 0
      %8735 = vmatpush1.bf16.msra.mxu0 %v8709
      %8736 = vmatprep.subr.bf16.mxu0 0
      %8737 = vmatpush2.bf16.msra.mxu0 0
      %8738 = vmatprep.subr.bf16.mxu0 0
      %8739 = vmatpush2.bf16.msra.mxu0 0
      %8740 = vmatprep.subr.bf16.mxu0 0
      %8741 = vmatpush2.bf16.msra.mxu0 0
      %8742 = vmatprep.subr.bf16.mxu0 0
      %8743 = vmatpush2.bf16.msra.mxu0 0
      %8744 = vmatprep.subr.bf16.mxu0 0
      %8745 = vmatpush2.bf16.msra.mxu0 0
      %8746 = vmatprep.subr.bf16.mxu0 0
      %8747 = vmatpush2.bf16.msra.mxu0 0
      %8748 = vmatprep.subr.bf16.mxu0 0
      %8749 = vmatpush2.bf16.msra.mxu0 0
      %8750 = vmatprep.subr.bf16.mxu0 0
      %8751 = vmatpush2.bf16.msra.mxu0 0
      %8752 = vmatprep.mubr.bf16.mxu0 0
      %8753 = vmatmul.mubr.bf16.gmra.mxu0 %v8718
      %v8754 = vpop.f32.mrf.mxu0
      %v8755 = vadd.f32 0.0, %v8754
      %v8756 = vpop.f32.mrf.mxu0
      %v8757 = vpop.f32.mrf.mxu0
      %v8758 = vpop.f32.mrf.mxu0
      %8759 = vdwg.mxu0
      %v8760 = vadd.f32 %v8645, %v8755
      %v8761 = vld [vmem:[%s8404] sm:$0x1]
      %v8762 = vld [vmem:[%s8404 + $0x2] sm:$0x1]
      %v8763 = vld [vmem:[%s7 + $0x60] sm:$0xf]
      %v8764 = vld [vmem:[%s7 + $0x64] sm:$0xf]
      %v8765 = vld [vmem:[%s7 + $0x68] sm:$0xf]
      %v8766 = vld [vmem:[%s7 + $0x6c] sm:$0xf]
      %v8767 = vld [vmem:[%s7 + $0x70] sm:$0xf]
      %v8768 = vld [vmem:[%s7 + $0x74] sm:$0xf]
      %v8769 = vld [vmem:[%s7 + $0x78] sm:$0xf]
      %v8770 = vld [vmem:[%s7 + $0x7c] sm:$0xf]
      %v8773 = vcombine.low %v8761, %v8762
      %v8775 = vunpack.c.l.s4 1966171168
      %v8776 = vunpack.c.0.s8 %v8775
      %v8777 = vlaneseq
      %v8778 = vshrl.u32 %v8777, 7
      %v8779 = vsub.s32 %v8776, %v8778
      %v8780 = vrot.slane %v8773, %v8779
      %v8782 = vunpack.c.l.s4 1966171168
      %v8783 = vunpack.c.0.s8 %v8782
      %v8784 = vlaneseq
      %v8785 = vshrl.u32 %v8784, 7
      %v8786 = vsub.s32 %v8783, %v8785
      %v8787 = vrot.slane %v8780, %v8786
      %v8796 = vunpack.c.l.b16 %v8763
      %v8797 = vunpack.c.l.b16 %v8764
      %v8798 = vunpack.c.l.b16 %v8765
      %v8799 = vunpack.c.l.b16 %v8766
      %v8800 = vunpack.c.l.b16 %v8767
      %v8801 = vunpack.c.l.b16 %v8768
      %v8802 = vunpack.c.l.b16 %v8769
      %v8803 = vunpack.c.l.b16 %v8770
      %v8804 = vpack.c.b16 %v8797, %v8796
      %v8805 = vpack.c.b16 %v8799, %v8798
      %v8806 = vpack.c.b16 %v8801, %v8800
      %v8807 = vpack.c.b16 %v8803, %v8802
      %v8813 = vsel %vm3190, %v8787, 0
      %8815 = vmatprep.subr.bf16.mxu0 0
      %8816 = vmatpush1.bf16.msra.mxu0 0
      %8817 = vmatprep.subr.bf16.mxu0 0
      %8818 = vmatpush1.bf16.msra.mxu0 0
      %8819 = vmatprep.subr.bf16.mxu0 0
      %8820 = vmatpush1.bf16.msra.mxu0 0
      %8821 = vmatprep.subr.bf16.mxu0 0
      %8822 = vmatpush1.bf16.msra.mxu0 0
      %8823 = vmatprep.subr.bf16.mxu0 0
      %8824 = vmatpush1.bf16.msra.mxu0 %v8807
      %8825 = vmatprep.subr.bf16.mxu0 0
      %8826 = vmatpush1.bf16.msra.mxu0 %v8806
      %8827 = vmatprep.subr.bf16.mxu0 0
      %8828 = vmatpush1.bf16.msra.mxu0 %v8805
      %8829 = vmatprep.subr.bf16.mxu0 0
      %8830 = vmatpush1.bf16.msra.mxu0 %v8804
      %8831 = vmatprep.subr.bf16.mxu0 0
      %8832 = vmatpush2.bf16.msra.mxu0 0
      %8833 = vmatprep.subr.bf16.mxu0 0
      %8834 = vmatpush2.bf16.msra.mxu0 0
      %8835 = vmatprep.subr.bf16.mxu0 0
      %8836 = vmatpush2.bf16.msra.mxu0 0
      %8837 = vmatprep.subr.bf16.mxu0 0
      %8838 = vmatpush2.bf16.msra.mxu0 0
      %8839 = vmatprep.subr.bf16.mxu0 0
      %8840 = vmatpush2.bf16.msra.mxu0 0
      %8841 = vmatprep.subr.bf16.mxu0 0
      %8842 = vmatpush2.bf16.msra.mxu0 0
      %8843 = vmatprep.subr.bf16.mxu0 0
      %8844 = vmatpush2.bf16.msra.mxu0 0
      %8845 = vmatprep.subr.bf16.mxu0 0
      %8846 = vmatpush2.bf16.msra.mxu0 0
      %8847 = vmatprep.mubr.bf16.mxu0 0
      %8848 = vmatmul.mubr.bf16.gmra.mxu0 %v8813
      %v8849 = vpop.f32.mrf.mxu0
      %v8850 = vadd.f32 0.0, %v8849
      %v8851 = vpop.f32.mrf.mxu0
      %v8852 = vpop.f32.mrf.mxu0
      %v8853 = vpop.f32.mrf.mxu0
      %8854 = vdwg.mxu0
      %v8855 = vadd.f32 %v8760, %v8850
      %v8856 = vld [vmem:[%s8404] sm:$0x3]
      %v8857 = vld [vmem:[%s8404 + $0x2] sm:$0x3]
      %v8861 = vunpack.c.l.s4 1966171168
      %v8862 = vunpack.c.0.s8 %v8861
      %v8863 = vlaneseq
      %v8864 = vshrl.u32 %v8863, 7
      %v8865 = vsub.s32 %v8862, %v8864
      %v8866 = vrot.slane %v8856, %v8865
      %v8867 = vcombine.high %v8866, %v8866
      %v8869 = vunpack.c.l.s4 1966171168
      %v8870 = vunpack.c.0.s8 %v8869
      %v8871 = vlaneseq
      %v8872 = vshrl.u32 %v8871, 7
      %v8873 = vsub.s32 %v8870, %v8872
      %v8874 = vrot.slane %v8857, %v8873
      %v8875 = vcombine.high %v8874, %v8874
      %v8877 = vshrl.u32 %v8866, 16
      %v8879 = vrot.slane %v8877, 7
      %v8880 = vrot.slane %v8879, 1
      %v8882 = vshll.u32 %v8867, 16
      %v8884 = vsel %vm8457, %v8880, %v8882
      %v8886 = vshrl.u32 %v8874, 16
      %v8888 = vrot.slane %v8886, 7
      %v8889 = vrot.slane %v8888, 1
      %v8891 = vshll.u32 %v8875, 16
      %v8893 = vsel %vm8457, %v8889, %v8891
      %v8894 = vld [vmem:[%s7 + $0x80] sm:$0xf]
      %v8895 = vld [vmem:[%s7 + $0x84] sm:$0xf]
      %v8896 = vld [vmem:[%s7 + $0x88] sm:$0xf]
      %v8897 = vld [vmem:[%s7 + $0x8c] sm:$0xf]
      %v8898 = vld [vmem:[%s7 + $0x90] sm:$0xf]
      %v8899 = vld [vmem:[%s7 + $0x94] sm:$0xf]
      %v8900 = vld [vmem:[%s7 + $0x98] sm:$0xf]
      %v8901 = vld [vmem:[%s7 + $0x9c] sm:$0xf]
      %v8902 = vcombine.low %v8884, %v8893
      %v8904 = vunpack.c.l.s4 1966171168
      %v8905 = vunpack.c.0.s8 %v8904
      %v8906 = vlaneseq
      %v8907 = vshrl.u32 %v8906, 7
      %v8908 = vsub.s32 %v8905, %v8907
      %v8909 = vrot.slane %v8902, %v8908
      %v8911 = vunpack.c.l.s4 1966171168
      %v8912 = vunpack.c.0.s8 %v8911
      %v8913 = vlaneseq
      %v8914 = vshrl.u32 %v8913, 7
      %v8915 = vsub.s32 %v8912, %v8914
      %v8916 = vrot.slane %v8909, %v8915
      %v8925 = vunpack.c.l.b16 %v8894
      %v8926 = vunpack.c.l.b16 %v8895
      %v8927 = vunpack.c.l.b16 %v8896
      %v8928 = vunpack.c.l.b16 %v8897
      %v8929 = vunpack.c.l.b16 %v8898
      %v8930 = vunpack.c.l.b16 %v8899
      %v8931 = vunpack.c.l.b16 %v8900
      %v8932 = vunpack.c.l.b16 %v8901
      %v8933 = vpack.c.b16 %v8926, %v8925
      %v8934 = vpack.c.b16 %v8928, %v8927
      %v8935 = vpack.c.b16 %v8930, %v8929
      %v8936 = vpack.c.b16 %v8932, %v8931
      %v8942 = vsel %vm3190, %v8916, 0
      %8944 = vmatprep.subr.bf16.mxu0 0
      %8945 = vmatpush1.bf16.msra.mxu0 0
      %8946 = vmatprep.subr.bf16.mxu0 0
      %8947 = vmatpush1.bf16.msra.mxu0 0
      %8948 = vmatprep.subr.bf16.mxu0 0
      %8949 = vmatpush1.bf16.msra.mxu0 0
      %8950 = vmatprep.subr.bf16.mxu0 0
      %8951 = vmatpush1.bf16.msra.mxu0 0
      %8952 = vmatprep.subr.bf16.mxu0 0
      %8953 = vmatpush1.bf16.msra.mxu0 %v8936
      %8954 = vmatprep.subr.bf16.mxu0 0
      %8955 = vmatpush1.bf16.msra.mxu0 %v8935
      %8956 = vmatprep.subr.bf16.mxu0 0
      %8957 = vmatpush1.bf16.msra.mxu0 %v8934
      %8958 = vmatprep.subr.bf16.mxu0 0
      %8959 = vmatpush1.bf16.msra.mxu0 %v8933
      %8960 = vmatprep.subr.bf16.mxu0 0
      %8961 = vmatpush2.bf16.msra.mxu0 0
      %8962 = vmatprep.subr.bf16.mxu0 0
      %8963 = vmatpush2.bf16.msra.mxu0 0
      %8964 = vmatprep.subr.bf16.mxu0 0
      %8965 = vmatpush2.bf16.msra.mxu0 0
      %8966 = vmatprep.subr.bf16.mxu0 0
      %8967 = vmatpush2.bf16.msra.mxu0 0
      %8968 = vmatprep.subr.bf16.mxu0 0
      %8969 = vmatpush2.bf16.msra.mxu0 0
      %8970 = vmatprep.subr.bf16.mxu0 0
      %8971 = vmatpush2.bf16.msra.mxu0 0
      %8972 = vmatprep.subr.bf16.mxu0 0
      %8973 = vmatpush2.bf16.msra.mxu0 0
      %8974 = vmatprep.subr.bf16.mxu0 0
      %8975 = vmatpush2.bf16.msra.mxu0 0
      %8976 = vmatprep.mubr.bf16.mxu0 0
      %8977 = vmatmul.mubr.bf16.gmra.mxu0 %v8942
      %v8978 = vpop.f32.mrf.mxu0
      %v8979 = vadd.f32 0.0, %v8978
      %v8980 = vpop.f32.mrf.mxu0
      %v8981 = vpop.f32.mrf.mxu0
      %v8982 = vpop.f32.mrf.mxu0
      %8983 = vdwg.mxu0
      %v8984 = vadd.f32 %v8855, %v8979
      %v8985 = vld [vmem:[%s8404] sm:$0x2]
      %v8986 = vld [vmem:[%s8404 + $0x2] sm:$0x2]
      %v8990 = vunpack.c.l.s4 1966171168
      %v8991 = vunpack.c.0.s8 %v8990
      %v8992 = vlaneseq
      %v8993 = vshrl.u32 %v8992, 7
      %v8994 = vsub.s32 %v8991, %v8993
      %v8995 = vrot.slane %v8985, %v8994
      %v8996 = vcombine.high %v8995, %v8995
      %v8998 = vunpack.c.l.s4 1966171168
      %v8999 = vunpack.c.0.s8 %v8998
      %v9000 = vlaneseq
      %v9001 = vshrl.u32 %v9000, 7
      %v9002 = vsub.s32 %v8999, %v9001
      %v9003 = vrot.slane %v8986, %v9002
      %v9004 = vcombine.high %v9003, %v9003
      %v9005 = vld [vmem:[%s7 + $0xa0] sm:$0xf]
      %v9006 = vld [vmem:[%s7 + $0xa4] sm:$0xf]
      %v9007 = vld [vmem:[%s7 + $0xa8] sm:$0xf]
      %v9008 = vld [vmem:[%s7 + $0xac] sm:$0xf]
      %v9009 = vld [vmem:[%s7 + $0xb0] sm:$0xf]
      %v9010 = vld [vmem:[%s7 + $0xb4] sm:$0xf]
      %v9011 = vld [vmem:[%s7 + $0xb8] sm:$0xf]
      %v9012 = vld [vmem:[%s7 + $0xbc] sm:$0xf]
      %v9013 = vcombine.low %v8996, %v9004
      %v9015 = vunpack.c.l.s4 1966171168
      %v9016 = vunpack.c.0.s8 %v9015
      %v9017 = vlaneseq
      %v9018 = vshrl.u32 %v9017, 7
      %v9019 = vsub.s32 %v9016, %v9018
      %v9020 = vrot.slane %v9013, %v9019
      %v9022 = vunpack.c.l.s4 1966171168
      %v9023 = vunpack.c.0.s8 %v9022
      %v9024 = vlaneseq
      %v9025 = vshrl.u32 %v9024, 7
      %v9026 = vsub.s32 %v9023, %v9025
      %v9027 = vrot.slane %v9020, %v9026
      %v9036 = vunpack.c.l.b16 %v9005
      %v9037 = vunpack.c.l.b16 %v9006
      %v9038 = vunpack.c.l.b16 %v9007
      %v9039 = vunpack.c.l.b16 %v9008
      %v9040 = vunpack.c.l.b16 %v9009
      %v9041 = vunpack.c.l.b16 %v9010
      %v9042 = vunpack.c.l.b16 %v9011
      %v9043 = vunpack.c.l.b16 %v9012
      %v9044 = vpack.c.b16 %v9037, %v9036
      %v9045 = vpack.c.b16 %v9039, %v9038
      %v9046 = vpack.c.b16 %v9041, %v9040
      %v9047 = vpack.c.b16 %v9043, %v9042
      %v9053 = vsel %vm3190, %v9027, 0
      %9055 = vmatprep.subr.bf16.mxu0 0
      %9056 = vmatpush1.bf16.msra.mxu0 0
      %9057 = vmatprep.subr.bf16.mxu0 0
      %9058 = vmatpush1.bf16.msra.mxu0 0
      %9059 = vmatprep.subr.bf16.mxu0 0
      %9060 = vmatpush1.bf16.msra.mxu0 0
      %9061 = vmatprep.subr.bf16.mxu0 0
      %9062 = vmatpush1.bf16.msra.mxu0 0
      %9063 = vmatprep.subr.bf16.mxu0 0
      %9064 = vmatpush1.bf16.msra.mxu0 %v9047
      %9065 = vmatprep.subr.bf16.mxu0 0
      %9066 = vmatpush1.bf16.msra.mxu0 %v9046
      %9067 = vmatprep.subr.bf16.mxu0 0
      %9068 = vmatpush1.bf16.msra.mxu0 %v9045
      %9069 = vmatprep.subr.bf16.mxu0 0
      %9070 = vmatpush1.bf16.msra.mxu0 %v9044
      %9071 = vmatprep.subr.bf16.mxu0 0
      %9072 = vmatpush2.bf16.msra.mxu0 0
      %9073 = vmatprep.subr.bf16.mxu0 0
      %9074 = vmatpush2.bf16.msra.mxu0 0
      %9075 = vmatprep.subr.bf16.mxu0 0
      %9076 = vmatpush2.bf16.msra.mxu0 0
      %9077 = vmatprep.subr.bf16.mxu0 0
      %9078 = vmatpush2.bf16.msra.mxu0 0
      %9079 = vmatprep.subr.bf16.mxu0 0
      %9080 = vmatpush2.bf16.msra.mxu0 0
      %9081 = vmatprep.subr.bf16.mxu0 0
      %9082 = vmatpush2.bf16.msra.mxu0 0
      %9083 = vmatprep.subr.bf16.mxu0 0
      %9084 = vmatpush2.bf16.msra.mxu0 0
      %9085 = vmatprep.subr.bf16.mxu0 0
      %9086 = vmatpush2.bf16.msra.mxu0 0
      %9087 = vmatprep.mubr.bf16.mxu0 0
      %9088 = vmatmul.mubr.bf16.gmra.mxu0 %v9053
      %v9089 = vpop.f32.mrf.mxu0
      %v9090 = vadd.f32 0.0, %v9089
      %v9091 = vpop.f32.mrf.mxu0
      %v9092 = vpop.f32.mrf.mxu0
      %v9093 = vpop.f32.mrf.mxu0
      %9094 = vdwg.mxu0
      %v9095 = vadd.f32 %v8984, %v9090
      %s9096 = scalar_lea.vmem [#allocation4], 4
      %v9097 = vld [vmem:[%s9096] sm:$0x1]
      %v9098 = vld [vmem:[%s9096 + $0x2] sm:$0x1]
      %v9099 = vld [vmem:[%s7 + $0xc0] sm:$0xf]
      %v9100 = vld [vmem:[%s7 + $0xc4] sm:$0xf]
      %v9101 = vld [vmem:[%s7 + $0xc8] sm:$0xf]
      %v9102 = vld [vmem:[%s7 + $0xcc] sm:$0xf]
      %v9103 = vld [vmem:[%s7 + $0xd0] sm:$0xf]
      %v9104 = vld [vmem:[%s7 + $0xd4] sm:$0xf]
      %v9105 = vld [vmem:[%s7 + $0xd8] sm:$0xf]
      %v9106 = vld [vmem:[%s7 + $0xdc] sm:$0xf]
      %v9109 = vcombine.low %v9097, %v9098
      %v9111 = vunpack.c.l.s4 1966171168
      %v9112 = vunpack.c.0.s8 %v9111
      %v9113 = vlaneseq
      %v9114 = vshrl.u32 %v9113, 7
      %v9115 = vsub.s32 %v9112, %v9114
      %v9116 = vrot.slane %v9109, %v9115
      %v9118 = vunpack.c.l.s4 1966171168
      %v9119 = vunpack.c.0.s8 %v9118
      %v9120 = vlaneseq
      %v9121 = vshrl.u32 %v9120, 7
      %v9122 = vsub.s32 %v9119, %v9121
      %v9123 = vrot.slane %v9116, %v9122
      %v9132 = vunpack.c.l.b16 %v9099
      %v9133 = vunpack.c.l.b16 %v9100
      %v9134 = vunpack.c.l.b16 %v9101
      %v9135 = vunpack.c.l.b16 %v9102
      %v9136 = vunpack.c.l.b16 %v9103
      %v9137 = vunpack.c.l.b16 %v9104
      %v9138 = vunpack.c.l.b16 %v9105
      %v9139 = vunpack.c.l.b16 %v9106
      %v9140 = vpack.c.b16 %v9133, %v9132
      %v9141 = vpack.c.b16 %v9135, %v9134
      %v9142 = vpack.c.b16 %v9137, %v9136
      %v9143 = vpack.c.b16 %v9139, %v9138
      %v9149 = vsel %vm3190, %v9123, 0
      %9151 = vmatprep.subr.bf16.mxu0 0
      %9152 = vmatpush1.bf16.msra.mxu0 0
      %9153 = vmatprep.subr.bf16.mxu0 0
      %9154 = vmatpush1.bf16.msra.mxu0 0
      %9155 = vmatprep.subr.bf16.mxu0 0
      %9156 = vmatpush1.bf16.msra.mxu0 0
      %9157 = vmatprep.subr.bf16.mxu0 0
      %9158 = vmatpush1.bf16.msra.mxu0 0
      %9159 = vmatprep.subr.bf16.mxu0 0
      %9160 = vmatpush1.bf16.msra.mxu0 %v9143
      %9161 = vmatprep.subr.bf16.mxu0 0
      %9162 = vmatpush1.bf16.msra.mxu0 %v9142
      %9163 = vmatprep.subr.bf16.mxu0 0
      %9164 = vmatpush1.bf16.msra.mxu0 %v9141
      %9165 = vmatprep.subr.bf16.mxu0 0
      %9166 = vmatpush1.bf16.msra.mxu0 %v9140
      %9167 = vmatprep.subr.bf16.mxu0 0
      %9168 = vmatpush2.bf16.msra.mxu0 0
      %9169 = vmatprep.subr.bf16.mxu0 0
      %9170 = vmatpush2.bf16.msra.mxu0 0
      %9171 = vmatprep.subr.bf16.mxu0 0
      %9172 = vmatpush2.bf16.msra.mxu0 0
      %9173 = vmatprep.subr.bf16.mxu0 0
      %9174 = vmatpush2.bf16.msra.mxu0 0
      %9175 = vmatprep.subr.bf16.mxu0 0
      %9176 = vmatpush2.bf16.msra.mxu0 0
      %9177 = vmatprep.subr.bf16.mxu0 0
      %9178 = vmatpush2.bf16.msra.mxu0 0
      %9179 = vmatprep.subr.bf16.mxu0 0
      %9180 = vmatpush2.bf16.msra.mxu0 0
      %9181 = vmatprep.subr.bf16.mxu0 0
      %9182 = vmatpush2.bf16.msra.mxu0 0
      %9183 = vmatprep.mubr.bf16.mxu0 0
      %9184 = vmatmul.mubr.bf16.gmra.mxu0 %v9149
      %v9185 = vpop.f32.mrf.mxu0
      %v9186 = vadd.f32 0.0, %v9185
      %v9187 = vpop.f32.mrf.mxu0
      %v9188 = vpop.f32.mrf.mxu0
      %v9189 = vpop.f32.mrf.mxu0
      %9190 = vdwg.mxu0
      %v9191 = vadd.f32 %v9095, %v9186
      %v9192 = vld [vmem:[%s9096] sm:$0x3]
      %v9193 = vld [vmem:[%s9096 + $0x2] sm:$0x3]
      %v9197 = vunpack.c.l.s4 1966171168
      %v9198 = vunpack.c.0.s8 %v9197
      %v9199 = vlaneseq
      %v9200 = vshrl.u32 %v9199, 7
      %v9201 = vsub.s32 %v9198, %v9200
      %v9202 = vrot.slane %v9192, %v9201
      %v9203 = vcombine.high %v9202, %v9202
      %v9205 = vunpack.c.l.s4 1966171168
      %v9206 = vunpack.c.0.s8 %v9205
      %v9207 = vlaneseq
      %v9208 = vshrl.u32 %v9207, 7
      %v9209 = vsub.s32 %v9206, %v9208
      %v9210 = vrot.slane %v9193, %v9209
      %v9211 = vcombine.high %v9210, %v9210
      %v9213 = vshrl.u32 %v9202, 16
      %v9215 = vrot.slane %v9213, 7
      %v9216 = vrot.slane %v9215, 1
      %v9218 = vshll.u32 %v9203, 16
      %v9220 = vsel %vm8457, %v9216, %v9218
      %v9222 = vshrl.u32 %v9210, 16
      %v9224 = vrot.slane %v9222, 7
      %v9225 = vrot.slane %v9224, 1
      %v9227 = vshll.u32 %v9211, 16
      %v9229 = vsel %vm8457, %v9225, %v9227
      %v9230 = vld [vmem:[%s7 + $0xe0] sm:$0xf]
      %v9231 = vld [vmem:[%s7 + $0xe4] sm:$0xf]
      %v9232 = vld [vmem:[%s7 + $0xe8] sm:$0xf]
      %v9233 = vld [vmem:[%s7 + $0xec] sm:$0xf]
      %v9234 = vld [vmem:[%s7 + $0xf0] sm:$0xf]
      %v9235 = vld [vmem:[%s7 + $0xf4] sm:$0xf]
      %v9236 = vld [vmem:[%s7 + $0xf8] sm:$0xf]
      %v9237 = vld [vmem:[%s7 + $0xfc] sm:$0xf]
      %v9238 = vcombine.low %v9220, %v9229
      %v9240 = vunpack.c.l.s4 1966171168
      %v9241 = vunpack.c.0.s8 %v9240
      %v9242 = vlaneseq
      %v9243 = vshrl.u32 %v9242, 7
      %v9244 = vsub.s32 %v9241, %v9243
      %v9245 = vrot.slane %v9238, %v9244
      %v9247 = vunpack.c.l.s4 1966171168
      %v9248 = vunpack.c.0.s8 %v9247
      %v9249 = vlaneseq
      %v9250 = vshrl.u32 %v9249, 7
      %v9251 = vsub.s32 %v9248, %v9250
      %v9252 = vrot.slane %v9245, %v9251
      %v9261 = vunpack.c.l.b16 %v9230
      %v9262 = vunpack.c.l.b16 %v9231
      %v9263 = vunpack.c.l.b16 %v9232
      %v9264 = vunpack.c.l.b16 %v9233
      %v9265 = vunpack.c.l.b16 %v9234
      %v9266 = vunpack.c.l.b16 %v9235
      %v9267 = vunpack.c.l.b16 %v9236
      %v9268 = vunpack.c.l.b16 %v9237
      %v9269 = vpack.c.b16 %v9262, %v9261
      %v9270 = vpack.c.b16 %v9264, %v9263
      %v9271 = vpack.c.b16 %v9266, %v9265
      %v9272 = vpack.c.b16 %v9268, %v9267
      %v9278 = vsel %vm3190, %v9252, 0
      %9280 = vmatprep.subr.bf16.mxu0 0
      %9281 = vmatpush1.bf16.msra.mxu0 0
      %9282 = vmatprep.subr.bf16.mxu0 0
      %9283 = vmatpush1.bf16.msra.mxu0 0
      %9284 = vmatprep.subr.bf16.mxu0 0
      %9285 = vmatpush1.bf16.msra.mxu0 0
      %9286 = vmatprep.subr.bf16.mxu0 0
      %9287 = vmatpush1.bf16.msra.mxu0 0
      %9288 = vmatprep.subr.bf16.mxu0 0
      %9289 = vmatpush1.bf16.msra.mxu0 %v9272
      %9290 = vmatprep.subr.bf16.mxu0 0
      %9291 = vmatpush1.bf16.msra.mxu0 %v9271
      %9292 = vmatprep.subr.bf16.mxu0 0
      %9293 = vmatpush1.bf16.msra.mxu0 %v9270
      %9294 = vmatprep.subr.bf16.mxu0 0
      %9295 = vmatpush1.bf16.msra.mxu0 %v9269
      %9296 = vmatprep.subr.bf16.mxu0 0
      %9297 = vmatpush2.bf16.msra.mxu0 0
      %9298 = vmatprep.subr.bf16.mxu0 0
      %9299 = vmatpush2.bf16.msra.mxu0 0
      %9300 = vmatprep.subr.bf16.mxu0 0
      %9301 = vmatpush2.bf16.msra.mxu0 0
      %9302 = vmatprep.subr.bf16.mxu0 0
      %9303 = vmatpush2.bf16.msra.mxu0 0
      %9304 = vmatprep.subr.bf16.mxu0 0
      %9305 = vmatpush2.bf16.msra.mxu0 0
      %9306 = vmatprep.subr.bf16.mxu0 0
      %9307 = vmatpush2.bf16.msra.mxu0 0
      %9308 = vmatprep.subr.bf16.mxu0 0
      %9309 = vmatpush2.bf16.msra.mxu0 0
      %9310 = vmatprep.subr.bf16.mxu0 0
      %9311 = vmatpush2.bf16.msra.mxu0 0
      %9312 = vmatprep.mubr.bf16.mxu0 0
      %9313 = vmatmul.mubr.bf16.gmra.mxu0 %v9278
      %v9314 = vpop.f32.mrf.mxu0
      %v9315 = vadd.f32 0.0, %v9314
      %v9316 = vpop.f32.mrf.mxu0
      %v9317 = vpop.f32.mrf.mxu0
      %v9318 = vpop.f32.mrf.mxu0
      %9319 = vdwg.mxu0
      %v9320 = vadd.f32 %v9191, %v9315
      %v9321 = vld [vmem:[%s9096] sm:$0x2]
      %v9322 = vld [vmem:[%s9096 + $0x2] sm:$0x2]
      %v9326 = vunpack.c.l.s4 1966171168
      %v9327 = vunpack.c.0.s8 %v9326
      %v9328 = vlaneseq
      %v9329 = vshrl.u32 %v9328, 7
      %v9330 = vsub.s32 %v9327, %v9329
      %v9331 = vrot.slane %v9321, %v9330
      %v9332 = vcombine.high %v9331, %v9331
      %v9334 = vunpack.c.l.s4 1966171168
      %v9335 = vunpack.c.0.s8 %v9334
      %v9336 = vlaneseq
      %v9337 = vshrl.u32 %v9336, 7
      %v9338 = vsub.s32 %v9335, %v9337
      %v9339 = vrot.slane %v9322, %v9338
      %v9340 = vcombine.high %v9339, %v9339
      %v9341 = vld [vmem:[%s7 + $0x100] sm:$0xf]
      %v9342 = vld [vmem:[%s7 + $0x104] sm:$0xf]
      %v9343 = vld [vmem:[%s7 + $0x108] sm:$0xf]
      %v9344 = vld [vmem:[%s7 + $0x10c] sm:$0xf]
      %v9345 = vld [vmem:[%s7 + $0x110] sm:$0xf]
      %v9346 = vld [vmem:[%s7 + $0x114] sm:$0xf]
      %v9347 = vld [vmem:[%s7 + $0x118] sm:$0xf]
      %v9348 = vld [vmem:[%s7 + $0x11c] sm:$0xf]
      %v9349 = vcombine.low %v9332, %v9340
      %v9351 = vunpack.c.l.s4 1966171168
      %v9352 = vunpack.c.0.s8 %v9351
      %v9353 = vlaneseq
      %v9354 = vshrl.u32 %v9353, 7
      %v9355 = vsub.s32 %v9352, %v9354
      %v9356 = vrot.slane %v9349, %v9355
      %v9358 = vunpack.c.l.s4 1966171168
      %v9359 = vunpack.c.0.s8 %v9358
      %v9360 = vlaneseq
      %v9361 = vshrl.u32 %v9360, 7
      %v9362 = vsub.s32 %v9359, %v9361
      %v9363 = vrot.slane %v9356, %v9362
      %v9372 = vunpack.c.l.b16 %v9341
      %v9373 = vunpack.c.l.b16 %v9342
      %v9374 = vunpack.c.l.b16 %v9343
      %v9375 = vunpack.c.l.b16 %v9344
      %v9376 = vunpack.c.l.b16 %v9345
      %v9377 = vunpack.c.l.b16 %v9346
      %v9378 = vunpack.c.l.b16 %v9347
      %v9379 = vunpack.c.l.b16 %v9348
      %v9380 = vpack.c.b16 %v9373, %v9372
      %v9381 = vpack.c.b16 %v9375, %v9374
      %v9382 = vpack.c.b16 %v9377, %v9376
      %v9383 = vpack.c.b16 %v9379, %v9378
      %v9389 = vsel %vm3190, %v9363, 0
      %9391 = vmatprep.subr.bf16.mxu0 0
      %9392 = vmatpush1.bf16.msra.mxu0 0
      %9393 = vmatprep.subr.bf16.mxu0 0
      %9394 = vmatpush1.bf16.msra.mxu0 0
      %9395 = vmatprep.subr.bf16.mxu0 0
      %9396 = vmatpush1.bf16.msra.mxu0 0
      %9397 = vmatprep.subr.bf16.mxu0 0
      %9398 = vmatpush1.bf16.msra.mxu0 0
      %9399 = vmatprep.subr.bf16.mxu0 0
      %9400 = vmatpush1.bf16.msra.mxu0 %v9383
      %9401 = vmatprep.subr.bf16.mxu0 0
      %9402 = vmatpush1.bf16.msra.mxu0 %v9382
      %9403 = vmatprep.subr.bf16.mxu0 0
      %9404 = vmatpush1.bf16.msra.mxu0 %v9381
      %9405 = vmatprep.subr.bf16.mxu0 0
      %9406 = vmatpush1.bf16.msra.mxu0 %v9380
      %9407 = vmatprep.subr.bf16.mxu0 0
      %9408 = vmatpush2.bf16.msra.mxu0 0
      %9409 = vmatprep.subr.bf16.mxu0 0
      %9410 = vmatpush2.bf16.msra.mxu0 0
      %9411 = vmatprep.subr.bf16.mxu0 0
      %9412 = vmatpush2.bf16.msra.mxu0 0
      %9413 = vmatprep.subr.bf16.mxu0 0
      %9414 = vmatpush2.bf16.msra.mxu0 0
      %9415 = vmatprep.subr.bf16.mxu0 0
      %9416 = vmatpush2.bf16.msra.mxu0 0
      %9417 = vmatprep.subr.bf16.mxu0 0
      %9418 = vmatpush2.bf16.msra.mxu0 0
      %9419 = vmatprep.subr.bf16.mxu0 0
      %9420 = vmatpush2.bf16.msra.mxu0 0
      %9421 = vmatprep.subr.bf16.mxu0 0
      %9422 = vmatpush2.bf16.msra.mxu0 0
      %9423 = vmatprep.mubr.bf16.mxu0 0
      %9424 = vmatmul.mubr.bf16.gmra.mxu0 %v9389
      %v9425 = vpop.f32.mrf.mxu0
      %v9426 = vadd.f32 0.0, %v9425
      %v9427 = vpop.f32.mrf.mxu0
      %v9428 = vpop.f32.mrf.mxu0
      %v9429 = vpop.f32.mrf.mxu0
      %9430 = vdwg.mxu0
      %v9431 = vadd.f32 %v9320, %v9426
      %v9432 = vld [vmem:[%s8] sm:$0x1]
      %v9434 = vlaneseq
      %v9435 = vshrl.u32 %v9434, 7
      %v9436 = vsub.s32 0, %v9435
      %v9437 = vrot.slane %v9432, %v9436
      %v9439 = vadd.f32 %v9431, %v9437
      %v9440 = vmax.f32 %v9439, 0.0
      %v9441 = vpack.c.bf16 %v9440, %v9440
      %v9444 = vunpack.c.l.s4 1966171168
      %v9445 = vunpack.c.0.s8 %v9444
      %v9446 = vlaneseq
      %v9447 = vshrl.u32 %v9446, 7
      %v9448 = vsub.s32 %v9445, %v9447
      %v9449 = vrot.slane %v9441, %v9448
      %v9450 = vcombine.high %v9449, %v9449
      %v9452 = vunpack.c.l.s4 1966171168
      %v9453 = vunpack.c.0.s8 %v9452
      %v9454 = vlaneseq
      %v9455 = vshrl.u32 %v9454, 7
      %v9456 = vsub.s32 %v9453, %v9455
      %v9457 = vrot.slane %v9449, %v9456
      %v9459 = vunpack.c.l.s4 1966171168
      %v9460 = vunpack.c.0.s8 %v9459
      %v9461 = vlaneseq
      %v9462 = vshrl.u32 %v9461, 7
      %v9463 = vsub.s32 %v9460, %v9462
      %v9464 = vrot.slane %v9450, %v9463
      %v9466 = vsel %vm1524, %v9457, 4286644096
      %v9468 = vunpack.i.l.bf16 %v9466
      %v9469 = vunpack.i.h.bf16 %v9466
      %v9470 = vmax.f32 %v9468, %v9469
      %v9471 = vrot.slane %v9470, 4
      %v9472 = vmax.f32 %v9470, %v9471
      %v9473 = vrot.slane %v9472, 2
      %v9474 = vmax.f32 %v9472, %v9473
      %v9475 = vrot.slane %v9474, 1
      %v9476 = vmax.f32 %v9474, %v9475
      %v9477 = vpack.i.bf16 %v9476, %v9476
      %v9479 = vsel %vm1524, %v9464, 4286644096
      %v9481 = vunpack.i.l.bf16 %v9479
      %v9482 = vunpack.i.h.bf16 %v9479
      %v9483 = vmax.f32 %v9481, %v9482
      %v9484 = vrot.slane %v9483, 4
      %v9485 = vmax.f32 %v9483, %v9484
      %v9486 = vrot.slane %v9485, 2
      %v9487 = vmax.f32 %v9485, %v9486
      %v9488 = vrot.slane %v9487, 1
      %v9489 = vmax.f32 %v9487, %v9488
      %v9490 = vpack.i.bf16 %v9489, %v9489
      %v9492 = vsel %vm3190, %v9477, 4286644096
      %v9495 = vsel %vm3190, %v9490, 4286644096
      %v9497 = vmax.bf16 %v9492, %v9495
      %v9498 = vld [vmem:[%s328] sm:$0x1]
      %v9499 = vsel %vm3647, %v9497, %v9498
      %9500 = vst [vmem:[%s328] sm:$0x1] %v9499
      %p9501 = scmp.lt.s32.totalorder %s20, 1
      %s9502 = scalar_select %p9501, %s20, 1
      %s9503 = scalar_lea.vmem %s9, %s9502
      // Predicated region
      $region57: #{_conv4_forward.1} parent=55 // pred_check
        %p9504 = pneg %p232
      $region58: #{_conv4_forward.1} parent=55 // pred_check_branch
        %9506 = sbr.rel (%p9504) target = $region60
      $region59: #{_conv4_forward.1} parent=55 // pred_region
        _
      $region60: #{_conv4_forward.1} parent=55 // pred_fallthru
        _
    $region56: #{_conv4_forward.1} parent=5 // pred_fallthru
      _
    %p9507 = scmp.le.s32.totalorder 2, %s15
    // Predicated region
    $region61: #{_conv4_forward.1} parent=5 // pred_check
      %p9508 = pneg %p9507
    $region62: #{_conv4_forward.1} parent=5 // pred_check_branch
      %9510 = sbr.rel (%p9508) target = $region64
    $region63: #{_conv4_forward.1} parent=5 // pred_region
      %s9511 = ssub.s32 %s15, 2
      // Predicated region
      $region65: #{_conv4_forward.1} parent=63 // pred_check
        %p9512 = pneg %p238
      $region66: #{_conv4_forward.1} parent=63 // pred_check_branch
        %9514 = sbr.rel (%p9512) target = $region68
      $region67: #{_conv4_forward.1} parent=63 // pred_region
        %p9515 = scmp.lt.s32.totalorder %s21, 1
        %s9516 = scalar_select %p9515, %s21, 1
        %s9517 = scalar_lea.vmem %s9, %s9516
      $region68: #{_conv4_forward.1} parent=63 // pred_fallthru
        _
    $region64: #{_conv4_forward.1} parent=5 // pred_fallthru
      _
  $region6: #{_conv4_forward.1} parent=0 // loop_footer
    %s19 = sadd.s32 1, %s15
  $region7: #{_conv4_forward.1} parent=0 // loop_footer_branch
    %14 = sbr.rel target = $region3
  $region8: #{_conv4_forward.1} parent=0 // loop_exit
    _

</llo_original>
